<compile_context>
chip_gen: v6e
topology: v6e:2x2x1
jax: 0.10.0
libtpu: 0.0.40
codegen_flags: <defaults>
</compile_context>

<pallas_src>
import functools

import jax
import jax.numpy as jnp
from jax.experimental import pallas as pl
from jax.experimental.pallas import tpu as pltpu


# ---------------------------------------------------------------------------
# Chip detection (gates the v7x-only M-splits; never raises)
# ---------------------------------------------------------------------------
@functools.lru_cache(maxsize=1)
def _tensorcores_per_chip():
    try:
        kind = jax.devices()[0].device_kind.lower()
    except Exception:
        return 1
    # v7x has 2 TensorCores per chip; v5e/v6e have 1.
    return 2 if ("v7" in kind or "tpu7" in kind or "tpu 7" in kind) else 1


# ---------------------------------------------------------------------------
# Pallas kernel 1: fused  X @ W + b  (+ optional ReLU), M tiled over the grid
# ---------------------------------------------------------------------------
def _matmul_bias_act_kernel(x_ref, w_ref, b_ref, o_ref, *, apply_relu):
    acc = jnp.dot(x_ref[...], w_ref[...], preferred_element_type=jnp.float32)
    acc = acc + b_ref[...]                    # (1, N) f32 broadcast over rows
    if apply_relu:
        acc = jnp.maximum(acc, 0.0)
    o_ref[...] = acc.astype(o_ref.dtype)


def pallas_matmul_bias_act(x, w, b, *, apply_relu, out_dtype, m_tiles=1):
    """x: (M, K) bf16, w: (K, N) bf16, b: (N,)/(1,N) f32 -> (M, N) out_dtype."""
    M, K = x.shape
    Kw, N = w.shape
    assert K == Kw, (K, Kw)
    if m_tiles < 1 or M % m_tiles != 0 or (M // m_tiles) % 16 != 0:
        m_tiles = 1                           # parameterized on M (small-M fallback)
    tm = M // m_tiles
    kernel = functools.partial(_matmul_bias_act_kernel, apply_relu=apply_relu)
    return pl.pallas_call(
        kernel,
        out_shape=jax.ShapeDtypeStruct((M, N), out_dtype),
        grid=(m_tiles,),
        in_specs=[
            pl.BlockSpec((tm, K), lambda i: (i, 0)),
            pl.BlockSpec((K, N), lambda i: (0, 0)),
            pl.BlockSpec((1, N), lambda i: (0, 0)),
        ],
        out_specs=pl.BlockSpec((tm, N), lambda i: (i, 0)),
        compiler_params=pltpu.CompilerParams(
            dimension_semantics=("parallel",)),
    )(x, w, b.reshape(1, N))


# ---------------------------------------------------------------------------
# Pallas kernel 2: K-tiled FC with VMEM f32 accumulator.
# Only used when M is large enough for compute to hide the weight DMA
# (M >= 256); at B=4 the single-shot kernel above is used instead.
# ---------------------------------------------------------------------------
def _fc_accum_kernel(x_ref, w_ref, b_ref, o_ref, acc_ref):
    k = pl.program_id(0)

    @pl.when(k == 0)
    def _():
        acc_ref[...] = jnp.zeros_like(acc_ref)

    acc_ref[...] += jnp.dot(x_ref[...], w_ref[...],
                            preferred_element_type=jnp.float32)

    @pl.when(k == pl.num_programs(0) - 1)
    def _():
        o_ref[...] = (acc_ref[...] + b_ref[...]).astype(o_ref.dtype)


def pallas_fc_ktiled(x, w, b, *, k_tile):
    """x: (M, K) bf16, w: (K, N) bf16, b f32 -> (M, N) f32, K tiled on grid."""
    M, K = x.shape
    Kw, N = w.shape
    assert K == Kw and K % k_tile == 0, (K, Kw, k_tile)
    nk = K // k_tile
    return pl.pallas_call(
        _fc_accum_kernel,
        out_shape=jax.ShapeDtypeStruct((M, N), jnp.float32),
        grid=(nk,),
        in_specs=[
            pl.BlockSpec((M, k_tile), lambda k: (0, k)),
            pl.BlockSpec((k_tile, N), lambda k: (k, 0)),
            pl.BlockSpec((1, N), lambda k: (0, 0)),
        ],
        out_specs=pl.BlockSpec((M, N), lambda k: (0, 0)),
        scratch_shapes=[pltpu.VMEM((M, N), jnp.float32)],
        compiler_params=pltpu.CompilerParams(
            dimension_semantics=("arbitrary",)),
    )(x, w, b.reshape(1, N))


# ---------------------------------------------------------------------------
# im2col glue (plain JAX) for the two 3x3 stride-2 convs
# ---------------------------------------------------------------------------
def _im2col(x_nhwc, ksize, stride, pad):
    B, H, W, C = x_nhwc.shape
    xp = jnp.pad(x_nhwc, ((0, 0), (pad, pad), (pad, pad), (0, 0)))
    OH = (H + 2 * pad - ksize) // stride + 1
    OW = (W + 2 * pad - ksize) // stride + 1
    cols = []
    for kh in range(ksize):
        for kw in range(ksize):
            cols.append(
                jax.lax.slice(
                    xp,
                    (0, kh, kw, 0),
                    (B, kh + stride * (OH - 1) + 1, kw + stride * (OW - 1) + 1, C),
                    (1, stride, stride, 1),
                )
            )
    # (B, OH, OW, kH*kW, C) with patch feature order (kh, kw, c_in)
    patches = jnp.stack(cols, axis=3)
    return patches.reshape(B * OH * OW, ksize * ksize * C), OH, OW


# ---------------------------------------------------------------------------
# One-time weight preparation (hoisted out of the forward pass).
# Torch OIHW f32 weights -> matmul-layout bf16 weights + (1,N) f32 biases.
# ---------------------------------------------------------------------------
def prepare_params(params):
    w1 = jnp.transpose(params["w1"], (2, 3, 1, 0)).reshape(27, 16)
    w1 = jnp.pad(w1, ((0, 5), (0, 0))).astype(jnp.bfloat16)       # K: 27 -> 32
    w2 = jnp.transpose(params["w2"], (2, 3, 1, 0)).reshape(144, 32)
    w2 = w2.astype(jnp.bfloat16)
    # conv3 (k=16 over a 16x16 map) == FC over 8192 features in (h, w, c) order
    w3 = jnp.transpose(params["w3"], (2, 3, 1, 0)).reshape(16 * 16 * 32, 64)
    w3 = w3.astype(jnp.bfloat16)
    return {
        "w1": w1, "b1": params["b1"].astype(jnp.float32).reshape(1, 16),
        "w2": w2, "b2": params["b2"].astype(jnp.float32).reshape(1, 32),
        "w3": w3, "b3": params["b3"].astype(jnp.float32).reshape(1, 64),
    }


# ---------------------------------------------------------------------------
# Encoder / Siamese forward (takes pre-prepared weights)
# ---------------------------------------------------------------------------
def encoder_forward(pp, x_nchw):
    B = x_nchw.shape[0]
    n_tc = _tensorcores_per_chip()
    x = jnp.transpose(x_nchw, (0, 2, 3, 1)).astype(jnp.bfloat16)  # NHWC bf16

    # ---- conv1: 3 -> 16, k3 s2 p1  (64x64 -> 32x32) ----
    cols1, OH1, OW1 = _im2col(x, 3, 2, 1)                 # (B*1024, 27)
    cols1 = jnp.pad(cols1, ((0, 0), (0, 5)))              # K: 27 -> 32
    h1 = pallas_matmul_bias_act(
        cols1, pp["w1"], pp["b1"], apply_relu=True, out_dtype=jnp.bfloat16,
        m_tiles=n_tc if cols1.shape[0] >= 2048 else 1)    # split M only on v7x
    h1 = h1.reshape(B, OH1, OW1, 16)

    # ---- conv2: 16 -> 32, k3 s2 p1  (32x32 -> 16x16) ----
    cols2, OH2, OW2 = _im2col(h1, 3, 2, 1)                # (B*256, 144)
    h2 = pallas_matmul_bias_act(
        cols2, pp["w2"], pp["b2"], apply_relu=True, out_dtype=jnp.bfloat16,
        m_tiles=n_tc if cols2.shape[0] >= 1024 else 1)    # split M only on v7x
    # conv3's "im2col" (k=16, s=1, p=0 on a 16x16 map) is a pure reshape:
    # NHWC flatten (h, w, c) order == patch order (kh, kw, c_in).
    h2 = h2.reshape(B, OH2 * OW2 * 32)                    # (B, 8192)

    # ---- conv3: 32 -> 64, k16  ==  FC over 8192 ----
    M = h2.shape[0]
    if M >= 256:
        # Large batch: K-tiling lets the 1 MB w3 DMA pipeline behind the MXU.
        enc = pallas_fc_ktiled(h2, pp["w3"], pp["b3"], k_tile=2048)
    else:
        # Small batch (latency regime): single-shot, bias fused, no scratch.
        enc = pallas_matmul_bias_act(h2, pp["w3"], pp["b3"], apply_relu=False,
                                     out_dtype=jnp.float32, m_tiles=1)
    return enc                                            # (B, 64) f32


def _squeeze_like_torch(x_b64):
    # torch.squeeze on (B, 64, 1, 1): drops the size-1 spatial dims (already
    # implicit here) and also the batch dim when B == 1.
    return x_b64[0] if x_b64.shape[0] == 1 else x_b64


def siamese_forward(pp, input1, input2):
    b1 = input1.shape[0]
    x = jnp.concatenate([input1, input2], axis=0)         # one encoder pass
    enc = encoder_forward(pp, x)                          # (B1+B2, 64)
    return _squeeze_like_torch(enc[:b1]), _squeeze_like_torch(enc[b1:])


# ---------------------------------------------------------------------------
# Pure-JAX f32 reference (for correctness check only; uses raw torch-layout
# weights, not the prepared ones)
# ---------------------------------------------------------------------------
def _conv_ref(x, w, b, stride, pad):
    y = jax.lax.conv_general_dilated(
        x, w, (stride, stride), ((pad, pad), (pad, pad)),
        dimension_numbers=("NCHW", "OIHW", "NCHW"),
    )
    return y + b[None, :, None, None]


def encoder_reference(params, x_nchw):
    x = jnp.maximum(_conv_ref(x_nchw, params["w1"], params["b1"], 2, 1), 0.0)
    x = jnp.maximum(_conv_ref(x, params["w2"], params["b2"], 2, 1), 0.0)
    x = _conv_ref(x, params["w3"], params["b3"], 1, 0)
    return jnp.squeeze(x)


# ---------------------------------------------------------------------------
# Deterministic parameter init (PyTorch Conv2d default: U(-1/sqrt(fan_in), .))
# ---------------------------------------------------------------------------
def _init_conv(key, c_out, c_in, k):
    fan_in = c_in * k * k
    bound = 1.0 / (fan_in ** 0.5)
    kw, kb = jax.random.split(key)
    w = jax.random.uniform(kw, (c_out, c_in, k, k), jnp.float32, -bound, bound)
    b = jax.random.uniform(kb, (c_out,), jnp.float32, -bound, bound)
    return w, b


def init_params(key):
    k1, k2, k3 = jax.random.split(key, 3)
    w1, b1 = _init_conv(k1, 16, 3, 3)
    w2, b2 = _init_conv(k2, 32, 16, 3)
    w3, b3 = _init_conv(k3, 64, 32, 16)
    return {"w1": w1, "b1": b1, "w2": w2, "b2": b2, "w3": w3, "b3": b3}


# ---------------------------------------------------------------------------
if __name__ == "__main__":
    key = jax.random.PRNGKey(0)
    kp, kx1, kx2 = jax.random.split(key, 3)

    params = init_params(kp)
    prepped = prepare_params(params)      # one-time; frozen weights, not per-call
    # Input spatial size is fixed at 64x64 by the encoder architecture.
    input1 = jax.random.uniform(kx1, (2, 3, 64, 64), jnp.float32)
    input2 = jax.random.uniform(kx2, (2, 3, 64, 64), jnp.float32)

    fwd = jax.jit(siamese_forward)
    out1, out2 = fwd(prepped, input1, input2)
    out1 = jax.block_until_ready(out1)
    out2 = jax.block_until_ready(out2)

    assert out1.shape == (2, 64) and out2.shape == (2, 64), (out1.shape, out2.shape)

    ref1 = encoder_reference(params, input1)
    ref2 = encoder_reference(params, input2)
    assert jnp.allclose(out1, ref1, rtol=1e-2, atol=1e-2), "output1 mismatch vs reference"
    assert jnp.allclose(out2, ref2, rtol=1e-2, atol=1e-2), "output2 mismatch vs reference"

    print("KERNEL_OK")
</pallas_src>

<mosaic_0001>
module attributes {stable_mosaic.version = 11 : i64} {
  func.func @_matmul_bias_act_kernel(%arg0: i32, %arg1: memref<4096x32xbf16, #tpu.memory_space<vmem>>, %arg2: memref<32x16xbf16, #tpu.memory_space<vmem>>, %arg3: memref<1x16xf32, #tpu.memory_space<vmem>>, %arg4: memref<4096x16xbf16, #tpu.memory_space<vmem>>) attributes {dimension_semantics = [#tpu.dimension_semantics<parallel>], iteration_bounds = array<i64: 1>, scalar_prefetch = 0 : i64, scratch_operands = 0 : i64, tpu.core_type = #tpu.core_type<tc>, window_params = [{transform_indices = @transform_0, window_bounds = array<i64: 4096, 32>}, {pipeline_mode = #tpu.pipeline_mode<synchronous>, transform_indices = @transform_1, window_bounds = array<i64: 32, 16>}, {pipeline_mode = #tpu.pipeline_mode<synchronous>, transform_indices = @transform_2, window_bounds = array<i64: 1, 16>}, {transform_indices = @transform_3, window_bounds = array<i64: 4096, 16>}]} {
    %c0 = arith.constant 0 : index
    %c0_0 = arith.constant 0 : index
    %0 = vector.load %arg1[%c0, %c0_0] : memref<4096x32xbf16, #tpu.memory_space<vmem>>, vector<4096x32xbf16>
    %c0_1 = arith.constant 0 : index
    %c0_2 = arith.constant 0 : index
    %1 = vector.load %arg2[%c0_1, %c0_2] : memref<32x16xbf16, #tpu.memory_space<vmem>>, vector<32x16xbf16>
    %cst = arith.constant dense<0.000000e+00> : vector<4096x16xf32>
    %2 = tpu.matmul %0, %1, %cst {dimension_numbers = #tpu.dot_dimension_numbers<[1], [0], [0], [1], [0, 0, 1, 1], [], []>} : vector<4096x32xbf16>, vector<32x16xbf16>, vector<4096x16xf32> -> vector<4096x16xf32>
    %c0_3 = arith.constant 0 : index
    %c0_4 = arith.constant 0 : index
    %3 = vector.load %arg3[%c0_3, %c0_4] : memref<1x16xf32, #tpu.memory_space<vmem>>, vector<1x16xf32>
    %4 = vector.broadcast %3 : vector<1x16xf32> to vector<4096x16xf32>
    %5 = arith.addf %2, %4 : vector<4096x16xf32>
    %cst_5 = arith.constant 0.000000e+00 : f32
    %6 = vector.broadcast %cst_5 : f32 to vector<4096x16xf32>
    %7 = arith.maximumf %5, %6 : vector<4096x16xf32>
    %8 = arith.truncf %7 : vector<4096x16xf32> to vector<4096x16xbf16>
    %c0_6 = arith.constant 0 : index
    %c0_7 = arith.constant 0 : index
    %9 = vector.load %arg4[%c0_6, %c0_7] : memref<4096x16xbf16, #tpu.memory_space<vmem>>, vector<4096x16xbf16>
    tpu.vector_store %arg4[%c0_6, %c0_7], %8 {strides = array<i32>} : memref<4096x16xbf16, #tpu.memory_space<vmem>>, vector<4096x16xbf16>,
    return
  }
  func.func @transform_0(%arg0: i32) -> (i32, i32) {
    %c0_i32 = arith.constant 0 : i32
    %c0_i32_0 = arith.constant 0 : i32
    return %arg0, %c0_i32 : i32, i32
  }
  func.func @transform_1(%arg0: i32) -> (i32, i32) {
    %c0_i32 = arith.constant 0 : i32
    %c0_i32_0 = arith.constant 0 : i32
    %c0_i32_1 = arith.constant 0 : i32
    return %c0_i32, %c0_i32_0 : i32, i32
  }
  func.func @transform_2(%arg0: i32) -> (i32, i32) {
    %c0_i32 = arith.constant 0 : i32
    %c0_i32_0 = arith.constant 0 : i32
    %c0_i32_1 = arith.constant 0 : i32
    return %c0_i32, %c0_i32_0 : i32, i32
  }
  func.func @transform_3(%arg0: i32) -> (i32, i32) {
    %c0_i32 = arith.constant 0 : i32
    %c0_i32_0 = arith.constant 0 : i32
    return %arg0, %c0_i32 : i32, i32
  }
}

module attributes {stable_mosaic.version = 11 : i64} {
  func.func @_matmul_bias_act_kernel(%arg0: i32, %arg1: memref<1024x144xbf16, #tpu.memory_space<vmem>>, %arg2: memref<144x32xbf16, #tpu.memory_space<vmem>>, %arg3: memref<1x32xf32, #tpu.memory_space<vmem>>, %arg4: memref<1024x32xbf16, #tpu.memory_space<vmem>>) attributes {dimension_semantics = [#tpu.dimension_semantics<parallel>], iteration_bounds = array<i64: 1>, scalar_prefetch = 0 : i64, scratch_operands = 0 : i64, tpu.core_type = #tpu.core_type<tc>, window_params = [{transform_indices = @transform_0, window_bounds = array<i64: 1024, 144>}, {pipeline_mode = #tpu.pipeline_mode<synchronous>, transform_indices = @transform_1, window_bounds = array<i64: 144, 32>}, {pipeline_mode = #tpu.pipeline_mode<synchronous>, transform_indices = @transform_2, window_bounds = array<i64: 1, 32>}, {transform_indices = @transform_3, window_bounds = array<i64: 1024, 32>}]} {
    %c0 = arith.constant 0 : index
    %c0_0 = arith.constant 0 : index
    %0 = vector.load %arg1[%c0, %c0_0] : memref<1024x144xbf16, #tpu.memory_space<vmem>>, vector<1024x144xbf16>
    %c0_1 = arith.constant 0 : index
    %c0_2 = arith.constant 0 : index
    %1 = vector.load %arg2[%c0_1, %c0_2] : memref<144x32xbf16, #tpu.memory_space<vmem>>, vector<144x32xbf16>
    %cst = arith.constant dense<0.000000e+00> : vector<1024x32xf32>
    %2 = tpu.matmul %0, %1, %cst {dimension_numbers = #tpu.dot_dimension_numbers<[1], [0], [0], [1], [0, 0, 1, 1], [], []>} : vector<1024x144xbf16>, vector<144x32xbf16>, vector<1024x32xf32> -> vector<1024x32xf32>
    %c0_3 = arith.constant 0 : index
    %c0_4 = arith.constant 0 : index
    %3 = vector.load %arg3[%c0_3, %c0_4] : memref<1x32xf32, #tpu.memory_space<vmem>>, vector<1x32xf32>
    %4 = vector.broadcast %3 : vector<1x32xf32> to vector<1024x32xf32>
    %5 = arith.addf %2, %4 : vector<1024x32xf32>
    %cst_5 = arith.constant 0.000000e+00 : f32
    %6 = vector.broadcast %cst_5 : f32 to vector<1024x32xf32>
    %7 = arith.maximumf %5, %6 : vector<1024x32xf32>
    %8 = arith.truncf %7 : vector<1024x32xf32> to vector<1024x32xbf16>
    %c0_6 = arith.constant 0 : index
    %c0_7 = arith.constant 0 : index
    %9 = vector.load %arg4[%c0_6, %c0_7] : memref<1024x32xbf16, #tpu.memory_space<vmem>>, vector<1024x32xbf16>
    tpu.vector_store %arg4[%c0_6, %c0_7], %8 {strides = array<i32>} : memref<1024x32xbf16, #tpu.memory_space<vmem>>, vector<1024x32xbf16>,
    return
  }
  func.func @transform_0(%arg0: i32) -> (i32, i32) {
    %c0_i32 = arith.constant 0 : i32
    %c0_i32_0 = arith.constant 0 : i32
    return %arg0, %c0_i32 : i32, i32
  }
  func.func @transform_1(%arg0: i32) -> (i32, i32) {
    %c0_i32 = arith.constant 0 : i32
    %c0_i32_0 = arith.constant 0 : i32
    %c0_i32_1 = arith.constant 0 : i32
    return %c0_i32, %c0_i32_0 : i32, i32
  }
  func.func @transform_2(%arg0: i32) -> (i32, i32) {
    %c0_i32 = arith.constant 0 : i32
    %c0_i32_0 = arith.constant 0 : i32
    %c0_i32_1 = arith.constant 0 : i32
    return %c0_i32, %c0_i32_0 : i32, i32
  }
  func.func @transform_3(%arg0: i32) -> (i32, i32) {
    %c0_i32 = arith.constant 0 : i32
    %c0_i32_0 = arith.constant 0 : i32
    return %arg0, %c0_i32 : i32, i32
  }
}

module attributes {stable_mosaic.version = 11 : i64} {
  func.func @_matmul_bias_act_kernel(%arg0: i32, %arg1: memref<4x8192xbf16, #tpu.memory_space<vmem>>, %arg2: memref<8192x64xbf16, #tpu.memory_space<vmem>>, %arg3: memref<1x64xf32, #tpu.memory_space<vmem>>, %arg4: memref<4x64xf32, #tpu.memory_space<vmem>>) attributes {dimension_semantics = [#tpu.dimension_semantics<parallel>], iteration_bounds = array<i64: 1>, scalar_prefetch = 0 : i64, scratch_operands = 0 : i64, tpu.core_type = #tpu.core_type<tc>, window_params = [{transform_indices = @transform_0, window_bounds = array<i64: 4, 8192>}, {pipeline_mode = #tpu.pipeline_mode<synchronous>, transform_indices = @transform_1, window_bounds = array<i64: 8192, 64>}, {pipeline_mode = #tpu.pipeline_mode<synchronous>, transform_indices = @transform_2, window_bounds = array<i64: 1, 64>}, {transform_indices = @transform_3, window_bounds = array<i64: 4, 64>}]} {
    %c0 = arith.constant 0 : index
    %c0_0 = arith.constant 0 : index
    %0 = vector.load %arg1[%c0, %c0_0] : memref<4x8192xbf16, #tpu.memory_space<vmem>>, vector<4x8192xbf16>
    %c0_1 = arith.constant 0 : index
    %c0_2 = arith.constant 0 : index
    %1 = vector.load %arg2[%c0_1, %c0_2] : memref<8192x64xbf16, #tpu.memory_space<vmem>>, vector<8192x64xbf16>
    %cst = arith.constant dense<0.000000e+00> : vector<4x64xf32>
    %2 = tpu.matmul %0, %1, %cst {dimension_numbers = #tpu.dot_dimension_numbers<[1], [0], [0], [1], [0, 0, 1, 1], [], []>} : vector<4x8192xbf16>, vector<8192x64xbf16>, vector<4x64xf32> -> vector<4x64xf32>
    %c0_3 = arith.constant 0 : index
    %c0_4 = arith.constant 0 : index
    %3 = vector.load %arg3[%c0_3, %c0_4] : memref<1x64xf32, #tpu.memory_space<vmem>>, vector<1x64xf32>
    %4 = vector.broadcast %3 : vector<1x64xf32> to vector<4x64xf32>
    %5 = arith.addf %2, %4 : vector<4x64xf32>
    %c0_5 = arith.constant 0 : index
    %c0_6 = arith.constant 0 : index
    %6 = vector.load %arg4[%c0_5, %c0_6] : memref<4x64xf32, #tpu.memory_space<vmem>>, vector<4x64xf32>
    tpu.vector_store %arg4[%c0_5, %c0_6], %5 {strides = array<i32>} : memref<4x64xf32, #tpu.memory_space<vmem>>, vector<4x64xf32>,
    return
  }
  func.func @transform_0(%arg0: i32) -> (i32, i32) {
    %c0_i32 = arith.constant 0 : i32
    %c0_i32_0 = arith.constant 0 : i32
    return %arg0, %c0_i32 : i32, i32
  }
  func.func @transform_1(%arg0: i32) -> (i32, i32) {
    %c0_i32 = arith.constant 0 : i32
    %c0_i32_0 = arith.constant 0 : i32
    %c0_i32_1 = arith.constant 0 : i32
    return %c0_i32, %c0_i32_0 : i32, i32
  }
  func.func @transform_2(%arg0: i32) -> (i32, i32) {
    %c0_i32 = arith.constant 0 : i32
    %c0_i32_0 = arith.constant 0 : i32
    %c0_i32_1 = arith.constant 0 : i32
    return %c0_i32, %c0_i32_0 : i32, i32
  }
  func.func @transform_3(%arg0: i32) -> (i32, i32) {
    %c0_i32 = arith.constant 0 : i32
    %c0_i32_0 = arith.constant 0 : i32
    return %arg0, %c0_i32 : i32, i32
  }
}

</mosaic_0001>

<llo_original>
// kernel: siamese_forward.3
$region0: #{siamese_forward.3}
  #allocation0 [shape = 'u32[]', space=smem, size = 0x4, offset = 0x4, fixed_abs, tag = 'smem constant byte address 0x4 - core index']
  #allocation1 [shape = 'u32[144,128]{1,0:T(1,128)}', space=vmem, size = 0x12000, scoped, tag = 'internal scratch']
  %s0 = inlined_call_operand.vmem [shape: bf16[4096,32], index: 0, kind: input, shape index: {}]
  %s1 = inlined_call_operand.vmem [shape: bf16[32,16], index: 1, kind: input, shape index: {}]
  %s2 = inlined_call_operand.vmem [shape: f32[1,16], index: 2, kind: input, shape index: {}]
  %s3 = inlined_call_operand.vmem [shape: bf16[4096,16], index: 3, kind: output, shape index: {}]
  %s4 = sld [smem:[#allocation0]]
  $region22: #{siamese_forward.3} parent=0
    _
  %s6 = ssub.s32 1, %s4
  %s7 = scalar_select 0, %s6, %s4
  // Predicated region
  $region2: #{siamese_forward.3} parent=0 // pred_check
    _
  $region3: #{siamese_forward.3} parent=0 // pred_check_branch
    %9 = sbr.rel (0) target = $region5
  $region4: #{siamese_forward.3} parent=0 // pred_region
    _
  $region5: #{siamese_forward.3} parent=0 // pred_fallthru
    _
  // Predicated region
  $region6: #{siamese_forward.3} parent=0 // pred_check
    _
  $region7: #{siamese_forward.3} parent=0 // pred_check_branch
    %11 = sbr.rel (0) target = $region9
  $region8: #{siamese_forward.3} parent=0 // pred_region
    _
  $region9: #{siamese_forward.3} parent=0 // pred_fallthru
    _
  // Predicated region
  $region10: #{siamese_forward.3} parent=0 // pred_check
    _
  $region11: #{siamese_forward.3} parent=0 // pred_check_branch
    %13 = sbr.rel (0) target = $region13
  $region12: #{siamese_forward.3} parent=0 // pred_region
    _
  $region13: #{siamese_forward.3} parent=0 // pred_fallthru
    _
  %v15 = vld [vmem:[%s0] sm:$0xf]
  %v16 = vld [vmem:[%s0 + $0x4] sm:$0xf]
  %v17 = vld [vmem:[%s0 + $0x8] sm:$0xf]
  %v18 = vld [vmem:[%s0 + $0xc] sm:$0xf]
  %v19 = vld [vmem:[%s0 + $0x10] sm:$0xf]
  %v20 = vld [vmem:[%s0 + $0x14] sm:$0xf]
  %v21 = vld [vmem:[%s0 + $0x18] sm:$0xf]
  %v22 = vld [vmem:[%s0 + $0x1c] sm:$0xf]
  %v23 = vld [vmem:[%s0 + $0x20] sm:$0xf]
  %v24 = vld [vmem:[%s0 + $0x24] sm:$0xf]
  %v25 = vld [vmem:[%s0 + $0x28] sm:$0xf]
  %v26 = vld [vmem:[%s0 + $0x2c] sm:$0xf]
  %v27 = vld [vmem:[%s0 + $0x30] sm:$0xf]
  %v28 = vld [vmem:[%s0 + $0x34] sm:$0xf]
  %v29 = vld [vmem:[%s0 + $0x38] sm:$0xf]
  %v30 = vld [vmem:[%s0 + $0x3c] sm:$0xf]
  %v31 = vld [vmem:[%s0 + $0x40] sm:$0xf]
  %v32 = vld [vmem:[%s0 + $0x44] sm:$0xf]
  %v33 = vld [vmem:[%s0 + $0x48] sm:$0xf]
  %v34 = vld [vmem:[%s0 + $0x4c] sm:$0xf]
  %v35 = vld [vmem:[%s0 + $0x50] sm:$0xf]
  %v36 = vld [vmem:[%s0 + $0x54] sm:$0xf]
  %v37 = vld [vmem:[%s0 + $0x58] sm:$0xf]
  %v38 = vld [vmem:[%s0 + $0x5c] sm:$0xf]
  %v39 = vld [vmem:[%s0 + $0x60] sm:$0xf]
  %v40 = vld [vmem:[%s0 + $0x64] sm:$0xf]
  %v41 = vld [vmem:[%s0 + $0x68] sm:$0xf]
  %v42 = vld [vmem:[%s0 + $0x6c] sm:$0xf]
  %v43 = vld [vmem:[%s0 + $0x70] sm:$0xf]
  %v44 = vld [vmem:[%s0 + $0x74] sm:$0xf]
  %v45 = vld [vmem:[%s0 + $0x78] sm:$0xf]
  %v46 = vld [vmem:[%s0 + $0x7c] sm:$0xf]
  %v47 = vld [vmem:[%s0 + $0x80] sm:$0xf]
  %v48 = vld [vmem:[%s0 + $0x84] sm:$0xf]
  %v49 = vld [vmem:[%s0 + $0x88] sm:$0xf]
  %v50 = vld [vmem:[%s0 + $0x8c] sm:$0xf]
  %v51 = vld [vmem:[%s0 + $0x90] sm:$0xf]
  %v52 = vld [vmem:[%s0 + $0x94] sm:$0xf]
  %v53 = vld [vmem:[%s0 + $0x98] sm:$0xf]
  %v54 = vld [vmem:[%s0 + $0x9c] sm:$0xf]
  %v55 = vld [vmem:[%s0 + $0xa0] sm:$0xf]
  %v56 = vld [vmem:[%s0 + $0xa4] sm:$0xf]
  %v57 = vld [vmem:[%s0 + $0xa8] sm:$0xf]
  %v58 = vld [vmem:[%s0 + $0xac] sm:$0xf]
  %v59 = vld [vmem:[%s0 + $0xb0] sm:$0xf]
  %v60 = vld [vmem:[%s0 + $0xb4] sm:$0xf]
  %v61 = vld [vmem:[%s0 + $0xb8] sm:$0xf]
  %v62 = vld [vmem:[%s0 + $0xbc] sm:$0xf]
  %v63 = vld [vmem:[%s0 + $0xc0] sm:$0xf]
  %v64 = vld [vmem:[%s0 + $0xc4] sm:$0xf]
  %v65 = vld [vmem:[%s0 + $0xc8] sm:$0xf]
  %v66 = vld [vmem:[%s0 + $0xcc] sm:$0xf]
  %v67 = vld [vmem:[%s0 + $0xd0] sm:$0xf]
  %v68 = vld [vmem:[%s0 + $0xd4] sm:$0xf]
  %v69 = vld [vmem:[%s0 + $0xd8] sm:$0xf]
  %v70 = vld [vmem:[%s0 + $0xdc] sm:$0xf]
  %v71 = vld [vmem:[%s0 + $0xe0] sm:$0xf]
  %v72 = vld [vmem:[%s0 + $0xe4] sm:$0xf]
  %v73 = vld [vmem:[%s0 + $0xe8] sm:$0xf]
  %v74 = vld [vmem:[%s0 + $0xec] sm:$0xf]
  %v75 = vld [vmem:[%s0 + $0xf0] sm:$0xf]
  %v76 = vld [vmem:[%s0 + $0xf4] sm:$0xf]
  %v77 = vld [vmem:[%s0 + $0xf8] sm:$0xf]
  %v78 = vld [vmem:[%s0 + $0xfc] sm:$0xf]
  %v79 = vld [vmem:[%s0 + $0x100] sm:$0xf]
  %v80 = vld [vmem:[%s0 + $0x104] sm:$0xf]
  %v81 = vld [vmem:[%s0 + $0x108] sm:$0xf]
  %v82 = vld [vmem:[%s0 + $0x10c] sm:$0xf]
  %v83 = vld [vmem:[%s0 + $0x110] sm:$0xf]
  %v84 = vld [vmem:[%s0 + $0x114] sm:$0xf]
  %v85 = vld [vmem:[%s0 + $0x118] sm:$0xf]
  %v86 = vld [vmem:[%s0 + $0x11c] sm:$0xf]
  %v87 = vld [vmem:[%s0 + $0x120] sm:$0xf]
  %v88 = vld [vmem:[%s0 + $0x124] sm:$0xf]
  %v89 = vld [vmem:[%s0 + $0x128] sm:$0xf]
  %v90 = vld [vmem:[%s0 + $0x12c] sm:$0xf]
  %v91 = vld [vmem:[%s0 + $0x130] sm:$0xf]
  %v92 = vld [vmem:[%s0 + $0x134] sm:$0xf]
  %v93 = vld [vmem:[%s0 + $0x138] sm:$0xf]
  %v94 = vld [vmem:[%s0 + $0x13c] sm:$0xf]
  %v95 = vld [vmem:[%s0 + $0x140] sm:$0xf]
  %v96 = vld [vmem:[%s0 + $0x144] sm:$0xf]
  %v97 = vld [vmem:[%s0 + $0x148] sm:$0xf]
  %v98 = vld [vmem:[%s0 + $0x14c] sm:$0xf]
  %v99 = vld [vmem:[%s0 + $0x150] sm:$0xf]
  %v100 = vld [vmem:[%s0 + $0x154] sm:$0xf]
  %v101 = vld [vmem:[%s0 + $0x158] sm:$0xf]
  %v102 = vld [vmem:[%s0 + $0x15c] sm:$0xf]
  %v103 = vld [vmem:[%s0 + $0x160] sm:$0xf]
  %v104 = vld [vmem:[%s0 + $0x164] sm:$0xf]
  %v105 = vld [vmem:[%s0 + $0x168] sm:$0xf]
  %v106 = vld [vmem:[%s0 + $0x16c] sm:$0xf]
  %v107 = vld [vmem:[%s0 + $0x170] sm:$0xf]
  %v108 = vld [vmem:[%s0 + $0x174] sm:$0xf]
  %v109 = vld [vmem:[%s0 + $0x178] sm:$0xf]
  %v110 = vld [vmem:[%s0 + $0x17c] sm:$0xf]
  %v111 = vld [vmem:[%s0 + $0x180] sm:$0xf]
  %v112 = vld [vmem:[%s0 + $0x184] sm:$0xf]
  %v113 = vld [vmem:[%s0 + $0x188] sm:$0xf]
  %v114 = vld [vmem:[%s0 + $0x18c] sm:$0xf]
  %v115 = vld [vmem:[%s0 + $0x190] sm:$0xf]
  %v116 = vld [vmem:[%s0 + $0x194] sm:$0xf]
  %v117 = vld [vmem:[%s0 + $0x198] sm:$0xf]
  %v118 = vld [vmem:[%s0 + $0x19c] sm:$0xf]
  %v119 = vld [vmem:[%s0 + $0x1a0] sm:$0xf]
  %v120 = vld [vmem:[%s0 + $0x1a4] sm:$0xf]
  %v121 = vld [vmem:[%s0 + $0x1a8] sm:$0xf]
  %v122 = vld [vmem:[%s0 + $0x1ac] sm:$0xf]
  %v123 = vld [vmem:[%s0 + $0x1b0] sm:$0xf]
  %v124 = vld [vmem:[%s0 + $0x1b4] sm:$0xf]
  %v125 = vld [vmem:[%s0 + $0x1b8] sm:$0xf]
  %v126 = vld [vmem:[%s0 + $0x1bc] sm:$0xf]
  %v127 = vld [vmem:[%s0 + $0x1c0] sm:$0xf]
  %v128 = vld [vmem:[%s0 + $0x1c4] sm:$0xf]
  %v129 = vld [vmem:[%s0 + $0x1c8] sm:$0xf]
  %v130 = vld [vmem:[%s0 + $0x1cc] sm:$0xf]
  %v131 = vld [vmem:[%s0 + $0x1d0] sm:$0xf]
  %v132 = vld [vmem:[%s0 + $0x1d4] sm:$0xf]
  %v133 = vld [vmem:[%s0 + $0x1d8] sm:$0xf]
  %v134 = vld [vmem:[%s0 + $0x1dc] sm:$0xf]
  %v135 = vld [vmem:[%s0 + $0x1e0] sm:$0xf]
  %v136 = vld [vmem:[%s0 + $0x1e4] sm:$0xf]
  %v137 = vld [vmem:[%s0 + $0x1e8] sm:$0xf]
  %v138 = vld [vmem:[%s0 + $0x1ec] sm:$0xf]
  %v139 = vld [vmem:[%s0 + $0x1f0] sm:$0xf]
  %v140 = vld [vmem:[%s0 + $0x1f4] sm:$0xf]
  %v141 = vld [vmem:[%s0 + $0x1f8] sm:$0xf]
  %v142 = vld [vmem:[%s0 + $0x1fc] sm:$0xf]
  %v143 = vld [vmem:[%s0 + $0x200] sm:$0xf]
  %v144 = vld [vmem:[%s0 + $0x204] sm:$0xf]
  %v145 = vld [vmem:[%s0 + $0x208] sm:$0xf]
  %v146 = vld [vmem:[%s0 + $0x20c] sm:$0xf]
  %v147 = vld [vmem:[%s0 + $0x210] sm:$0xf]
  %v148 = vld [vmem:[%s0 + $0x214] sm:$0xf]
  %v149 = vld [vmem:[%s0 + $0x218] sm:$0xf]
  %v150 = vld [vmem:[%s0 + $0x21c] sm:$0xf]
  %v151 = vld [vmem:[%s0 + $0x220] sm:$0xf]
  %v152 = vld [vmem:[%s0 + $0x224] sm:$0xf]
  %v153 = vld [vmem:[%s0 + $0x228] sm:$0xf]
  %v154 = vld [vmem:[%s0 + $0x22c] sm:$0xf]
  %v155 = vld [vmem:[%s0 + $0x230] sm:$0xf]
  %v156 = vld [vmem:[%s0 + $0x234] sm:$0xf]
  %v157 = vld [vmem:[%s0 + $0x238] sm:$0xf]
  %v158 = vld [vmem:[%s0 + $0x23c] sm:$0xf]
  %v159 = vld [vmem:[%s0 + $0x240] sm:$0xf]
  %v160 = vld [vmem:[%s0 + $0x244] sm:$0xf]
  %v161 = vld [vmem:[%s0 + $0x248] sm:$0xf]
  %v162 = vld [vmem:[%s0 + $0x24c] sm:$0xf]
  %v163 = vld [vmem:[%s0 + $0x250] sm:$0xf]
  %v164 = vld [vmem:[%s0 + $0x254] sm:$0xf]
  %v165 = vld [vmem:[%s0 + $0x258] sm:$0xf]
  %v166 = vld [vmem:[%s0 + $0x25c] sm:$0xf]
  %v167 = vld [vmem:[%s0 + $0x260] sm:$0xf]
  %v168 = vld [vmem:[%s0 + $0x264] sm:$0xf]
  %v169 = vld [vmem:[%s0 + $0x268] sm:$0xf]
  %v170 = vld [vmem:[%s0 + $0x26c] sm:$0xf]
  %v171 = vld [vmem:[%s0 + $0x270] sm:$0xf]
  %v172 = vld [vmem:[%s0 + $0x274] sm:$0xf]
  %v173 = vld [vmem:[%s0 + $0x278] sm:$0xf]
  %v174 = vld [vmem:[%s0 + $0x27c] sm:$0xf]
  %v175 = vld [vmem:[%s0 + $0x280] sm:$0xf]
  %v176 = vld [vmem:[%s0 + $0x284] sm:$0xf]
  %v177 = vld [vmem:[%s0 + $0x288] sm:$0xf]
  %v178 = vld [vmem:[%s0 + $0x28c] sm:$0xf]
  %v179 = vld [vmem:[%s0 + $0x290] sm:$0xf]
  %v180 = vld [vmem:[%s0 + $0x294] sm:$0xf]
  %v181 = vld [vmem:[%s0 + $0x298] sm:$0xf]
  %v182 = vld [vmem:[%s0 + $0x29c] sm:$0xf]
  %v183 = vld [vmem:[%s0 + $0x2a0] sm:$0xf]
  %v184 = vld [vmem:[%s0 + $0x2a4] sm:$0xf]
  %v185 = vld [vmem:[%s0 + $0x2a8] sm:$0xf]
  %v186 = vld [vmem:[%s0 + $0x2ac] sm:$0xf]
  %v187 = vld [vmem:[%s0 + $0x2b0] sm:$0xf]
  %v188 = vld [vmem:[%s0 + $0x2b4] sm:$0xf]
  %v189 = vld [vmem:[%s0 + $0x2b8] sm:$0xf]
  %v190 = vld [vmem:[%s0 + $0x2bc] sm:$0xf]
  %v191 = vld [vmem:[%s0 + $0x2c0] sm:$0xf]
  %v192 = vld [vmem:[%s0 + $0x2c4] sm:$0xf]
  %v193 = vld [vmem:[%s0 + $0x2c8] sm:$0xf]
  %v194 = vld [vmem:[%s0 + $0x2cc] sm:$0xf]
  %v195 = vld [vmem:[%s0 + $0x2d0] sm:$0xf]
  %v196 = vld [vmem:[%s0 + $0x2d4] sm:$0xf]
  %v197 = vld [vmem:[%s0 + $0x2d8] sm:$0xf]
  %v198 = vld [vmem:[%s0 + $0x2dc] sm:$0xf]
  %v199 = vld [vmem:[%s0 + $0x2e0] sm:$0xf]
  %v200 = vld [vmem:[%s0 + $0x2e4] sm:$0xf]
  %v201 = vld [vmem:[%s0 + $0x2e8] sm:$0xf]
  %v202 = vld [vmem:[%s0 + $0x2ec] sm:$0xf]
  %v203 = vld [vmem:[%s0 + $0x2f0] sm:$0xf]
  %v204 = vld [vmem:[%s0 + $0x2f4] sm:$0xf]
  %v205 = vld [vmem:[%s0 + $0x2f8] sm:$0xf]
  %v206 = vld [vmem:[%s0 + $0x2fc] sm:$0xf]
  %v207 = vld [vmem:[%s0 + $0x300] sm:$0xf]
  %v208 = vld [vmem:[%s0 + $0x304] sm:$0xf]
  %v209 = vld [vmem:[%s0 + $0x308] sm:$0xf]
  %v210 = vld [vmem:[%s0 + $0x30c] sm:$0xf]
  %v211 = vld [vmem:[%s0 + $0x310] sm:$0xf]
  %v212 = vld [vmem:[%s0 + $0x314] sm:$0xf]
  %v213 = vld [vmem:[%s0 + $0x318] sm:$0xf]
  %v214 = vld [vmem:[%s0 + $0x31c] sm:$0xf]
  %v215 = vld [vmem:[%s0 + $0x320] sm:$0xf]
  %v216 = vld [vmem:[%s0 + $0x324] sm:$0xf]
  %v217 = vld [vmem:[%s0 + $0x328] sm:$0xf]
  %v218 = vld [vmem:[%s0 + $0x32c] sm:$0xf]
  %v219 = vld [vmem:[%s0 + $0x330] sm:$0xf]
  %v220 = vld [vmem:[%s0 + $0x334] sm:$0xf]
  %v221 = vld [vmem:[%s0 + $0x338] sm:$0xf]
  %v222 = vld [vmem:[%s0 + $0x33c] sm:$0xf]
  %v223 = vld [vmem:[%s0 + $0x340] sm:$0xf]
  %v224 = vld [vmem:[%s0 + $0x344] sm:$0xf]
  %v225 = vld [vmem:[%s0 + $0x348] sm:$0xf]
  %v226 = vld [vmem:[%s0 + $0x34c] sm:$0xf]
  %v227 = vld [vmem:[%s0 + $0x350] sm:$0xf]
  %v228 = vld [vmem:[%s0 + $0x354] sm:$0xf]
  %v229 = vld [vmem:[%s0 + $0x358] sm:$0xf]
  %v230 = vld [vmem:[%s0 + $0x35c] sm:$0xf]
  %v231 = vld [vmem:[%s0 + $0x360] sm:$0xf]
  %v232 = vld [vmem:[%s0 + $0x364] sm:$0xf]
  %v233 = vld [vmem:[%s0 + $0x368] sm:$0xf]
  %v234 = vld [vmem:[%s0 + $0x36c] sm:$0xf]
  %v235 = vld [vmem:[%s0 + $0x370] sm:$0xf]
  %v236 = vld [vmem:[%s0 + $0x374] sm:$0xf]
  %v237 = vld [vmem:[%s0 + $0x378] sm:$0xf]
  %v238 = vld [vmem:[%s0 + $0x37c] sm:$0xf]
  %v239 = vld [vmem:[%s0 + $0x380] sm:$0xf]
  %v240 = vld [vmem:[%s0 + $0x384] sm:$0xf]
  %v241 = vld [vmem:[%s0 + $0x388] sm:$0xf]
  %v242 = vld [vmem:[%s0 + $0x38c] sm:$0xf]
  %v243 = vld [vmem:[%s0 + $0x390] sm:$0xf]
  %v244 = vld [vmem:[%s0 + $0x394] sm:$0xf]
  %v245 = vld [vmem:[%s0 + $0x398] sm:$0xf]
  %v246 = vld [vmem:[%s0 + $0x39c] sm:$0xf]
  %v247 = vld [vmem:[%s0 + $0x3a0] sm:$0xf]
  %v248 = vld [vmem:[%s0 + $0x3a4] sm:$0xf]
  %v249 = vld [vmem:[%s0 + $0x3a8] sm:$0xf]
  %v250 = vld [vmem:[%s0 + $0x3ac] sm:$0xf]
  %v251 = vld [vmem:[%s0 + $0x3b0] sm:$0xf]
  %v252 = vld [vmem:[%s0 + $0x3b4] sm:$0xf]
  %v253 = vld [vmem:[%s0 + $0x3b8] sm:$0xf]
  %v254 = vld [vmem:[%s0 + $0x3bc] sm:$0xf]
  %v255 = vld [vmem:[%s0 + $0x3c0] sm:$0xf]
  %v256 = vld [vmem:[%s0 + $0x3c4] sm:$0xf]
  %v257 = vld [vmem:[%s0 + $0x3c8] sm:$0xf]
  %v258 = vld [vmem:[%s0 + $0x3cc] sm:$0xf]
  %v259 = vld [vmem:[%s0 + $0x3d0] sm:$0xf]
  %v260 = vld [vmem:[%s0 + $0x3d4] sm:$0xf]
  %v261 = vld [vmem:[%s0 + $0x3d8] sm:$0xf]
  %v262 = vld [vmem:[%s0 + $0x3dc] sm:$0xf]
  %v263 = vld [vmem:[%s0 + $0x3e0] sm:$0xf]
  %v264 = vld [vmem:[%s0 + $0x3e4] sm:$0xf]
  %v265 = vld [vmem:[%s0 + $0x3e8] sm:$0xf]
  %v266 = vld [vmem:[%s0 + $0x3ec] sm:$0xf]
  %v267 = vld [vmem:[%s0 + $0x3f0] sm:$0xf]
  %v268 = vld [vmem:[%s0 + $0x3f4] sm:$0xf]
  %v269 = vld [vmem:[%s0 + $0x3f8] sm:$0xf]
  %v270 = vld [vmem:[%s0 + $0x3fc] sm:$0xf]
  %v271 = vld [vmem:[%s0 + $0x400] sm:$0xf]
  %v272 = vld [vmem:[%s0 + $0x404] sm:$0xf]
  %v273 = vld [vmem:[%s0 + $0x408] sm:$0xf]
  %v274 = vld [vmem:[%s0 + $0x40c] sm:$0xf]
  %v275 = vld [vmem:[%s0 + $0x410] sm:$0xf]
  %v276 = vld [vmem:[%s0 + $0x414] sm:$0xf]
  %v277 = vld [vmem:[%s0 + $0x418] sm:$0xf]
  %v278 = vld [vmem:[%s0 + $0x41c] sm:$0xf]
  %v279 = vld [vmem:[%s0 + $0x420] sm:$0xf]
  %v280 = vld [vmem:[%s0 + $0x424] sm:$0xf]
  %v281 = vld [vmem:[%s0 + $0x428] sm:$0xf]
  %v282 = vld [vmem:[%s0 + $0x42c] sm:$0xf]
  %v283 = vld [vmem:[%s0 + $0x430] sm:$0xf]
  %v284 = vld [vmem:[%s0 + $0x434] sm:$0xf]
  %v285 = vld [vmem:[%s0 + $0x438] sm:$0xf]
  %v286 = vld [vmem:[%s0 + $0x43c] sm:$0xf]
  %v287 = vld [vmem:[%s0 + $0x440] sm:$0xf]
  %v288 = vld [vmem:[%s0 + $0x444] sm:$0xf]
  %v289 = vld [vmem:[%s0 + $0x448] sm:$0xf]
  %v290 = vld [vmem:[%s0 + $0x44c] sm:$0xf]
  %v291 = vld [vmem:[%s0 + $0x450] sm:$0xf]
  %v292 = vld [vmem:[%s0 + $0x454] sm:$0xf]
  %v293 = vld [vmem:[%s0 + $0x458] sm:$0xf]
  %v294 = vld [vmem:[%s0 + $0x45c] sm:$0xf]
  %v295 = vld [vmem:[%s0 + $0x460] sm:$0xf]
  %v296 = vld [vmem:[%s0 + $0x464] sm:$0xf]
  %v297 = vld [vmem:[%s0 + $0x468] sm:$0xf]
  %v298 = vld [vmem:[%s0 + $0x46c] sm:$0xf]
  %v299 = vld [vmem:[%s0 + $0x470] sm:$0xf]
  %v300 = vld [vmem:[%s0 + $0x474] sm:$0xf]
  %v301 = vld [vmem:[%s0 + $0x478] sm:$0xf]
  %v302 = vld [vmem:[%s0 + $0x47c] sm:$0xf]
  %v303 = vld [vmem:[%s0 + $0x480] sm:$0xf]
  %v304 = vld [vmem:[%s0 + $0x484] sm:$0xf]
  %v305 = vld [vmem:[%s0 + $0x488] sm:$0xf]
  %v306 = vld [vmem:[%s0 + $0x48c] sm:$0xf]
  %v307 = vld [vmem:[%s0 + $0x490] sm:$0xf]
  %v308 = vld [vmem:[%s0 + $0x494] sm:$0xf]
  %v309 = vld [vmem:[%s0 + $0x498] sm:$0xf]
  %v310 = vld [vmem:[%s0 + $0x49c] sm:$0xf]
  %v311 = vld [vmem:[%s0 + $0x4a0] sm:$0xf]
  %v312 = vld [vmem:[%s0 + $0x4a4] sm:$0xf]
  %v313 = vld [vmem:[%s0 + $0x4a8] sm:$0xf]
  %v314 = vld [vmem:[%s0 + $0x4ac] sm:$0xf]
  %v315 = vld [vmem:[%s0 + $0x4b0] sm:$0xf]
  %v316 = vld [vmem:[%s0 + $0x4b4] sm:$0xf]
  %v317 = vld [vmem:[%s0 + $0x4b8] sm:$0xf]
  %v318 = vld [vmem:[%s0 + $0x4bc] sm:$0xf]
  %v319 = vld [vmem:[%s0 + $0x4c0] sm:$0xf]
  %v320 = vld [vmem:[%s0 + $0x4c4] sm:$0xf]
  %v321 = vld [vmem:[%s0 + $0x4c8] sm:$0xf]
  %v322 = vld [vmem:[%s0 + $0x4cc] sm:$0xf]
  %v323 = vld [vmem:[%s0 + $0x4d0] sm:$0xf]
  %v324 = vld [vmem:[%s0 + $0x4d4] sm:$0xf]
  %v325 = vld [vmem:[%s0 + $0x4d8] sm:$0xf]
  %v326 = vld [vmem:[%s0 + $0x4dc] sm:$0xf]
  %v327 = vld [vmem:[%s0 + $0x4e0] sm:$0xf]
  %v328 = vld [vmem:[%s0 + $0x4e4] sm:$0xf]
  %v329 = vld [vmem:[%s0 + $0x4e8] sm:$0xf]
  %v330 = vld [vmem:[%s0 + $0x4ec] sm:$0xf]
  %v331 = vld [vmem:[%s0 + $0x4f0] sm:$0xf]
  %v332 = vld [vmem:[%s0 + $0x4f4] sm:$0xf]
  %v333 = vld [vmem:[%s0 + $0x4f8] sm:$0xf]
  %v334 = vld [vmem:[%s0 + $0x4fc] sm:$0xf]
  %v335 = vld [vmem:[%s0 + $0x500] sm:$0xf]
  %v336 = vld [vmem:[%s0 + $0x504] sm:$0xf]
  %v337 = vld [vmem:[%s0 + $0x508] sm:$0xf]
  %v338 = vld [vmem:[%s0 + $0x50c] sm:$0xf]
  %v339 = vld [vmem:[%s0 + $0x510] sm:$0xf]
  %v340 = vld [vmem:[%s0 + $0x514] sm:$0xf]
  %v341 = vld [vmem:[%s0 + $0x518] sm:$0xf]
  %v342 = vld [vmem:[%s0 + $0x51c] sm:$0xf]
  %v343 = vld [vmem:[%s0 + $0x520] sm:$0xf]
  %v344 = vld [vmem:[%s0 + $0x524] sm:$0xf]
  %v345 = vld [vmem:[%s0 + $0x528] sm:$0xf]
  %v346 = vld [vmem:[%s0 + $0x52c] sm:$0xf]
  %v347 = vld [vmem:[%s0 + $0x530] sm:$0xf]
  %v348 = vld [vmem:[%s0 + $0x534] sm:$0xf]
  %v349 = vld [vmem:[%s0 + $0x538] sm:$0xf]
  %v350 = vld [vmem:[%s0 + $0x53c] sm:$0xf]
  %v351 = vld [vmem:[%s0 + $0x540] sm:$0xf]
  %v352 = vld [vmem:[%s0 + $0x544] sm:$0xf]
  %v353 = vld [vmem:[%s0 + $0x548] sm:$0xf]
  %v354 = vld [vmem:[%s0 + $0x54c] sm:$0xf]
  %v355 = vld [vmem:[%s0 + $0x550] sm:$0xf]
  %v356 = vld [vmem:[%s0 + $0x554] sm:$0xf]
  %v357 = vld [vmem:[%s0 + $0x558] sm:$0xf]
  %v358 = vld [vmem:[%s0 + $0x55c] sm:$0xf]
  %v359 = vld [vmem:[%s0 + $0x560] sm:$0xf]
  %v360 = vld [vmem:[%s0 + $0x564] sm:$0xf]
  %v361 = vld [vmem:[%s0 + $0x568] sm:$0xf]
  %v362 = vld [vmem:[%s0 + $0x56c] sm:$0xf]
  %v363 = vld [vmem:[%s0 + $0x570] sm:$0xf]
  %v364 = vld [vmem:[%s0 + $0x574] sm:$0xf]
  %v365 = vld [vmem:[%s0 + $0x578] sm:$0xf]
  %v366 = vld [vmem:[%s0 + $0x57c] sm:$0xf]
  %v367 = vld [vmem:[%s0 + $0x580] sm:$0xf]
  %v368 = vld [vmem:[%s0 + $0x584] sm:$0xf]
  %v369 = vld [vmem:[%s0 + $0x588] sm:$0xf]
  %v370 = vld [vmem:[%s0 + $0x58c] sm:$0xf]
  %v371 = vld [vmem:[%s0 + $0x590] sm:$0xf]
  %v372 = vld [vmem:[%s0 + $0x594] sm:$0xf]
  %v373 = vld [vmem:[%s0 + $0x598] sm:$0xf]
  %v374 = vld [vmem:[%s0 + $0x59c] sm:$0xf]
  %v375 = vld [vmem:[%s0 + $0x5a0] sm:$0xf]
  %v376 = vld [vmem:[%s0 + $0x5a4] sm:$0xf]
  %v377 = vld [vmem:[%s0 + $0x5a8] sm:$0xf]
  %v378 = vld [vmem:[%s0 + $0x5ac] sm:$0xf]
  %v379 = vld [vmem:[%s0 + $0x5b0] sm:$0xf]
  %v380 = vld [vmem:[%s0 + $0x5b4] sm:$0xf]
  %v381 = vld [vmem:[%s0 + $0x5b8] sm:$0xf]
  %v382 = vld [vmem:[%s0 + $0x5bc] sm:$0xf]
  %v383 = vld [vmem:[%s0 + $0x5c0] sm:$0xf]
  %v384 = vld [vmem:[%s0 + $0x5c4] sm:$0xf]
  %v385 = vld [vmem:[%s0 + $0x5c8] sm:$0xf]
  %v386 = vld [vmem:[%s0 + $0x5cc] sm:$0xf]
  %v387 = vld [vmem:[%s0 + $0x5d0] sm:$0xf]
  %v388 = vld [vmem:[%s0 + $0x5d4] sm:$0xf]
  %v389 = vld [vmem:[%s0 + $0x5d8] sm:$0xf]
  %v390 = vld [vmem:[%s0 + $0x5dc] sm:$0xf]
  %v391 = vld [vmem:[%s0 + $0x5e0] sm:$0xf]
  %v392 = vld [vmem:[%s0 + $0x5e4] sm:$0xf]
  %v393 = vld [vmem:[%s0 + $0x5e8] sm:$0xf]
  %v394 = vld [vmem:[%s0 + $0x5ec] sm:$0xf]
  %v395 = vld [vmem:[%s0 + $0x5f0] sm:$0xf]
  %v396 = vld [vmem:[%s0 + $0x5f4] sm:$0xf]
  %v397 = vld [vmem:[%s0 + $0x5f8] sm:$0xf]
  %v398 = vld [vmem:[%s0 + $0x5fc] sm:$0xf]
  %v399 = vld [vmem:[%s0 + $0x600] sm:$0xf]
  %v400 = vld [vmem:[%s0 + $0x604] sm:$0xf]
  %v401 = vld [vmem:[%s0 + $0x608] sm:$0xf]
  %v402 = vld [vmem:[%s0 + $0x60c] sm:$0xf]
  %v403 = vld [vmem:[%s0 + $0x610] sm:$0xf]
  %v404 = vld [vmem:[%s0 + $0x614] sm:$0xf]
  %v405 = vld [vmem:[%s0 + $0x618] sm:$0xf]
  %v406 = vld [vmem:[%s0 + $0x61c] sm:$0xf]
  %v407 = vld [vmem:[%s0 + $0x620] sm:$0xf]
  %v408 = vld [vmem:[%s0 + $0x624] sm:$0xf]
  %v409 = vld [vmem:[%s0 + $0x628] sm:$0xf]
  %v410 = vld [vmem:[%s0 + $0x62c] sm:$0xf]
  %v411 = vld [vmem:[%s0 + $0x630] sm:$0xf]
  %v412 = vld [vmem:[%s0 + $0x634] sm:$0xf]
  %v413 = vld [vmem:[%s0 + $0x638] sm:$0xf]
  %v414 = vld [vmem:[%s0 + $0x63c] sm:$0xf]
  %v415 = vld [vmem:[%s0 + $0x640] sm:$0xf]
  %v416 = vld [vmem:[%s0 + $0x644] sm:$0xf]
  %v417 = vld [vmem:[%s0 + $0x648] sm:$0xf]
  %v418 = vld [vmem:[%s0 + $0x64c] sm:$0xf]
  %v419 = vld [vmem:[%s0 + $0x650] sm:$0xf]
  %v420 = vld [vmem:[%s0 + $0x654] sm:$0xf]
  %v421 = vld [vmem:[%s0 + $0x658] sm:$0xf]
  %v422 = vld [vmem:[%s0 + $0x65c] sm:$0xf]
  %v423 = vld [vmem:[%s0 + $0x660] sm:$0xf]
  %v424 = vld [vmem:[%s0 + $0x664] sm:$0xf]
  %v425 = vld [vmem:[%s0 + $0x668] sm:$0xf]
  %v426 = vld [vmem:[%s0 + $0x66c] sm:$0xf]
  %v427 = vld [vmem:[%s0 + $0x670] sm:$0xf]
  %v428 = vld [vmem:[%s0 + $0x674] sm:$0xf]
  %v429 = vld [vmem:[%s0 + $0x678] sm:$0xf]
  %v430 = vld [vmem:[%s0 + $0x67c] sm:$0xf]
  %v431 = vld [vmem:[%s0 + $0x680] sm:$0xf]
  %v432 = vld [vmem:[%s0 + $0x684] sm:$0xf]
  %v433 = vld [vmem:[%s0 + $0x688] sm:$0xf]
  %v434 = vld [vmem:[%s0 + $0x68c] sm:$0xf]
  %v435 = vld [vmem:[%s0 + $0x690] sm:$0xf]
  %v436 = vld [vmem:[%s0 + $0x694] sm:$0xf]
  %v437 = vld [vmem:[%s0 + $0x698] sm:$0xf]
  %v438 = vld [vmem:[%s0 + $0x69c] sm:$0xf]
  %v439 = vld [vmem:[%s0 + $0x6a0] sm:$0xf]
  %v440 = vld [vmem:[%s0 + $0x6a4] sm:$0xf]
  %v441 = vld [vmem:[%s0 + $0x6a8] sm:$0xf]
  %v442 = vld [vmem:[%s0 + $0x6ac] sm:$0xf]
  %v443 = vld [vmem:[%s0 + $0x6b0] sm:$0xf]
  %v444 = vld [vmem:[%s0 + $0x6b4] sm:$0xf]
  %v445 = vld [vmem:[%s0 + $0x6b8] sm:$0xf]
  %v446 = vld [vmem:[%s0 + $0x6bc] sm:$0xf]
  %v447 = vld [vmem:[%s0 + $0x6c0] sm:$0xf]
  %v448 = vld [vmem:[%s0 + $0x6c4] sm:$0xf]
  %v449 = vld [vmem:[%s0 + $0x6c8] sm:$0xf]
  %v450 = vld [vmem:[%s0 + $0x6cc] sm:$0xf]
  %v451 = vld [vmem:[%s0 + $0x6d0] sm:$0xf]
  %v452 = vld [vmem:[%s0 + $0x6d4] sm:$0xf]
  %v453 = vld [vmem:[%s0 + $0x6d8] sm:$0xf]
  %v454 = vld [vmem:[%s0 + $0x6dc] sm:$0xf]
  %v455 = vld [vmem:[%s0 + $0x6e0] sm:$0xf]
  %v456 = vld [vmem:[%s0 + $0x6e4] sm:$0xf]
  %v457 = vld [vmem:[%s0 + $0x6e8] sm:$0xf]
  %v458 = vld [vmem:[%s0 + $0x6ec] sm:$0xf]
  %v459 = vld [vmem:[%s0 + $0x6f0] sm:$0xf]
  %v460 = vld [vmem:[%s0 + $0x6f4] sm:$0xf]
  %v461 = vld [vmem:[%s0 + $0x6f8] sm:$0xf]
  %v462 = vld [vmem:[%s0 + $0x6fc] sm:$0xf]
  %v463 = vld [vmem:[%s0 + $0x700] sm:$0xf]
  %v464 = vld [vmem:[%s0 + $0x704] sm:$0xf]
  %v465 = vld [vmem:[%s0 + $0x708] sm:$0xf]
  %v466 = vld [vmem:[%s0 + $0x70c] sm:$0xf]
  %v467 = vld [vmem:[%s0 + $0x710] sm:$0xf]
  %v468 = vld [vmem:[%s0 + $0x714] sm:$0xf]
  %v469 = vld [vmem:[%s0 + $0x718] sm:$0xf]
  %v470 = vld [vmem:[%s0 + $0x71c] sm:$0xf]
  %v471 = vld [vmem:[%s0 + $0x720] sm:$0xf]
  %v472 = vld [vmem:[%s0 + $0x724] sm:$0xf]
  %v473 = vld [vmem:[%s0 + $0x728] sm:$0xf]
  %v474 = vld [vmem:[%s0 + $0x72c] sm:$0xf]
  %v475 = vld [vmem:[%s0 + $0x730] sm:$0xf]
  %v476 = vld [vmem:[%s0 + $0x734] sm:$0xf]
  %v477 = vld [vmem:[%s0 + $0x738] sm:$0xf]
  %v478 = vld [vmem:[%s0 + $0x73c] sm:$0xf]
  %v479 = vld [vmem:[%s0 + $0x740] sm:$0xf]
  %v480 = vld [vmem:[%s0 + $0x744] sm:$0xf]
  %v481 = vld [vmem:[%s0 + $0x748] sm:$0xf]
  %v482 = vld [vmem:[%s0 + $0x74c] sm:$0xf]
  %v483 = vld [vmem:[%s0 + $0x750] sm:$0xf]
  %v484 = vld [vmem:[%s0 + $0x754] sm:$0xf]
  %v485 = vld [vmem:[%s0 + $0x758] sm:$0xf]
  %v486 = vld [vmem:[%s0 + $0x75c] sm:$0xf]
  %v487 = vld [vmem:[%s0 + $0x760] sm:$0xf]
  %v488 = vld [vmem:[%s0 + $0x764] sm:$0xf]
  %v489 = vld [vmem:[%s0 + $0x768] sm:$0xf]
  %v490 = vld [vmem:[%s0 + $0x76c] sm:$0xf]
  %v491 = vld [vmem:[%s0 + $0x770] sm:$0xf]
  %v492 = vld [vmem:[%s0 + $0x774] sm:$0xf]
  %v493 = vld [vmem:[%s0 + $0x778] sm:$0xf]
  %v494 = vld [vmem:[%s0 + $0x77c] sm:$0xf]
  %v495 = vld [vmem:[%s0 + $0x780] sm:$0xf]
  %v496 = vld [vmem:[%s0 + $0x784] sm:$0xf]
  %v497 = vld [vmem:[%s0 + $0x788] sm:$0xf]
  %v498 = vld [vmem:[%s0 + $0x78c] sm:$0xf]
  %v499 = vld [vmem:[%s0 + $0x790] sm:$0xf]
  %v500 = vld [vmem:[%s0 + $0x794] sm:$0xf]
  %v501 = vld [vmem:[%s0 + $0x798] sm:$0xf]
  %v502 = vld [vmem:[%s0 + $0x79c] sm:$0xf]
  %v503 = vld [vmem:[%s0 + $0x7a0] sm:$0xf]
  %v504 = vld [vmem:[%s0 + $0x7a4] sm:$0xf]
  %v505 = vld [vmem:[%s0 + $0x7a8] sm:$0xf]
  %v506 = vld [vmem:[%s0 + $0x7ac] sm:$0xf]
  %v507 = vld [vmem:[%s0 + $0x7b0] sm:$0xf]
  %v508 = vld [vmem:[%s0 + $0x7b4] sm:$0xf]
  %v509 = vld [vmem:[%s0 + $0x7b8] sm:$0xf]
  %v510 = vld [vmem:[%s0 + $0x7bc] sm:$0xf]
  %v511 = vld [vmem:[%s0 + $0x7c0] sm:$0xf]
  %v512 = vld [vmem:[%s0 + $0x7c4] sm:$0xf]
  %v513 = vld [vmem:[%s0 + $0x7c8] sm:$0xf]
  %v514 = vld [vmem:[%s0 + $0x7cc] sm:$0xf]
  %v515 = vld [vmem:[%s0 + $0x7d0] sm:$0xf]
  %v516 = vld [vmem:[%s0 + $0x7d4] sm:$0xf]
  %v517 = vld [vmem:[%s0 + $0x7d8] sm:$0xf]
  %v518 = vld [vmem:[%s0 + $0x7dc] sm:$0xf]
  %v519 = vld [vmem:[%s0 + $0x7e0] sm:$0xf]
  %v520 = vld [vmem:[%s0 + $0x7e4] sm:$0xf]
  %v521 = vld [vmem:[%s0 + $0x7e8] sm:$0xf]
  %v522 = vld [vmem:[%s0 + $0x7ec] sm:$0xf]
  %v523 = vld [vmem:[%s0 + $0x7f0] sm:$0xf]
  %v524 = vld [vmem:[%s0 + $0x7f4] sm:$0xf]
  %v525 = vld [vmem:[%s0 + $0x7f8] sm:$0xf]
  %v526 = vld [vmem:[%s0 + $0x7fc] sm:$0xf]
  %v527 = vld [vmem:[%s1] sm:$0xf]
  %v528 = vld [vmem:[%s1 + $0x4] sm:$0xf]
  %v529 = vld [vmem:[%s1 + $0x8] sm:$0xf]
  %v530 = vld [vmem:[%s1 + $0xc] sm:$0xf]
  %v531 = vld [vmem:[%s2] sm:$0x1]
  %v533 = vlaneseq
  %v534 = vshrl.u32 %v533, 7
  %v535 = vsub.s32 0, %v534
  %v536 = vrot.slane %v531, %v535
  %v1050 = vunpack.c.l.b16 %v15
  %v1051 = vunpack.c.l.b16 %v16
  %v1052 = vunpack.c.l.b16 %v17
  %v1053 = vunpack.c.l.b16 %v18
  %v1054 = vunpack.c.l.b16 %v19
  %v1055 = vunpack.c.l.b16 %v20
  %v1056 = vunpack.c.l.b16 %v21
  %v1057 = vunpack.c.l.b16 %v22
  %v1058 = vunpack.c.l.b16 %v23
  %v1059 = vunpack.c.l.b16 %v24
  %v1060 = vunpack.c.l.b16 %v25
  %v1061 = vunpack.c.l.b16 %v26
  %v1062 = vunpack.c.l.b16 %v27
  %v1063 = vunpack.c.l.b16 %v28
  %v1064 = vunpack.c.l.b16 %v29
  %v1065 = vunpack.c.l.b16 %v30
  %v1066 = vunpack.c.l.b16 %v31
  %v1067 = vunpack.c.l.b16 %v32
  %v1068 = vunpack.c.l.b16 %v33
  %v1069 = vunpack.c.l.b16 %v34
  %v1070 = vunpack.c.l.b16 %v35
  %v1071 = vunpack.c.l.b16 %v36
  %v1072 = vunpack.c.l.b16 %v37
  %v1073 = vunpack.c.l.b16 %v38
  %v1074 = vunpack.c.l.b16 %v39
  %v1075 = vunpack.c.l.b16 %v40
  %v1076 = vunpack.c.l.b16 %v41
  %v1077 = vunpack.c.l.b16 %v42
  %v1078 = vunpack.c.l.b16 %v43
  %v1079 = vunpack.c.l.b16 %v44
  %v1080 = vunpack.c.l.b16 %v45
  %v1081 = vunpack.c.l.b16 %v46
  %v1082 = vunpack.c.l.b16 %v47
  %v1083 = vunpack.c.l.b16 %v48
  %v1084 = vunpack.c.l.b16 %v49
  %v1085 = vunpack.c.l.b16 %v50
  %v1086 = vunpack.c.l.b16 %v51
  %v1087 = vunpack.c.l.b16 %v52
  %v1088 = vunpack.c.l.b16 %v53
  %v1089 = vunpack.c.l.b16 %v54
  %v1090 = vunpack.c.l.b16 %v55
  %v1091 = vunpack.c.l.b16 %v56
  %v1092 = vunpack.c.l.b16 %v57
  %v1093 = vunpack.c.l.b16 %v58
  %v1094 = vunpack.c.l.b16 %v59
  %v1095 = vunpack.c.l.b16 %v60
  %v1096 = vunpack.c.l.b16 %v61
  %v1097 = vunpack.c.l.b16 %v62
  %v1098 = vunpack.c.l.b16 %v63
  %v1099 = vunpack.c.l.b16 %v64
  %v1100 = vunpack.c.l.b16 %v65
  %v1101 = vunpack.c.l.b16 %v66
  %v1102 = vunpack.c.l.b16 %v67
  %v1103 = vunpack.c.l.b16 %v68
  %v1104 = vunpack.c.l.b16 %v69
  %v1105 = vunpack.c.l.b16 %v70
  %v1106 = vunpack.c.l.b16 %v71
  %v1107 = vunpack.c.l.b16 %v72
  %v1108 = vunpack.c.l.b16 %v73
  %v1109 = vunpack.c.l.b16 %v74
  %v1110 = vunpack.c.l.b16 %v75
  %v1111 = vunpack.c.l.b16 %v76
  %v1112 = vunpack.c.l.b16 %v77
  %v1113 = vunpack.c.l.b16 %v78
  %v1114 = vunpack.c.l.b16 %v79
  %v1115 = vunpack.c.l.b16 %v80
  %v1116 = vunpack.c.l.b16 %v81
  %v1117 = vunpack.c.l.b16 %v82
  %v1118 = vunpack.c.l.b16 %v83
  %v1119 = vunpack.c.l.b16 %v84
  %v1120 = vunpack.c.l.b16 %v85
  %v1121 = vunpack.c.l.b16 %v86
  %v1122 = vunpack.c.l.b16 %v87
  %v1123 = vunpack.c.l.b16 %v88
  %v1124 = vunpack.c.l.b16 %v89
  %v1125 = vunpack.c.l.b16 %v90
  %v1126 = vunpack.c.l.b16 %v91
  %v1127 = vunpack.c.l.b16 %v92
  %v1128 = vunpack.c.l.b16 %v93
  %v1129 = vunpack.c.l.b16 %v94
  %v1130 = vunpack.c.l.b16 %v95
  %v1131 = vunpack.c.l.b16 %v96
  %v1132 = vunpack.c.l.b16 %v97
  %v1133 = vunpack.c.l.b16 %v98
  %v1134 = vunpack.c.l.b16 %v99
  %v1135 = vunpack.c.l.b16 %v100
  %v1136 = vunpack.c.l.b16 %v101
  %v1137 = vunpack.c.l.b16 %v102
  %v1138 = vunpack.c.l.b16 %v103
  %v1139 = vunpack.c.l.b16 %v104
  %v1140 = vunpack.c.l.b16 %v105
  %v1141 = vunpack.c.l.b16 %v106
  %v1142 = vunpack.c.l.b16 %v107
  %v1143 = vunpack.c.l.b16 %v108
  %v1144 = vunpack.c.l.b16 %v109
  %v1145 = vunpack.c.l.b16 %v110
  %v1146 = vunpack.c.l.b16 %v111
  %v1147 = vunpack.c.l.b16 %v112
  %v1148 = vunpack.c.l.b16 %v113
  %v1149 = vunpack.c.l.b16 %v114
  %v1150 = vunpack.c.l.b16 %v115
  %v1151 = vunpack.c.l.b16 %v116
  %v1152 = vunpack.c.l.b16 %v117
  %v1153 = vunpack.c.l.b16 %v118
  %v1154 = vunpack.c.l.b16 %v119
  %v1155 = vunpack.c.l.b16 %v120
  %v1156 = vunpack.c.l.b16 %v121
  %v1157 = vunpack.c.l.b16 %v122
  %v1158 = vunpack.c.l.b16 %v123
  %v1159 = vunpack.c.l.b16 %v124
  %v1160 = vunpack.c.l.b16 %v125
  %v1161 = vunpack.c.l.b16 %v126
  %v1162 = vunpack.c.l.b16 %v127
  %v1163 = vunpack.c.l.b16 %v128
  %v1164 = vunpack.c.l.b16 %v129
  %v1165 = vunpack.c.l.b16 %v130
  %v1166 = vunpack.c.l.b16 %v131
  %v1167 = vunpack.c.l.b16 %v132
  %v1168 = vunpack.c.l.b16 %v133
  %v1169 = vunpack.c.l.b16 %v134
  %v1170 = vunpack.c.l.b16 %v135
  %v1171 = vunpack.c.l.b16 %v136
  %v1172 = vunpack.c.l.b16 %v137
  %v1173 = vunpack.c.l.b16 %v138
  %v1174 = vunpack.c.l.b16 %v139
  %v1175 = vunpack.c.l.b16 %v140
  %v1176 = vunpack.c.l.b16 %v141
  %v1177 = vunpack.c.l.b16 %v142
  %v1178 = vunpack.c.l.b16 %v143
  %v1179 = vunpack.c.l.b16 %v144
  %v1180 = vunpack.c.l.b16 %v145
  %v1181 = vunpack.c.l.b16 %v146
  %v1182 = vunpack.c.l.b16 %v147
  %v1183 = vunpack.c.l.b16 %v148
  %v1184 = vunpack.c.l.b16 %v149
  %v1185 = vunpack.c.l.b16 %v150
  %v1186 = vunpack.c.l.b16 %v151
  %v1187 = vunpack.c.l.b16 %v152
  %v1188 = vunpack.c.l.b16 %v153
  %v1189 = vunpack.c.l.b16 %v154
  %v1190 = vunpack.c.l.b16 %v155
  %v1191 = vunpack.c.l.b16 %v156
  %v1192 = vunpack.c.l.b16 %v157
  %v1193 = vunpack.c.l.b16 %v158
  %v1194 = vunpack.c.l.b16 %v159
  %v1195 = vunpack.c.l.b16 %v160
  %v1196 = vunpack.c.l.b16 %v161
  %v1197 = vunpack.c.l.b16 %v162
  %v1198 = vunpack.c.l.b16 %v163
  %v1199 = vunpack.c.l.b16 %v164
  %v1200 = vunpack.c.l.b16 %v165
  %v1201 = vunpack.c.l.b16 %v166
  %v1202 = vunpack.c.l.b16 %v167
  %v1203 = vunpack.c.l.b16 %v168
  %v1204 = vunpack.c.l.b16 %v169
  %v1205 = vunpack.c.l.b16 %v170
  %v1206 = vunpack.c.l.b16 %v171
  %v1207 = vunpack.c.l.b16 %v172
  %v1208 = vunpack.c.l.b16 %v173
  %v1209 = vunpack.c.l.b16 %v174
  %v1210 = vunpack.c.l.b16 %v175
  %v1211 = vunpack.c.l.b16 %v176
  %v1212 = vunpack.c.l.b16 %v177
  %v1213 = vunpack.c.l.b16 %v178
  %v1214 = vunpack.c.l.b16 %v179
  %v1215 = vunpack.c.l.b16 %v180
  %v1216 = vunpack.c.l.b16 %v181
  %v1217 = vunpack.c.l.b16 %v182
  %v1218 = vunpack.c.l.b16 %v183
  %v1219 = vunpack.c.l.b16 %v184
  %v1220 = vunpack.c.l.b16 %v185
  %v1221 = vunpack.c.l.b16 %v186
  %v1222 = vunpack.c.l.b16 %v187
  %v1223 = vunpack.c.l.b16 %v188
  %v1224 = vunpack.c.l.b16 %v189
  %v1225 = vunpack.c.l.b16 %v190
  %v1226 = vunpack.c.l.b16 %v191
  %v1227 = vunpack.c.l.b16 %v192
  %v1228 = vunpack.c.l.b16 %v193
  %v1229 = vunpack.c.l.b16 %v194
  %v1230 = vunpack.c.l.b16 %v195
  %v1231 = vunpack.c.l.b16 %v196
  %v1232 = vunpack.c.l.b16 %v197
  %v1233 = vunpack.c.l.b16 %v198
  %v1234 = vunpack.c.l.b16 %v199
  %v1235 = vunpack.c.l.b16 %v200
  %v1236 = vunpack.c.l.b16 %v201
  %v1237 = vunpack.c.l.b16 %v202
  %v1238 = vunpack.c.l.b16 %v203
  %v1239 = vunpack.c.l.b16 %v204
  %v1240 = vunpack.c.l.b16 %v205
  %v1241 = vunpack.c.l.b16 %v206
  %v1242 = vunpack.c.l.b16 %v207
  %v1243 = vunpack.c.l.b16 %v208
  %v1244 = vunpack.c.l.b16 %v209
  %v1245 = vunpack.c.l.b16 %v210
  %v1246 = vunpack.c.l.b16 %v211
  %v1247 = vunpack.c.l.b16 %v212
  %v1248 = vunpack.c.l.b16 %v213
  %v1249 = vunpack.c.l.b16 %v214
  %v1250 = vunpack.c.l.b16 %v215
  %v1251 = vunpack.c.l.b16 %v216
  %v1252 = vunpack.c.l.b16 %v217
  %v1253 = vunpack.c.l.b16 %v218
  %v1254 = vunpack.c.l.b16 %v219
  %v1255 = vunpack.c.l.b16 %v220
  %v1256 = vunpack.c.l.b16 %v221
  %v1257 = vunpack.c.l.b16 %v222
  %v1258 = vunpack.c.l.b16 %v223
  %v1259 = vunpack.c.l.b16 %v224
  %v1260 = vunpack.c.l.b16 %v225
  %v1261 = vunpack.c.l.b16 %v226
  %v1262 = vunpack.c.l.b16 %v227
  %v1263 = vunpack.c.l.b16 %v228
  %v1264 = vunpack.c.l.b16 %v229
  %v1265 = vunpack.c.l.b16 %v230
  %v1266 = vunpack.c.l.b16 %v231
  %v1267 = vunpack.c.l.b16 %v232
  %v1268 = vunpack.c.l.b16 %v233
  %v1269 = vunpack.c.l.b16 %v234
  %v1270 = vunpack.c.l.b16 %v235
  %v1271 = vunpack.c.l.b16 %v236
  %v1272 = vunpack.c.l.b16 %v237
  %v1273 = vunpack.c.l.b16 %v238
  %v1274 = vunpack.c.l.b16 %v239
  %v1275 = vunpack.c.l.b16 %v240
  %v1276 = vunpack.c.l.b16 %v241
  %v1277 = vunpack.c.l.b16 %v242
  %v1278 = vunpack.c.l.b16 %v243
  %v1279 = vunpack.c.l.b16 %v244
  %v1280 = vunpack.c.l.b16 %v245
  %v1281 = vunpack.c.l.b16 %v246
  %v1282 = vunpack.c.l.b16 %v247
  %v1283 = vunpack.c.l.b16 %v248
  %v1284 = vunpack.c.l.b16 %v249
  %v1285 = vunpack.c.l.b16 %v250
  %v1286 = vunpack.c.l.b16 %v251
  %v1287 = vunpack.c.l.b16 %v252
  %v1288 = vunpack.c.l.b16 %v253
  %v1289 = vunpack.c.l.b16 %v254
  %v1290 = vunpack.c.l.b16 %v255
  %v1291 = vunpack.c.l.b16 %v256
  %v1292 = vunpack.c.l.b16 %v257
  %v1293 = vunpack.c.l.b16 %v258
  %v1294 = vunpack.c.l.b16 %v259
  %v1295 = vunpack.c.l.b16 %v260
  %v1296 = vunpack.c.l.b16 %v261
  %v1297 = vunpack.c.l.b16 %v262
  %v1298 = vunpack.c.l.b16 %v263
  %v1299 = vunpack.c.l.b16 %v264
  %v1300 = vunpack.c.l.b16 %v265
  %v1301 = vunpack.c.l.b16 %v266
  %v1302 = vunpack.c.l.b16 %v267
  %v1303 = vunpack.c.l.b16 %v268
  %v1304 = vunpack.c.l.b16 %v269
  %v1305 = vunpack.c.l.b16 %v270
  %v1306 = vunpack.c.l.b16 %v271
  %v1307 = vunpack.c.l.b16 %v272
  %v1308 = vunpack.c.l.b16 %v273
  %v1309 = vunpack.c.l.b16 %v274
  %v1310 = vunpack.c.l.b16 %v275
  %v1311 = vunpack.c.l.b16 %v276
  %v1312 = vunpack.c.l.b16 %v277
  %v1313 = vunpack.c.l.b16 %v278
  %v1314 = vunpack.c.l.b16 %v279
  %v1315 = vunpack.c.l.b16 %v280
  %v1316 = vunpack.c.l.b16 %v281
  %v1317 = vunpack.c.l.b16 %v282
  %v1318 = vunpack.c.l.b16 %v283
  %v1319 = vunpack.c.l.b16 %v284
  %v1320 = vunpack.c.l.b16 %v285
  %v1321 = vunpack.c.l.b16 %v286
  %v1322 = vunpack.c.l.b16 %v287
  %v1323 = vunpack.c.l.b16 %v288
  %v1324 = vunpack.c.l.b16 %v289
  %v1325 = vunpack.c.l.b16 %v290
  %v1326 = vunpack.c.l.b16 %v291
  %v1327 = vunpack.c.l.b16 %v292
  %v1328 = vunpack.c.l.b16 %v293
  %v1329 = vunpack.c.l.b16 %v294
  %v1330 = vunpack.c.l.b16 %v295
  %v1331 = vunpack.c.l.b16 %v296
  %v1332 = vunpack.c.l.b16 %v297
  %v1333 = vunpack.c.l.b16 %v298
  %v1334 = vunpack.c.l.b16 %v299
  %v1335 = vunpack.c.l.b16 %v300
  %v1336 = vunpack.c.l.b16 %v301
  %v1337 = vunpack.c.l.b16 %v302
  %v1338 = vunpack.c.l.b16 %v303
  %v1339 = vunpack.c.l.b16 %v304
  %v1340 = vunpack.c.l.b16 %v305
  %v1341 = vunpack.c.l.b16 %v306
  %v1342 = vunpack.c.l.b16 %v307
  %v1343 = vunpack.c.l.b16 %v308
  %v1344 = vunpack.c.l.b16 %v309
  %v1345 = vunpack.c.l.b16 %v310
  %v1346 = vunpack.c.l.b16 %v311
  %v1347 = vunpack.c.l.b16 %v312
  %v1348 = vunpack.c.l.b16 %v313
  %v1349 = vunpack.c.l.b16 %v314
  %v1350 = vunpack.c.l.b16 %v315
  %v1351 = vunpack.c.l.b16 %v316
  %v1352 = vunpack.c.l.b16 %v317
  %v1353 = vunpack.c.l.b16 %v318
  %v1354 = vunpack.c.l.b16 %v319
  %v1355 = vunpack.c.l.b16 %v320
  %v1356 = vunpack.c.l.b16 %v321
  %v1357 = vunpack.c.l.b16 %v322
  %v1358 = vunpack.c.l.b16 %v323
  %v1359 = vunpack.c.l.b16 %v324
  %v1360 = vunpack.c.l.b16 %v325
  %v1361 = vunpack.c.l.b16 %v326
  %v1362 = vunpack.c.l.b16 %v327
  %v1363 = vunpack.c.l.b16 %v328
  %v1364 = vunpack.c.l.b16 %v329
  %v1365 = vunpack.c.l.b16 %v330
  %v1366 = vunpack.c.l.b16 %v331
  %v1367 = vunpack.c.l.b16 %v332
  %v1368 = vunpack.c.l.b16 %v333
  %v1369 = vunpack.c.l.b16 %v334
  %v1370 = vunpack.c.l.b16 %v335
  %v1371 = vunpack.c.l.b16 %v336
  %v1372 = vunpack.c.l.b16 %v337
  %v1373 = vunpack.c.l.b16 %v338
  %v1374 = vunpack.c.l.b16 %v339
  %v1375 = vunpack.c.l.b16 %v340
  %v1376 = vunpack.c.l.b16 %v341
  %v1377 = vunpack.c.l.b16 %v342
  %v1378 = vunpack.c.l.b16 %v343
  %v1379 = vunpack.c.l.b16 %v344
  %v1380 = vunpack.c.l.b16 %v345
  %v1381 = vunpack.c.l.b16 %v346
  %v1382 = vunpack.c.l.b16 %v347
  %v1383 = vunpack.c.l.b16 %v348
  %v1384 = vunpack.c.l.b16 %v349
  %v1385 = vunpack.c.l.b16 %v350
  %v1386 = vunpack.c.l.b16 %v351
  %v1387 = vunpack.c.l.b16 %v352
  %v1388 = vunpack.c.l.b16 %v353
  %v1389 = vunpack.c.l.b16 %v354
  %v1390 = vunpack.c.l.b16 %v355
  %v1391 = vunpack.c.l.b16 %v356
  %v1392 = vunpack.c.l.b16 %v357
  %v1393 = vunpack.c.l.b16 %v358
  %v1394 = vunpack.c.l.b16 %v359
  %v1395 = vunpack.c.l.b16 %v360
  %v1396 = vunpack.c.l.b16 %v361
  %v1397 = vunpack.c.l.b16 %v362
  %v1398 = vunpack.c.l.b16 %v363
  %v1399 = vunpack.c.l.b16 %v364
  %v1400 = vunpack.c.l.b16 %v365
  %v1401 = vunpack.c.l.b16 %v366
  %v1402 = vunpack.c.l.b16 %v367
  %v1403 = vunpack.c.l.b16 %v368
  %v1404 = vunpack.c.l.b16 %v369
  %v1405 = vunpack.c.l.b16 %v370
  %v1406 = vunpack.c.l.b16 %v371
  %v1407 = vunpack.c.l.b16 %v372
  %v1408 = vunpack.c.l.b16 %v373
  %v1409 = vunpack.c.l.b16 %v374
  %v1410 = vunpack.c.l.b16 %v375
  %v1411 = vunpack.c.l.b16 %v376
  %v1412 = vunpack.c.l.b16 %v377
  %v1413 = vunpack.c.l.b16 %v378
  %v1414 = vunpack.c.l.b16 %v379
  %v1415 = vunpack.c.l.b16 %v380
  %v1416 = vunpack.c.l.b16 %v381
  %v1417 = vunpack.c.l.b16 %v382
  %v1418 = vunpack.c.l.b16 %v383
  %v1419 = vunpack.c.l.b16 %v384
  %v1420 = vunpack.c.l.b16 %v385
  %v1421 = vunpack.c.l.b16 %v386
  %v1422 = vunpack.c.l.b16 %v387
  %v1423 = vunpack.c.l.b16 %v388
  %v1424 = vunpack.c.l.b16 %v389
  %v1425 = vunpack.c.l.b16 %v390
  %v1426 = vunpack.c.l.b16 %v391
  %v1427 = vunpack.c.l.b16 %v392
  %v1428 = vunpack.c.l.b16 %v393
  %v1429 = vunpack.c.l.b16 %v394
  %v1430 = vunpack.c.l.b16 %v395
  %v1431 = vunpack.c.l.b16 %v396
  %v1432 = vunpack.c.l.b16 %v397
  %v1433 = vunpack.c.l.b16 %v398
  %v1434 = vunpack.c.l.b16 %v399
  %v1435 = vunpack.c.l.b16 %v400
  %v1436 = vunpack.c.l.b16 %v401
  %v1437 = vunpack.c.l.b16 %v402
  %v1438 = vunpack.c.l.b16 %v403
  %v1439 = vunpack.c.l.b16 %v404
  %v1440 = vunpack.c.l.b16 %v405
  %v1441 = vunpack.c.l.b16 %v406
  %v1442 = vunpack.c.l.b16 %v407
  %v1443 = vunpack.c.l.b16 %v408
  %v1444 = vunpack.c.l.b16 %v409
  %v1445 = vunpack.c.l.b16 %v410
  %v1446 = vunpack.c.l.b16 %v411
  %v1447 = vunpack.c.l.b16 %v412
  %v1448 = vunpack.c.l.b16 %v413
  %v1449 = vunpack.c.l.b16 %v414
  %v1450 = vunpack.c.l.b16 %v415
  %v1451 = vunpack.c.l.b16 %v416
  %v1452 = vunpack.c.l.b16 %v417
  %v1453 = vunpack.c.l.b16 %v418
  %v1454 = vunpack.c.l.b16 %v419
  %v1455 = vunpack.c.l.b16 %v420
  %v1456 = vunpack.c.l.b16 %v421
  %v1457 = vunpack.c.l.b16 %v422
  %v1458 = vunpack.c.l.b16 %v423
  %v1459 = vunpack.c.l.b16 %v424
  %v1460 = vunpack.c.l.b16 %v425
  %v1461 = vunpack.c.l.b16 %v426
  %v1462 = vunpack.c.l.b16 %v427
  %v1463 = vunpack.c.l.b16 %v428
  %v1464 = vunpack.c.l.b16 %v429
  %v1465 = vunpack.c.l.b16 %v430
  %v1466 = vunpack.c.l.b16 %v431
  %v1467 = vunpack.c.l.b16 %v432
  %v1468 = vunpack.c.l.b16 %v433
  %v1469 = vunpack.c.l.b16 %v434
  %v1470 = vunpack.c.l.b16 %v435
  %v1471 = vunpack.c.l.b16 %v436
  %v1472 = vunpack.c.l.b16 %v437
  %v1473 = vunpack.c.l.b16 %v438
  %v1474 = vunpack.c.l.b16 %v439
  %v1475 = vunpack.c.l.b16 %v440
  %v1476 = vunpack.c.l.b16 %v441
  %v1477 = vunpack.c.l.b16 %v442
  %v1478 = vunpack.c.l.b16 %v443
  %v1479 = vunpack.c.l.b16 %v444
  %v1480 = vunpack.c.l.b16 %v445
  %v1481 = vunpack.c.l.b16 %v446
  %v1482 = vunpack.c.l.b16 %v447
  %v1483 = vunpack.c.l.b16 %v448
  %v1484 = vunpack.c.l.b16 %v449
  %v1485 = vunpack.c.l.b16 %v450
  %v1486 = vunpack.c.l.b16 %v451
  %v1487 = vunpack.c.l.b16 %v452
  %v1488 = vunpack.c.l.b16 %v453
  %v1489 = vunpack.c.l.b16 %v454
  %v1490 = vunpack.c.l.b16 %v455
  %v1491 = vunpack.c.l.b16 %v456
  %v1492 = vunpack.c.l.b16 %v457
  %v1493 = vunpack.c.l.b16 %v458
  %v1494 = vunpack.c.l.b16 %v459
  %v1495 = vunpack.c.l.b16 %v460
  %v1496 = vunpack.c.l.b16 %v461
  %v1497 = vunpack.c.l.b16 %v462
  %v1498 = vunpack.c.l.b16 %v463
  %v1499 = vunpack.c.l.b16 %v464
  %v1500 = vunpack.c.l.b16 %v465
  %v1501 = vunpack.c.l.b16 %v466
  %v1502 = vunpack.c.l.b16 %v467
  %v1503 = vunpack.c.l.b16 %v468
  %v1504 = vunpack.c.l.b16 %v469
  %v1505 = vunpack.c.l.b16 %v470
  %v1506 = vunpack.c.l.b16 %v471
  %v1507 = vunpack.c.l.b16 %v472
  %v1508 = vunpack.c.l.b16 %v473
  %v1509 = vunpack.c.l.b16 %v474
  %v1510 = vunpack.c.l.b16 %v475
  %v1511 = vunpack.c.l.b16 %v476
  %v1512 = vunpack.c.l.b16 %v477
  %v1513 = vunpack.c.l.b16 %v478
  %v1514 = vunpack.c.l.b16 %v479
  %v1515 = vunpack.c.l.b16 %v480
  %v1516 = vunpack.c.l.b16 %v481
  %v1517 = vunpack.c.l.b16 %v482
  %v1518 = vunpack.c.l.b16 %v483
  %v1519 = vunpack.c.l.b16 %v484
  %v1520 = vunpack.c.l.b16 %v485
  %v1521 = vunpack.c.l.b16 %v486
  %v1522 = vunpack.c.l.b16 %v487
  %v1523 = vunpack.c.l.b16 %v488
  %v1524 = vunpack.c.l.b16 %v489
  %v1525 = vunpack.c.l.b16 %v490
  %v1526 = vunpack.c.l.b16 %v491
  %v1527 = vunpack.c.l.b16 %v492
  %v1528 = vunpack.c.l.b16 %v493
  %v1529 = vunpack.c.l.b16 %v494
  %v1530 = vunpack.c.l.b16 %v495
  %v1531 = vunpack.c.l.b16 %v496
  %v1532 = vunpack.c.l.b16 %v497
  %v1533 = vunpack.c.l.b16 %v498
  %v1534 = vunpack.c.l.b16 %v499
  %v1535 = vunpack.c.l.b16 %v500
  %v1536 = vunpack.c.l.b16 %v501
  %v1537 = vunpack.c.l.b16 %v502
  %v1538 = vunpack.c.l.b16 %v503
  %v1539 = vunpack.c.l.b16 %v504
  %v1540 = vunpack.c.l.b16 %v505
  %v1541 = vunpack.c.l.b16 %v506
  %v1542 = vunpack.c.l.b16 %v507
  %v1543 = vunpack.c.l.b16 %v508
  %v1544 = vunpack.c.l.b16 %v509
  %v1545 = vunpack.c.l.b16 %v510
  %v1546 = vunpack.c.l.b16 %v511
  %v1547 = vunpack.c.l.b16 %v512
  %v1548 = vunpack.c.l.b16 %v513
  %v1549 = vunpack.c.l.b16 %v514
  %v1550 = vunpack.c.l.b16 %v515
  %v1551 = vunpack.c.l.b16 %v516
  %v1552 = vunpack.c.l.b16 %v517
  %v1553 = vunpack.c.l.b16 %v518
  %v1554 = vunpack.c.l.b16 %v519
  %v1555 = vunpack.c.l.b16 %v520
  %v1556 = vunpack.c.l.b16 %v521
  %v1557 = vunpack.c.l.b16 %v522
  %v1558 = vunpack.c.l.b16 %v523
  %v1559 = vunpack.c.l.b16 %v524
  %v1560 = vunpack.c.l.b16 %v525
  %v1561 = vunpack.c.l.b16 %v526
  %v1562 = vpack.c.b16 %v1051, %v1050
  %v1563 = vpack.c.b16 %v1053, %v1052
  %v1564 = vpack.c.b16 %v1055, %v1054
  %v1565 = vpack.c.b16 %v1057, %v1056
  %v1566 = vpack.c.b16 %v1059, %v1058
  %v1567 = vpack.c.b16 %v1061, %v1060
  %v1568 = vpack.c.b16 %v1063, %v1062
  %v1569 = vpack.c.b16 %v1065, %v1064
  %v1570 = vpack.c.b16 %v1067, %v1066
  %v1571 = vpack.c.b16 %v1069, %v1068
  %v1572 = vpack.c.b16 %v1071, %v1070
  %v1573 = vpack.c.b16 %v1073, %v1072
  %v1574 = vpack.c.b16 %v1075, %v1074
  %v1575 = vpack.c.b16 %v1077, %v1076
  %v1576 = vpack.c.b16 %v1079, %v1078
  %v1577 = vpack.c.b16 %v1081, %v1080
  %v1578 = vpack.c.b16 %v1083, %v1082
  %v1579 = vpack.c.b16 %v1085, %v1084
  %v1580 = vpack.c.b16 %v1087, %v1086
  %v1581 = vpack.c.b16 %v1089, %v1088
  %v1582 = vpack.c.b16 %v1091, %v1090
  %v1583 = vpack.c.b16 %v1093, %v1092
  %v1584 = vpack.c.b16 %v1095, %v1094
  %v1585 = vpack.c.b16 %v1097, %v1096
  %v1586 = vpack.c.b16 %v1099, %v1098
  %v1587 = vpack.c.b16 %v1101, %v1100
  %v1588 = vpack.c.b16 %v1103, %v1102
  %v1589 = vpack.c.b16 %v1105, %v1104
  %v1590 = vpack.c.b16 %v1107, %v1106
  %v1591 = vpack.c.b16 %v1109, %v1108
  %v1592 = vpack.c.b16 %v1111, %v1110
  %v1593 = vpack.c.b16 %v1113, %v1112
  %v1594 = vpack.c.b16 %v1115, %v1114
  %v1595 = vpack.c.b16 %v1117, %v1116
  %v1596 = vpack.c.b16 %v1119, %v1118
  %v1597 = vpack.c.b16 %v1121, %v1120
  %v1598 = vpack.c.b16 %v1123, %v1122
  %v1599 = vpack.c.b16 %v1125, %v1124
  %v1600 = vpack.c.b16 %v1127, %v1126
  %v1601 = vpack.c.b16 %v1129, %v1128
  %v1602 = vpack.c.b16 %v1131, %v1130
  %v1603 = vpack.c.b16 %v1133, %v1132
  %v1604 = vpack.c.b16 %v1135, %v1134
  %v1605 = vpack.c.b16 %v1137, %v1136
  %v1606 = vpack.c.b16 %v1139, %v1138
  %v1607 = vpack.c.b16 %v1141, %v1140
  %v1608 = vpack.c.b16 %v1143, %v1142
  %v1609 = vpack.c.b16 %v1145, %v1144
  %v1610 = vpack.c.b16 %v1147, %v1146
  %v1611 = vpack.c.b16 %v1149, %v1148
  %v1612 = vpack.c.b16 %v1151, %v1150
  %v1613 = vpack.c.b16 %v1153, %v1152
  %v1614 = vpack.c.b16 %v1155, %v1154
  %v1615 = vpack.c.b16 %v1157, %v1156
  %v1616 = vpack.c.b16 %v1159, %v1158
  %v1617 = vpack.c.b16 %v1161, %v1160
  %v1618 = vpack.c.b16 %v1163, %v1162
  %v1619 = vpack.c.b16 %v1165, %v1164
  %v1620 = vpack.c.b16 %v1167, %v1166
  %v1621 = vpack.c.b16 %v1169, %v1168
  %v1622 = vpack.c.b16 %v1171, %v1170
  %v1623 = vpack.c.b16 %v1173, %v1172
  %v1624 = vpack.c.b16 %v1175, %v1174
  %v1625 = vpack.c.b16 %v1177, %v1176
  %v1626 = vpack.c.b16 %v1179, %v1178
  %v1627 = vpack.c.b16 %v1181, %v1180
  %v1628 = vpack.c.b16 %v1183, %v1182
  %v1629 = vpack.c.b16 %v1185, %v1184
  %v1630 = vpack.c.b16 %v1187, %v1186
  %v1631 = vpack.c.b16 %v1189, %v1188
  %v1632 = vpack.c.b16 %v1191, %v1190
  %v1633 = vpack.c.b16 %v1193, %v1192
  %v1634 = vpack.c.b16 %v1195, %v1194
  %v1635 = vpack.c.b16 %v1197, %v1196
  %v1636 = vpack.c.b16 %v1199, %v1198
  %v1637 = vpack.c.b16 %v1201, %v1200
  %v1638 = vpack.c.b16 %v1203, %v1202
  %v1639 = vpack.c.b16 %v1205, %v1204
  %v1640 = vpack.c.b16 %v1207, %v1206
  %v1641 = vpack.c.b16 %v1209, %v1208
  %v1642 = vpack.c.b16 %v1211, %v1210
  %v1643 = vpack.c.b16 %v1213, %v1212
  %v1644 = vpack.c.b16 %v1215, %v1214
  %v1645 = vpack.c.b16 %v1217, %v1216
  %v1646 = vpack.c.b16 %v1219, %v1218
  %v1647 = vpack.c.b16 %v1221, %v1220
  %v1648 = vpack.c.b16 %v1223, %v1222
  %v1649 = vpack.c.b16 %v1225, %v1224
  %v1650 = vpack.c.b16 %v1227, %v1226
  %v1651 = vpack.c.b16 %v1229, %v1228
  %v1652 = vpack.c.b16 %v1231, %v1230
  %v1653 = vpack.c.b16 %v1233, %v1232
  %v1654 = vpack.c.b16 %v1235, %v1234
  %v1655 = vpack.c.b16 %v1237, %v1236
  %v1656 = vpack.c.b16 %v1239, %v1238
  %v1657 = vpack.c.b16 %v1241, %v1240
  %v1658 = vpack.c.b16 %v1243, %v1242
  %v1659 = vpack.c.b16 %v1245, %v1244
  %v1660 = vpack.c.b16 %v1247, %v1246
  %v1661 = vpack.c.b16 %v1249, %v1248
  %v1662 = vpack.c.b16 %v1251, %v1250
  %v1663 = vpack.c.b16 %v1253, %v1252
  %v1664 = vpack.c.b16 %v1255, %v1254
  %v1665 = vpack.c.b16 %v1257, %v1256
  %v1666 = vpack.c.b16 %v1259, %v1258
  %v1667 = vpack.c.b16 %v1261, %v1260
  %v1668 = vpack.c.b16 %v1263, %v1262
  %v1669 = vpack.c.b16 %v1265, %v1264
  %v1670 = vpack.c.b16 %v1267, %v1266
  %v1671 = vpack.c.b16 %v1269, %v1268
  %v1672 = vpack.c.b16 %v1271, %v1270
  %v1673 = vpack.c.b16 %v1273, %v1272
  %v1674 = vpack.c.b16 %v1275, %v1274
  %v1675 = vpack.c.b16 %v1277, %v1276
  %v1676 = vpack.c.b16 %v1279, %v1278
  %v1677 = vpack.c.b16 %v1281, %v1280
  %v1678 = vpack.c.b16 %v1283, %v1282
  %v1679 = vpack.c.b16 %v1285, %v1284
  %v1680 = vpack.c.b16 %v1287, %v1286
  %v1681 = vpack.c.b16 %v1289, %v1288
  %v1682 = vpack.c.b16 %v1291, %v1290
  %v1683 = vpack.c.b16 %v1293, %v1292
  %v1684 = vpack.c.b16 %v1295, %v1294
  %v1685 = vpack.c.b16 %v1297, %v1296
  %v1686 = vpack.c.b16 %v1299, %v1298
  %v1687 = vpack.c.b16 %v1301, %v1300
  %v1688 = vpack.c.b16 %v1303, %v1302
  %v1689 = vpack.c.b16 %v1305, %v1304
  %v1690 = vpack.c.b16 %v1307, %v1306
  %v1691 = vpack.c.b16 %v1309, %v1308
  %v1692 = vpack.c.b16 %v1311, %v1310
  %v1693 = vpack.c.b16 %v1313, %v1312
  %v1694 = vpack.c.b16 %v1315, %v1314
  %v1695 = vpack.c.b16 %v1317, %v1316
  %v1696 = vpack.c.b16 %v1319, %v1318
  %v1697 = vpack.c.b16 %v1321, %v1320
  %v1698 = vpack.c.b16 %v1323, %v1322
  %v1699 = vpack.c.b16 %v1325, %v1324
  %v1700 = vpack.c.b16 %v1327, %v1326
  %v1701 = vpack.c.b16 %v1329, %v1328
  %v1702 = vpack.c.b16 %v1331, %v1330
  %v1703 = vpack.c.b16 %v1333, %v1332
  %v1704 = vpack.c.b16 %v1335, %v1334
  %v1705 = vpack.c.b16 %v1337, %v1336
  %v1706 = vpack.c.b16 %v1339, %v1338
  %v1707 = vpack.c.b16 %v1341, %v1340
  %v1708 = vpack.c.b16 %v1343, %v1342
  %v1709 = vpack.c.b16 %v1345, %v1344
  %v1710 = vpack.c.b16 %v1347, %v1346
  %v1711 = vpack.c.b16 %v1349, %v1348
  %v1712 = vpack.c.b16 %v1351, %v1350
  %v1713 = vpack.c.b16 %v1353, %v1352
  %v1714 = vpack.c.b16 %v1355, %v1354
  %v1715 = vpack.c.b16 %v1357, %v1356
  %v1716 = vpack.c.b16 %v1359, %v1358
  %v1717 = vpack.c.b16 %v1361, %v1360
  %v1718 = vpack.c.b16 %v1363, %v1362
  %v1719 = vpack.c.b16 %v1365, %v1364
  %v1720 = vpack.c.b16 %v1367, %v1366
  %v1721 = vpack.c.b16 %v1369, %v1368
  %v1722 = vpack.c.b16 %v1371, %v1370
  %v1723 = vpack.c.b16 %v1373, %v1372
  %v1724 = vpack.c.b16 %v1375, %v1374
  %v1725 = vpack.c.b16 %v1377, %v1376
  %v1726 = vpack.c.b16 %v1379, %v1378
  %v1727 = vpack.c.b16 %v1381, %v1380
  %v1728 = vpack.c.b16 %v1383, %v1382
  %v1729 = vpack.c.b16 %v1385, %v1384
  %v1730 = vpack.c.b16 %v1387, %v1386
  %v1731 = vpack.c.b16 %v1389, %v1388
  %v1732 = vpack.c.b16 %v1391, %v1390
  %v1733 = vpack.c.b16 %v1393, %v1392
  %v1734 = vpack.c.b16 %v1395, %v1394
  %v1735 = vpack.c.b16 %v1397, %v1396
  %v1736 = vpack.c.b16 %v1399, %v1398
  %v1737 = vpack.c.b16 %v1401, %v1400
  %v1738 = vpack.c.b16 %v1403, %v1402
  %v1739 = vpack.c.b16 %v1405, %v1404
  %v1740 = vpack.c.b16 %v1407, %v1406
  %v1741 = vpack.c.b16 %v1409, %v1408
  %v1742 = vpack.c.b16 %v1411, %v1410
  %v1743 = vpack.c.b16 %v1413, %v1412
  %v1744 = vpack.c.b16 %v1415, %v1414
  %v1745 = vpack.c.b16 %v1417, %v1416
  %v1746 = vpack.c.b16 %v1419, %v1418
  %v1747 = vpack.c.b16 %v1421, %v1420
  %v1748 = vpack.c.b16 %v1423, %v1422
  %v1749 = vpack.c.b16 %v1425, %v1424
  %v1750 = vpack.c.b16 %v1427, %v1426
  %v1751 = vpack.c.b16 %v1429, %v1428
  %v1752 = vpack.c.b16 %v1431, %v1430
  %v1753 = vpack.c.b16 %v1433, %v1432
  %v1754 = vpack.c.b16 %v1435, %v1434
  %v1755 = vpack.c.b16 %v1437, %v1436
  %v1756 = vpack.c.b16 %v1439, %v1438
  %v1757 = vpack.c.b16 %v1441, %v1440
  %v1758 = vpack.c.b16 %v1443, %v1442
  %v1759 = vpack.c.b16 %v1445, %v1444
  %v1760 = vpack.c.b16 %v1447, %v1446
  %v1761 = vpack.c.b16 %v1449, %v1448
  %v1762 = vpack.c.b16 %v1451, %v1450
  %v1763 = vpack.c.b16 %v1453, %v1452
  %v1764 = vpack.c.b16 %v1455, %v1454
  %v1765 = vpack.c.b16 %v1457, %v1456
  %v1766 = vpack.c.b16 %v1459, %v1458
  %v1767 = vpack.c.b16 %v1461, %v1460
  %v1768 = vpack.c.b16 %v1463, %v1462
  %v1769 = vpack.c.b16 %v1465, %v1464
  %v1770 = vpack.c.b16 %v1467, %v1466
  %v1771 = vpack.c.b16 %v1469, %v1468
  %v1772 = vpack.c.b16 %v1471, %v1470
  %v1773 = vpack.c.b16 %v1473, %v1472
  %v1774 = vpack.c.b16 %v1475, %v1474
  %v1775 = vpack.c.b16 %v1477, %v1476
  %v1776 = vpack.c.b16 %v1479, %v1478
  %v1777 = vpack.c.b16 %v1481, %v1480
  %v1778 = vpack.c.b16 %v1483, %v1482
  %v1779 = vpack.c.b16 %v1485, %v1484
  %v1780 = vpack.c.b16 %v1487, %v1486
  %v1781 = vpack.c.b16 %v1489, %v1488
  %v1782 = vpack.c.b16 %v1491, %v1490
  %v1783 = vpack.c.b16 %v1493, %v1492
  %v1784 = vpack.c.b16 %v1495, %v1494
  %v1785 = vpack.c.b16 %v1497, %v1496
  %v1786 = vpack.c.b16 %v1499, %v1498
  %v1787 = vpack.c.b16 %v1501, %v1500
  %v1788 = vpack.c.b16 %v1503, %v1502
  %v1789 = vpack.c.b16 %v1505, %v1504
  %v1790 = vpack.c.b16 %v1507, %v1506
  %v1791 = vpack.c.b16 %v1509, %v1508
  %v1792 = vpack.c.b16 %v1511, %v1510
  %v1793 = vpack.c.b16 %v1513, %v1512
  %v1794 = vpack.c.b16 %v1515, %v1514
  %v1795 = vpack.c.b16 %v1517, %v1516
  %v1796 = vpack.c.b16 %v1519, %v1518
  %v1797 = vpack.c.b16 %v1521, %v1520
  %v1798 = vpack.c.b16 %v1523, %v1522
  %v1799 = vpack.c.b16 %v1525, %v1524
  %v1800 = vpack.c.b16 %v1527, %v1526
  %v1801 = vpack.c.b16 %v1529, %v1528
  %v1802 = vpack.c.b16 %v1531, %v1530
  %v1803 = vpack.c.b16 %v1533, %v1532
  %v1804 = vpack.c.b16 %v1535, %v1534
  %v1805 = vpack.c.b16 %v1537, %v1536
  %v1806 = vpack.c.b16 %v1539, %v1538
  %v1807 = vpack.c.b16 %v1541, %v1540
  %v1808 = vpack.c.b16 %v1543, %v1542
  %v1809 = vpack.c.b16 %v1545, %v1544
  %v1810 = vpack.c.b16 %v1547, %v1546
  %v1811 = vpack.c.b16 %v1549, %v1548
  %v1812 = vpack.c.b16 %v1551, %v1550
  %v1813 = vpack.c.b16 %v1553, %v1552
  %v1814 = vpack.c.b16 %v1555, %v1554
  %v1815 = vpack.c.b16 %v1557, %v1556
  %v1816 = vpack.c.b16 %v1559, %v1558
  %v1817 = vpack.c.b16 %v1561, %v1560
  %v1822 = vunpack.c.l.b16 %v527
  %v1823 = vunpack.c.l.b16 %v528
  %v1824 = vunpack.c.l.b16 %v529
  %v1825 = vunpack.c.l.b16 %v530
  %v1826 = vpack.c.b16 %v1823, %v1822
  %v1827 = vpack.c.b16 %v1825, %v1824
  %vm1830 = vcmask 261120
  %v1832 = vsel %vm1830, %v1562, 0
  %v1835 = vsel %vm1830, %v1563, 0
  %v1838 = vsel %vm1830, %v1564, 0
  %v1841 = vsel %vm1830, %v1565, 0
  %v1844 = vsel %vm1830, %v1566, 0
  %v1847 = vsel %vm1830, %v1567, 0
  %v1850 = vsel %vm1830, %v1568, 0
  %v1853 = vsel %vm1830, %v1569, 0
  %v1856 = vsel %vm1830, %v1570, 0
  %v1859 = vsel %vm1830, %v1571, 0
  %v1862 = vsel %vm1830, %v1572, 0
  %v1865 = vsel %vm1830, %v1573, 0
  %v1868 = vsel %vm1830, %v1574, 0
  %v1871 = vsel %vm1830, %v1575, 0
  %v1874 = vsel %vm1830, %v1576, 0
  %v1877 = vsel %vm1830, %v1577, 0
  %v1880 = vsel %vm1830, %v1578, 0
  %v1883 = vsel %vm1830, %v1579, 0
  %v1886 = vsel %vm1830, %v1580, 0
  %v1889 = vsel %vm1830, %v1581, 0
  %v1892 = vsel %vm1830, %v1582, 0
  %v1895 = vsel %vm1830, %v1583, 0
  %v1898 = vsel %vm1830, %v1584, 0
  %v1901 = vsel %vm1830, %v1585, 0
  %v1904 = vsel %vm1830, %v1586, 0
  %v1907 = vsel %vm1830, %v1587, 0
  %v1910 = vsel %vm1830, %v1588, 0
  %v1913 = vsel %vm1830, %v1589, 0
  %v1916 = vsel %vm1830, %v1590, 0
  %v1919 = vsel %vm1830, %v1591, 0
  %v1922 = vsel %vm1830, %v1592, 0
  %v1925 = vsel %vm1830, %v1593, 0
  %v1928 = vsel %vm1830, %v1594, 0
  %v1931 = vsel %vm1830, %v1595, 0
  %v1934 = vsel %vm1830, %v1596, 0
  %v1937 = vsel %vm1830, %v1597, 0
  %v1940 = vsel %vm1830, %v1598, 0
  %v1943 = vsel %vm1830, %v1599, 0
  %v1946 = vsel %vm1830, %v1600, 0
  %v1949 = vsel %vm1830, %v1601, 0
  %v1952 = vsel %vm1830, %v1602, 0
  %v1955 = vsel %vm1830, %v1603, 0
  %v1958 = vsel %vm1830, %v1604, 0
  %v1961 = vsel %vm1830, %v1605, 0
  %v1964 = vsel %vm1830, %v1606, 0
  %v1967 = vsel %vm1830, %v1607, 0
  %v1970 = vsel %vm1830, %v1608, 0
  %v1973 = vsel %vm1830, %v1609, 0
  %v1976 = vsel %vm1830, %v1610, 0
  %v1979 = vsel %vm1830, %v1611, 0
  %v1982 = vsel %vm1830, %v1612, 0
  %v1985 = vsel %vm1830, %v1613, 0
  %v1988 = vsel %vm1830, %v1614, 0
  %v1991 = vsel %vm1830, %v1615, 0
  %v1994 = vsel %vm1830, %v1616, 0
  %v1997 = vsel %vm1830, %v1617, 0
  %v2000 = vsel %vm1830, %v1618, 0
  %v2003 = vsel %vm1830, %v1619, 0
  %v2006 = vsel %vm1830, %v1620, 0
  %v2009 = vsel %vm1830, %v1621, 0
  %v2012 = vsel %vm1830, %v1622, 0
  %v2015 = vsel %vm1830, %v1623, 0
  %v2018 = vsel %vm1830, %v1624, 0
  %v2021 = vsel %vm1830, %v1625, 0
  %v2024 = vsel %vm1830, %v1626, 0
  %v2027 = vsel %vm1830, %v1627, 0
  %v2030 = vsel %vm1830, %v1628, 0
  %v2033 = vsel %vm1830, %v1629, 0
  %v2036 = vsel %vm1830, %v1630, 0
  %v2039 = vsel %vm1830, %v1631, 0
  %v2042 = vsel %vm1830, %v1632, 0
  %v2045 = vsel %vm1830, %v1633, 0
  %v2048 = vsel %vm1830, %v1634, 0
  %v2051 = vsel %vm1830, %v1635, 0
  %v2054 = vsel %vm1830, %v1636, 0
  %v2057 = vsel %vm1830, %v1637, 0
  %v2060 = vsel %vm1830, %v1638, 0
  %v2063 = vsel %vm1830, %v1639, 0
  %v2066 = vsel %vm1830, %v1640, 0
  %v2069 = vsel %vm1830, %v1641, 0
  %v2072 = vsel %vm1830, %v1642, 0
  %v2075 = vsel %vm1830, %v1643, 0
  %v2078 = vsel %vm1830, %v1644, 0
  %v2081 = vsel %vm1830, %v1645, 0
  %v2084 = vsel %vm1830, %v1646, 0
  %v2087 = vsel %vm1830, %v1647, 0
  %v2090 = vsel %vm1830, %v1648, 0
  %v2093 = vsel %vm1830, %v1649, 0
  %v2096 = vsel %vm1830, %v1650, 0
  %v2099 = vsel %vm1830, %v1651, 0
  %v2102 = vsel %vm1830, %v1652, 0
  %v2105 = vsel %vm1830, %v1653, 0
  %v2108 = vsel %vm1830, %v1654, 0
  %v2111 = vsel %vm1830, %v1655, 0
  %v2114 = vsel %vm1830, %v1656, 0
  %v2117 = vsel %vm1830, %v1657, 0
  %v2120 = vsel %vm1830, %v1658, 0
  %v2123 = vsel %vm1830, %v1659, 0
  %v2126 = vsel %vm1830, %v1660, 0
  %v2129 = vsel %vm1830, %v1661, 0
  %v2132 = vsel %vm1830, %v1662, 0
  %v2135 = vsel %vm1830, %v1663, 0
  %v2138 = vsel %vm1830, %v1664, 0
  %v2141 = vsel %vm1830, %v1665, 0
  %v2144 = vsel %vm1830, %v1666, 0
  %v2147 = vsel %vm1830, %v1667, 0
  %v2150 = vsel %vm1830, %v1668, 0
  %v2153 = vsel %vm1830, %v1669, 0
  %v2156 = vsel %vm1830, %v1670, 0
  %v2159 = vsel %vm1830, %v1671, 0
  %v2162 = vsel %vm1830, %v1672, 0
  %v2165 = vsel %vm1830, %v1673, 0
  %v2168 = vsel %vm1830, %v1674, 0
  %v2171 = vsel %vm1830, %v1675, 0
  %v2174 = vsel %vm1830, %v1676, 0
  %v2177 = vsel %vm1830, %v1677, 0
  %v2180 = vsel %vm1830, %v1678, 0
  %v2183 = vsel %vm1830, %v1679, 0
  %v2186 = vsel %vm1830, %v1680, 0
  %v2189 = vsel %vm1830, %v1681, 0
  %v2192 = vsel %vm1830, %v1682, 0
  %v2195 = vsel %vm1830, %v1683, 0
  %v2198 = vsel %vm1830, %v1684, 0
  %v2201 = vsel %vm1830, %v1685, 0
  %v2204 = vsel %vm1830, %v1686, 0
  %v2207 = vsel %vm1830, %v1687, 0
  %v2210 = vsel %vm1830, %v1688, 0
  %v2213 = vsel %vm1830, %v1689, 0
  %v2216 = vsel %vm1830, %v1690, 0
  %v2219 = vsel %vm1830, %v1691, 0
  %v2222 = vsel %vm1830, %v1692, 0
  %v2225 = vsel %vm1830, %v1693, 0
  %v2228 = vsel %vm1830, %v1694, 0
  %v2231 = vsel %vm1830, %v1695, 0
  %v2234 = vsel %vm1830, %v1696, 0
  %v2237 = vsel %vm1830, %v1697, 0
  %v2240 = vsel %vm1830, %v1698, 0
  %v2243 = vsel %vm1830, %v1699, 0
  %v2246 = vsel %vm1830, %v1700, 0
  %v2249 = vsel %vm1830, %v1701, 0
  %v2252 = vsel %vm1830, %v1702, 0
  %v2255 = vsel %vm1830, %v1703, 0
  %v2258 = vsel %vm1830, %v1704, 0
  %v2261 = vsel %vm1830, %v1705, 0
  %v2264 = vsel %vm1830, %v1706, 0
  %v2267 = vsel %vm1830, %v1707, 0
  %v2270 = vsel %vm1830, %v1708, 0
  %v2273 = vsel %vm1830, %v1709, 0
  %v2276 = vsel %vm1830, %v1710, 0
  %v2279 = vsel %vm1830, %v1711, 0
  %v2282 = vsel %vm1830, %v1712, 0
  %v2285 = vsel %vm1830, %v1713, 0
  %v2288 = vsel %vm1830, %v1714, 0
  %v2291 = vsel %vm1830, %v1715, 0
  %v2294 = vsel %vm1830, %v1716, 0
  %v2297 = vsel %vm1830, %v1717, 0
  %v2300 = vsel %vm1830, %v1718, 0
  %v2303 = vsel %vm1830, %v1719, 0
  %v2306 = vsel %vm1830, %v1720, 0
  %v2309 = vsel %vm1830, %v1721, 0
  %v2312 = vsel %vm1830, %v1722, 0
  %v2315 = vsel %vm1830, %v1723, 0
  %v2318 = vsel %vm1830, %v1724, 0
  %v2321 = vsel %vm1830, %v1725, 0
  %v2324 = vsel %vm1830, %v1726, 0
  %v2327 = vsel %vm1830, %v1727, 0
  %v2330 = vsel %vm1830, %v1728, 0
  %v2333 = vsel %vm1830, %v1729, 0
  %v2336 = vsel %vm1830, %v1730, 0
  %v2339 = vsel %vm1830, %v1731, 0
  %v2342 = vsel %vm1830, %v1732, 0
  %v2345 = vsel %vm1830, %v1733, 0
  %v2348 = vsel %vm1830, %v1734, 0
  %v2351 = vsel %vm1830, %v1735, 0
  %v2354 = vsel %vm1830, %v1736, 0
  %v2357 = vsel %vm1830, %v1737, 0
  %v2360 = vsel %vm1830, %v1738, 0
  %v2363 = vsel %vm1830, %v1739, 0
  %v2366 = vsel %vm1830, %v1740, 0
  %v2369 = vsel %vm1830, %v1741, 0
  %v2372 = vsel %vm1830, %v1742, 0
  %v2375 = vsel %vm1830, %v1743, 0
  %v2378 = vsel %vm1830, %v1744, 0
  %v2381 = vsel %vm1830, %v1745, 0
  %v2384 = vsel %vm1830, %v1746, 0
  %v2387 = vsel %vm1830, %v1747, 0
  %v2390 = vsel %vm1830, %v1748, 0
  %v2393 = vsel %vm1830, %v1749, 0
  %v2396 = vsel %vm1830, %v1750, 0
  %v2399 = vsel %vm1830, %v1751, 0
  %v2402 = vsel %vm1830, %v1752, 0
  %v2405 = vsel %vm1830, %v1753, 0
  %v2408 = vsel %vm1830, %v1754, 0
  %v2411 = vsel %vm1830, %v1755, 0
  %v2414 = vsel %vm1830, %v1756, 0
  %v2417 = vsel %vm1830, %v1757, 0
  %v2420 = vsel %vm1830, %v1758, 0
  %v2423 = vsel %vm1830, %v1759, 0
  %v2426 = vsel %vm1830, %v1760, 0
  %v2429 = vsel %vm1830, %v1761, 0
  %v2432 = vsel %vm1830, %v1762, 0
  %v2435 = vsel %vm1830, %v1763, 0
  %v2438 = vsel %vm1830, %v1764, 0
  %v2441 = vsel %vm1830, %v1765, 0
  %v2444 = vsel %vm1830, %v1766, 0
  %v2447 = vsel %vm1830, %v1767, 0
  %v2450 = vsel %vm1830, %v1768, 0
  %v2453 = vsel %vm1830, %v1769, 0
  %v2456 = vsel %vm1830, %v1770, 0
  %v2459 = vsel %vm1830, %v1771, 0
  %v2462 = vsel %vm1830, %v1772, 0
  %v2465 = vsel %vm1830, %v1773, 0
  %v2468 = vsel %vm1830, %v1774, 0
  %v2471 = vsel %vm1830, %v1775, 0
  %v2474 = vsel %vm1830, %v1776, 0
  %v2477 = vsel %vm1830, %v1777, 0
  %v2480 = vsel %vm1830, %v1778, 0
  %v2483 = vsel %vm1830, %v1779, 0
  %v2486 = vsel %vm1830, %v1780, 0
  %v2489 = vsel %vm1830, %v1781, 0
  %v2492 = vsel %vm1830, %v1782, 0
  %v2495 = vsel %vm1830, %v1783, 0
  %v2498 = vsel %vm1830, %v1784, 0
  %v2501 = vsel %vm1830, %v1785, 0
  %v2504 = vsel %vm1830, %v1786, 0
  %v2507 = vsel %vm1830, %v1787, 0
  %v2510 = vsel %vm1830, %v1788, 0
  %v2513 = vsel %vm1830, %v1789, 0
  %v2516 = vsel %vm1830, %v1790, 0
  %v2519 = vsel %vm1830, %v1791, 0
  %v2522 = vsel %vm1830, %v1792, 0
  %v2525 = vsel %vm1830, %v1793, 0
  %v2528 = vsel %vm1830, %v1794, 0
  %v2531 = vsel %vm1830, %v1795, 0
  %v2534 = vsel %vm1830, %v1796, 0
  %v2537 = vsel %vm1830, %v1797, 0
  %v2540 = vsel %vm1830, %v1798, 0
  %v2543 = vsel %vm1830, %v1799, 0
  %v2546 = vsel %vm1830, %v1800, 0
  %v2549 = vsel %vm1830, %v1801, 0
  %v2552 = vsel %vm1830, %v1802, 0
  %v2555 = vsel %vm1830, %v1803, 0
  %v2558 = vsel %vm1830, %v1804, 0
  %v2561 = vsel %vm1830, %v1805, 0
  %v2564 = vsel %vm1830, %v1806, 0
  %v2567 = vsel %vm1830, %v1807, 0
  %v2570 = vsel %vm1830, %v1808, 0
  %v2573 = vsel %vm1830, %v1809, 0
  %v2576 = vsel %vm1830, %v1810, 0
  %v2579 = vsel %vm1830, %v1811, 0
  %v2582 = vsel %vm1830, %v1812, 0
  %v2585 = vsel %vm1830, %v1813, 0
  %v2588 = vsel %vm1830, %v1814, 0
  %v2591 = vsel %vm1830, %v1815, 0
  %v2594 = vsel %vm1830, %v1816, 0
  %v2597 = vsel %vm1830, %v1817, 0
  %2599 = vmatprep.subr.bf16.mxu0 0
  %2600 = vmatpush1.bf16.msra.mxu0 0
  %2601 = vmatprep.subr.bf16.mxu0 0
  %2602 = vmatpush1.bf16.msra.mxu0 0
  %2603 = vmatprep.subr.bf16.mxu0 0
  %2604 = vmatpush1.bf16.msra.mxu0 0
  %2605 = vmatprep.subr.bf16.mxu0 0
  %2606 = vmatpush1.bf16.msra.mxu0 0
  %2607 = vmatprep.subr.bf16.mxu0 0
  %2608 = vmatpush1.bf16.msra.mxu0 0
  %2609 = vmatprep.subr.bf16.mxu0 0
  %2610 = vmatpush1.bf16.msra.mxu0 0
  %2611 = vmatprep.subr.bf16.mxu0 0
  %2612 = vmatpush1.bf16.msra.mxu0 %v1827
  %2613 = vmatprep.subr.bf16.mxu0 0
  %2614 = vmatpush1.bf16.msra.mxu0 %v1826
  %2615 = vmatprep.subr.bf16.mxu0 0
  %2616 = vmatpush2.bf16.msra.mxu0 0
  %2617 = vmatprep.subr.bf16.mxu0 0
  %2618 = vmatpush2.bf16.msra.mxu0 0
  %2619 = vmatprep.subr.bf16.mxu0 0
  %2620 = vmatpush2.bf16.msra.mxu0 0
  %2621 = vmatprep.subr.bf16.mxu0 0
  %2622 = vmatpush2.bf16.msra.mxu0 0
  %2623 = vmatprep.subr.bf16.mxu0 0
  %2624 = vmatpush2.bf16.msra.mxu0 0
  %2625 = vmatprep.subr.bf16.mxu0 0
  %2626 = vmatpush2.bf16.msra.mxu0 0
  %2627 = vmatprep.subr.bf16.mxu0 0
  %2628 = vmatpush2.bf16.msra.mxu0 0
  %2629 = vmatprep.subr.bf16.mxu0 0
  %2630 = vmatpush2.bf16.msra.mxu0 0
  %2631 = vmatprep.mubr.bf16.mxu0 0
  %2632 = vmatmul.mubr.bf16.gmra.mxu0 %v1832
  %v2633 = vpop.f32.mrf.mxu0
  %v2634 = vadd.f32 %v536, %v2633
  %v2635 = vpop.f32.mrf.mxu0
  %v2636 = vpop.f32.mrf.mxu0
  %v2637 = vadd.f32 %v536, %v2636
  %v2638 = vpop.f32.mrf.mxu0
  %2639 = vmatprep.mubr.bf16.mxu0 0
  %2640 = vmatmul.mubr.bf16.gmra.mxu0 %v1835
  %v2641 = vpop.f32.mrf.mxu0
  %v2642 = vadd.f32 %v536, %v2641
  %v2643 = vpop.f32.mrf.mxu0
  %v2644 = vpop.f32.mrf.mxu0
  %v2645 = vadd.f32 %v536, %v2644
  %v2646 = vpop.f32.mrf.mxu0
  %2647 = vmatprep.mubr.bf16.mxu0 0
  %2648 = vmatmul.mubr.bf16.gmra.mxu0 %v1838
  %v2649 = vpop.f32.mrf.mxu0
  %v2650 = vadd.f32 %v536, %v2649
  %v2651 = vpop.f32.mrf.mxu0
  %v2652 = vpop.f32.mrf.mxu0
  %v2653 = vadd.f32 %v536, %v2652
  %v2654 = vpop.f32.mrf.mxu0
  %2655 = vmatprep.mubr.bf16.mxu0 0
  %2656 = vmatmul.mubr.bf16.gmra.mxu0 %v1841
  %v2657 = vpop.f32.mrf.mxu0
  %v2658 = vadd.f32 %v536, %v2657
  %v2659 = vpop.f32.mrf.mxu0
  %v2660 = vpop.f32.mrf.mxu0
  %v2661 = vadd.f32 %v536, %v2660
  %v2662 = vpop.f32.mrf.mxu0
  %2663 = vmatprep.mubr.bf16.mxu0 0
  %2664 = vmatmul.mubr.bf16.gmra.mxu0 %v1844
  %v2665 = vpop.f32.mrf.mxu0
  %v2666 = vadd.f32 %v536, %v2665
  %v2667 = vpop.f32.mrf.mxu0
  %v2668 = vpop.f32.mrf.mxu0
  %v2669 = vadd.f32 %v536, %v2668
  %v2670 = vpop.f32.mrf.mxu0
  %2671 = vmatprep.mubr.bf16.mxu0 0
  %2672 = vmatmul.mubr.bf16.gmra.mxu0 %v1847
  %v2673 = vpop.f32.mrf.mxu0
  %v2674 = vadd.f32 %v536, %v2673
  %v2675 = vpop.f32.mrf.mxu0
  %v2676 = vpop.f32.mrf.mxu0
  %v2677 = vadd.f32 %v536, %v2676
  %v2678 = vpop.f32.mrf.mxu0
  %2679 = vmatprep.mubr.bf16.mxu0 0
  %2680 = vmatmul.mubr.bf16.gmra.mxu0 %v1850
  %v2681 = vpop.f32.mrf.mxu0
  %v2682 = vadd.f32 %v536, %v2681
  %v2683 = vpop.f32.mrf.mxu0
  %v2684 = vpop.f32.mrf.mxu0
  %v2685 = vadd.f32 %v536, %v2684
  %v2686 = vpop.f32.mrf.mxu0
  %2687 = vmatprep.mubr.bf16.mxu0 0
  %2688 = vmatmul.mubr.bf16.gmra.mxu0 %v1853
  %v2689 = vpop.f32.mrf.mxu0
  %v2690 = vadd.f32 %v536, %v2689
  %v2691 = vpop.f32.mrf.mxu0
  %v2692 = vpop.f32.mrf.mxu0
  %v2693 = vadd.f32 %v536, %v2692
  %v2694 = vpop.f32.mrf.mxu0
  %2695 = vmatprep.mubr.bf16.mxu0 0
  %2696 = vmatmul.mubr.bf16.gmra.mxu0 %v1856
  %v2697 = vpop.f32.mrf.mxu0
  %v2698 = vadd.f32 %v536, %v2697
  %v2699 = vpop.f32.mrf.mxu0
  %v2700 = vpop.f32.mrf.mxu0
  %v2701 = vadd.f32 %v536, %v2700
  %v2702 = vpop.f32.mrf.mxu0
  %2703 = vmatprep.mubr.bf16.mxu0 0
  %2704 = vmatmul.mubr.bf16.gmra.mxu0 %v1859
  %v2705 = vpop.f32.mrf.mxu0
  %v2706 = vadd.f32 %v536, %v2705
  %v2707 = vpop.f32.mrf.mxu0
  %v2708 = vpop.f32.mrf.mxu0
  %v2709 = vadd.f32 %v536, %v2708
  %v2710 = vpop.f32.mrf.mxu0
  %2711 = vmatprep.mubr.bf16.mxu0 0
  %2712 = vmatmul.mubr.bf16.gmra.mxu0 %v1862
  %v2713 = vpop.f32.mrf.mxu0
  %v2714 = vadd.f32 %v536, %v2713
  %v2715 = vpop.f32.mrf.mxu0
  %v2716 = vpop.f32.mrf.mxu0
  %v2717 = vadd.f32 %v536, %v2716
  %v2718 = vpop.f32.mrf.mxu0
  %2719 = vmatprep.mubr.bf16.mxu0 0
  %2720 = vmatmul.mubr.bf16.gmra.mxu0 %v1865
  %v2721 = vpop.f32.mrf.mxu0
  %v2722 = vadd.f32 %v536, %v2721
  %v2723 = vpop.f32.mrf.mxu0
  %v2724 = vpop.f32.mrf.mxu0
  %v2725 = vadd.f32 %v536, %v2724
  %v2726 = vpop.f32.mrf.mxu0
  %2727 = vmatprep.mubr.bf16.mxu0 0
  %2728 = vmatmul.mubr.bf16.gmra.mxu0 %v1868
  %v2729 = vpop.f32.mrf.mxu0
  %v2730 = vadd.f32 %v536, %v2729
  %v2731 = vpop.f32.mrf.mxu0
  %v2732 = vpop.f32.mrf.mxu0
  %v2733 = vadd.f32 %v536, %v2732
  %v2734 = vpop.f32.mrf.mxu0
  %2735 = vmatprep.mubr.bf16.mxu0 0
  %2736 = vmatmul.mubr.bf16.gmra.mxu0 %v1871
  %v2737 = vpop.f32.mrf.mxu0
  %v2738 = vadd.f32 %v536, %v2737
  %v2739 = vpop.f32.mrf.mxu0
  %v2740 = vpop.f32.mrf.mxu0
  %v2741 = vadd.f32 %v536, %v2740
  %v2742 = vpop.f32.mrf.mxu0
  %2743 = vmatprep.mubr.bf16.mxu0 0
  %2744 = vmatmul.mubr.bf16.gmra.mxu0 %v1874
  %v2745 = vpop.f32.mrf.mxu0
  %v2746 = vadd.f32 %v536, %v2745
  %v2747 = vpop.f32.mrf.mxu0
  %v2748 = vpop.f32.mrf.mxu0
  %v2749 = vadd.f32 %v536, %v2748
  %v2750 = vpop.f32.mrf.mxu0
  %2751 = vmatprep.mubr.bf16.mxu0 0
  %2752 = vmatmul.mubr.bf16.gmra.mxu0 %v1877
  %v2753 = vpop.f32.mrf.mxu0
  %v2754 = vadd.f32 %v536, %v2753
  %v2755 = vpop.f32.mrf.mxu0
  %v2756 = vpop.f32.mrf.mxu0
  %v2757 = vadd.f32 %v536, %v2756
  %v2758 = vpop.f32.mrf.mxu0
  %2759 = vmatprep.mubr.bf16.mxu0 0
  %2760 = vmatmul.mubr.bf16.gmra.mxu0 %v1880
  %v2761 = vpop.f32.mrf.mxu0
  %v2762 = vadd.f32 %v536, %v2761
  %v2763 = vpop.f32.mrf.mxu0
  %v2764 = vpop.f32.mrf.mxu0
  %v2765 = vadd.f32 %v536, %v2764
  %v2766 = vpop.f32.mrf.mxu0
  %2767 = vmatprep.mubr.bf16.mxu0 0
  %2768 = vmatmul.mubr.bf16.gmra.mxu0 %v1883
  %v2769 = vpop.f32.mrf.mxu0
  %v2770 = vadd.f32 %v536, %v2769
  %v2771 = vpop.f32.mrf.mxu0
  %v2772 = vpop.f32.mrf.mxu0
  %v2773 = vadd.f32 %v536, %v2772
  %v2774 = vpop.f32.mrf.mxu0
  %2775 = vmatprep.mubr.bf16.mxu0 0
  %2776 = vmatmul.mubr.bf16.gmra.mxu0 %v1886
  %v2777 = vpop.f32.mrf.mxu0
  %v2778 = vadd.f32 %v536, %v2777
  %v2779 = vpop.f32.mrf.mxu0
  %v2780 = vpop.f32.mrf.mxu0
  %v2781 = vadd.f32 %v536, %v2780
  %v2782 = vpop.f32.mrf.mxu0
  %2783 = vmatprep.mubr.bf16.mxu0 0
  %2784 = vmatmul.mubr.bf16.gmra.mxu0 %v1889
  %v2785 = vpop.f32.mrf.mxu0
  %v2786 = vadd.f32 %v536, %v2785
  %v2787 = vpop.f32.mrf.mxu0
  %v2788 = vpop.f32.mrf.mxu0
  %v2789 = vadd.f32 %v536, %v2788
  %v2790 = vpop.f32.mrf.mxu0
  %2791 = vmatprep.mubr.bf16.mxu0 0
  %2792 = vmatmul.mubr.bf16.gmra.mxu0 %v1892
  %v2793 = vpop.f32.mrf.mxu0
  %v2794 = vadd.f32 %v536, %v2793
  %v2795 = vpop.f32.mrf.mxu0
  %v2796 = vpop.f32.mrf.mxu0
  %v2797 = vadd.f32 %v536, %v2796
  %v2798 = vpop.f32.mrf.mxu0
  %2799 = vmatprep.mubr.bf16.mxu0 0
  %2800 = vmatmul.mubr.bf16.gmra.mxu0 %v1895
  %v2801 = vpop.f32.mrf.mxu0
  %v2802 = vadd.f32 %v536, %v2801
  %v2803 = vpop.f32.mrf.mxu0
  %v2804 = vpop.f32.mrf.mxu0
  %v2805 = vadd.f32 %v536, %v2804
  %v2806 = vpop.f32.mrf.mxu0
  %2807 = vmatprep.mubr.bf16.mxu0 0
  %2808 = vmatmul.mubr.bf16.gmra.mxu0 %v1898
  %v2809 = vpop.f32.mrf.mxu0
  %v2810 = vadd.f32 %v536, %v2809
  %v2811 = vpop.f32.mrf.mxu0
  %v2812 = vpop.f32.mrf.mxu0
  %v2813 = vadd.f32 %v536, %v2812
  %v2814 = vpop.f32.mrf.mxu0
  %2815 = vmatprep.mubr.bf16.mxu0 0
  %2816 = vmatmul.mubr.bf16.gmra.mxu0 %v1901
  %v2817 = vpop.f32.mrf.mxu0
  %v2818 = vadd.f32 %v536, %v2817
  %v2819 = vpop.f32.mrf.mxu0
  %v2820 = vpop.f32.mrf.mxu0
  %v2821 = vadd.f32 %v536, %v2820
  %v2822 = vpop.f32.mrf.mxu0
  %2823 = vmatprep.mubr.bf16.mxu0 0
  %2824 = vmatmul.mubr.bf16.gmra.mxu0 %v1904
  %v2825 = vpop.f32.mrf.mxu0
  %v2826 = vadd.f32 %v536, %v2825
  %v2827 = vpop.f32.mrf.mxu0
  %v2828 = vpop.f32.mrf.mxu0
  %v2829 = vadd.f32 %v536, %v2828
  %v2830 = vpop.f32.mrf.mxu0
  %2831 = vmatprep.mubr.bf16.mxu0 0
  %2832 = vmatmul.mubr.bf16.gmra.mxu0 %v1907
  %v2833 = vpop.f32.mrf.mxu0
  %v2834 = vadd.f32 %v536, %v2833
  %v2835 = vpop.f32.mrf.mxu0
  %v2836 = vpop.f32.mrf.mxu0
  %v2837 = vadd.f32 %v536, %v2836
  %v2838 = vpop.f32.mrf.mxu0
  %2839 = vmatprep.mubr.bf16.mxu0 0
  %2840 = vmatmul.mubr.bf16.gmra.mxu0 %v1910
  %v2841 = vpop.f32.mrf.mxu0
  %v2842 = vadd.f32 %v536, %v2841
  %v2843 = vpop.f32.mrf.mxu0
  %v2844 = vpop.f32.mrf.mxu0
  %v2845 = vadd.f32 %v536, %v2844
  %v2846 = vpop.f32.mrf.mxu0
  %2847 = vmatprep.mubr.bf16.mxu0 0
  %2848 = vmatmul.mubr.bf16.gmra.mxu0 %v1913
  %v2849 = vpop.f32.mrf.mxu0
  %v2850 = vadd.f32 %v536, %v2849
  %v2851 = vpop.f32.mrf.mxu0
  %v2852 = vpop.f32.mrf.mxu0
  %v2853 = vadd.f32 %v536, %v2852
  %v2854 = vpop.f32.mrf.mxu0
  %2855 = vmatprep.mubr.bf16.mxu0 0
  %2856 = vmatmul.mubr.bf16.gmra.mxu0 %v1916
  %v2857 = vpop.f32.mrf.mxu0
  %v2858 = vadd.f32 %v536, %v2857
  %v2859 = vpop.f32.mrf.mxu0
  %v2860 = vpop.f32.mrf.mxu0
  %v2861 = vadd.f32 %v536, %v2860
  %v2862 = vpop.f32.mrf.mxu0
  %2863 = vmatprep.mubr.bf16.mxu0 0
  %2864 = vmatmul.mubr.bf16.gmra.mxu0 %v1919
  %v2865 = vpop.f32.mrf.mxu0
  %v2866 = vadd.f32 %v536, %v2865
  %v2867 = vpop.f32.mrf.mxu0
  %v2868 = vpop.f32.mrf.mxu0
  %v2869 = vadd.f32 %v536, %v2868
  %v2870 = vpop.f32.mrf.mxu0
  %2871 = vmatprep.mubr.bf16.mxu0 0
  %2872 = vmatmul.mubr.bf16.gmra.mxu0 %v1922
  %v2873 = vpop.f32.mrf.mxu0
  %v2874 = vadd.f32 %v536, %v2873
  %v2875 = vpop.f32.mrf.mxu0
  %v2876 = vpop.f32.mrf.mxu0
  %v2877 = vadd.f32 %v536, %v2876
  %v2878 = vpop.f32.mrf.mxu0
  %2879 = vmatprep.mubr.bf16.mxu0 0
  %2880 = vmatmul.mubr.bf16.gmra.mxu0 %v1925
  %v2881 = vpop.f32.mrf.mxu0
  %v2882 = vadd.f32 %v536, %v2881
  %v2883 = vpop.f32.mrf.mxu0
  %v2884 = vpop.f32.mrf.mxu0
  %v2885 = vadd.f32 %v536, %v2884
  %v2886 = vpop.f32.mrf.mxu0
  %2887 = vmatprep.mubr.bf16.mxu0 0
  %2888 = vmatmul.mubr.bf16.gmra.mxu0 %v1928
  %v2889 = vpop.f32.mrf.mxu0
  %v2890 = vadd.f32 %v536, %v2889
  %v2891 = vpop.f32.mrf.mxu0
  %v2892 = vpop.f32.mrf.mxu0
  %v2893 = vadd.f32 %v536, %v2892
  %v2894 = vpop.f32.mrf.mxu0
  %2895 = vmatprep.mubr.bf16.mxu0 0
  %2896 = vmatmul.mubr.bf16.gmra.mxu0 %v1931
  %v2897 = vpop.f32.mrf.mxu0
  %v2898 = vadd.f32 %v536, %v2897
  %v2899 = vpop.f32.mrf.mxu0
  %v2900 = vpop.f32.mrf.mxu0
  %v2901 = vadd.f32 %v536, %v2900
  %v2902 = vpop.f32.mrf.mxu0
  %2903 = vmatprep.mubr.bf16.mxu0 0
  %2904 = vmatmul.mubr.bf16.gmra.mxu0 %v1934
  %v2905 = vpop.f32.mrf.mxu0
  %v2906 = vadd.f32 %v536, %v2905
  %v2907 = vpop.f32.mrf.mxu0
  %v2908 = vpop.f32.mrf.mxu0
  %v2909 = vadd.f32 %v536, %v2908
  %v2910 = vpop.f32.mrf.mxu0
  %2911 = vmatprep.mubr.bf16.mxu0 0
  %2912 = vmatmul.mubr.bf16.gmra.mxu0 %v1937
  %v2913 = vpop.f32.mrf.mxu0
  %v2914 = vadd.f32 %v536, %v2913
  %v2915 = vpop.f32.mrf.mxu0
  %v2916 = vpop.f32.mrf.mxu0
  %v2917 = vadd.f32 %v536, %v2916
  %v2918 = vpop.f32.mrf.mxu0
  %2919 = vmatprep.mubr.bf16.mxu0 0
  %2920 = vmatmul.mubr.bf16.gmra.mxu0 %v1940
  %v2921 = vpop.f32.mrf.mxu0
  %v2922 = vadd.f32 %v536, %v2921
  %v2923 = vpop.f32.mrf.mxu0
  %v2924 = vpop.f32.mrf.mxu0
  %v2925 = vadd.f32 %v536, %v2924
  %v2926 = vpop.f32.mrf.mxu0
  %2927 = vmatprep.mubr.bf16.mxu0 0
  %2928 = vmatmul.mubr.bf16.gmra.mxu0 %v1943
  %v2929 = vpop.f32.mrf.mxu0
  %v2930 = vadd.f32 %v536, %v2929
  %v2931 = vpop.f32.mrf.mxu0
  %v2932 = vpop.f32.mrf.mxu0
  %v2933 = vadd.f32 %v536, %v2932
  %v2934 = vpop.f32.mrf.mxu0
  %2935 = vmatprep.mubr.bf16.mxu0 0
  %2936 = vmatmul.mubr.bf16.gmra.mxu0 %v1946
  %v2937 = vpop.f32.mrf.mxu0
  %v2938 = vadd.f32 %v536, %v2937
  %v2939 = vpop.f32.mrf.mxu0
  %v2940 = vpop.f32.mrf.mxu0
  %v2941 = vadd.f32 %v536, %v2940
  %v2942 = vpop.f32.mrf.mxu0
  %2943 = vmatprep.mubr.bf16.mxu0 0
  %2944 = vmatmul.mubr.bf16.gmra.mxu0 %v1949
  %v2945 = vpop.f32.mrf.mxu0
  %v2946 = vadd.f32 %v536, %v2945
  %v2947 = vpop.f32.mrf.mxu0
  %v2948 = vpop.f32.mrf.mxu0
  %v2949 = vadd.f32 %v536, %v2948
  %v2950 = vpop.f32.mrf.mxu0
  %2951 = vmatprep.mubr.bf16.mxu0 0
  %2952 = vmatmul.mubr.bf16.gmra.mxu0 %v1952
  %v2953 = vpop.f32.mrf.mxu0
  %v2954 = vadd.f32 %v536, %v2953
  %v2955 = vpop.f32.mrf.mxu0
  %v2956 = vpop.f32.mrf.mxu0
  %v2957 = vadd.f32 %v536, %v2956
  %v2958 = vpop.f32.mrf.mxu0
  %2959 = vmatprep.mubr.bf16.mxu0 0
  %2960 = vmatmul.mubr.bf16.gmra.mxu0 %v1955
  %v2961 = vpop.f32.mrf.mxu0
  %v2962 = vadd.f32 %v536, %v2961
  %v2963 = vpop.f32.mrf.mxu0
  %v2964 = vpop.f32.mrf.mxu0
  %v2965 = vadd.f32 %v536, %v2964
  %v2966 = vpop.f32.mrf.mxu0
  %2967 = vmatprep.mubr.bf16.mxu0 0
  %2968 = vmatmul.mubr.bf16.gmra.mxu0 %v1958
  %v2969 = vpop.f32.mrf.mxu0
  %v2970 = vadd.f32 %v536, %v2969
  %v2971 = vpop.f32.mrf.mxu0
  %v2972 = vpop.f32.mrf.mxu0
  %v2973 = vadd.f32 %v536, %v2972
  %v2974 = vpop.f32.mrf.mxu0
  %2975 = vmatprep.mubr.bf16.mxu0 0
  %2976 = vmatmul.mubr.bf16.gmra.mxu0 %v1961
  %v2977 = vpop.f32.mrf.mxu0
  %v2978 = vadd.f32 %v536, %v2977
  %v2979 = vpop.f32.mrf.mxu0
  %v2980 = vpop.f32.mrf.mxu0
  %v2981 = vadd.f32 %v536, %v2980
  %v2982 = vpop.f32.mrf.mxu0
  %2983 = vmatprep.mubr.bf16.mxu0 0
  %2984 = vmatmul.mubr.bf16.gmra.mxu0 %v1964
  %v2985 = vpop.f32.mrf.mxu0
  %v2986 = vadd.f32 %v536, %v2985
  %v2987 = vpop.f32.mrf.mxu0
  %v2988 = vpop.f32.mrf.mxu0
  %v2989 = vadd.f32 %v536, %v2988
  %v2990 = vpop.f32.mrf.mxu0
  %2991 = vmatprep.mubr.bf16.mxu0 0
  %2992 = vmatmul.mubr.bf16.gmra.mxu0 %v1967
  %v2993 = vpop.f32.mrf.mxu0
  %v2994 = vadd.f32 %v536, %v2993
  %v2995 = vpop.f32.mrf.mxu0
  %v2996 = vpop.f32.mrf.mxu0
  %v2997 = vadd.f32 %v536, %v2996
  %v2998 = vpop.f32.mrf.mxu0
  %2999 = vmatprep.mubr.bf16.mxu0 0
  %3000 = vmatmul.mubr.bf16.gmra.mxu0 %v1970
  %v3001 = vpop.f32.mrf.mxu0
  %v3002 = vadd.f32 %v536, %v3001
  %v3003 = vpop.f32.mrf.mxu0
  %v3004 = vpop.f32.mrf.mxu0
  %v3005 = vadd.f32 %v536, %v3004
  %v3006 = vpop.f32.mrf.mxu0
  %3007 = vmatprep.mubr.bf16.mxu0 0
  %3008 = vmatmul.mubr.bf16.gmra.mxu0 %v1973
  %v3009 = vpop.f32.mrf.mxu0
  %v3010 = vadd.f32 %v536, %v3009
  %v3011 = vpop.f32.mrf.mxu0
  %v3012 = vpop.f32.mrf.mxu0
  %v3013 = vadd.f32 %v536, %v3012
  %v3014 = vpop.f32.mrf.mxu0
  %3015 = vmatprep.mubr.bf16.mxu0 0
  %3016 = vmatmul.mubr.bf16.gmra.mxu0 %v1976
  %v3017 = vpop.f32.mrf.mxu0
  %v3018 = vadd.f32 %v536, %v3017
  %v3019 = vpop.f32.mrf.mxu0
  %v3020 = vpop.f32.mrf.mxu0
  %v3021 = vadd.f32 %v536, %v3020
  %v3022 = vpop.f32.mrf.mxu0
  %3023 = vmatprep.mubr.bf16.mxu0 0
  %3024 = vmatmul.mubr.bf16.gmra.mxu0 %v1979
  %v3025 = vpop.f32.mrf.mxu0
  %v3026 = vadd.f32 %v536, %v3025
  %v3027 = vpop.f32.mrf.mxu0
  %v3028 = vpop.f32.mrf.mxu0
  %v3029 = vadd.f32 %v536, %v3028
  %v3030 = vpop.f32.mrf.mxu0
  %3031 = vmatprep.mubr.bf16.mxu0 0
  %3032 = vmatmul.mubr.bf16.gmra.mxu0 %v1982
  %v3033 = vpop.f32.mrf.mxu0
  %v3034 = vadd.f32 %v536, %v3033
  %v3035 = vpop.f32.mrf.mxu0
  %v3036 = vpop.f32.mrf.mxu0
  %v3037 = vadd.f32 %v536, %v3036
  %v3038 = vpop.f32.mrf.mxu0
  %3039 = vmatprep.mubr.bf16.mxu0 0
  %3040 = vmatmul.mubr.bf16.gmra.mxu0 %v1985
  %v3041 = vpop.f32.mrf.mxu0
  %v3042 = vadd.f32 %v536, %v3041
  %v3043 = vpop.f32.mrf.mxu0
  %v3044 = vpop.f32.mrf.mxu0
  %v3045 = vadd.f32 %v536, %v3044
  %v3046 = vpop.f32.mrf.mxu0
  %3047 = vmatprep.mubr.bf16.mxu0 0
  %3048 = vmatmul.mubr.bf16.gmra.mxu0 %v1988
  %v3049 = vpop.f32.mrf.mxu0
  %v3050 = vadd.f32 %v536, %v3049
  %v3051 = vpop.f32.mrf.mxu0
  %v3052 = vpop.f32.mrf.mxu0
  %v3053 = vadd.f32 %v536, %v3052
  %v3054 = vpop.f32.mrf.mxu0
  %3055 = vmatprep.mubr.bf16.mxu0 0
  %3056 = vmatmul.mubr.bf16.gmra.mxu0 %v1991
  %v3057 = vpop.f32.mrf.mxu0
  %v3058 = vadd.f32 %v536, %v3057
  %v3059 = vpop.f32.mrf.mxu0
  %v3060 = vpop.f32.mrf.mxu0
  %v3061 = vadd.f32 %v536, %v3060
  %v3062 = vpop.f32.mrf.mxu0
  %3063 = vmatprep.mubr.bf16.mxu0 0
  %3064 = vmatmul.mubr.bf16.gmra.mxu0 %v1994
  %v3065 = vpop.f32.mrf.mxu0
  %v3066 = vadd.f32 %v536, %v3065
  %v3067 = vpop.f32.mrf.mxu0
  %v3068 = vpop.f32.mrf.mxu0
  %v3069 = vadd.f32 %v536, %v3068
  %v3070 = vpop.f32.mrf.mxu0
  %3071 = vmatprep.mubr.bf16.mxu0 0
  %3072 = vmatmul.mubr.bf16.gmra.mxu0 %v1997
  %v3073 = vpop.f32.mrf.mxu0
  %v3074 = vadd.f32 %v536, %v3073
  %v3075 = vpop.f32.mrf.mxu0
  %v3076 = vpop.f32.mrf.mxu0
  %v3077 = vadd.f32 %v536, %v3076
  %v3078 = vpop.f32.mrf.mxu0
  %3079 = vmatprep.mubr.bf16.mxu0 0
  %3080 = vmatmul.mubr.bf16.gmra.mxu0 %v2000
  %v3081 = vpop.f32.mrf.mxu0
  %v3082 = vadd.f32 %v536, %v3081
  %v3083 = vpop.f32.mrf.mxu0
  %v3084 = vpop.f32.mrf.mxu0
  %v3085 = vadd.f32 %v536, %v3084
  %v3086 = vpop.f32.mrf.mxu0
  %3087 = vmatprep.mubr.bf16.mxu0 0
  %3088 = vmatmul.mubr.bf16.gmra.mxu0 %v2003
  %v3089 = vpop.f32.mrf.mxu0
  %v3090 = vadd.f32 %v536, %v3089
  %v3091 = vpop.f32.mrf.mxu0
  %v3092 = vpop.f32.mrf.mxu0
  %v3093 = vadd.f32 %v536, %v3092
  %v3094 = vpop.f32.mrf.mxu0
  %3095 = vmatprep.mubr.bf16.mxu0 0
  %3096 = vmatmul.mubr.bf16.gmra.mxu0 %v2006
  %v3097 = vpop.f32.mrf.mxu0
  %v3098 = vadd.f32 %v536, %v3097
  %v3099 = vpop.f32.mrf.mxu0
  %v3100 = vpop.f32.mrf.mxu0
  %v3101 = vadd.f32 %v536, %v3100
  %v3102 = vpop.f32.mrf.mxu0
  %3103 = vmatprep.mubr.bf16.mxu0 0
  %3104 = vmatmul.mubr.bf16.gmra.mxu0 %v2009
  %v3105 = vpop.f32.mrf.mxu0
  %v3106 = vadd.f32 %v536, %v3105
  %v3107 = vpop.f32.mrf.mxu0
  %v3108 = vpop.f32.mrf.mxu0
  %v3109 = vadd.f32 %v536, %v3108
  %v3110 = vpop.f32.mrf.mxu0
  %3111 = vmatprep.mubr.bf16.mxu0 0
  %3112 = vmatmul.mubr.bf16.gmra.mxu0 %v2012
  %v3113 = vpop.f32.mrf.mxu0
  %v3114 = vadd.f32 %v536, %v3113
  %v3115 = vpop.f32.mrf.mxu0
  %v3116 = vpop.f32.mrf.mxu0
  %v3117 = vadd.f32 %v536, %v3116
  %v3118 = vpop.f32.mrf.mxu0
  %3119 = vmatprep.mubr.bf16.mxu0 0
  %3120 = vmatmul.mubr.bf16.gmra.mxu0 %v2015
  %v3121 = vpop.f32.mrf.mxu0
  %v3122 = vadd.f32 %v536, %v3121
  %v3123 = vpop.f32.mrf.mxu0
  %v3124 = vpop.f32.mrf.mxu0
  %v3125 = vadd.f32 %v536, %v3124
  %v3126 = vpop.f32.mrf.mxu0
  %3127 = vmatprep.mubr.bf16.mxu0 0
  %3128 = vmatmul.mubr.bf16.gmra.mxu0 %v2018
  %v3129 = vpop.f32.mrf.mxu0
  %v3130 = vadd.f32 %v536, %v3129
  %v3131 = vpop.f32.mrf.mxu0
  %v3132 = vpop.f32.mrf.mxu0
  %v3133 = vadd.f32 %v536, %v3132
  %v3134 = vpop.f32.mrf.mxu0
  %3135 = vmatprep.mubr.bf16.mxu0 0
  %3136 = vmatmul.mubr.bf16.gmra.mxu0 %v2021
  %v3137 = vpop.f32.mrf.mxu0
  %v3138 = vadd.f32 %v536, %v3137
  %v3139 = vpop.f32.mrf.mxu0
  %v3140 = vpop.f32.mrf.mxu0
  %v3141 = vadd.f32 %v536, %v3140
  %v3142 = vpop.f32.mrf.mxu0
  %3143 = vmatprep.mubr.bf16.mxu0 0
  %3144 = vmatmul.mubr.bf16.gmra.mxu0 %v2024
  %v3145 = vpop.f32.mrf.mxu0
  %v3146 = vadd.f32 %v536, %v3145
  %v3147 = vpop.f32.mrf.mxu0
  %v3148 = vpop.f32.mrf.mxu0
  %v3149 = vadd.f32 %v536, %v3148
  %v3150 = vpop.f32.mrf.mxu0
  %3151 = vmatprep.mubr.bf16.mxu0 0
  %3152 = vmatmul.mubr.bf16.gmra.mxu0 %v2027
  %v3153 = vpop.f32.mrf.mxu0
  %v3154 = vadd.f32 %v536, %v3153
  %v3155 = vpop.f32.mrf.mxu0
  %v3156 = vpop.f32.mrf.mxu0
  %v3157 = vadd.f32 %v536, %v3156
  %v3158 = vpop.f32.mrf.mxu0
  %3159 = vmatprep.mubr.bf16.mxu0 0
  %3160 = vmatmul.mubr.bf16.gmra.mxu0 %v2030
  %v3161 = vpop.f32.mrf.mxu0
  %v3162 = vadd.f32 %v536, %v3161
  %v3163 = vpop.f32.mrf.mxu0
  %v3164 = vpop.f32.mrf.mxu0
  %v3165 = vadd.f32 %v536, %v3164
  %v3166 = vpop.f32.mrf.mxu0
  %3167 = vmatprep.mubr.bf16.mxu0 0
  %3168 = vmatmul.mubr.bf16.gmra.mxu0 %v2033
  %v3169 = vpop.f32.mrf.mxu0
  %v3170 = vadd.f32 %v536, %v3169
  %v3171 = vpop.f32.mrf.mxu0
  %v3172 = vpop.f32.mrf.mxu0
  %v3173 = vadd.f32 %v536, %v3172
  %v3174 = vpop.f32.mrf.mxu0
  %3175 = vmatprep.mubr.bf16.mxu0 0
  %3176 = vmatmul.mubr.bf16.gmra.mxu0 %v2036
  %v3177 = vpop.f32.mrf.mxu0
  %v3178 = vadd.f32 %v536, %v3177
  %v3179 = vpop.f32.mrf.mxu0
  %v3180 = vpop.f32.mrf.mxu0
  %v3181 = vadd.f32 %v536, %v3180
  %v3182 = vpop.f32.mrf.mxu0
  %3183 = vmatprep.mubr.bf16.mxu0 0
  %3184 = vmatmul.mubr.bf16.gmra.mxu0 %v2039
  %v3185 = vpop.f32.mrf.mxu0
  %v3186 = vadd.f32 %v536, %v3185
  %v3187 = vpop.f32.mrf.mxu0
  %v3188 = vpop.f32.mrf.mxu0
  %v3189 = vadd.f32 %v536, %v3188
  %v3190 = vpop.f32.mrf.mxu0
  %3191 = vmatprep.mubr.bf16.mxu0 0
  %3192 = vmatmul.mubr.bf16.gmra.mxu0 %v2042
  %v3193 = vpop.f32.mrf.mxu0
  %v3194 = vadd.f32 %v536, %v3193
  %v3195 = vpop.f32.mrf.mxu0
  %v3196 = vpop.f32.mrf.mxu0
  %v3197 = vadd.f32 %v536, %v3196
  %v3198 = vpop.f32.mrf.mxu0
  %3199 = vmatprep.mubr.bf16.mxu0 0
  %3200 = vmatmul.mubr.bf16.gmra.mxu0 %v2045
  %v3201 = vpop.f32.mrf.mxu0
  %v3202 = vadd.f32 %v536, %v3201
  %v3203 = vpop.f32.mrf.mxu0
  %v3204 = vpop.f32.mrf.mxu0
  %v3205 = vadd.f32 %v536, %v3204
  %v3206 = vpop.f32.mrf.mxu0
  %3207 = vmatprep.mubr.bf16.mxu0 0
  %3208 = vmatmul.mubr.bf16.gmra.mxu0 %v2048
  %v3209 = vpop.f32.mrf.mxu0
  %v3210 = vadd.f32 %v536, %v3209
  %v3211 = vpop.f32.mrf.mxu0
  %v3212 = vpop.f32.mrf.mxu0
  %v3213 = vadd.f32 %v536, %v3212
  %v3214 = vpop.f32.mrf.mxu0
  %3215 = vmatprep.mubr.bf16.mxu0 0
  %3216 = vmatmul.mubr.bf16.gmra.mxu0 %v2051
  %v3217 = vpop.f32.mrf.mxu0
  %v3218 = vadd.f32 %v536, %v3217
  %v3219 = vpop.f32.mrf.mxu0
  %v3220 = vpop.f32.mrf.mxu0
  %v3221 = vadd.f32 %v536, %v3220
  %v3222 = vpop.f32.mrf.mxu0
  %3223 = vmatprep.mubr.bf16.mxu0 0
  %3224 = vmatmul.mubr.bf16.gmra.mxu0 %v2054
  %v3225 = vpop.f32.mrf.mxu0
  %v3226 = vadd.f32 %v536, %v3225
  %v3227 = vpop.f32.mrf.mxu0
  %v3228 = vpop.f32.mrf.mxu0
  %v3229 = vadd.f32 %v536, %v3228
  %v3230 = vpop.f32.mrf.mxu0
  %3231 = vmatprep.mubr.bf16.mxu0 0
  %3232 = vmatmul.mubr.bf16.gmra.mxu0 %v2057
  %v3233 = vpop.f32.mrf.mxu0
  %v3234 = vadd.f32 %v536, %v3233
  %v3235 = vpop.f32.mrf.mxu0
  %v3236 = vpop.f32.mrf.mxu0
  %v3237 = vadd.f32 %v536, %v3236
  %v3238 = vpop.f32.mrf.mxu0
  %3239 = vmatprep.mubr.bf16.mxu0 0
  %3240 = vmatmul.mubr.bf16.gmra.mxu0 %v2060
  %v3241 = vpop.f32.mrf.mxu0
  %v3242 = vadd.f32 %v536, %v3241
  %v3243 = vpop.f32.mrf.mxu0
  %v3244 = vpop.f32.mrf.mxu0
  %v3245 = vadd.f32 %v536, %v3244
  %v3246 = vpop.f32.mrf.mxu0
  %3247 = vmatprep.mubr.bf16.mxu0 0
  %3248 = vmatmul.mubr.bf16.gmra.mxu0 %v2063
  %v3249 = vpop.f32.mrf.mxu0
  %v3250 = vadd.f32 %v536, %v3249
  %v3251 = vpop.f32.mrf.mxu0
  %v3252 = vpop.f32.mrf.mxu0
  %v3253 = vadd.f32 %v536, %v3252
  %v3254 = vpop.f32.mrf.mxu0
  %3255 = vmatprep.mubr.bf16.mxu0 0
  %3256 = vmatmul.mubr.bf16.gmra.mxu0 %v2066
  %v3257 = vpop.f32.mrf.mxu0
  %v3258 = vadd.f32 %v536, %v3257
  %v3259 = vpop.f32.mrf.mxu0
  %v3260 = vpop.f32.mrf.mxu0
  %v3261 = vadd.f32 %v536, %v3260
  %v3262 = vpop.f32.mrf.mxu0
  %3263 = vmatprep.mubr.bf16.mxu0 0
  %3264 = vmatmul.mubr.bf16.gmra.mxu0 %v2069
  %v3265 = vpop.f32.mrf.mxu0
  %v3266 = vadd.f32 %v536, %v3265
  %v3267 = vpop.f32.mrf.mxu0
  %v3268 = vpop.f32.mrf.mxu0
  %v3269 = vadd.f32 %v536, %v3268
  %v3270 = vpop.f32.mrf.mxu0
  %3271 = vmatprep.mubr.bf16.mxu0 0
  %3272 = vmatmul.mubr.bf16.gmra.mxu0 %v2072
  %v3273 = vpop.f32.mrf.mxu0
  %v3274 = vadd.f32 %v536, %v3273
  %v3275 = vpop.f32.mrf.mxu0
  %v3276 = vpop.f32.mrf.mxu0
  %v3277 = vadd.f32 %v536, %v3276
  %v3278 = vpop.f32.mrf.mxu0
  %3279 = vmatprep.mubr.bf16.mxu0 0
  %3280 = vmatmul.mubr.bf16.gmra.mxu0 %v2075
  %v3281 = vpop.f32.mrf.mxu0
  %v3282 = vadd.f32 %v536, %v3281
  %v3283 = vpop.f32.mrf.mxu0
  %v3284 = vpop.f32.mrf.mxu0
  %v3285 = vadd.f32 %v536, %v3284
  %v3286 = vpop.f32.mrf.mxu0
  %3287 = vmatprep.mubr.bf16.mxu0 0
  %3288 = vmatmul.mubr.bf16.gmra.mxu0 %v2078
  %v3289 = vpop.f32.mrf.mxu0
  %v3290 = vadd.f32 %v536, %v3289
  %v3291 = vpop.f32.mrf.mxu0
  %v3292 = vpop.f32.mrf.mxu0
  %v3293 = vadd.f32 %v536, %v3292
  %v3294 = vpop.f32.mrf.mxu0
  %3295 = vmatprep.mubr.bf16.mxu0 0
  %3296 = vmatmul.mubr.bf16.gmra.mxu0 %v2081
  %v3297 = vpop.f32.mrf.mxu0
  %v3298 = vadd.f32 %v536, %v3297
  %v3299 = vpop.f32.mrf.mxu0
  %v3300 = vpop.f32.mrf.mxu0
  %v3301 = vadd.f32 %v536, %v3300
  %v3302 = vpop.f32.mrf.mxu0
  %3303 = vmatprep.mubr.bf16.mxu0 0
  %3304 = vmatmul.mubr.bf16.gmra.mxu0 %v2084
  %v3305 = vpop.f32.mrf.mxu0
  %v3306 = vadd.f32 %v536, %v3305
  %v3307 = vpop.f32.mrf.mxu0
  %v3308 = vpop.f32.mrf.mxu0
  %v3309 = vadd.f32 %v536, %v3308
  %v3310 = vpop.f32.mrf.mxu0
  %3311 = vmatprep.mubr.bf16.mxu0 0
  %3312 = vmatmul.mubr.bf16.gmra.mxu0 %v2087
  %v3313 = vpop.f32.mrf.mxu0
  %v3314 = vadd.f32 %v536, %v3313
  %v3315 = vpop.f32.mrf.mxu0
  %v3316 = vpop.f32.mrf.mxu0
  %v3317 = vadd.f32 %v536, %v3316
  %v3318 = vpop.f32.mrf.mxu0
  %3319 = vmatprep.mubr.bf16.mxu0 0
  %3320 = vmatmul.mubr.bf16.gmra.mxu0 %v2090
  %v3321 = vpop.f32.mrf.mxu0
  %v3322 = vadd.f32 %v536, %v3321
  %v3323 = vpop.f32.mrf.mxu0
  %v3324 = vpop.f32.mrf.mxu0
  %v3325 = vadd.f32 %v536, %v3324
  %v3326 = vpop.f32.mrf.mxu0
  %3327 = vmatprep.mubr.bf16.mxu0 0
  %3328 = vmatmul.mubr.bf16.gmra.mxu0 %v2093
  %v3329 = vpop.f32.mrf.mxu0
  %v3330 = vadd.f32 %v536, %v3329
  %v3331 = vpop.f32.mrf.mxu0
  %v3332 = vpop.f32.mrf.mxu0
  %v3333 = vadd.f32 %v536, %v3332
  %v3334 = vpop.f32.mrf.mxu0
  %3335 = vmatprep.mubr.bf16.mxu0 0
  %3336 = vmatmul.mubr.bf16.gmra.mxu0 %v2096
  %v3337 = vpop.f32.mrf.mxu0
  %v3338 = vadd.f32 %v536, %v3337
  %v3339 = vpop.f32.mrf.mxu0
  %v3340 = vpop.f32.mrf.mxu0
  %v3341 = vadd.f32 %v536, %v3340
  %v3342 = vpop.f32.mrf.mxu0
  %3343 = vmatprep.mubr.bf16.mxu0 0
  %3344 = vmatmul.mubr.bf16.gmra.mxu0 %v2099
  %v3345 = vpop.f32.mrf.mxu0
  %v3346 = vadd.f32 %v536, %v3345
  %v3347 = vpop.f32.mrf.mxu0
  %v3348 = vpop.f32.mrf.mxu0
  %v3349 = vadd.f32 %v536, %v3348
  %v3350 = vpop.f32.mrf.mxu0
  %3351 = vmatprep.mubr.bf16.mxu0 0
  %3352 = vmatmul.mubr.bf16.gmra.mxu0 %v2102
  %v3353 = vpop.f32.mrf.mxu0
  %v3354 = vadd.f32 %v536, %v3353
  %v3355 = vpop.f32.mrf.mxu0
  %v3356 = vpop.f32.mrf.mxu0
  %v3357 = vadd.f32 %v536, %v3356
  %v3358 = vpop.f32.mrf.mxu0
  %3359 = vmatprep.mubr.bf16.mxu0 0
  %3360 = vmatmul.mubr.bf16.gmra.mxu0 %v2105
  %v3361 = vpop.f32.mrf.mxu0
  %v3362 = vadd.f32 %v536, %v3361
  %v3363 = vpop.f32.mrf.mxu0
  %v3364 = vpop.f32.mrf.mxu0
  %v3365 = vadd.f32 %v536, %v3364
  %v3366 = vpop.f32.mrf.mxu0
  %3367 = vmatprep.mubr.bf16.mxu0 0
  %3368 = vmatmul.mubr.bf16.gmra.mxu0 %v2108
  %v3369 = vpop.f32.mrf.mxu0
  %v3370 = vadd.f32 %v536, %v3369
  %v3371 = vpop.f32.mrf.mxu0
  %v3372 = vpop.f32.mrf.mxu0
  %v3373 = vadd.f32 %v536, %v3372
  %v3374 = vpop.f32.mrf.mxu0
  %3375 = vmatprep.mubr.bf16.mxu0 0
  %3376 = vmatmul.mubr.bf16.gmra.mxu0 %v2111
  %v3377 = vpop.f32.mrf.mxu0
  %v3378 = vadd.f32 %v536, %v3377
  %v3379 = vpop.f32.mrf.mxu0
  %v3380 = vpop.f32.mrf.mxu0
  %v3381 = vadd.f32 %v536, %v3380
  %v3382 = vpop.f32.mrf.mxu0
  %3383 = vmatprep.mubr.bf16.mxu0 0
  %3384 = vmatmul.mubr.bf16.gmra.mxu0 %v2114
  %v3385 = vpop.f32.mrf.mxu0
  %v3386 = vadd.f32 %v536, %v3385
  %v3387 = vpop.f32.mrf.mxu0
  %v3388 = vpop.f32.mrf.mxu0
  %v3389 = vadd.f32 %v536, %v3388
  %v3390 = vpop.f32.mrf.mxu0
  %3391 = vmatprep.mubr.bf16.mxu0 0
  %3392 = vmatmul.mubr.bf16.gmra.mxu0 %v2117
  %v3393 = vpop.f32.mrf.mxu0
  %v3394 = vadd.f32 %v536, %v3393
  %v3395 = vpop.f32.mrf.mxu0
  %v3396 = vpop.f32.mrf.mxu0
  %v3397 = vadd.f32 %v536, %v3396
  %v3398 = vpop.f32.mrf.mxu0
  %3399 = vmatprep.mubr.bf16.mxu0 0
  %3400 = vmatmul.mubr.bf16.gmra.mxu0 %v2120
  %v3401 = vpop.f32.mrf.mxu0
  %v3402 = vadd.f32 %v536, %v3401
  %v3403 = vpop.f32.mrf.mxu0
  %v3404 = vpop.f32.mrf.mxu0
  %v3405 = vadd.f32 %v536, %v3404
  %v3406 = vpop.f32.mrf.mxu0
  %3407 = vmatprep.mubr.bf16.mxu0 0
  %3408 = vmatmul.mubr.bf16.gmra.mxu0 %v2123
  %v3409 = vpop.f32.mrf.mxu0
  %v3410 = vadd.f32 %v536, %v3409
  %v3411 = vpop.f32.mrf.mxu0
  %v3412 = vpop.f32.mrf.mxu0
  %v3413 = vadd.f32 %v536, %v3412
  %v3414 = vpop.f32.mrf.mxu0
  %3415 = vmatprep.mubr.bf16.mxu0 0
  %3416 = vmatmul.mubr.bf16.gmra.mxu0 %v2126
  %v3417 = vpop.f32.mrf.mxu0
  %v3418 = vadd.f32 %v536, %v3417
  %v3419 = vpop.f32.mrf.mxu0
  %v3420 = vpop.f32.mrf.mxu0
  %v3421 = vadd.f32 %v536, %v3420
  %v3422 = vpop.f32.mrf.mxu0
  %3423 = vmatprep.mubr.bf16.mxu0 0
  %3424 = vmatmul.mubr.bf16.gmra.mxu0 %v2129
  %v3425 = vpop.f32.mrf.mxu0
  %v3426 = vadd.f32 %v536, %v3425
  %v3427 = vpop.f32.mrf.mxu0
  %v3428 = vpop.f32.mrf.mxu0
  %v3429 = vadd.f32 %v536, %v3428
  %v3430 = vpop.f32.mrf.mxu0
  %3431 = vmatprep.mubr.bf16.mxu0 0
  %3432 = vmatmul.mubr.bf16.gmra.mxu0 %v2132
  %v3433 = vpop.f32.mrf.mxu0
  %v3434 = vadd.f32 %v536, %v3433
  %v3435 = vpop.f32.mrf.mxu0
  %v3436 = vpop.f32.mrf.mxu0
  %v3437 = vadd.f32 %v536, %v3436
  %v3438 = vpop.f32.mrf.mxu0
  %3439 = vmatprep.mubr.bf16.mxu0 0
  %3440 = vmatmul.mubr.bf16.gmra.mxu0 %v2135
  %v3441 = vpop.f32.mrf.mxu0
  %v3442 = vadd.f32 %v536, %v3441
  %v3443 = vpop.f32.mrf.mxu0
  %v3444 = vpop.f32.mrf.mxu0
  %v3445 = vadd.f32 %v536, %v3444
  %v3446 = vpop.f32.mrf.mxu0
  %3447 = vmatprep.mubr.bf16.mxu0 0
  %3448 = vmatmul.mubr.bf16.gmra.mxu0 %v2138
  %v3449 = vpop.f32.mrf.mxu0
  %v3450 = vadd.f32 %v536, %v3449
  %v3451 = vpop.f32.mrf.mxu0
  %v3452 = vpop.f32.mrf.mxu0
  %v3453 = vadd.f32 %v536, %v3452
  %v3454 = vpop.f32.mrf.mxu0
  %3455 = vmatprep.mubr.bf16.mxu0 0
  %3456 = vmatmul.mubr.bf16.gmra.mxu0 %v2141
  %v3457 = vpop.f32.mrf.mxu0
  %v3458 = vadd.f32 %v536, %v3457
  %v3459 = vpop.f32.mrf.mxu0
  %v3460 = vpop.f32.mrf.mxu0
  %v3461 = vadd.f32 %v536, %v3460
  %v3462 = vpop.f32.mrf.mxu0
  %3463 = vmatprep.mubr.bf16.mxu0 0
  %3464 = vmatmul.mubr.bf16.gmra.mxu0 %v2144
  %v3465 = vpop.f32.mrf.mxu0
  %v3466 = vadd.f32 %v536, %v3465
  %v3467 = vpop.f32.mrf.mxu0
  %v3468 = vpop.f32.mrf.mxu0
  %v3469 = vadd.f32 %v536, %v3468
  %v3470 = vpop.f32.mrf.mxu0
  %3471 = vmatprep.mubr.bf16.mxu0 0
  %3472 = vmatmul.mubr.bf16.gmra.mxu0 %v2147
  %v3473 = vpop.f32.mrf.mxu0
  %v3474 = vadd.f32 %v536, %v3473
  %v3475 = vpop.f32.mrf.mxu0
  %v3476 = vpop.f32.mrf.mxu0
  %v3477 = vadd.f32 %v536, %v3476
  %v3478 = vpop.f32.mrf.mxu0
  %3479 = vmatprep.mubr.bf16.mxu0 0
  %3480 = vmatmul.mubr.bf16.gmra.mxu0 %v2150
  %v3481 = vpop.f32.mrf.mxu0
  %v3482 = vadd.f32 %v536, %v3481
  %v3483 = vpop.f32.mrf.mxu0
  %v3484 = vpop.f32.mrf.mxu0
  %v3485 = vadd.f32 %v536, %v3484
  %v3486 = vpop.f32.mrf.mxu0
  %3487 = vmatprep.mubr.bf16.mxu0 0
  %3488 = vmatmul.mubr.bf16.gmra.mxu0 %v2153
  %v3489 = vpop.f32.mrf.mxu0
  %v3490 = vadd.f32 %v536, %v3489
  %v3491 = vpop.f32.mrf.mxu0
  %v3492 = vpop.f32.mrf.mxu0
  %v3493 = vadd.f32 %v536, %v3492
  %v3494 = vpop.f32.mrf.mxu0
  %3495 = vmatprep.mubr.bf16.mxu0 0
  %3496 = vmatmul.mubr.bf16.gmra.mxu0 %v2156
  %v3497 = vpop.f32.mrf.mxu0
  %v3498 = vadd.f32 %v536, %v3497
  %v3499 = vpop.f32.mrf.mxu0
  %v3500 = vpop.f32.mrf.mxu0
  %v3501 = vadd.f32 %v536, %v3500
  %v3502 = vpop.f32.mrf.mxu0
  %3503 = vmatprep.mubr.bf16.mxu0 0
  %3504 = vmatmul.mubr.bf16.gmra.mxu0 %v2159
  %v3505 = vpop.f32.mrf.mxu0
  %v3506 = vadd.f32 %v536, %v3505
  %v3507 = vpop.f32.mrf.mxu0
  %v3508 = vpop.f32.mrf.mxu0
  %v3509 = vadd.f32 %v536, %v3508
  %v3510 = vpop.f32.mrf.mxu0
  %3511 = vmatprep.mubr.bf16.mxu0 0
  %3512 = vmatmul.mubr.bf16.gmra.mxu0 %v2162
  %v3513 = vpop.f32.mrf.mxu0
  %v3514 = vadd.f32 %v536, %v3513
  %v3515 = vpop.f32.mrf.mxu0
  %v3516 = vpop.f32.mrf.mxu0
  %v3517 = vadd.f32 %v536, %v3516
  %v3518 = vpop.f32.mrf.mxu0
  %3519 = vmatprep.mubr.bf16.mxu0 0
  %3520 = vmatmul.mubr.bf16.gmra.mxu0 %v2165
  %v3521 = vpop.f32.mrf.mxu0
  %v3522 = vadd.f32 %v536, %v3521
  %v3523 = vpop.f32.mrf.mxu0
  %v3524 = vpop.f32.mrf.mxu0
  %v3525 = vadd.f32 %v536, %v3524
  %v3526 = vpop.f32.mrf.mxu0
  %3527 = vmatprep.mubr.bf16.mxu0 0
  %3528 = vmatmul.mubr.bf16.gmra.mxu0 %v2168
  %v3529 = vpop.f32.mrf.mxu0
  %v3530 = vadd.f32 %v536, %v3529
  %v3531 = vpop.f32.mrf.mxu0
  %v3532 = vpop.f32.mrf.mxu0
  %v3533 = vadd.f32 %v536, %v3532
  %v3534 = vpop.f32.mrf.mxu0
  %3535 = vmatprep.mubr.bf16.mxu0 0
  %3536 = vmatmul.mubr.bf16.gmra.mxu0 %v2171
  %v3537 = vpop.f32.mrf.mxu0
  %v3538 = vadd.f32 %v536, %v3537
  %v3539 = vpop.f32.mrf.mxu0
  %v3540 = vpop.f32.mrf.mxu0
  %v3541 = vadd.f32 %v536, %v3540
  %v3542 = vpop.f32.mrf.mxu0
  %3543 = vmatprep.mubr.bf16.mxu0 0
  %3544 = vmatmul.mubr.bf16.gmra.mxu0 %v2174
  %v3545 = vpop.f32.mrf.mxu0
  %v3546 = vadd.f32 %v536, %v3545
  %v3547 = vpop.f32.mrf.mxu0
  %v3548 = vpop.f32.mrf.mxu0
  %v3549 = vadd.f32 %v536, %v3548
  %v3550 = vpop.f32.mrf.mxu0
  %3551 = vmatprep.mubr.bf16.mxu0 0
  %3552 = vmatmul.mubr.bf16.gmra.mxu0 %v2177
  %v3553 = vpop.f32.mrf.mxu0
  %v3554 = vadd.f32 %v536, %v3553
  %v3555 = vpop.f32.mrf.mxu0
  %v3556 = vpop.f32.mrf.mxu0
  %v3557 = vadd.f32 %v536, %v3556
  %v3558 = vpop.f32.mrf.mxu0
  %3559 = vmatprep.mubr.bf16.mxu0 0
  %3560 = vmatmul.mubr.bf16.gmra.mxu0 %v2180
  %v3561 = vpop.f32.mrf.mxu0
  %v3562 = vadd.f32 %v536, %v3561
  %v3563 = vpop.f32.mrf.mxu0
  %v3564 = vpop.f32.mrf.mxu0
  %v3565 = vadd.f32 %v536, %v3564
  %v3566 = vpop.f32.mrf.mxu0
  %3567 = vmatprep.mubr.bf16.mxu0 0
  %3568 = vmatmul.mubr.bf16.gmra.mxu0 %v2183
  %v3569 = vpop.f32.mrf.mxu0
  %v3570 = vadd.f32 %v536, %v3569
  %v3571 = vpop.f32.mrf.mxu0
  %v3572 = vpop.f32.mrf.mxu0
  %v3573 = vadd.f32 %v536, %v3572
  %v3574 = vpop.f32.mrf.mxu0
  %3575 = vmatprep.mubr.bf16.mxu0 0
  %3576 = vmatmul.mubr.bf16.gmra.mxu0 %v2186
  %v3577 = vpop.f32.mrf.mxu0
  %v3578 = vadd.f32 %v536, %v3577
  %v3579 = vpop.f32.mrf.mxu0
  %v3580 = vpop.f32.mrf.mxu0
  %v3581 = vadd.f32 %v536, %v3580
  %v3582 = vpop.f32.mrf.mxu0
  %3583 = vmatprep.mubr.bf16.mxu0 0
  %3584 = vmatmul.mubr.bf16.gmra.mxu0 %v2189
  %v3585 = vpop.f32.mrf.mxu0
  %v3586 = vadd.f32 %v536, %v3585
  %v3587 = vpop.f32.mrf.mxu0
  %v3588 = vpop.f32.mrf.mxu0
  %v3589 = vadd.f32 %v536, %v3588
  %v3590 = vpop.f32.mrf.mxu0
  %3591 = vmatprep.mubr.bf16.mxu0 0
  %3592 = vmatmul.mubr.bf16.gmra.mxu0 %v2192
  %v3593 = vpop.f32.mrf.mxu0
  %v3594 = vadd.f32 %v536, %v3593
  %v3595 = vpop.f32.mrf.mxu0
  %v3596 = vpop.f32.mrf.mxu0
  %v3597 = vadd.f32 %v536, %v3596
  %v3598 = vpop.f32.mrf.mxu0
  %3599 = vmatprep.mubr.bf16.mxu0 0
  %3600 = vmatmul.mubr.bf16.gmra.mxu0 %v2195
  %v3601 = vpop.f32.mrf.mxu0
  %v3602 = vadd.f32 %v536, %v3601
  %v3603 = vpop.f32.mrf.mxu0
  %v3604 = vpop.f32.mrf.mxu0
  %v3605 = vadd.f32 %v536, %v3604
  %v3606 = vpop.f32.mrf.mxu0
  %3607 = vmatprep.mubr.bf16.mxu0 0
  %3608 = vmatmul.mubr.bf16.gmra.mxu0 %v2198
  %v3609 = vpop.f32.mrf.mxu0
  %v3610 = vadd.f32 %v536, %v3609
  %v3611 = vpop.f32.mrf.mxu0
  %v3612 = vpop.f32.mrf.mxu0
  %v3613 = vadd.f32 %v536, %v3612
  %v3614 = vpop.f32.mrf.mxu0
  %3615 = vmatprep.mubr.bf16.mxu0 0
  %3616 = vmatmul.mubr.bf16.gmra.mxu0 %v2201
  %v3617 = vpop.f32.mrf.mxu0
  %v3618 = vadd.f32 %v536, %v3617
  %v3619 = vpop.f32.mrf.mxu0
  %v3620 = vpop.f32.mrf.mxu0
  %v3621 = vadd.f32 %v536, %v3620
  %v3622 = vpop.f32.mrf.mxu0
  %3623 = vmatprep.mubr.bf16.mxu0 0
  %3624 = vmatmul.mubr.bf16.gmra.mxu0 %v2204
  %v3625 = vpop.f32.mrf.mxu0
  %v3626 = vadd.f32 %v536, %v3625
  %v3627 = vpop.f32.mrf.mxu0
  %v3628 = vpop.f32.mrf.mxu0
  %v3629 = vadd.f32 %v536, %v3628
  %v3630 = vpop.f32.mrf.mxu0
  %3631 = vmatprep.mubr.bf16.mxu0 0
  %3632 = vmatmul.mubr.bf16.gmra.mxu0 %v2207
  %v3633 = vpop.f32.mrf.mxu0
  %v3634 = vadd.f32 %v536, %v3633
  %v3635 = vpop.f32.mrf.mxu0
  %v3636 = vpop.f32.mrf.mxu0
  %v3637 = vadd.f32 %v536, %v3636
  %v3638 = vpop.f32.mrf.mxu0
  %3639 = vmatprep.mubr.bf16.mxu0 0
  %3640 = vmatmul.mubr.bf16.gmra.mxu0 %v2210
  %v3641 = vpop.f32.mrf.mxu0
  %v3642 = vadd.f32 %v536, %v3641
  %v3643 = vpop.f32.mrf.mxu0
  %v3644 = vpop.f32.mrf.mxu0
  %v3645 = vadd.f32 %v536, %v3644
  %v3646 = vpop.f32.mrf.mxu0
  %3647 = vmatprep.mubr.bf16.mxu0 0
  %3648 = vmatmul.mubr.bf16.gmra.mxu0 %v2213
  %v3649 = vpop.f32.mrf.mxu0
  %v3650 = vadd.f32 %v536, %v3649
  %v3651 = vpop.f32.mrf.mxu0
  %v3652 = vpop.f32.mrf.mxu0
  %v3653 = vadd.f32 %v536, %v3652
  %v3654 = vpop.f32.mrf.mxu0
  %3655 = vmatprep.mubr.bf16.mxu0 0
  %3656 = vmatmul.mubr.bf16.gmra.mxu0 %v2216
  %v3657 = vpop.f32.mrf.mxu0
  %v3658 = vadd.f32 %v536, %v3657
  %v3659 = vpop.f32.mrf.mxu0
  %v3660 = vpop.f32.mrf.mxu0
  %v3661 = vadd.f32 %v536, %v3660
  %v3662 = vpop.f32.mrf.mxu0
  %3663 = vmatprep.mubr.bf16.mxu0 0
  %3664 = vmatmul.mubr.bf16.gmra.mxu0 %v2219
  %v3665 = vpop.f32.mrf.mxu0
  %v3666 = vadd.f32 %v536, %v3665
  %v3667 = vpop.f32.mrf.mxu0
  %v3668 = vpop.f32.mrf.mxu0
  %v3669 = vadd.f32 %v536, %v3668
  %v3670 = vpop.f32.mrf.mxu0
  %3671 = vmatprep.mubr.bf16.mxu0 0
  %3672 = vmatmul.mubr.bf16.gmra.mxu0 %v2222
  %v3673 = vpop.f32.mrf.mxu0
  %v3674 = vadd.f32 %v536, %v3673
  %v3675 = vpop.f32.mrf.mxu0
  %v3676 = vpop.f32.mrf.mxu0
  %v3677 = vadd.f32 %v536, %v3676
  %v3678 = vpop.f32.mrf.mxu0
  %3679 = vmatprep.mubr.bf16.mxu0 0
  %3680 = vmatmul.mubr.bf16.gmra.mxu0 %v2225
  %v3681 = vpop.f32.mrf.mxu0
  %v3682 = vadd.f32 %v536, %v3681
  %v3683 = vpop.f32.mrf.mxu0
  %v3684 = vpop.f32.mrf.mxu0
  %v3685 = vadd.f32 %v536, %v3684
  %v3686 = vpop.f32.mrf.mxu0
  %3687 = vmatprep.mubr.bf16.mxu0 0
  %3688 = vmatmul.mubr.bf16.gmra.mxu0 %v2228
  %v3689 = vpop.f32.mrf.mxu0
  %v3690 = vadd.f32 %v536, %v3689
  %v3691 = vpop.f32.mrf.mxu0
  %v3692 = vpop.f32.mrf.mxu0
  %v3693 = vadd.f32 %v536, %v3692
  %v3694 = vpop.f32.mrf.mxu0
  %3695 = vmatprep.mubr.bf16.mxu0 0
  %3696 = vmatmul.mubr.bf16.gmra.mxu0 %v2231
  %v3697 = vpop.f32.mrf.mxu0
  %v3698 = vadd.f32 %v536, %v3697
  %v3699 = vpop.f32.mrf.mxu0
  %v3700 = vpop.f32.mrf.mxu0
  %v3701 = vadd.f32 %v536, %v3700
  %v3702 = vpop.f32.mrf.mxu0
  %3703 = vmatprep.mubr.bf16.mxu0 0
  %3704 = vmatmul.mubr.bf16.gmra.mxu0 %v2234
  %v3705 = vpop.f32.mrf.mxu0
  %v3706 = vadd.f32 %v536, %v3705
  %v3707 = vpop.f32.mrf.mxu0
  %v3708 = vpop.f32.mrf.mxu0
  %v3709 = vadd.f32 %v536, %v3708
  %v3710 = vpop.f32.mrf.mxu0
  %3711 = vmatprep.mubr.bf16.mxu0 0
  %3712 = vmatmul.mubr.bf16.gmra.mxu0 %v2237
  %v3713 = vpop.f32.mrf.mxu0
  %v3714 = vadd.f32 %v536, %v3713
  %v3715 = vpop.f32.mrf.mxu0
  %v3716 = vpop.f32.mrf.mxu0
  %v3717 = vadd.f32 %v536, %v3716
  %v3718 = vpop.f32.mrf.mxu0
  %3719 = vmatprep.mubr.bf16.mxu0 0
  %3720 = vmatmul.mubr.bf16.gmra.mxu0 %v2240
  %v3721 = vpop.f32.mrf.mxu0
  %v3722 = vadd.f32 %v536, %v3721
  %v3723 = vpop.f32.mrf.mxu0
  %v3724 = vpop.f32.mrf.mxu0
  %v3725 = vadd.f32 %v536, %v3724
  %v3726 = vpop.f32.mrf.mxu0
  %3727 = vmatprep.mubr.bf16.mxu0 0
  %3728 = vmatmul.mubr.bf16.gmra.mxu0 %v2243
  %v3729 = vpop.f32.mrf.mxu0
  %v3730 = vadd.f32 %v536, %v3729
  %v3731 = vpop.f32.mrf.mxu0
  %v3732 = vpop.f32.mrf.mxu0
  %v3733 = vadd.f32 %v536, %v3732
  %v3734 = vpop.f32.mrf.mxu0
  %3735 = vmatprep.mubr.bf16.mxu0 0
  %3736 = vmatmul.mubr.bf16.gmra.mxu0 %v2246
  %v3737 = vpop.f32.mrf.mxu0
  %v3738 = vadd.f32 %v536, %v3737
  %v3739 = vpop.f32.mrf.mxu0
  %v3740 = vpop.f32.mrf.mxu0
  %v3741 = vadd.f32 %v536, %v3740
  %v3742 = vpop.f32.mrf.mxu0
  %3743 = vmatprep.mubr.bf16.mxu0 0
  %3744 = vmatmul.mubr.bf16.gmra.mxu0 %v2249
  %v3745 = vpop.f32.mrf.mxu0
  %v3746 = vadd.f32 %v536, %v3745
  %v3747 = vpop.f32.mrf.mxu0
  %v3748 = vpop.f32.mrf.mxu0
  %v3749 = vadd.f32 %v536, %v3748
  %v3750 = vpop.f32.mrf.mxu0
  %3751 = vmatprep.mubr.bf16.mxu0 0
  %3752 = vmatmul.mubr.bf16.gmra.mxu0 %v2252
  %v3753 = vpop.f32.mrf.mxu0
  %v3754 = vadd.f32 %v536, %v3753
  %v3755 = vpop.f32.mrf.mxu0
  %v3756 = vpop.f32.mrf.mxu0
  %v3757 = vadd.f32 %v536, %v3756
  %v3758 = vpop.f32.mrf.mxu0
  %3759 = vmatprep.mubr.bf16.mxu0 0
  %3760 = vmatmul.mubr.bf16.gmra.mxu0 %v2255
  %v3761 = vpop.f32.mrf.mxu0
  %v3762 = vadd.f32 %v536, %v3761
  %v3763 = vpop.f32.mrf.mxu0
  %v3764 = vpop.f32.mrf.mxu0
  %v3765 = vadd.f32 %v536, %v3764
  %v3766 = vpop.f32.mrf.mxu0
  %3767 = vmatprep.mubr.bf16.mxu0 0
  %3768 = vmatmul.mubr.bf16.gmra.mxu0 %v2258
  %v3769 = vpop.f32.mrf.mxu0
  %v3770 = vadd.f32 %v536, %v3769
  %v3771 = vpop.f32.mrf.mxu0
  %v3772 = vpop.f32.mrf.mxu0
  %v3773 = vadd.f32 %v536, %v3772
  %v3774 = vpop.f32.mrf.mxu0
  %3775 = vmatprep.mubr.bf16.mxu0 0
  %3776 = vmatmul.mubr.bf16.gmra.mxu0 %v2261
  %v3777 = vpop.f32.mrf.mxu0
  %v3778 = vadd.f32 %v536, %v3777
  %v3779 = vpop.f32.mrf.mxu0
  %v3780 = vpop.f32.mrf.mxu0
  %v3781 = vadd.f32 %v536, %v3780
  %v3782 = vpop.f32.mrf.mxu0
  %3783 = vmatprep.mubr.bf16.mxu0 0
  %3784 = vmatmul.mubr.bf16.gmra.mxu0 %v2264
  %v3785 = vpop.f32.mrf.mxu0
  %v3786 = vadd.f32 %v536, %v3785
  %v3787 = vpop.f32.mrf.mxu0
  %v3788 = vpop.f32.mrf.mxu0
  %v3789 = vadd.f32 %v536, %v3788
  %v3790 = vpop.f32.mrf.mxu0
  %3791 = vmatprep.mubr.bf16.mxu0 0
  %3792 = vmatmul.mubr.bf16.gmra.mxu0 %v2267
  %v3793 = vpop.f32.mrf.mxu0
  %v3794 = vadd.f32 %v536, %v3793
  %v3795 = vpop.f32.mrf.mxu0
  %v3796 = vpop.f32.mrf.mxu0
  %v3797 = vadd.f32 %v536, %v3796
  %v3798 = vpop.f32.mrf.mxu0
  %3799 = vmatprep.mubr.bf16.mxu0 0
  %3800 = vmatmul.mubr.bf16.gmra.mxu0 %v2270
  %v3801 = vpop.f32.mrf.mxu0
  %v3802 = vadd.f32 %v536, %v3801
  %v3803 = vpop.f32.mrf.mxu0
  %v3804 = vpop.f32.mrf.mxu0
  %v3805 = vadd.f32 %v536, %v3804
  %v3806 = vpop.f32.mrf.mxu0
  %3807 = vmatprep.mubr.bf16.mxu0 0
  %3808 = vmatmul.mubr.bf16.gmra.mxu0 %v2273
  %v3809 = vpop.f32.mrf.mxu0
  %v3810 = vadd.f32 %v536, %v3809
  %v3811 = vpop.f32.mrf.mxu0
  %v3812 = vpop.f32.mrf.mxu0
  %v3813 = vadd.f32 %v536, %v3812
  %v3814 = vpop.f32.mrf.mxu0
  %3815 = vmatprep.mubr.bf16.mxu0 0
  %3816 = vmatmul.mubr.bf16.gmra.mxu0 %v2276
  %v3817 = vpop.f32.mrf.mxu0
  %v3818 = vadd.f32 %v536, %v3817
  %v3819 = vpop.f32.mrf.mxu0
  %v3820 = vpop.f32.mrf.mxu0
  %v3821 = vadd.f32 %v536, %v3820
  %v3822 = vpop.f32.mrf.mxu0
  %3823 = vmatprep.mubr.bf16.mxu0 0
  %3824 = vmatmul.mubr.bf16.gmra.mxu0 %v2279
  %v3825 = vpop.f32.mrf.mxu0
  %v3826 = vadd.f32 %v536, %v3825
  %v3827 = vpop.f32.mrf.mxu0
  %v3828 = vpop.f32.mrf.mxu0
  %v3829 = vadd.f32 %v536, %v3828
  %v3830 = vpop.f32.mrf.mxu0
  %3831 = vmatprep.mubr.bf16.mxu0 0
  %3832 = vmatmul.mubr.bf16.gmra.mxu0 %v2282
  %v3833 = vpop.f32.mrf.mxu0
  %v3834 = vadd.f32 %v536, %v3833
  %v3835 = vpop.f32.mrf.mxu0
  %v3836 = vpop.f32.mrf.mxu0
  %v3837 = vadd.f32 %v536, %v3836
  %v3838 = vpop.f32.mrf.mxu0
  %3839 = vmatprep.mubr.bf16.mxu0 0
  %3840 = vmatmul.mubr.bf16.gmra.mxu0 %v2285
  %v3841 = vpop.f32.mrf.mxu0
  %v3842 = vadd.f32 %v536, %v3841
  %v3843 = vpop.f32.mrf.mxu0
  %v3844 = vpop.f32.mrf.mxu0
  %v3845 = vadd.f32 %v536, %v3844
  %v3846 = vpop.f32.mrf.mxu0
  %3847 = vmatprep.mubr.bf16.mxu0 0
  %3848 = vmatmul.mubr.bf16.gmra.mxu0 %v2288
  %v3849 = vpop.f32.mrf.mxu0
  %v3850 = vadd.f32 %v536, %v3849
  %v3851 = vpop.f32.mrf.mxu0
  %v3852 = vpop.f32.mrf.mxu0
  %v3853 = vadd.f32 %v536, %v3852
  %v3854 = vpop.f32.mrf.mxu0
  %3855 = vmatprep.mubr.bf16.mxu0 0
  %3856 = vmatmul.mubr.bf16.gmra.mxu0 %v2291
  %v3857 = vpop.f32.mrf.mxu0
  %v3858 = vadd.f32 %v536, %v3857
  %v3859 = vpop.f32.mrf.mxu0
  %v3860 = vpop.f32.mrf.mxu0
  %v3861 = vadd.f32 %v536, %v3860
  %v3862 = vpop.f32.mrf.mxu0
  %3863 = vmatprep.mubr.bf16.mxu0 0
  %3864 = vmatmul.mubr.bf16.gmra.mxu0 %v2294
  %v3865 = vpop.f32.mrf.mxu0
  %v3866 = vadd.f32 %v536, %v3865
  %v3867 = vpop.f32.mrf.mxu0
  %v3868 = vpop.f32.mrf.mxu0
  %v3869 = vadd.f32 %v536, %v3868
  %v3870 = vpop.f32.mrf.mxu0
  %3871 = vmatprep.mubr.bf16.mxu0 0
  %3872 = vmatmul.mubr.bf16.gmra.mxu0 %v2297
  %v3873 = vpop.f32.mrf.mxu0
  %v3874 = vadd.f32 %v536, %v3873
  %v3875 = vpop.f32.mrf.mxu0
  %v3876 = vpop.f32.mrf.mxu0
  %v3877 = vadd.f32 %v536, %v3876
  %v3878 = vpop.f32.mrf.mxu0
  %3879 = vmatprep.mubr.bf16.mxu0 0
  %3880 = vmatmul.mubr.bf16.gmra.mxu0 %v2300
  %v3881 = vpop.f32.mrf.mxu0
  %v3882 = vadd.f32 %v536, %v3881
  %v3883 = vpop.f32.mrf.mxu0
  %v3884 = vpop.f32.mrf.mxu0
  %v3885 = vadd.f32 %v536, %v3884
  %v3886 = vpop.f32.mrf.mxu0
  %3887 = vmatprep.mubr.bf16.mxu0 0
  %3888 = vmatmul.mubr.bf16.gmra.mxu0 %v2303
  %v3889 = vpop.f32.mrf.mxu0
  %v3890 = vadd.f32 %v536, %v3889
  %v3891 = vpop.f32.mrf.mxu0
  %v3892 = vpop.f32.mrf.mxu0
  %v3893 = vadd.f32 %v536, %v3892
  %v3894 = vpop.f32.mrf.mxu0
  %3895 = vmatprep.mubr.bf16.mxu0 0
  %3896 = vmatmul.mubr.bf16.gmra.mxu0 %v2306
  %v3897 = vpop.f32.mrf.mxu0
  %v3898 = vadd.f32 %v536, %v3897
  %v3899 = vpop.f32.mrf.mxu0
  %v3900 = vpop.f32.mrf.mxu0
  %v3901 = vadd.f32 %v536, %v3900
  %v3902 = vpop.f32.mrf.mxu0
  %3903 = vmatprep.mubr.bf16.mxu0 0
  %3904 = vmatmul.mubr.bf16.gmra.mxu0 %v2309
  %v3905 = vpop.f32.mrf.mxu0
  %v3906 = vadd.f32 %v536, %v3905
  %v3907 = vpop.f32.mrf.mxu0
  %v3908 = vpop.f32.mrf.mxu0
  %v3909 = vadd.f32 %v536, %v3908
  %v3910 = vpop.f32.mrf.mxu0
  %3911 = vmatprep.mubr.bf16.mxu0 0
  %3912 = vmatmul.mubr.bf16.gmra.mxu0 %v2312
  %v3913 = vpop.f32.mrf.mxu0
  %v3914 = vadd.f32 %v536, %v3913
  %v3915 = vpop.f32.mrf.mxu0
  %v3916 = vpop.f32.mrf.mxu0
  %v3917 = vadd.f32 %v536, %v3916
  %v3918 = vpop.f32.mrf.mxu0
  %3919 = vmatprep.mubr.bf16.mxu0 0
  %3920 = vmatmul.mubr.bf16.gmra.mxu0 %v2315
  %v3921 = vpop.f32.mrf.mxu0
  %v3922 = vadd.f32 %v536, %v3921
  %v3923 = vpop.f32.mrf.mxu0
  %v3924 = vpop.f32.mrf.mxu0
  %v3925 = vadd.f32 %v536, %v3924
  %v3926 = vpop.f32.mrf.mxu0
  %3927 = vmatprep.mubr.bf16.mxu0 0
  %3928 = vmatmul.mubr.bf16.gmra.mxu0 %v2318
  %v3929 = vpop.f32.mrf.mxu0
  %v3930 = vadd.f32 %v536, %v3929
  %v3931 = vpop.f32.mrf.mxu0
  %v3932 = vpop.f32.mrf.mxu0
  %v3933 = vadd.f32 %v536, %v3932
  %v3934 = vpop.f32.mrf.mxu0
  %3935 = vmatprep.mubr.bf16.mxu0 0
  %3936 = vmatmul.mubr.bf16.gmra.mxu0 %v2321
  %v3937 = vpop.f32.mrf.mxu0
  %v3938 = vadd.f32 %v536, %v3937
  %v3939 = vpop.f32.mrf.mxu0
  %v3940 = vpop.f32.mrf.mxu0
  %v3941 = vadd.f32 %v536, %v3940
  %v3942 = vpop.f32.mrf.mxu0
  %3943 = vmatprep.mubr.bf16.mxu0 0
  %3944 = vmatmul.mubr.bf16.gmra.mxu0 %v2324
  %v3945 = vpop.f32.mrf.mxu0
  %v3946 = vadd.f32 %v536, %v3945
  %v3947 = vpop.f32.mrf.mxu0
  %v3948 = vpop.f32.mrf.mxu0
  %v3949 = vadd.f32 %v536, %v3948
  %v3950 = vpop.f32.mrf.mxu0
  %3951 = vmatprep.mubr.bf16.mxu0 0
  %3952 = vmatmul.mubr.bf16.gmra.mxu0 %v2327
  %v3953 = vpop.f32.mrf.mxu0
  %v3954 = vadd.f32 %v536, %v3953
  %v3955 = vpop.f32.mrf.mxu0
  %v3956 = vpop.f32.mrf.mxu0
  %v3957 = vadd.f32 %v536, %v3956
  %v3958 = vpop.f32.mrf.mxu0
  %3959 = vmatprep.mubr.bf16.mxu0 0
  %3960 = vmatmul.mubr.bf16.gmra.mxu0 %v2330
  %v3961 = vpop.f32.mrf.mxu0
  %v3962 = vadd.f32 %v536, %v3961
  %v3963 = vpop.f32.mrf.mxu0
  %v3964 = vpop.f32.mrf.mxu0
  %v3965 = vadd.f32 %v536, %v3964
  %v3966 = vpop.f32.mrf.mxu0
  %3967 = vmatprep.mubr.bf16.mxu0 0
  %3968 = vmatmul.mubr.bf16.gmra.mxu0 %v2333
  %v3969 = vpop.f32.mrf.mxu0
  %v3970 = vadd.f32 %v536, %v3969
  %v3971 = vpop.f32.mrf.mxu0
  %v3972 = vpop.f32.mrf.mxu0
  %v3973 = vadd.f32 %v536, %v3972
  %v3974 = vpop.f32.mrf.mxu0
  %3975 = vmatprep.mubr.bf16.mxu0 0
  %3976 = vmatmul.mubr.bf16.gmra.mxu0 %v2336
  %v3977 = vpop.f32.mrf.mxu0
  %v3978 = vadd.f32 %v536, %v3977
  %v3979 = vpop.f32.mrf.mxu0
  %v3980 = vpop.f32.mrf.mxu0
  %v3981 = vadd.f32 %v536, %v3980
  %v3982 = vpop.f32.mrf.mxu0
  %3983 = vmatprep.mubr.bf16.mxu0 0
  %3984 = vmatmul.mubr.bf16.gmra.mxu0 %v2339
  %v3985 = vpop.f32.mrf.mxu0
  %v3986 = vadd.f32 %v536, %v3985
  %v3987 = vpop.f32.mrf.mxu0
  %v3988 = vpop.f32.mrf.mxu0
  %v3989 = vadd.f32 %v536, %v3988
  %v3990 = vpop.f32.mrf.mxu0
  %3991 = vmatprep.mubr.bf16.mxu0 0
  %3992 = vmatmul.mubr.bf16.gmra.mxu0 %v2342
  %v3993 = vpop.f32.mrf.mxu0
  %v3994 = vadd.f32 %v536, %v3993
  %v3995 = vpop.f32.mrf.mxu0
  %v3996 = vpop.f32.mrf.mxu0
  %v3997 = vadd.f32 %v536, %v3996
  %v3998 = vpop.f32.mrf.mxu0
  %3999 = vmatprep.mubr.bf16.mxu0 0
  %4000 = vmatmul.mubr.bf16.gmra.mxu0 %v2345
  %v4001 = vpop.f32.mrf.mxu0
  %v4002 = vadd.f32 %v536, %v4001
  %v4003 = vpop.f32.mrf.mxu0
  %v4004 = vpop.f32.mrf.mxu0
  %v4005 = vadd.f32 %v536, %v4004
  %v4006 = vpop.f32.mrf.mxu0
  %4007 = vmatprep.mubr.bf16.mxu0 0
  %4008 = vmatmul.mubr.bf16.gmra.mxu0 %v2348
  %v4009 = vpop.f32.mrf.mxu0
  %v4010 = vadd.f32 %v536, %v4009
  %v4011 = vpop.f32.mrf.mxu0
  %v4012 = vpop.f32.mrf.mxu0
  %v4013 = vadd.f32 %v536, %v4012
  %v4014 = vpop.f32.mrf.mxu0
  %4015 = vmatprep.mubr.bf16.mxu0 0
  %4016 = vmatmul.mubr.bf16.gmra.mxu0 %v2351
  %v4017 = vpop.f32.mrf.mxu0
  %v4018 = vadd.f32 %v536, %v4017
  %v4019 = vpop.f32.mrf.mxu0
  %v4020 = vpop.f32.mrf.mxu0
  %v4021 = vadd.f32 %v536, %v4020
  %v4022 = vpop.f32.mrf.mxu0
  %4023 = vmatprep.mubr.bf16.mxu0 0
  %4024 = vmatmul.mubr.bf16.gmra.mxu0 %v2354
  %v4025 = vpop.f32.mrf.mxu0
  %v4026 = vadd.f32 %v536, %v4025
  %v4027 = vpop.f32.mrf.mxu0
  %v4028 = vpop.f32.mrf.mxu0
  %v4029 = vadd.f32 %v536, %v4028
  %v4030 = vpop.f32.mrf.mxu0
  %4031 = vmatprep.mubr.bf16.mxu0 0
  %4032 = vmatmul.mubr.bf16.gmra.mxu0 %v2357
  %v4033 = vpop.f32.mrf.mxu0
  %v4034 = vadd.f32 %v536, %v4033
  %v4035 = vpop.f32.mrf.mxu0
  %v4036 = vpop.f32.mrf.mxu0
  %v4037 = vadd.f32 %v536, %v4036
  %v4038 = vpop.f32.mrf.mxu0
  %4039 = vmatprep.mubr.bf16.mxu0 0
  %4040 = vmatmul.mubr.bf16.gmra.mxu0 %v2360
  %v4041 = vpop.f32.mrf.mxu0
  %v4042 = vadd.f32 %v536, %v4041
  %v4043 = vpop.f32.mrf.mxu0
  %v4044 = vpop.f32.mrf.mxu0
  %v4045 = vadd.f32 %v536, %v4044
  %v4046 = vpop.f32.mrf.mxu0
  %4047 = vmatprep.mubr.bf16.mxu0 0
  %4048 = vmatmul.mubr.bf16.gmra.mxu0 %v2363
  %v4049 = vpop.f32.mrf.mxu0
  %v4050 = vadd.f32 %v536, %v4049
  %v4051 = vpop.f32.mrf.mxu0
  %v4052 = vpop.f32.mrf.mxu0
  %v4053 = vadd.f32 %v536, %v4052
  %v4054 = vpop.f32.mrf.mxu0
  %4055 = vmatprep.mubr.bf16.mxu0 0
  %4056 = vmatmul.mubr.bf16.gmra.mxu0 %v2366
  %v4057 = vpop.f32.mrf.mxu0
  %v4058 = vadd.f32 %v536, %v4057
  %v4059 = vpop.f32.mrf.mxu0
  %v4060 = vpop.f32.mrf.mxu0
  %v4061 = vadd.f32 %v536, %v4060
  %v4062 = vpop.f32.mrf.mxu0
  %4063 = vmatprep.mubr.bf16.mxu0 0
  %4064 = vmatmul.mubr.bf16.gmra.mxu0 %v2369
  %v4065 = vpop.f32.mrf.mxu0
  %v4066 = vadd.f32 %v536, %v4065
  %v4067 = vpop.f32.mrf.mxu0
  %v4068 = vpop.f32.mrf.mxu0
  %v4069 = vadd.f32 %v536, %v4068
  %v4070 = vpop.f32.mrf.mxu0
  %4071 = vmatprep.mubr.bf16.mxu0 0
  %4072 = vmatmul.mubr.bf16.gmra.mxu0 %v2372
  %v4073 = vpop.f32.mrf.mxu0
  %v4074 = vadd.f32 %v536, %v4073
  %v4075 = vpop.f32.mrf.mxu0
  %v4076 = vpop.f32.mrf.mxu0
  %v4077 = vadd.f32 %v536, %v4076
  %v4078 = vpop.f32.mrf.mxu0
  %4079 = vmatprep.mubr.bf16.mxu0 0
  %4080 = vmatmul.mubr.bf16.gmra.mxu0 %v2375
  %v4081 = vpop.f32.mrf.mxu0
  %v4082 = vadd.f32 %v536, %v4081
  %v4083 = vpop.f32.mrf.mxu0
  %v4084 = vpop.f32.mrf.mxu0
  %v4085 = vadd.f32 %v536, %v4084
  %v4086 = vpop.f32.mrf.mxu0
  %4087 = vmatprep.mubr.bf16.mxu0 0
  %4088 = vmatmul.mubr.bf16.gmra.mxu0 %v2378
  %v4089 = vpop.f32.mrf.mxu0
  %v4090 = vadd.f32 %v536, %v4089
  %v4091 = vpop.f32.mrf.mxu0
  %v4092 = vpop.f32.mrf.mxu0
  %v4093 = vadd.f32 %v536, %v4092
  %v4094 = vpop.f32.mrf.mxu0
  %4095 = vmatprep.mubr.bf16.mxu0 0
  %4096 = vmatmul.mubr.bf16.gmra.mxu0 %v2381
  %v4097 = vpop.f32.mrf.mxu0
  %v4098 = vadd.f32 %v536, %v4097
  %v4099 = vpop.f32.mrf.mxu0
  %v4100 = vpop.f32.mrf.mxu0
  %v4101 = vadd.f32 %v536, %v4100
  %v4102 = vpop.f32.mrf.mxu0
  %4103 = vmatprep.mubr.bf16.mxu0 0
  %4104 = vmatmul.mubr.bf16.gmra.mxu0 %v2384
  %v4105 = vpop.f32.mrf.mxu0
  %v4106 = vadd.f32 %v536, %v4105
  %v4107 = vpop.f32.mrf.mxu0
  %v4108 = vpop.f32.mrf.mxu0
  %v4109 = vadd.f32 %v536, %v4108
  %v4110 = vpop.f32.mrf.mxu0
  %4111 = vmatprep.mubr.bf16.mxu0 0
  %4112 = vmatmul.mubr.bf16.gmra.mxu0 %v2387
  %v4113 = vpop.f32.mrf.mxu0
  %v4114 = vadd.f32 %v536, %v4113
  %v4115 = vpop.f32.mrf.mxu0
  %v4116 = vpop.f32.mrf.mxu0
  %v4117 = vadd.f32 %v536, %v4116
  %v4118 = vpop.f32.mrf.mxu0
  %4119 = vmatprep.mubr.bf16.mxu0 0
  %4120 = vmatmul.mubr.bf16.gmra.mxu0 %v2390
  %v4121 = vpop.f32.mrf.mxu0
  %v4122 = vadd.f32 %v536, %v4121
  %v4123 = vpop.f32.mrf.mxu0
  %v4124 = vpop.f32.mrf.mxu0
  %v4125 = vadd.f32 %v536, %v4124
  %v4126 = vpop.f32.mrf.mxu0
  %4127 = vmatprep.mubr.bf16.mxu0 0
  %4128 = vmatmul.mubr.bf16.gmra.mxu0 %v2393
  %v4129 = vpop.f32.mrf.mxu0
  %v4130 = vadd.f32 %v536, %v4129
  %v4131 = vpop.f32.mrf.mxu0
  %v4132 = vpop.f32.mrf.mxu0
  %v4133 = vadd.f32 %v536, %v4132
  %v4134 = vpop.f32.mrf.mxu0
  %4135 = vmatprep.mubr.bf16.mxu0 0
  %4136 = vmatmul.mubr.bf16.gmra.mxu0 %v2396
  %v4137 = vpop.f32.mrf.mxu0
  %v4138 = vadd.f32 %v536, %v4137
  %v4139 = vpop.f32.mrf.mxu0
  %v4140 = vpop.f32.mrf.mxu0
  %v4141 = vadd.f32 %v536, %v4140
  %v4142 = vpop.f32.mrf.mxu0
  %4143 = vmatprep.mubr.bf16.mxu0 0
  %4144 = vmatmul.mubr.bf16.gmra.mxu0 %v2399
  %v4145 = vpop.f32.mrf.mxu0
  %v4146 = vadd.f32 %v536, %v4145
  %v4147 = vpop.f32.mrf.mxu0
  %v4148 = vpop.f32.mrf.mxu0
  %v4149 = vadd.f32 %v536, %v4148
  %v4150 = vpop.f32.mrf.mxu0
  %4151 = vmatprep.mubr.bf16.mxu0 0
  %4152 = vmatmul.mubr.bf16.gmra.mxu0 %v2402
  %v4153 = vpop.f32.mrf.mxu0
  %v4154 = vadd.f32 %v536, %v4153
  %v4155 = vpop.f32.mrf.mxu0
  %v4156 = vpop.f32.mrf.mxu0
  %v4157 = vadd.f32 %v536, %v4156
  %v4158 = vpop.f32.mrf.mxu0
  %4159 = vmatprep.mubr.bf16.mxu0 0
  %4160 = vmatmul.mubr.bf16.gmra.mxu0 %v2405
  %v4161 = vpop.f32.mrf.mxu0
  %v4162 = vadd.f32 %v536, %v4161
  %v4163 = vpop.f32.mrf.mxu0
  %v4164 = vpop.f32.mrf.mxu0
  %v4165 = vadd.f32 %v536, %v4164
  %v4166 = vpop.f32.mrf.mxu0
  %4167 = vmatprep.mubr.bf16.mxu0 0
  %4168 = vmatmul.mubr.bf16.gmra.mxu0 %v2408
  %v4169 = vpop.f32.mrf.mxu0
  %v4170 = vadd.f32 %v536, %v4169
  %v4171 = vpop.f32.mrf.mxu0
  %v4172 = vpop.f32.mrf.mxu0
  %v4173 = vadd.f32 %v536, %v4172
  %v4174 = vpop.f32.mrf.mxu0
  %4175 = vmatprep.mubr.bf16.mxu0 0
  %4176 = vmatmul.mubr.bf16.gmra.mxu0 %v2411
  %v4177 = vpop.f32.mrf.mxu0
  %v4178 = vadd.f32 %v536, %v4177
  %v4179 = vpop.f32.mrf.mxu0
  %v4180 = vpop.f32.mrf.mxu0
  %v4181 = vadd.f32 %v536, %v4180
  %v4182 = vpop.f32.mrf.mxu0
  %4183 = vmatprep.mubr.bf16.mxu0 0
  %4184 = vmatmul.mubr.bf16.gmra.mxu0 %v2414
  %v4185 = vpop.f32.mrf.mxu0
  %v4186 = vadd.f32 %v536, %v4185
  %v4187 = vpop.f32.mrf.mxu0
  %v4188 = vpop.f32.mrf.mxu0
  %v4189 = vadd.f32 %v536, %v4188
  %v4190 = vpop.f32.mrf.mxu0
  %4191 = vmatprep.mubr.bf16.mxu0 0
  %4192 = vmatmul.mubr.bf16.gmra.mxu0 %v2417
  %v4193 = vpop.f32.mrf.mxu0
  %v4194 = vadd.f32 %v536, %v4193
  %v4195 = vpop.f32.mrf.mxu0
  %v4196 = vpop.f32.mrf.mxu0
  %v4197 = vadd.f32 %v536, %v4196
  %v4198 = vpop.f32.mrf.mxu0
  %4199 = vmatprep.mubr.bf16.mxu0 0
  %4200 = vmatmul.mubr.bf16.gmra.mxu0 %v2420
  %v4201 = vpop.f32.mrf.mxu0
  %v4202 = vadd.f32 %v536, %v4201
  %v4203 = vpop.f32.mrf.mxu0
  %v4204 = vpop.f32.mrf.mxu0
  %v4205 = vadd.f32 %v536, %v4204
  %v4206 = vpop.f32.mrf.mxu0
  %4207 = vmatprep.mubr.bf16.mxu0 0
  %4208 = vmatmul.mubr.bf16.gmra.mxu0 %v2423
  %v4209 = vpop.f32.mrf.mxu0
  %v4210 = vadd.f32 %v536, %v4209
  %v4211 = vpop.f32.mrf.mxu0
  %v4212 = vpop.f32.mrf.mxu0
  %v4213 = vadd.f32 %v536, %v4212
  %v4214 = vpop.f32.mrf.mxu0
  %4215 = vmatprep.mubr.bf16.mxu0 0
  %4216 = vmatmul.mubr.bf16.gmra.mxu0 %v2426
  %v4217 = vpop.f32.mrf.mxu0
  %v4218 = vadd.f32 %v536, %v4217
  %v4219 = vpop.f32.mrf.mxu0
  %v4220 = vpop.f32.mrf.mxu0
  %v4221 = vadd.f32 %v536, %v4220
  %v4222 = vpop.f32.mrf.mxu0
  %4223 = vmatprep.mubr.bf16.mxu0 0
  %4224 = vmatmul.mubr.bf16.gmra.mxu0 %v2429
  %v4225 = vpop.f32.mrf.mxu0
  %v4226 = vadd.f32 %v536, %v4225
  %v4227 = vpop.f32.mrf.mxu0
  %v4228 = vpop.f32.mrf.mxu0
  %v4229 = vadd.f32 %v536, %v4228
  %v4230 = vpop.f32.mrf.mxu0
  %4231 = vmatprep.mubr.bf16.mxu0 0
  %4232 = vmatmul.mubr.bf16.gmra.mxu0 %v2432
  %v4233 = vpop.f32.mrf.mxu0
  %v4234 = vadd.f32 %v536, %v4233
  %v4235 = vpop.f32.mrf.mxu0
  %v4236 = vpop.f32.mrf.mxu0
  %v4237 = vadd.f32 %v536, %v4236
  %v4238 = vpop.f32.mrf.mxu0
  %4239 = vmatprep.mubr.bf16.mxu0 0
  %4240 = vmatmul.mubr.bf16.gmra.mxu0 %v2435
  %v4241 = vpop.f32.mrf.mxu0
  %v4242 = vadd.f32 %v536, %v4241
  %v4243 = vpop.f32.mrf.mxu0
  %v4244 = vpop.f32.mrf.mxu0
  %v4245 = vadd.f32 %v536, %v4244
  %v4246 = vpop.f32.mrf.mxu0
  %4247 = vmatprep.mubr.bf16.mxu0 0
  %4248 = vmatmul.mubr.bf16.gmra.mxu0 %v2438
  %v4249 = vpop.f32.mrf.mxu0
  %v4250 = vadd.f32 %v536, %v4249
  %v4251 = vpop.f32.mrf.mxu0
  %v4252 = vpop.f32.mrf.mxu0
  %v4253 = vadd.f32 %v536, %v4252
  %v4254 = vpop.f32.mrf.mxu0
  %4255 = vmatprep.mubr.bf16.mxu0 0
  %4256 = vmatmul.mubr.bf16.gmra.mxu0 %v2441
  %v4257 = vpop.f32.mrf.mxu0
  %v4258 = vadd.f32 %v536, %v4257
  %v4259 = vpop.f32.mrf.mxu0
  %v4260 = vpop.f32.mrf.mxu0
  %v4261 = vadd.f32 %v536, %v4260
  %v4262 = vpop.f32.mrf.mxu0
  %4263 = vmatprep.mubr.bf16.mxu0 0
  %4264 = vmatmul.mubr.bf16.gmra.mxu0 %v2444
  %v4265 = vpop.f32.mrf.mxu0
  %v4266 = vadd.f32 %v536, %v4265
  %v4267 = vpop.f32.mrf.mxu0
  %v4268 = vpop.f32.mrf.mxu0
  %v4269 = vadd.f32 %v536, %v4268
  %v4270 = vpop.f32.mrf.mxu0
  %4271 = vmatprep.mubr.bf16.mxu0 0
  %4272 = vmatmul.mubr.bf16.gmra.mxu0 %v2447
  %v4273 = vpop.f32.mrf.mxu0
  %v4274 = vadd.f32 %v536, %v4273
  %v4275 = vpop.f32.mrf.mxu0
  %v4276 = vpop.f32.mrf.mxu0
  %v4277 = vadd.f32 %v536, %v4276
  %v4278 = vpop.f32.mrf.mxu0
  %4279 = vmatprep.mubr.bf16.mxu0 0
  %4280 = vmatmul.mubr.bf16.gmra.mxu0 %v2450
  %v4281 = vpop.f32.mrf.mxu0
  %v4282 = vadd.f32 %v536, %v4281
  %v4283 = vpop.f32.mrf.mxu0
  %v4284 = vpop.f32.mrf.mxu0
  %v4285 = vadd.f32 %v536, %v4284
  %v4286 = vpop.f32.mrf.mxu0
  %4287 = vmatprep.mubr.bf16.mxu0 0
  %4288 = vmatmul.mubr.bf16.gmra.mxu0 %v2453
  %v4289 = vpop.f32.mrf.mxu0
  %v4290 = vadd.f32 %v536, %v4289
  %v4291 = vpop.f32.mrf.mxu0
  %v4292 = vpop.f32.mrf.mxu0
  %v4293 = vadd.f32 %v536, %v4292
  %v4294 = vpop.f32.mrf.mxu0
  %4295 = vmatprep.mubr.bf16.mxu0 0
  %4296 = vmatmul.mubr.bf16.gmra.mxu0 %v2456
  %v4297 = vpop.f32.mrf.mxu0
  %v4298 = vadd.f32 %v536, %v4297
  %v4299 = vpop.f32.mrf.mxu0
  %v4300 = vpop.f32.mrf.mxu0
  %v4301 = vadd.f32 %v536, %v4300
  %v4302 = vpop.f32.mrf.mxu0
  %4303 = vmatprep.mubr.bf16.mxu0 0
  %4304 = vmatmul.mubr.bf16.gmra.mxu0 %v2459
  %v4305 = vpop.f32.mrf.mxu0
  %v4306 = vadd.f32 %v536, %v4305
  %v4307 = vpop.f32.mrf.mxu0
  %v4308 = vpop.f32.mrf.mxu0
  %v4309 = vadd.f32 %v536, %v4308
  %v4310 = vpop.f32.mrf.mxu0
  %4311 = vmatprep.mubr.bf16.mxu0 0
  %4312 = vmatmul.mubr.bf16.gmra.mxu0 %v2462
  %v4313 = vpop.f32.mrf.mxu0
  %v4314 = vadd.f32 %v536, %v4313
  %v4315 = vpop.f32.mrf.mxu0
  %v4316 = vpop.f32.mrf.mxu0
  %v4317 = vadd.f32 %v536, %v4316
  %v4318 = vpop.f32.mrf.mxu0
  %4319 = vmatprep.mubr.bf16.mxu0 0
  %4320 = vmatmul.mubr.bf16.gmra.mxu0 %v2465
  %v4321 = vpop.f32.mrf.mxu0
  %v4322 = vadd.f32 %v536, %v4321
  %v4323 = vpop.f32.mrf.mxu0
  %v4324 = vpop.f32.mrf.mxu0
  %v4325 = vadd.f32 %v536, %v4324
  %v4326 = vpop.f32.mrf.mxu0
  %4327 = vmatprep.mubr.bf16.mxu0 0
  %4328 = vmatmul.mubr.bf16.gmra.mxu0 %v2468
  %v4329 = vpop.f32.mrf.mxu0
  %v4330 = vadd.f32 %v536, %v4329
  %v4331 = vpop.f32.mrf.mxu0
  %v4332 = vpop.f32.mrf.mxu0
  %v4333 = vadd.f32 %v536, %v4332
  %v4334 = vpop.f32.mrf.mxu0
  %4335 = vmatprep.mubr.bf16.mxu0 0
  %4336 = vmatmul.mubr.bf16.gmra.mxu0 %v2471
  %v4337 = vpop.f32.mrf.mxu0
  %v4338 = vadd.f32 %v536, %v4337
  %v4339 = vpop.f32.mrf.mxu0
  %v4340 = vpop.f32.mrf.mxu0
  %v4341 = vadd.f32 %v536, %v4340
  %v4342 = vpop.f32.mrf.mxu0
  %4343 = vmatprep.mubr.bf16.mxu0 0
  %4344 = vmatmul.mubr.bf16.gmra.mxu0 %v2474
  %v4345 = vpop.f32.mrf.mxu0
  %v4346 = vadd.f32 %v536, %v4345
  %v4347 = vpop.f32.mrf.mxu0
  %v4348 = vpop.f32.mrf.mxu0
  %v4349 = vadd.f32 %v536, %v4348
  %v4350 = vpop.f32.mrf.mxu0
  %4351 = vmatprep.mubr.bf16.mxu0 0
  %4352 = vmatmul.mubr.bf16.gmra.mxu0 %v2477
  %v4353 = vpop.f32.mrf.mxu0
  %v4354 = vadd.f32 %v536, %v4353
  %v4355 = vpop.f32.mrf.mxu0
  %v4356 = vpop.f32.mrf.mxu0
  %v4357 = vadd.f32 %v536, %v4356
  %v4358 = vpop.f32.mrf.mxu0
  %4359 = vmatprep.mubr.bf16.mxu0 0
  %4360 = vmatmul.mubr.bf16.gmra.mxu0 %v2480
  %v4361 = vpop.f32.mrf.mxu0
  %v4362 = vadd.f32 %v536, %v4361
  %v4363 = vpop.f32.mrf.mxu0
  %v4364 = vpop.f32.mrf.mxu0
  %v4365 = vadd.f32 %v536, %v4364
  %v4366 = vpop.f32.mrf.mxu0
  %4367 = vmatprep.mubr.bf16.mxu0 0
  %4368 = vmatmul.mubr.bf16.gmra.mxu0 %v2483
  %v4369 = vpop.f32.mrf.mxu0
  %v4370 = vadd.f32 %v536, %v4369
  %v4371 = vpop.f32.mrf.mxu0
  %v4372 = vpop.f32.mrf.mxu0
  %v4373 = vadd.f32 %v536, %v4372
  %v4374 = vpop.f32.mrf.mxu0
  %4375 = vmatprep.mubr.bf16.mxu0 0
  %4376 = vmatmul.mubr.bf16.gmra.mxu0 %v2486
  %v4377 = vpop.f32.mrf.mxu0
  %v4378 = vadd.f32 %v536, %v4377
  %v4379 = vpop.f32.mrf.mxu0
  %v4380 = vpop.f32.mrf.mxu0
  %v4381 = vadd.f32 %v536, %v4380
  %v4382 = vpop.f32.mrf.mxu0
  %4383 = vmatprep.mubr.bf16.mxu0 0
  %4384 = vmatmul.mubr.bf16.gmra.mxu0 %v2489
  %v4385 = vpop.f32.mrf.mxu0
  %v4386 = vadd.f32 %v536, %v4385
  %v4387 = vpop.f32.mrf.mxu0
  %v4388 = vpop.f32.mrf.mxu0
  %v4389 = vadd.f32 %v536, %v4388
  %v4390 = vpop.f32.mrf.mxu0
  %4391 = vmatprep.mubr.bf16.mxu0 0
  %4392 = vmatmul.mubr.bf16.gmra.mxu0 %v2492
  %v4393 = vpop.f32.mrf.mxu0
  %v4394 = vadd.f32 %v536, %v4393
  %v4395 = vpop.f32.mrf.mxu0
  %v4396 = vpop.f32.mrf.mxu0
  %v4397 = vadd.f32 %v536, %v4396
  %v4398 = vpop.f32.mrf.mxu0
  %4399 = vmatprep.mubr.bf16.mxu0 0
  %4400 = vmatmul.mubr.bf16.gmra.mxu0 %v2495
  %v4401 = vpop.f32.mrf.mxu0
  %v4402 = vadd.f32 %v536, %v4401
  %v4403 = vpop.f32.mrf.mxu0
  %v4404 = vpop.f32.mrf.mxu0
  %v4405 = vadd.f32 %v536, %v4404
  %v4406 = vpop.f32.mrf.mxu0
  %4407 = vmatprep.mubr.bf16.mxu0 0
  %4408 = vmatmul.mubr.bf16.gmra.mxu0 %v2498
  %v4409 = vpop.f32.mrf.mxu0
  %v4410 = vadd.f32 %v536, %v4409
  %v4411 = vpop.f32.mrf.mxu0
  %v4412 = vpop.f32.mrf.mxu0
  %v4413 = vadd.f32 %v536, %v4412
  %v4414 = vpop.f32.mrf.mxu0
  %4415 = vmatprep.mubr.bf16.mxu0 0
  %4416 = vmatmul.mubr.bf16.gmra.mxu0 %v2501
  %v4417 = vpop.f32.mrf.mxu0
  %v4418 = vadd.f32 %v536, %v4417
  %v4419 = vpop.f32.mrf.mxu0
  %v4420 = vpop.f32.mrf.mxu0
  %v4421 = vadd.f32 %v536, %v4420
  %v4422 = vpop.f32.mrf.mxu0
  %4423 = vmatprep.mubr.bf16.mxu0 0
  %4424 = vmatmul.mubr.bf16.gmra.mxu0 %v2504
  %v4425 = vpop.f32.mrf.mxu0
  %v4426 = vadd.f32 %v536, %v4425
  %v4427 = vpop.f32.mrf.mxu0
  %v4428 = vpop.f32.mrf.mxu0
  %v4429 = vadd.f32 %v536, %v4428
  %v4430 = vpop.f32.mrf.mxu0
  %4431 = vmatprep.mubr.bf16.mxu0 0
  %4432 = vmatmul.mubr.bf16.gmra.mxu0 %v2507
  %v4433 = vpop.f32.mrf.mxu0
  %v4434 = vadd.f32 %v536, %v4433
  %v4435 = vpop.f32.mrf.mxu0
  %v4436 = vpop.f32.mrf.mxu0
  %v4437 = vadd.f32 %v536, %v4436
  %v4438 = vpop.f32.mrf.mxu0
  %4439 = vmatprep.mubr.bf16.mxu0 0
  %4440 = vmatmul.mubr.bf16.gmra.mxu0 %v2510
  %v4441 = vpop.f32.mrf.mxu0
  %v4442 = vadd.f32 %v536, %v4441
  %v4443 = vpop.f32.mrf.mxu0
  %v4444 = vpop.f32.mrf.mxu0
  %v4445 = vadd.f32 %v536, %v4444
  %v4446 = vpop.f32.mrf.mxu0
  %4447 = vmatprep.mubr.bf16.mxu0 0
  %4448 = vmatmul.mubr.bf16.gmra.mxu0 %v2513
  %v4449 = vpop.f32.mrf.mxu0
  %v4450 = vadd.f32 %v536, %v4449
  %v4451 = vpop.f32.mrf.mxu0
  %v4452 = vpop.f32.mrf.mxu0
  %v4453 = vadd.f32 %v536, %v4452
  %v4454 = vpop.f32.mrf.mxu0
  %4455 = vmatprep.mubr.bf16.mxu0 0
  %4456 = vmatmul.mubr.bf16.gmra.mxu0 %v2516
  %v4457 = vpop.f32.mrf.mxu0
  %v4458 = vadd.f32 %v536, %v4457
  %v4459 = vpop.f32.mrf.mxu0
  %v4460 = vpop.f32.mrf.mxu0
  %v4461 = vadd.f32 %v536, %v4460
  %v4462 = vpop.f32.mrf.mxu0
  %4463 = vmatprep.mubr.bf16.mxu0 0
  %4464 = vmatmul.mubr.bf16.gmra.mxu0 %v2519
  %v4465 = vpop.f32.mrf.mxu0
  %v4466 = vadd.f32 %v536, %v4465
  %v4467 = vpop.f32.mrf.mxu0
  %v4468 = vpop.f32.mrf.mxu0
  %v4469 = vadd.f32 %v536, %v4468
  %v4470 = vpop.f32.mrf.mxu0
  %4471 = vmatprep.mubr.bf16.mxu0 0
  %4472 = vmatmul.mubr.bf16.gmra.mxu0 %v2522
  %v4473 = vpop.f32.mrf.mxu0
  %v4474 = vadd.f32 %v536, %v4473
  %v4475 = vpop.f32.mrf.mxu0
  %v4476 = vpop.f32.mrf.mxu0
  %v4477 = vadd.f32 %v536, %v4476
  %v4478 = vpop.f32.mrf.mxu0
  %4479 = vmatprep.mubr.bf16.mxu0 0
  %4480 = vmatmul.mubr.bf16.gmra.mxu0 %v2525
  %v4481 = vpop.f32.mrf.mxu0
  %v4482 = vadd.f32 %v536, %v4481
  %v4483 = vpop.f32.mrf.mxu0
  %v4484 = vpop.f32.mrf.mxu0
  %v4485 = vadd.f32 %v536, %v4484
  %v4486 = vpop.f32.mrf.mxu0
  %4487 = vmatprep.mubr.bf16.mxu0 0
  %4488 = vmatmul.mubr.bf16.gmra.mxu0 %v2528
  %v4489 = vpop.f32.mrf.mxu0
  %v4490 = vadd.f32 %v536, %v4489
  %v4491 = vpop.f32.mrf.mxu0
  %v4492 = vpop.f32.mrf.mxu0
  %v4493 = vadd.f32 %v536, %v4492
  %v4494 = vpop.f32.mrf.mxu0
  %4495 = vmatprep.mubr.bf16.mxu0 0
  %4496 = vmatmul.mubr.bf16.gmra.mxu0 %v2531
  %v4497 = vpop.f32.mrf.mxu0
  %v4498 = vadd.f32 %v536, %v4497
  %v4499 = vpop.f32.mrf.mxu0
  %v4500 = vpop.f32.mrf.mxu0
  %v4501 = vadd.f32 %v536, %v4500
  %v4502 = vpop.f32.mrf.mxu0
  %4503 = vmatprep.mubr.bf16.mxu0 0
  %4504 = vmatmul.mubr.bf16.gmra.mxu0 %v2534
  %v4505 = vpop.f32.mrf.mxu0
  %v4506 = vadd.f32 %v536, %v4505
  %v4507 = vpop.f32.mrf.mxu0
  %v4508 = vpop.f32.mrf.mxu0
  %v4509 = vadd.f32 %v536, %v4508
  %v4510 = vpop.f32.mrf.mxu0
  %4511 = vmatprep.mubr.bf16.mxu0 0
  %4512 = vmatmul.mubr.bf16.gmra.mxu0 %v2537
  %v4513 = vpop.f32.mrf.mxu0
  %v4514 = vadd.f32 %v536, %v4513
  %v4515 = vpop.f32.mrf.mxu0
  %v4516 = vpop.f32.mrf.mxu0
  %v4517 = vadd.f32 %v536, %v4516
  %v4518 = vpop.f32.mrf.mxu0
  %4519 = vmatprep.mubr.bf16.mxu0 0
  %4520 = vmatmul.mubr.bf16.gmra.mxu0 %v2540
  %v4521 = vpop.f32.mrf.mxu0
  %v4522 = vadd.f32 %v536, %v4521
  %v4523 = vpop.f32.mrf.mxu0
  %v4524 = vpop.f32.mrf.mxu0
  %v4525 = vadd.f32 %v536, %v4524
  %v4526 = vpop.f32.mrf.mxu0
  %4527 = vmatprep.mubr.bf16.mxu0 0
  %4528 = vmatmul.mubr.bf16.gmra.mxu0 %v2543
  %v4529 = vpop.f32.mrf.mxu0
  %v4530 = vadd.f32 %v536, %v4529
  %v4531 = vpop.f32.mrf.mxu0
  %v4532 = vpop.f32.mrf.mxu0
  %v4533 = vadd.f32 %v536, %v4532
  %v4534 = vpop.f32.mrf.mxu0
  %4535 = vmatprep.mubr.bf16.mxu0 0
  %4536 = vmatmul.mubr.bf16.gmra.mxu0 %v2546
  %v4537 = vpop.f32.mrf.mxu0
  %v4538 = vadd.f32 %v536, %v4537
  %v4539 = vpop.f32.mrf.mxu0
  %v4540 = vpop.f32.mrf.mxu0
  %v4541 = vadd.f32 %v536, %v4540
  %v4542 = vpop.f32.mrf.mxu0
  %4543 = vmatprep.mubr.bf16.mxu0 0
  %4544 = vmatmul.mubr.bf16.gmra.mxu0 %v2549
  %v4545 = vpop.f32.mrf.mxu0
  %v4546 = vadd.f32 %v536, %v4545
  %v4547 = vpop.f32.mrf.mxu0
  %v4548 = vpop.f32.mrf.mxu0
  %v4549 = vadd.f32 %v536, %v4548
  %v4550 = vpop.f32.mrf.mxu0
  %4551 = vmatprep.mubr.bf16.mxu0 0
  %4552 = vmatmul.mubr.bf16.gmra.mxu0 %v2552
  %v4553 = vpop.f32.mrf.mxu0
  %v4554 = vadd.f32 %v536, %v4553
  %v4555 = vpop.f32.mrf.mxu0
  %v4556 = vpop.f32.mrf.mxu0
  %v4557 = vadd.f32 %v536, %v4556
  %v4558 = vpop.f32.mrf.mxu0
  %4559 = vmatprep.mubr.bf16.mxu0 0
  %4560 = vmatmul.mubr.bf16.gmra.mxu0 %v2555
  %v4561 = vpop.f32.mrf.mxu0
  %v4562 = vadd.f32 %v536, %v4561
  %v4563 = vpop.f32.mrf.mxu0
  %v4564 = vpop.f32.mrf.mxu0
  %v4565 = vadd.f32 %v536, %v4564
  %v4566 = vpop.f32.mrf.mxu0
  %4567 = vmatprep.mubr.bf16.mxu0 0
  %4568 = vmatmul.mubr.bf16.gmra.mxu0 %v2558
  %v4569 = vpop.f32.mrf.mxu0
  %v4570 = vadd.f32 %v536, %v4569
  %v4571 = vpop.f32.mrf.mxu0
  %v4572 = vpop.f32.mrf.mxu0
  %v4573 = vadd.f32 %v536, %v4572
  %v4574 = vpop.f32.mrf.mxu0
  %4575 = vmatprep.mubr.bf16.mxu0 0
  %4576 = vmatmul.mubr.bf16.gmra.mxu0 %v2561
  %v4577 = vpop.f32.mrf.mxu0
  %v4578 = vadd.f32 %v536, %v4577
  %v4579 = vpop.f32.mrf.mxu0
  %v4580 = vpop.f32.mrf.mxu0
  %v4581 = vadd.f32 %v536, %v4580
  %v4582 = vpop.f32.mrf.mxu0
  %4583 = vmatprep.mubr.bf16.mxu0 0
  %4584 = vmatmul.mubr.bf16.gmra.mxu0 %v2564
  %v4585 = vpop.f32.mrf.mxu0
  %v4586 = vadd.f32 %v536, %v4585
  %v4587 = vpop.f32.mrf.mxu0
  %v4588 = vpop.f32.mrf.mxu0
  %v4589 = vadd.f32 %v536, %v4588
  %v4590 = vpop.f32.mrf.mxu0
  %4591 = vmatprep.mubr.bf16.mxu0 0
  %4592 = vmatmul.mubr.bf16.gmra.mxu0 %v2567
  %v4593 = vpop.f32.mrf.mxu0
  %v4594 = vadd.f32 %v536, %v4593
  %v4595 = vpop.f32.mrf.mxu0
  %v4596 = vpop.f32.mrf.mxu0
  %v4597 = vadd.f32 %v536, %v4596
  %v4598 = vpop.f32.mrf.mxu0
  %4599 = vmatprep.mubr.bf16.mxu0 0
  %4600 = vmatmul.mubr.bf16.gmra.mxu0 %v2570
  %v4601 = vpop.f32.mrf.mxu0
  %v4602 = vadd.f32 %v536, %v4601
  %v4603 = vpop.f32.mrf.mxu0
  %v4604 = vpop.f32.mrf.mxu0
  %v4605 = vadd.f32 %v536, %v4604
  %v4606 = vpop.f32.mrf.mxu0
  %4607 = vmatprep.mubr.bf16.mxu0 0
  %4608 = vmatmul.mubr.bf16.gmra.mxu0 %v2573
  %v4609 = vpop.f32.mrf.mxu0
  %v4610 = vadd.f32 %v536, %v4609
  %v4611 = vpop.f32.mrf.mxu0
  %v4612 = vpop.f32.mrf.mxu0
  %v4613 = vadd.f32 %v536, %v4612
  %v4614 = vpop.f32.mrf.mxu0
  %4615 = vmatprep.mubr.bf16.mxu0 0
  %4616 = vmatmul.mubr.bf16.gmra.mxu0 %v2576
  %v4617 = vpop.f32.mrf.mxu0
  %v4618 = vadd.f32 %v536, %v4617
  %v4619 = vpop.f32.mrf.mxu0
  %v4620 = vpop.f32.mrf.mxu0
  %v4621 = vadd.f32 %v536, %v4620
  %v4622 = vpop.f32.mrf.mxu0
  %4623 = vmatprep.mubr.bf16.mxu0 0
  %4624 = vmatmul.mubr.bf16.gmra.mxu0 %v2579
  %v4625 = vpop.f32.mrf.mxu0
  %v4626 = vadd.f32 %v536, %v4625
  %v4627 = vpop.f32.mrf.mxu0
  %v4628 = vpop.f32.mrf.mxu0
  %v4629 = vadd.f32 %v536, %v4628
  %v4630 = vpop.f32.mrf.mxu0
  %4631 = vmatprep.mubr.bf16.mxu0 0
  %4632 = vmatmul.mubr.bf16.gmra.mxu0 %v2582
  %v4633 = vpop.f32.mrf.mxu0
  %v4634 = vadd.f32 %v536, %v4633
  %v4635 = vpop.f32.mrf.mxu0
  %v4636 = vpop.f32.mrf.mxu0
  %v4637 = vadd.f32 %v536, %v4636
  %v4638 = vpop.f32.mrf.mxu0
  %4639 = vmatprep.mubr.bf16.mxu0 0
  %4640 = vmatmul.mubr.bf16.gmra.mxu0 %v2585
  %v4641 = vpop.f32.mrf.mxu0
  %v4642 = vadd.f32 %v536, %v4641
  %v4643 = vpop.f32.mrf.mxu0
  %v4644 = vpop.f32.mrf.mxu0
  %v4645 = vadd.f32 %v536, %v4644
  %v4646 = vpop.f32.mrf.mxu0
  %4647 = vmatprep.mubr.bf16.mxu0 0
  %4648 = vmatmul.mubr.bf16.gmra.mxu0 %v2588
  %v4649 = vpop.f32.mrf.mxu0
  %v4650 = vadd.f32 %v536, %v4649
  %v4651 = vpop.f32.mrf.mxu0
  %v4652 = vpop.f32.mrf.mxu0
  %v4653 = vadd.f32 %v536, %v4652
  %v4654 = vpop.f32.mrf.mxu0
  %4655 = vmatprep.mubr.bf16.mxu0 0
  %4656 = vmatmul.mubr.bf16.gmra.mxu0 %v2591
  %v4657 = vpop.f32.mrf.mxu0
  %v4658 = vadd.f32 %v536, %v4657
  %v4659 = vpop.f32.mrf.mxu0
  %v4660 = vpop.f32.mrf.mxu0
  %v4661 = vadd.f32 %v536, %v4660
  %v4662 = vpop.f32.mrf.mxu0
  %4663 = vmatprep.mubr.bf16.mxu0 0
  %4664 = vmatmul.mubr.bf16.gmra.mxu0 %v2594
  %v4665 = vpop.f32.mrf.mxu0
  %v4666 = vadd.f32 %v536, %v4665
  %v4667 = vpop.f32.mrf.mxu0
  %v4668 = vpop.f32.mrf.mxu0
  %v4669 = vadd.f32 %v536, %v4668
  %v4670 = vpop.f32.mrf.mxu0
  %4671 = vmatprep.mubr.bf16.mxu0 0
  %4672 = vmatmul.mubr.bf16.gmra.mxu0 %v2597
  %v4673 = vpop.f32.mrf.mxu0
  %v4674 = vadd.f32 %v536, %v4673
  %v4675 = vpop.f32.mrf.mxu0
  %v4676 = vpop.f32.mrf.mxu0
  %v4677 = vadd.f32 %v536, %v4676
  %v4678 = vpop.f32.mrf.mxu0
  %4679 = vdwg.mxu0
  %v4680 = vmax.f32 %v2634, 0.0
  %v4681 = vmax.f32 %v2637, 0.0
  %v4682 = vmax.f32 %v2642, 0.0
  %v4683 = vmax.f32 %v2645, 0.0
  %v4684 = vmax.f32 %v2650, 0.0
  %v4685 = vmax.f32 %v2653, 0.0
  %v4686 = vmax.f32 %v2658, 0.0
  %v4687 = vmax.f32 %v2661, 0.0
  %v4688 = vmax.f32 %v2666, 0.0
  %v4689 = vmax.f32 %v2669, 0.0
  %v4690 = vmax.f32 %v2674, 0.0
  %v4691 = vmax.f32 %v2677, 0.0
  %v4692 = vmax.f32 %v2682, 0.0
  %v4693 = vmax.f32 %v2685, 0.0
  %v4694 = vmax.f32 %v2690, 0.0
  %v4695 = vmax.f32 %v2693, 0.0
  %v4696 = vmax.f32 %v2698, 0.0
  %v4697 = vmax.f32 %v2701, 0.0
  %v4698 = vmax.f32 %v2706, 0.0
  %v4699 = vmax.f32 %v2709, 0.0
  %v4700 = vmax.f32 %v2714, 0.0
  %v4701 = vmax.f32 %v2717, 0.0
  %v4702 = vmax.f32 %v2722, 0.0
  %v4703 = vmax.f32 %v2725, 0.0
  %v4704 = vmax.f32 %v2730, 0.0
  %v4705 = vmax.f32 %v2733, 0.0
  %v4706 = vmax.f32 %v2738, 0.0
  %v4707 = vmax.f32 %v2741, 0.0
  %v4708 = vmax.f32 %v2746, 0.0
  %v4709 = vmax.f32 %v2749, 0.0
  %v4710 = vmax.f32 %v2754, 0.0
  %v4711 = vmax.f32 %v2757, 0.0
  %v4712 = vmax.f32 %v2762, 0.0
  %v4713 = vmax.f32 %v2765, 0.0
  %v4714 = vmax.f32 %v2770, 0.0
  %v4715 = vmax.f32 %v2773, 0.0
  %v4716 = vmax.f32 %v2778, 0.0
  %v4717 = vmax.f32 %v2781, 0.0
  %v4718 = vmax.f32 %v2786, 0.0
  %v4719 = vmax.f32 %v2789, 0.0
  %v4720 = vmax.f32 %v2794, 0.0
  %v4721 = vmax.f32 %v2797, 0.0
  %v4722 = vmax.f32 %v2802, 0.0
  %v4723 = vmax.f32 %v2805, 0.0
  %v4724 = vmax.f32 %v2810, 0.0
  %v4725 = vmax.f32 %v2813, 0.0
  %v4726 = vmax.f32 %v2818, 0.0
  %v4727 = vmax.f32 %v2821, 0.0
  %v4728 = vmax.f32 %v2826, 0.0
  %v4729 = vmax.f32 %v2829, 0.0
  %v4730 = vmax.f32 %v2834, 0.0
  %v4731 = vmax.f32 %v2837, 0.0
  %v4732 = vmax.f32 %v2842, 0.0
  %v4733 = vmax.f32 %v2845, 0.0
  %v4734 = vmax.f32 %v2850, 0.0
  %v4735 = vmax.f32 %v2853, 0.0
  %v4736 = vmax.f32 %v2858, 0.0
  %v4737 = vmax.f32 %v2861, 0.0
  %v4738 = vmax.f32 %v2866, 0.0
  %v4739 = vmax.f32 %v2869, 0.0
  %v4740 = vmax.f32 %v2874, 0.0
  %v4741 = vmax.f32 %v2877, 0.0
  %v4742 = vmax.f32 %v2882, 0.0
  %v4743 = vmax.f32 %v2885, 0.0
  %v4744 = vmax.f32 %v2890, 0.0
  %v4745 = vmax.f32 %v2893, 0.0
  %v4746 = vmax.f32 %v2898, 0.0
  %v4747 = vmax.f32 %v2901, 0.0
  %v4748 = vmax.f32 %v2906, 0.0
  %v4749 = vmax.f32 %v2909, 0.0
  %v4750 = vmax.f32 %v2914, 0.0
  %v4751 = vmax.f32 %v2917, 0.0
  %v4752 = vmax.f32 %v2922, 0.0
  %v4753 = vmax.f32 %v2925, 0.0
  %v4754 = vmax.f32 %v2930, 0.0
  %v4755 = vmax.f32 %v2933, 0.0
  %v4756 = vmax.f32 %v2938, 0.0
  %v4757 = vmax.f32 %v2941, 0.0
  %v4758 = vmax.f32 %v2946, 0.0
  %v4759 = vmax.f32 %v2949, 0.0
  %v4760 = vmax.f32 %v2954, 0.0
  %v4761 = vmax.f32 %v2957, 0.0
  %v4762 = vmax.f32 %v2962, 0.0
  %v4763 = vmax.f32 %v2965, 0.0
  %v4764 = vmax.f32 %v2970, 0.0
  %v4765 = vmax.f32 %v2973, 0.0
  %v4766 = vmax.f32 %v2978, 0.0
  %v4767 = vmax.f32 %v2981, 0.0
  %v4768 = vmax.f32 %v2986, 0.0
  %v4769 = vmax.f32 %v2989, 0.0
  %v4770 = vmax.f32 %v2994, 0.0
  %v4771 = vmax.f32 %v2997, 0.0
  %v4772 = vmax.f32 %v3002, 0.0
  %v4773 = vmax.f32 %v3005, 0.0
  %v4774 = vmax.f32 %v3010, 0.0
  %v4775 = vmax.f32 %v3013, 0.0
  %v4776 = vmax.f32 %v3018, 0.0
  %v4777 = vmax.f32 %v3021, 0.0
  %v4778 = vmax.f32 %v3026, 0.0
  %v4779 = vmax.f32 %v3029, 0.0
  %v4780 = vmax.f32 %v3034, 0.0
  %v4781 = vmax.f32 %v3037, 0.0
  %v4782 = vmax.f32 %v3042, 0.0
  %v4783 = vmax.f32 %v3045, 0.0
  %v4784 = vmax.f32 %v3050, 0.0
  %v4785 = vmax.f32 %v3053, 0.0
  %v4786 = vmax.f32 %v3058, 0.0
  %v4787 = vmax.f32 %v3061, 0.0
  %v4788 = vmax.f32 %v3066, 0.0
  %v4789 = vmax.f32 %v3069, 0.0
  %v4790 = vmax.f32 %v3074, 0.0
  %v4791 = vmax.f32 %v3077, 0.0
  %v4792 = vmax.f32 %v3082, 0.0
  %v4793 = vmax.f32 %v3085, 0.0
  %v4794 = vmax.f32 %v3090, 0.0
  %v4795 = vmax.f32 %v3093, 0.0
  %v4796 = vmax.f32 %v3098, 0.0
  %v4797 = vmax.f32 %v3101, 0.0
  %v4798 = vmax.f32 %v3106, 0.0
  %v4799 = vmax.f32 %v3109, 0.0
  %v4800 = vmax.f32 %v3114, 0.0
  %v4801 = vmax.f32 %v3117, 0.0
  %v4802 = vmax.f32 %v3122, 0.0
  %v4803 = vmax.f32 %v3125, 0.0
  %v4804 = vmax.f32 %v3130, 0.0
  %v4805 = vmax.f32 %v3133, 0.0
  %v4806 = vmax.f32 %v3138, 0.0
  %v4807 = vmax.f32 %v3141, 0.0
  %v4808 = vmax.f32 %v3146, 0.0
  %v4809 = vmax.f32 %v3149, 0.0
  %v4810 = vmax.f32 %v3154, 0.0
  %v4811 = vmax.f32 %v3157, 0.0
  %v4812 = vmax.f32 %v3162, 0.0
  %v4813 = vmax.f32 %v3165, 0.0
  %v4814 = vmax.f32 %v3170, 0.0
  %v4815 = vmax.f32 %v3173, 0.0
  %v4816 = vmax.f32 %v3178, 0.0
  %v4817 = vmax.f32 %v3181, 0.0
  %v4818 = vmax.f32 %v3186, 0.0
  %v4819 = vmax.f32 %v3189, 0.0
  %v4820 = vmax.f32 %v3194, 0.0
  %v4821 = vmax.f32 %v3197, 0.0
  %v4822 = vmax.f32 %v3202, 0.0
  %v4823 = vmax.f32 %v3205, 0.0
  %v4824 = vmax.f32 %v3210, 0.0
  %v4825 = vmax.f32 %v3213, 0.0
  %v4826 = vmax.f32 %v3218, 0.0
  %v4827 = vmax.f32 %v3221, 0.0
  %v4828 = vmax.f32 %v3226, 0.0
  %v4829 = vmax.f32 %v3229, 0.0
  %v4830 = vmax.f32 %v3234, 0.0
  %v4831 = vmax.f32 %v3237, 0.0
  %v4832 = vmax.f32 %v3242, 0.0
  %v4833 = vmax.f32 %v3245, 0.0
  %v4834 = vmax.f32 %v3250, 0.0
  %v4835 = vmax.f32 %v3253, 0.0
  %v4836 = vmax.f32 %v3258, 0.0
  %v4837 = vmax.f32 %v3261, 0.0
  %v4838 = vmax.f32 %v3266, 0.0
  %v4839 = vmax.f32 %v3269, 0.0
  %v4840 = vmax.f32 %v3274, 0.0
  %v4841 = vmax.f32 %v3277, 0.0
  %v4842 = vmax.f32 %v3282, 0.0
  %v4843 = vmax.f32 %v3285, 0.0
  %v4844 = vmax.f32 %v3290, 0.0
  %v4845 = vmax.f32 %v3293, 0.0
  %v4846 = vmax.f32 %v3298, 0.0
  %v4847 = vmax.f32 %v3301, 0.0
  %v4848 = vmax.f32 %v3306, 0.0
  %v4849 = vmax.f32 %v3309, 0.0
  %v4850 = vmax.f32 %v3314, 0.0
  %v4851 = vmax.f32 %v3317, 0.0
  %v4852 = vmax.f32 %v3322, 0.0
  %v4853 = vmax.f32 %v3325, 0.0
  %v4854 = vmax.f32 %v3330, 0.0
  %v4855 = vmax.f32 %v3333, 0.0
  %v4856 = vmax.f32 %v3338, 0.0
  %v4857 = vmax.f32 %v3341, 0.0
  %v4858 = vmax.f32 %v3346, 0.0
  %v4859 = vmax.f32 %v3349, 0.0
  %v4860 = vmax.f32 %v3354, 0.0
  %v4861 = vmax.f32 %v3357, 0.0
  %v4862 = vmax.f32 %v3362, 0.0
  %v4863 = vmax.f32 %v3365, 0.0
  %v4864 = vmax.f32 %v3370, 0.0
  %v4865 = vmax.f32 %v3373, 0.0
  %v4866 = vmax.f32 %v3378, 0.0
  %v4867 = vmax.f32 %v3381, 0.0
  %v4868 = vmax.f32 %v3386, 0.0
  %v4869 = vmax.f32 %v3389, 0.0
  %v4870 = vmax.f32 %v3394, 0.0
  %v4871 = vmax.f32 %v3397, 0.0
  %v4872 = vmax.f32 %v3402, 0.0
  %v4873 = vmax.f32 %v3405, 0.0
  %v4874 = vmax.f32 %v3410, 0.0
  %v4875 = vmax.f32 %v3413, 0.0
  %v4876 = vmax.f32 %v3418, 0.0
  %v4877 = vmax.f32 %v3421, 0.0
  %v4878 = vmax.f32 %v3426, 0.0
  %v4879 = vmax.f32 %v3429, 0.0
  %v4880 = vmax.f32 %v3434, 0.0
  %v4881 = vmax.f32 %v3437, 0.0
  %v4882 = vmax.f32 %v3442, 0.0
  %v4883 = vmax.f32 %v3445, 0.0
  %v4884 = vmax.f32 %v3450, 0.0
  %v4885 = vmax.f32 %v3453, 0.0
  %v4886 = vmax.f32 %v3458, 0.0
  %v4887 = vmax.f32 %v3461, 0.0
  %v4888 = vmax.f32 %v3466, 0.0
  %v4889 = vmax.f32 %v3469, 0.0
  %v4890 = vmax.f32 %v3474, 0.0
  %v4891 = vmax.f32 %v3477, 0.0
  %v4892 = vmax.f32 %v3482, 0.0
  %v4893 = vmax.f32 %v3485, 0.0
  %v4894 = vmax.f32 %v3490, 0.0
  %v4895 = vmax.f32 %v3493, 0.0
  %v4896 = vmax.f32 %v3498, 0.0
  %v4897 = vmax.f32 %v3501, 0.0
  %v4898 = vmax.f32 %v3506, 0.0
  %v4899 = vmax.f32 %v3509, 0.0
  %v4900 = vmax.f32 %v3514, 0.0
  %v4901 = vmax.f32 %v3517, 0.0
  %v4902 = vmax.f32 %v3522, 0.0
  %v4903 = vmax.f32 %v3525, 0.0
  %v4904 = vmax.f32 %v3530, 0.0
  %v4905 = vmax.f32 %v3533, 0.0
  %v4906 = vmax.f32 %v3538, 0.0
  %v4907 = vmax.f32 %v3541, 0.0
  %v4908 = vmax.f32 %v3546, 0.0
  %v4909 = vmax.f32 %v3549, 0.0
  %v4910 = vmax.f32 %v3554, 0.0
  %v4911 = vmax.f32 %v3557, 0.0
  %v4912 = vmax.f32 %v3562, 0.0
  %v4913 = vmax.f32 %v3565, 0.0
  %v4914 = vmax.f32 %v3570, 0.0
  %v4915 = vmax.f32 %v3573, 0.0
  %v4916 = vmax.f32 %v3578, 0.0
  %v4917 = vmax.f32 %v3581, 0.0
  %v4918 = vmax.f32 %v3586, 0.0
  %v4919 = vmax.f32 %v3589, 0.0
  %v4920 = vmax.f32 %v3594, 0.0
  %v4921 = vmax.f32 %v3597, 0.0
  %v4922 = vmax.f32 %v3602, 0.0
  %v4923 = vmax.f32 %v3605, 0.0
  %v4924 = vmax.f32 %v3610, 0.0
  %v4925 = vmax.f32 %v3613, 0.0
  %v4926 = vmax.f32 %v3618, 0.0
  %v4927 = vmax.f32 %v3621, 0.0
  %v4928 = vmax.f32 %v3626, 0.0
  %v4929 = vmax.f32 %v3629, 0.0
  %v4930 = vmax.f32 %v3634, 0.0
  %v4931 = vmax.f32 %v3637, 0.0
  %v4932 = vmax.f32 %v3642, 0.0
  %v4933 = vmax.f32 %v3645, 0.0
  %v4934 = vmax.f32 %v3650, 0.0
  %v4935 = vmax.f32 %v3653, 0.0
  %v4936 = vmax.f32 %v3658, 0.0
  %v4937 = vmax.f32 %v3661, 0.0
  %v4938 = vmax.f32 %v3666, 0.0
  %v4939 = vmax.f32 %v3669, 0.0
  %v4940 = vmax.f32 %v3674, 0.0
  %v4941 = vmax.f32 %v3677, 0.0
  %v4942 = vmax.f32 %v3682, 0.0
  %v4943 = vmax.f32 %v3685, 0.0
  %v4944 = vmax.f32 %v3690, 0.0
  %v4945 = vmax.f32 %v3693, 0.0
  %v4946 = vmax.f32 %v3698, 0.0
  %v4947 = vmax.f32 %v3701, 0.0
  %v4948 = vmax.f32 %v3706, 0.0
  %v4949 = vmax.f32 %v3709, 0.0
  %v4950 = vmax.f32 %v3714, 0.0
  %v4951 = vmax.f32 %v3717, 0.0
  %v4952 = vmax.f32 %v3722, 0.0
  %v4953 = vmax.f32 %v3725, 0.0
  %v4954 = vmax.f32 %v3730, 0.0
  %v4955 = vmax.f32 %v3733, 0.0
  %v4956 = vmax.f32 %v3738, 0.0
  %v4957 = vmax.f32 %v3741, 0.0
  %v4958 = vmax.f32 %v3746, 0.0
  %v4959 = vmax.f32 %v3749, 0.0
  %v4960 = vmax.f32 %v3754, 0.0
  %v4961 = vmax.f32 %v3757, 0.0
  %v4962 = vmax.f32 %v3762, 0.0
  %v4963 = vmax.f32 %v3765, 0.0
  %v4964 = vmax.f32 %v3770, 0.0
  %v4965 = vmax.f32 %v3773, 0.0
  %v4966 = vmax.f32 %v3778, 0.0
  %v4967 = vmax.f32 %v3781, 0.0
  %v4968 = vmax.f32 %v3786, 0.0
  %v4969 = vmax.f32 %v3789, 0.0
  %v4970 = vmax.f32 %v3794, 0.0
  %v4971 = vmax.f32 %v3797, 0.0
  %v4972 = vmax.f32 %v3802, 0.0
  %v4973 = vmax.f32 %v3805, 0.0
  %v4974 = vmax.f32 %v3810, 0.0
  %v4975 = vmax.f32 %v3813, 0.0
  %v4976 = vmax.f32 %v3818, 0.0
  %v4977 = vmax.f32 %v3821, 0.0
  %v4978 = vmax.f32 %v3826, 0.0
  %v4979 = vmax.f32 %v3829, 0.0
  %v4980 = vmax.f32 %v3834, 0.0
  %v4981 = vmax.f32 %v3837, 0.0
  %v4982 = vmax.f32 %v3842, 0.0
  %v4983 = vmax.f32 %v3845, 0.0
  %v4984 = vmax.f32 %v3850, 0.0
  %v4985 = vmax.f32 %v3853, 0.0
  %v4986 = vmax.f32 %v3858, 0.0
  %v4987 = vmax.f32 %v3861, 0.0
  %v4988 = vmax.f32 %v3866, 0.0
  %v4989 = vmax.f32 %v3869, 0.0
  %v4990 = vmax.f32 %v3874, 0.0
  %v4991 = vmax.f32 %v3877, 0.0
  %v4992 = vmax.f32 %v3882, 0.0
  %v4993 = vmax.f32 %v3885, 0.0
  %v4994 = vmax.f32 %v3890, 0.0
  %v4995 = vmax.f32 %v3893, 0.0
  %v4996 = vmax.f32 %v3898, 0.0
  %v4997 = vmax.f32 %v3901, 0.0
  %v4998 = vmax.f32 %v3906, 0.0
  %v4999 = vmax.f32 %v3909, 0.0
  %v5000 = vmax.f32 %v3914, 0.0
  %v5001 = vmax.f32 %v3917, 0.0
  %v5002 = vmax.f32 %v3922, 0.0
  %v5003 = vmax.f32 %v3925, 0.0
  %v5004 = vmax.f32 %v3930, 0.0
  %v5005 = vmax.f32 %v3933, 0.0
  %v5006 = vmax.f32 %v3938, 0.0
  %v5007 = vmax.f32 %v3941, 0.0
  %v5008 = vmax.f32 %v3946, 0.0
  %v5009 = vmax.f32 %v3949, 0.0
  %v5010 = vmax.f32 %v3954, 0.0
  %v5011 = vmax.f32 %v3957, 0.0
  %v5012 = vmax.f32 %v3962, 0.0
  %v5013 = vmax.f32 %v3965, 0.0
  %v5014 = vmax.f32 %v3970, 0.0
  %v5015 = vmax.f32 %v3973, 0.0
  %v5016 = vmax.f32 %v3978, 0.0
  %v5017 = vmax.f32 %v3981, 0.0
  %v5018 = vmax.f32 %v3986, 0.0
  %v5019 = vmax.f32 %v3989, 0.0
  %v5020 = vmax.f32 %v3994, 0.0
  %v5021 = vmax.f32 %v3997, 0.0
  %v5022 = vmax.f32 %v4002, 0.0
  %v5023 = vmax.f32 %v4005, 0.0
  %v5024 = vmax.f32 %v4010, 0.0
  %v5025 = vmax.f32 %v4013, 0.0
  %v5026 = vmax.f32 %v4018, 0.0
  %v5027 = vmax.f32 %v4021, 0.0
  %v5028 = vmax.f32 %v4026, 0.0
  %v5029 = vmax.f32 %v4029, 0.0
  %v5030 = vmax.f32 %v4034, 0.0
  %v5031 = vmax.f32 %v4037, 0.0
  %v5032 = vmax.f32 %v4042, 0.0
  %v5033 = vmax.f32 %v4045, 0.0
  %v5034 = vmax.f32 %v4050, 0.0
  %v5035 = vmax.f32 %v4053, 0.0
  %v5036 = vmax.f32 %v4058, 0.0
  %v5037 = vmax.f32 %v4061, 0.0
  %v5038 = vmax.f32 %v4066, 0.0
  %v5039 = vmax.f32 %v4069, 0.0
  %v5040 = vmax.f32 %v4074, 0.0
  %v5041 = vmax.f32 %v4077, 0.0
  %v5042 = vmax.f32 %v4082, 0.0
  %v5043 = vmax.f32 %v4085, 0.0
  %v5044 = vmax.f32 %v4090, 0.0
  %v5045 = vmax.f32 %v4093, 0.0
  %v5046 = vmax.f32 %v4098, 0.0
  %v5047 = vmax.f32 %v4101, 0.0
  %v5048 = vmax.f32 %v4106, 0.0
  %v5049 = vmax.f32 %v4109, 0.0
  %v5050 = vmax.f32 %v4114, 0.0
  %v5051 = vmax.f32 %v4117, 0.0
  %v5052 = vmax.f32 %v4122, 0.0
  %v5053 = vmax.f32 %v4125, 0.0
  %v5054 = vmax.f32 %v4130, 0.0
  %v5055 = vmax.f32 %v4133, 0.0
  %v5056 = vmax.f32 %v4138, 0.0
  %v5057 = vmax.f32 %v4141, 0.0
  %v5058 = vmax.f32 %v4146, 0.0
  %v5059 = vmax.f32 %v4149, 0.0
  %v5060 = vmax.f32 %v4154, 0.0
  %v5061 = vmax.f32 %v4157, 0.0
  %v5062 = vmax.f32 %v4162, 0.0
  %v5063 = vmax.f32 %v4165, 0.0
  %v5064 = vmax.f32 %v4170, 0.0
  %v5065 = vmax.f32 %v4173, 0.0
  %v5066 = vmax.f32 %v4178, 0.0
  %v5067 = vmax.f32 %v4181, 0.0
  %v5068 = vmax.f32 %v4186, 0.0
  %v5069 = vmax.f32 %v4189, 0.0
  %v5070 = vmax.f32 %v4194, 0.0
  %v5071 = vmax.f32 %v4197, 0.0
  %v5072 = vmax.f32 %v4202, 0.0
  %v5073 = vmax.f32 %v4205, 0.0
  %v5074 = vmax.f32 %v4210, 0.0
  %v5075 = vmax.f32 %v4213, 0.0
  %v5076 = vmax.f32 %v4218, 0.0
  %v5077 = vmax.f32 %v4221, 0.0
  %v5078 = vmax.f32 %v4226, 0.0
  %v5079 = vmax.f32 %v4229, 0.0
  %v5080 = vmax.f32 %v4234, 0.0
  %v5081 = vmax.f32 %v4237, 0.0
  %v5082 = vmax.f32 %v4242, 0.0
  %v5083 = vmax.f32 %v4245, 0.0
  %v5084 = vmax.f32 %v4250, 0.0
  %v5085 = vmax.f32 %v4253, 0.0
  %v5086 = vmax.f32 %v4258, 0.0
  %v5087 = vmax.f32 %v4261, 0.0
  %v5088 = vmax.f32 %v4266, 0.0
  %v5089 = vmax.f32 %v4269, 0.0
  %v5090 = vmax.f32 %v4274, 0.0
  %v5091 = vmax.f32 %v4277, 0.0
  %v5092 = vmax.f32 %v4282, 0.0
  %v5093 = vmax.f32 %v4285, 0.0
  %v5094 = vmax.f32 %v4290, 0.0
  %v5095 = vmax.f32 %v4293, 0.0
  %v5096 = vmax.f32 %v4298, 0.0
  %v5097 = vmax.f32 %v4301, 0.0
  %v5098 = vmax.f32 %v4306, 0.0
  %v5099 = vmax.f32 %v4309, 0.0
  %v5100 = vmax.f32 %v4314, 0.0
  %v5101 = vmax.f32 %v4317, 0.0
  %v5102 = vmax.f32 %v4322, 0.0
  %v5103 = vmax.f32 %v4325, 0.0
  %v5104 = vmax.f32 %v4330, 0.0
  %v5105 = vmax.f32 %v4333, 0.0
  %v5106 = vmax.f32 %v4338, 0.0
  %v5107 = vmax.f32 %v4341, 0.0
  %v5108 = vmax.f32 %v4346, 0.0
  %v5109 = vmax.f32 %v4349, 0.0
  %v5110 = vmax.f32 %v4354, 0.0
  %v5111 = vmax.f32 %v4357, 0.0
  %v5112 = vmax.f32 %v4362, 0.0
  %v5113 = vmax.f32 %v4365, 0.0
  %v5114 = vmax.f32 %v4370, 0.0
  %v5115 = vmax.f32 %v4373, 0.0
  %v5116 = vmax.f32 %v4378, 0.0
  %v5117 = vmax.f32 %v4381, 0.0
  %v5118 = vmax.f32 %v4386, 0.0
  %v5119 = vmax.f32 %v4389, 0.0
  %v5120 = vmax.f32 %v4394, 0.0
  %v5121 = vmax.f32 %v4397, 0.0
  %v5122 = vmax.f32 %v4402, 0.0
  %v5123 = vmax.f32 %v4405, 0.0
  %v5124 = vmax.f32 %v4410, 0.0
  %v5125 = vmax.f32 %v4413, 0.0
  %v5126 = vmax.f32 %v4418, 0.0
  %v5127 = vmax.f32 %v4421, 0.0
  %v5128 = vmax.f32 %v4426, 0.0
  %v5129 = vmax.f32 %v4429, 0.0
  %v5130 = vmax.f32 %v4434, 0.0
  %v5131 = vmax.f32 %v4437, 0.0
  %v5132 = vmax.f32 %v4442, 0.0
  %v5133 = vmax.f32 %v4445, 0.0
  %v5134 = vmax.f32 %v4450, 0.0
  %v5135 = vmax.f32 %v4453, 0.0
  %v5136 = vmax.f32 %v4458, 0.0
  %v5137 = vmax.f32 %v4461, 0.0
  %v5138 = vmax.f32 %v4466, 0.0
  %v5139 = vmax.f32 %v4469, 0.0
  %v5140 = vmax.f32 %v4474, 0.0
  %v5141 = vmax.f32 %v4477, 0.0
  %v5142 = vmax.f32 %v4482, 0.0
  %v5143 = vmax.f32 %v4485, 0.0
  %v5144 = vmax.f32 %v4490, 0.0
  %v5145 = vmax.f32 %v4493, 0.0
  %v5146 = vmax.f32 %v4498, 0.0
  %v5147 = vmax.f32 %v4501, 0.0
  %v5148 = vmax.f32 %v4506, 0.0
  %v5149 = vmax.f32 %v4509, 0.0
  %v5150 = vmax.f32 %v4514, 0.0
  %v5151 = vmax.f32 %v4517, 0.0
  %v5152 = vmax.f32 %v4522, 0.0
  %v5153 = vmax.f32 %v4525, 0.0
  %v5154 = vmax.f32 %v4530, 0.0
  %v5155 = vmax.f32 %v4533, 0.0
  %v5156 = vmax.f32 %v4538, 0.0
  %v5157 = vmax.f32 %v4541, 0.0
  %v5158 = vmax.f32 %v4546, 0.0
  %v5159 = vmax.f32 %v4549, 0.0
  %v5160 = vmax.f32 %v4554, 0.0
  %v5161 = vmax.f32 %v4557, 0.0
  %v5162 = vmax.f32 %v4562, 0.0
  %v5163 = vmax.f32 %v4565, 0.0
  %v5164 = vmax.f32 %v4570, 0.0
  %v5165 = vmax.f32 %v4573, 0.0
  %v5166 = vmax.f32 %v4578, 0.0
  %v5167 = vmax.f32 %v4581, 0.0
  %v5168 = vmax.f32 %v4586, 0.0
  %v5169 = vmax.f32 %v4589, 0.0
  %v5170 = vmax.f32 %v4594, 0.0
  %v5171 = vmax.f32 %v4597, 0.0
  %v5172 = vmax.f32 %v4602, 0.0
  %v5173 = vmax.f32 %v4605, 0.0
  %v5174 = vmax.f32 %v4610, 0.0
  %v5175 = vmax.f32 %v4613, 0.0
  %v5176 = vmax.f32 %v4618, 0.0
  %v5177 = vmax.f32 %v4621, 0.0
  %v5178 = vmax.f32 %v4626, 0.0
  %v5179 = vmax.f32 %v4629, 0.0
  %v5180 = vmax.f32 %v4634, 0.0
  %v5181 = vmax.f32 %v4637, 0.0
  %v5182 = vmax.f32 %v4642, 0.0
  %v5183 = vmax.f32 %v4645, 0.0
  %v5184 = vmax.f32 %v4650, 0.0
  %v5185 = vmax.f32 %v4653, 0.0
  %v5186 = vmax.f32 %v4658, 0.0
  %v5187 = vmax.f32 %v4661, 0.0
  %v5188 = vmax.f32 %v4666, 0.0
  %v5189 = vmax.f32 %v4669, 0.0
  %v5190 = vmax.f32 %v4674, 0.0
  %v5191 = vmax.f32 %v4677, 0.0
  %v5192 = vpack.c.bf16 %v4681, %v4680
  %v5193 = vpack.c.bf16 %v4683, %v4682
  %v5194 = vpack.c.bf16 %v4685, %v4684
  %v5195 = vpack.c.bf16 %v4687, %v4686
  %v5196 = vpack.c.bf16 %v4689, %v4688
  %v5197 = vpack.c.bf16 %v4691, %v4690
  %v5198 = vpack.c.bf16 %v4693, %v4692
  %v5199 = vpack.c.bf16 %v4695, %v4694
  %v5200 = vpack.c.bf16 %v4697, %v4696
  %v5201 = vpack.c.bf16 %v4699, %v4698
  %v5202 = vpack.c.bf16 %v4701, %v4700
  %v5203 = vpack.c.bf16 %v4703, %v4702
  %v5204 = vpack.c.bf16 %v4705, %v4704
  %v5205 = vpack.c.bf16 %v4707, %v4706
  %v5206 = vpack.c.bf16 %v4709, %v4708
  %v5207 = vpack.c.bf16 %v4711, %v4710
  %v5208 = vpack.c.bf16 %v4713, %v4712
  %v5209 = vpack.c.bf16 %v4715, %v4714
  %v5210 = vpack.c.bf16 %v4717, %v4716
  %v5211 = vpack.c.bf16 %v4719, %v4718
  %v5212 = vpack.c.bf16 %v4721, %v4720
  %v5213 = vpack.c.bf16 %v4723, %v4722
  %v5214 = vpack.c.bf16 %v4725, %v4724
  %v5215 = vpack.c.bf16 %v4727, %v4726
  %v5216 = vpack.c.bf16 %v4729, %v4728
  %v5217 = vpack.c.bf16 %v4731, %v4730
  %v5218 = vpack.c.bf16 %v4733, %v4732
  %v5219 = vpack.c.bf16 %v4735, %v4734
  %v5220 = vpack.c.bf16 %v4737, %v4736
  %v5221 = vpack.c.bf16 %v4739, %v4738
  %v5222 = vpack.c.bf16 %v4741, %v4740
  %v5223 = vpack.c.bf16 %v4743, %v4742
  %v5224 = vpack.c.bf16 %v4745, %v4744
  %v5225 = vpack.c.bf16 %v4747, %v4746
  %v5226 = vpack.c.bf16 %v4749, %v4748
  %v5227 = vpack.c.bf16 %v4751, %v4750
  %v5228 = vpack.c.bf16 %v4753, %v4752
  %v5229 = vpack.c.bf16 %v4755, %v4754
  %v5230 = vpack.c.bf16 %v4757, %v4756
  %v5231 = vpack.c.bf16 %v4759, %v4758
  %v5232 = vpack.c.bf16 %v4761, %v4760
  %v5233 = vpack.c.bf16 %v4763, %v4762
  %v5234 = vpack.c.bf16 %v4765, %v4764
  %v5235 = vpack.c.bf16 %v4767, %v4766
  %v5236 = vpack.c.bf16 %v4769, %v4768
  %v5237 = vpack.c.bf16 %v4771, %v4770
  %v5238 = vpack.c.bf16 %v4773, %v4772
  %v5239 = vpack.c.bf16 %v4775, %v4774
  %v5240 = vpack.c.bf16 %v4777, %v4776
  %v5241 = vpack.c.bf16 %v4779, %v4778
  %v5242 = vpack.c.bf16 %v4781, %v4780
  %v5243 = vpack.c.bf16 %v4783, %v4782
  %v5244 = vpack.c.bf16 %v4785, %v4784
  %v5245 = vpack.c.bf16 %v4787, %v4786
  %v5246 = vpack.c.bf16 %v4789, %v4788
  %v5247 = vpack.c.bf16 %v4791, %v4790
  %v5248 = vpack.c.bf16 %v4793, %v4792
  %v5249 = vpack.c.bf16 %v4795, %v4794
  %v5250 = vpack.c.bf16 %v4797, %v4796
  %v5251 = vpack.c.bf16 %v4799, %v4798
  %v5252 = vpack.c.bf16 %v4801, %v4800
  %v5253 = vpack.c.bf16 %v4803, %v4802
  %v5254 = vpack.c.bf16 %v4805, %v4804
  %v5255 = vpack.c.bf16 %v4807, %v4806
  %v5256 = vpack.c.bf16 %v4809, %v4808
  %v5257 = vpack.c.bf16 %v4811, %v4810
  %v5258 = vpack.c.bf16 %v4813, %v4812
  %v5259 = vpack.c.bf16 %v4815, %v4814
  %v5260 = vpack.c.bf16 %v4817, %v4816
  %v5261 = vpack.c.bf16 %v4819, %v4818
  %v5262 = vpack.c.bf16 %v4821, %v4820
  %v5263 = vpack.c.bf16 %v4823, %v4822
  %v5264 = vpack.c.bf16 %v4825, %v4824
  %v5265 = vpack.c.bf16 %v4827, %v4826
  %v5266 = vpack.c.bf16 %v4829, %v4828
  %v5267 = vpack.c.bf16 %v4831, %v4830
  %v5268 = vpack.c.bf16 %v4833, %v4832
  %v5269 = vpack.c.bf16 %v4835, %v4834
  %v5270 = vpack.c.bf16 %v4837, %v4836
  %v5271 = vpack.c.bf16 %v4839, %v4838
  %v5272 = vpack.c.bf16 %v4841, %v4840
  %v5273 = vpack.c.bf16 %v4843, %v4842
  %v5274 = vpack.c.bf16 %v4845, %v4844
  %v5275 = vpack.c.bf16 %v4847, %v4846
  %v5276 = vpack.c.bf16 %v4849, %v4848
  %v5277 = vpack.c.bf16 %v4851, %v4850
  %v5278 = vpack.c.bf16 %v4853, %v4852
  %v5279 = vpack.c.bf16 %v4855, %v4854
  %v5280 = vpack.c.bf16 %v4857, %v4856
  %v5281 = vpack.c.bf16 %v4859, %v4858
  %v5282 = vpack.c.bf16 %v4861, %v4860
  %v5283 = vpack.c.bf16 %v4863, %v4862
  %v5284 = vpack.c.bf16 %v4865, %v4864
  %v5285 = vpack.c.bf16 %v4867, %v4866
  %v5286 = vpack.c.bf16 %v4869, %v4868
  %v5287 = vpack.c.bf16 %v4871, %v4870
  %v5288 = vpack.c.bf16 %v4873, %v4872
  %v5289 = vpack.c.bf16 %v4875, %v4874
  %v5290 = vpack.c.bf16 %v4877, %v4876
  %v5291 = vpack.c.bf16 %v4879, %v4878
  %v5292 = vpack.c.bf16 %v4881, %v4880
  %v5293 = vpack.c.bf16 %v4883, %v4882
  %v5294 = vpack.c.bf16 %v4885, %v4884
  %v5295 = vpack.c.bf16 %v4887, %v4886
  %v5296 = vpack.c.bf16 %v4889, %v4888
  %v5297 = vpack.c.bf16 %v4891, %v4890
  %v5298 = vpack.c.bf16 %v4893, %v4892
  %v5299 = vpack.c.bf16 %v4895, %v4894
  %v5300 = vpack.c.bf16 %v4897, %v4896
  %v5301 = vpack.c.bf16 %v4899, %v4898
  %v5302 = vpack.c.bf16 %v4901, %v4900
  %v5303 = vpack.c.bf16 %v4903, %v4902
  %v5304 = vpack.c.bf16 %v4905, %v4904
  %v5305 = vpack.c.bf16 %v4907, %v4906
  %v5306 = vpack.c.bf16 %v4909, %v4908
  %v5307 = vpack.c.bf16 %v4911, %v4910
  %v5308 = vpack.c.bf16 %v4913, %v4912
  %v5309 = vpack.c.bf16 %v4915, %v4914
  %v5310 = vpack.c.bf16 %v4917, %v4916
  %v5311 = vpack.c.bf16 %v4919, %v4918
  %v5312 = vpack.c.bf16 %v4921, %v4920
  %v5313 = vpack.c.bf16 %v4923, %v4922
  %v5314 = vpack.c.bf16 %v4925, %v4924
  %v5315 = vpack.c.bf16 %v4927, %v4926
  %v5316 = vpack.c.bf16 %v4929, %v4928
  %v5317 = vpack.c.bf16 %v4931, %v4930
  %v5318 = vpack.c.bf16 %v4933, %v4932
  %v5319 = vpack.c.bf16 %v4935, %v4934
  %v5320 = vpack.c.bf16 %v4937, %v4936
  %v5321 = vpack.c.bf16 %v4939, %v4938
  %v5322 = vpack.c.bf16 %v4941, %v4940
  %v5323 = vpack.c.bf16 %v4943, %v4942
  %v5324 = vpack.c.bf16 %v4945, %v4944
  %v5325 = vpack.c.bf16 %v4947, %v4946
  %v5326 = vpack.c.bf16 %v4949, %v4948
  %v5327 = vpack.c.bf16 %v4951, %v4950
  %v5328 = vpack.c.bf16 %v4953, %v4952
  %v5329 = vpack.c.bf16 %v4955, %v4954
  %v5330 = vpack.c.bf16 %v4957, %v4956
  %v5331 = vpack.c.bf16 %v4959, %v4958
  %v5332 = vpack.c.bf16 %v4961, %v4960
  %v5333 = vpack.c.bf16 %v4963, %v4962
  %v5334 = vpack.c.bf16 %v4965, %v4964
  %v5335 = vpack.c.bf16 %v4967, %v4966
  %v5336 = vpack.c.bf16 %v4969, %v4968
  %v5337 = vpack.c.bf16 %v4971, %v4970
  %v5338 = vpack.c.bf16 %v4973, %v4972
  %v5339 = vpack.c.bf16 %v4975, %v4974
  %v5340 = vpack.c.bf16 %v4977, %v4976
  %v5341 = vpack.c.bf16 %v4979, %v4978
  %v5342 = vpack.c.bf16 %v4981, %v4980
  %v5343 = vpack.c.bf16 %v4983, %v4982
  %v5344 = vpack.c.bf16 %v4985, %v4984
  %v5345 = vpack.c.bf16 %v4987, %v4986
  %v5346 = vpack.c.bf16 %v4989, %v4988
  %v5347 = vpack.c.bf16 %v4991, %v4990
  %v5348 = vpack.c.bf16 %v4993, %v4992
  %v5349 = vpack.c.bf16 %v4995, %v4994
  %v5350 = vpack.c.bf16 %v4997, %v4996
  %v5351 = vpack.c.bf16 %v4999, %v4998
  %v5352 = vpack.c.bf16 %v5001, %v5000
  %v5353 = vpack.c.bf16 %v5003, %v5002
  %v5354 = vpack.c.bf16 %v5005, %v5004
  %v5355 = vpack.c.bf16 %v5007, %v5006
  %v5356 = vpack.c.bf16 %v5009, %v5008
  %v5357 = vpack.c.bf16 %v5011, %v5010
  %v5358 = vpack.c.bf16 %v5013, %v5012
  %v5359 = vpack.c.bf16 %v5015, %v5014
  %v5360 = vpack.c.bf16 %v5017, %v5016
  %v5361 = vpack.c.bf16 %v5019, %v5018
  %v5362 = vpack.c.bf16 %v5021, %v5020
  %v5363 = vpack.c.bf16 %v5023, %v5022
  %v5364 = vpack.c.bf16 %v5025, %v5024
  %v5365 = vpack.c.bf16 %v5027, %v5026
  %v5366 = vpack.c.bf16 %v5029, %v5028
  %v5367 = vpack.c.bf16 %v5031, %v5030
  %v5368 = vpack.c.bf16 %v5033, %v5032
  %v5369 = vpack.c.bf16 %v5035, %v5034
  %v5370 = vpack.c.bf16 %v5037, %v5036
  %v5371 = vpack.c.bf16 %v5039, %v5038
  %v5372 = vpack.c.bf16 %v5041, %v5040
  %v5373 = vpack.c.bf16 %v5043, %v5042
  %v5374 = vpack.c.bf16 %v5045, %v5044
  %v5375 = vpack.c.bf16 %v5047, %v5046
  %v5376 = vpack.c.bf16 %v5049, %v5048
  %v5377 = vpack.c.bf16 %v5051, %v5050
  %v5378 = vpack.c.bf16 %v5053, %v5052
  %v5379 = vpack.c.bf16 %v5055, %v5054
  %v5380 = vpack.c.bf16 %v5057, %v5056
  %v5381 = vpack.c.bf16 %v5059, %v5058
  %v5382 = vpack.c.bf16 %v5061, %v5060
  %v5383 = vpack.c.bf16 %v5063, %v5062
  %v5384 = vpack.c.bf16 %v5065, %v5064
  %v5385 = vpack.c.bf16 %v5067, %v5066
  %v5386 = vpack.c.bf16 %v5069, %v5068
  %v5387 = vpack.c.bf16 %v5071, %v5070
  %v5388 = vpack.c.bf16 %v5073, %v5072
  %v5389 = vpack.c.bf16 %v5075, %v5074
  %v5390 = vpack.c.bf16 %v5077, %v5076
  %v5391 = vpack.c.bf16 %v5079, %v5078
  %v5392 = vpack.c.bf16 %v5081, %v5080
  %v5393 = vpack.c.bf16 %v5083, %v5082
  %v5394 = vpack.c.bf16 %v5085, %v5084
  %v5395 = vpack.c.bf16 %v5087, %v5086
  %v5396 = vpack.c.bf16 %v5089, %v5088
  %v5397 = vpack.c.bf16 %v5091, %v5090
  %v5398 = vpack.c.bf16 %v5093, %v5092
  %v5399 = vpack.c.bf16 %v5095, %v5094
  %v5400 = vpack.c.bf16 %v5097, %v5096
  %v5401 = vpack.c.bf16 %v5099, %v5098
  %v5402 = vpack.c.bf16 %v5101, %v5100
  %v5403 = vpack.c.bf16 %v5103, %v5102
  %v5404 = vpack.c.bf16 %v5105, %v5104
  %v5405 = vpack.c.bf16 %v5107, %v5106
  %v5406 = vpack.c.bf16 %v5109, %v5108
  %v5407 = vpack.c.bf16 %v5111, %v5110
  %v5408 = vpack.c.bf16 %v5113, %v5112
  %v5409 = vpack.c.bf16 %v5115, %v5114
  %v5410 = vpack.c.bf16 %v5117, %v5116
  %v5411 = vpack.c.bf16 %v5119, %v5118
  %v5412 = vpack.c.bf16 %v5121, %v5120
  %v5413 = vpack.c.bf16 %v5123, %v5122
  %v5414 = vpack.c.bf16 %v5125, %v5124
  %v5415 = vpack.c.bf16 %v5127, %v5126
  %v5416 = vpack.c.bf16 %v5129, %v5128
  %v5417 = vpack.c.bf16 %v5131, %v5130
  %v5418 = vpack.c.bf16 %v5133, %v5132
  %v5419 = vpack.c.bf16 %v5135, %v5134
  %v5420 = vpack.c.bf16 %v5137, %v5136
  %v5421 = vpack.c.bf16 %v5139, %v5138
  %v5422 = vpack.c.bf16 %v5141, %v5140
  %v5423 = vpack.c.bf16 %v5143, %v5142
  %v5424 = vpack.c.bf16 %v5145, %v5144
  %v5425 = vpack.c.bf16 %v5147, %v5146
  %v5426 = vpack.c.bf16 %v5149, %v5148
  %v5427 = vpack.c.bf16 %v5151, %v5150
  %v5428 = vpack.c.bf16 %v5153, %v5152
  %v5429 = vpack.c.bf16 %v5155, %v5154
  %v5430 = vpack.c.bf16 %v5157, %v5156
  %v5431 = vpack.c.bf16 %v5159, %v5158
  %v5432 = vpack.c.bf16 %v5161, %v5160
  %v5433 = vpack.c.bf16 %v5163, %v5162
  %v5434 = vpack.c.bf16 %v5165, %v5164
  %v5435 = vpack.c.bf16 %v5167, %v5166
  %v5436 = vpack.c.bf16 %v5169, %v5168
  %v5437 = vpack.c.bf16 %v5171, %v5170
  %v5438 = vpack.c.bf16 %v5173, %v5172
  %v5439 = vpack.c.bf16 %v5175, %v5174
  %v5440 = vpack.c.bf16 %v5177, %v5176
  %v5441 = vpack.c.bf16 %v5179, %v5178
  %v5442 = vpack.c.bf16 %v5181, %v5180
  %v5443 = vpack.c.bf16 %v5183, %v5182
  %v5444 = vpack.c.bf16 %v5185, %v5184
  %v5445 = vpack.c.bf16 %v5187, %v5186
  %v5446 = vpack.c.bf16 %v5189, %v5188
  %v5447 = vpack.c.bf16 %v5191, %v5190
  %v5704 = vunpack.c.l.b16 %v5192
  %v5705 = vunpack.c.h.b16 %v5192
  %v5706 = vunpack.c.l.b16 %v5193
  %v5707 = vunpack.c.h.b16 %v5193
  %v5708 = vunpack.c.l.b16 %v5194
  %v5709 = vunpack.c.h.b16 %v5194
  %v5710 = vunpack.c.l.b16 %v5195
  %v5711 = vunpack.c.h.b16 %v5195
  %v5712 = vunpack.c.l.b16 %v5196
  %v5713 = vunpack.c.h.b16 %v5196
  %v5714 = vunpack.c.l.b16 %v5197
  %v5715 = vunpack.c.h.b16 %v5197
  %v5716 = vunpack.c.l.b16 %v5198
  %v5717 = vunpack.c.h.b16 %v5198
  %v5718 = vunpack.c.l.b16 %v5199
  %v5719 = vunpack.c.h.b16 %v5199
  %v5720 = vunpack.c.l.b16 %v5200
  %v5721 = vunpack.c.h.b16 %v5200
  %v5722 = vunpack.c.l.b16 %v5201
  %v5723 = vunpack.c.h.b16 %v5201
  %v5724 = vunpack.c.l.b16 %v5202
  %v5725 = vunpack.c.h.b16 %v5202
  %v5726 = vunpack.c.l.b16 %v5203
  %v5727 = vunpack.c.h.b16 %v5203
  %v5728 = vunpack.c.l.b16 %v5204
  %v5729 = vunpack.c.h.b16 %v5204
  %v5730 = vunpack.c.l.b16 %v5205
  %v5731 = vunpack.c.h.b16 %v5205
  %v5732 = vunpack.c.l.b16 %v5206
  %v5733 = vunpack.c.h.b16 %v5206
  %v5734 = vunpack.c.l.b16 %v5207
  %v5735 = vunpack.c.h.b16 %v5207
  %v5736 = vunpack.c.l.b16 %v5208
  %v5737 = vunpack.c.h.b16 %v5208
  %v5738 = vunpack.c.l.b16 %v5209
  %v5739 = vunpack.c.h.b16 %v5209
  %v5740 = vunpack.c.l.b16 %v5210
  %v5741 = vunpack.c.h.b16 %v5210
  %v5742 = vunpack.c.l.b16 %v5211
  %v5743 = vunpack.c.h.b16 %v5211
  %v5744 = vunpack.c.l.b16 %v5212
  %v5745 = vunpack.c.h.b16 %v5212
  %v5746 = vunpack.c.l.b16 %v5213
  %v5747 = vunpack.c.h.b16 %v5213
  %v5748 = vunpack.c.l.b16 %v5214
  %v5749 = vunpack.c.h.b16 %v5214
  %v5750 = vunpack.c.l.b16 %v5215
  %v5751 = vunpack.c.h.b16 %v5215
  %v5752 = vunpack.c.l.b16 %v5216
  %v5753 = vunpack.c.h.b16 %v5216
  %v5754 = vunpack.c.l.b16 %v5217
  %v5755 = vunpack.c.h.b16 %v5217
  %v5756 = vunpack.c.l.b16 %v5218
  %v5757 = vunpack.c.h.b16 %v5218
  %v5758 = vunpack.c.l.b16 %v5219
  %v5759 = vunpack.c.h.b16 %v5219
  %v5760 = vunpack.c.l.b16 %v5220
  %v5761 = vunpack.c.h.b16 %v5220
  %v5762 = vunpack.c.l.b16 %v5221
  %v5763 = vunpack.c.h.b16 %v5221
  %v5764 = vunpack.c.l.b16 %v5222
  %v5765 = vunpack.c.h.b16 %v5222
  %v5766 = vunpack.c.l.b16 %v5223
  %v5767 = vunpack.c.h.b16 %v5223
  %v5768 = vunpack.c.l.b16 %v5224
  %v5769 = vunpack.c.h.b16 %v5224
  %v5770 = vunpack.c.l.b16 %v5225
  %v5771 = vunpack.c.h.b16 %v5225
  %v5772 = vunpack.c.l.b16 %v5226
  %v5773 = vunpack.c.h.b16 %v5226
  %v5774 = vunpack.c.l.b16 %v5227
  %v5775 = vunpack.c.h.b16 %v5227
  %v5776 = vunpack.c.l.b16 %v5228
  %v5777 = vunpack.c.h.b16 %v5228
  %v5778 = vunpack.c.l.b16 %v5229
  %v5779 = vunpack.c.h.b16 %v5229
  %v5780 = vunpack.c.l.b16 %v5230
  %v5781 = vunpack.c.h.b16 %v5230
  %v5782 = vunpack.c.l.b16 %v5231
  %v5783 = vunpack.c.h.b16 %v5231
  %v5784 = vunpack.c.l.b16 %v5232
  %v5785 = vunpack.c.h.b16 %v5232
  %v5786 = vunpack.c.l.b16 %v5233
  %v5787 = vunpack.c.h.b16 %v5233
  %v5788 = vunpack.c.l.b16 %v5234
  %v5789 = vunpack.c.h.b16 %v5234
  %v5790 = vunpack.c.l.b16 %v5235
  %v5791 = vunpack.c.h.b16 %v5235
  %v5792 = vunpack.c.l.b16 %v5236
  %v5793 = vunpack.c.h.b16 %v5236
  %v5794 = vunpack.c.l.b16 %v5237
  %v5795 = vunpack.c.h.b16 %v5237
  %v5796 = vunpack.c.l.b16 %v5238
  %v5797 = vunpack.c.h.b16 %v5238
  %v5798 = vunpack.c.l.b16 %v5239
  %v5799 = vunpack.c.h.b16 %v5239
  %v5800 = vunpack.c.l.b16 %v5240
  %v5801 = vunpack.c.h.b16 %v5240
  %v5802 = vunpack.c.l.b16 %v5241
  %v5803 = vunpack.c.h.b16 %v5241
  %v5804 = vunpack.c.l.b16 %v5242
  %v5805 = vunpack.c.h.b16 %v5242
  %v5806 = vunpack.c.l.b16 %v5243
  %v5807 = vunpack.c.h.b16 %v5243
  %v5808 = vunpack.c.l.b16 %v5244
  %v5809 = vunpack.c.h.b16 %v5244
  %v5810 = vunpack.c.l.b16 %v5245
  %v5811 = vunpack.c.h.b16 %v5245
  %v5812 = vunpack.c.l.b16 %v5246
  %v5813 = vunpack.c.h.b16 %v5246
  %v5814 = vunpack.c.l.b16 %v5247
  %v5815 = vunpack.c.h.b16 %v5247
  %v5816 = vunpack.c.l.b16 %v5248
  %v5817 = vunpack.c.h.b16 %v5248
  %v5818 = vunpack.c.l.b16 %v5249
  %v5819 = vunpack.c.h.b16 %v5249
  %v5820 = vunpack.c.l.b16 %v5250
  %v5821 = vunpack.c.h.b16 %v5250
  %v5822 = vunpack.c.l.b16 %v5251
  %v5823 = vunpack.c.h.b16 %v5251
  %v5824 = vunpack.c.l.b16 %v5252
  %v5825 = vunpack.c.h.b16 %v5252
  %v5826 = vunpack.c.l.b16 %v5253
  %v5827 = vunpack.c.h.b16 %v5253
  %v5828 = vunpack.c.l.b16 %v5254
  %v5829 = vunpack.c.h.b16 %v5254
  %v5830 = vunpack.c.l.b16 %v5255
  %v5831 = vunpack.c.h.b16 %v5255
  %v5832 = vunpack.c.l.b16 %v5256
  %v5833 = vunpack.c.h.b16 %v5256
  %v5834 = vunpack.c.l.b16 %v5257
  %v5835 = vunpack.c.h.b16 %v5257
  %v5836 = vunpack.c.l.b16 %v5258
  %v5837 = vunpack.c.h.b16 %v5258
  %v5838 = vunpack.c.l.b16 %v5259
  %v5839 = vunpack.c.h.b16 %v5259
  %v5840 = vunpack.c.l.b16 %v5260
  %v5841 = vunpack.c.h.b16 %v5260
  %v5842 = vunpack.c.l.b16 %v5261
  %v5843 = vunpack.c.h.b16 %v5261
  %v5844 = vunpack.c.l.b16 %v5262
  %v5845 = vunpack.c.h.b16 %v5262
  %v5846 = vunpack.c.l.b16 %v5263
  %v5847 = vunpack.c.h.b16 %v5263
  %v5848 = vunpack.c.l.b16 %v5264
  %v5849 = vunpack.c.h.b16 %v5264
  %v5850 = vunpack.c.l.b16 %v5265
  %v5851 = vunpack.c.h.b16 %v5265
  %v5852 = vunpack.c.l.b16 %v5266
  %v5853 = vunpack.c.h.b16 %v5266
  %v5854 = vunpack.c.l.b16 %v5267
  %v5855 = vunpack.c.h.b16 %v5267
  %v5856 = vunpack.c.l.b16 %v5268
  %v5857 = vunpack.c.h.b16 %v5268
  %v5858 = vunpack.c.l.b16 %v5269
  %v5859 = vunpack.c.h.b16 %v5269
  %v5860 = vunpack.c.l.b16 %v5270
  %v5861 = vunpack.c.h.b16 %v5270
  %v5862 = vunpack.c.l.b16 %v5271
  %v5863 = vunpack.c.h.b16 %v5271
  %v5864 = vunpack.c.l.b16 %v5272
  %v5865 = vunpack.c.h.b16 %v5272
  %v5866 = vunpack.c.l.b16 %v5273
  %v5867 = vunpack.c.h.b16 %v5273
  %v5868 = vunpack.c.l.b16 %v5274
  %v5869 = vunpack.c.h.b16 %v5274
  %v5870 = vunpack.c.l.b16 %v5275
  %v5871 = vunpack.c.h.b16 %v5275
  %v5872 = vunpack.c.l.b16 %v5276
  %v5873 = vunpack.c.h.b16 %v5276
  %v5874 = vunpack.c.l.b16 %v5277
  %v5875 = vunpack.c.h.b16 %v5277
  %v5876 = vunpack.c.l.b16 %v5278
  %v5877 = vunpack.c.h.b16 %v5278
  %v5878 = vunpack.c.l.b16 %v5279
  %v5879 = vunpack.c.h.b16 %v5279
  %v5880 = vunpack.c.l.b16 %v5280
  %v5881 = vunpack.c.h.b16 %v5280
  %v5882 = vunpack.c.l.b16 %v5281
  %v5883 = vunpack.c.h.b16 %v5281
  %v5884 = vunpack.c.l.b16 %v5282
  %v5885 = vunpack.c.h.b16 %v5282
  %v5886 = vunpack.c.l.b16 %v5283
  %v5887 = vunpack.c.h.b16 %v5283
  %v5888 = vunpack.c.l.b16 %v5284
  %v5889 = vunpack.c.h.b16 %v5284
  %v5890 = vunpack.c.l.b16 %v5285
  %v5891 = vunpack.c.h.b16 %v5285
  %v5892 = vunpack.c.l.b16 %v5286
  %v5893 = vunpack.c.h.b16 %v5286
  %v5894 = vunpack.c.l.b16 %v5287
  %v5895 = vunpack.c.h.b16 %v5287
  %v5896 = vunpack.c.l.b16 %v5288
  %v5897 = vunpack.c.h.b16 %v5288
  %v5898 = vunpack.c.l.b16 %v5289
  %v5899 = vunpack.c.h.b16 %v5289
  %v5900 = vunpack.c.l.b16 %v5290
  %v5901 = vunpack.c.h.b16 %v5290
  %v5902 = vunpack.c.l.b16 %v5291
  %v5903 = vunpack.c.h.b16 %v5291
  %v5904 = vunpack.c.l.b16 %v5292
  %v5905 = vunpack.c.h.b16 %v5292
  %v5906 = vunpack.c.l.b16 %v5293
  %v5907 = vunpack.c.h.b16 %v5293
  %v5908 = vunpack.c.l.b16 %v5294
  %v5909 = vunpack.c.h.b16 %v5294
  %v5910 = vunpack.c.l.b16 %v5295
  %v5911 = vunpack.c.h.b16 %v5295
  %v5912 = vunpack.c.l.b16 %v5296
  %v5913 = vunpack.c.h.b16 %v5296
  %v5914 = vunpack.c.l.b16 %v5297
  %v5915 = vunpack.c.h.b16 %v5297
  %v5916 = vunpack.c.l.b16 %v5298
  %v5917 = vunpack.c.h.b16 %v5298
  %v5918 = vunpack.c.l.b16 %v5299
  %v5919 = vunpack.c.h.b16 %v5299
  %v5920 = vunpack.c.l.b16 %v5300
  %v5921 = vunpack.c.h.b16 %v5300
  %v5922 = vunpack.c.l.b16 %v5301
  %v5923 = vunpack.c.h.b16 %v5301
  %v5924 = vunpack.c.l.b16 %v5302
  %v5925 = vunpack.c.h.b16 %v5302
  %v5926 = vunpack.c.l.b16 %v5303
  %v5927 = vunpack.c.h.b16 %v5303
  %v5928 = vunpack.c.l.b16 %v5304
  %v5929 = vunpack.c.h.b16 %v5304
  %v5930 = vunpack.c.l.b16 %v5305
  %v5931 = vunpack.c.h.b16 %v5305
  %v5932 = vunpack.c.l.b16 %v5306
  %v5933 = vunpack.c.h.b16 %v5306
  %v5934 = vunpack.c.l.b16 %v5307
  %v5935 = vunpack.c.h.b16 %v5307
  %v5936 = vunpack.c.l.b16 %v5308
  %v5937 = vunpack.c.h.b16 %v5308
  %v5938 = vunpack.c.l.b16 %v5309
  %v5939 = vunpack.c.h.b16 %v5309
  %v5940 = vunpack.c.l.b16 %v5310
  %v5941 = vunpack.c.h.b16 %v5310
  %v5942 = vunpack.c.l.b16 %v5311
  %v5943 = vunpack.c.h.b16 %v5311
  %v5944 = vunpack.c.l.b16 %v5312
  %v5945 = vunpack.c.h.b16 %v5312
  %v5946 = vunpack.c.l.b16 %v5313
  %v5947 = vunpack.c.h.b16 %v5313
  %v5948 = vunpack.c.l.b16 %v5314
  %v5949 = vunpack.c.h.b16 %v5314
  %v5950 = vunpack.c.l.b16 %v5315
  %v5951 = vunpack.c.h.b16 %v5315
  %v5952 = vunpack.c.l.b16 %v5316
  %v5953 = vunpack.c.h.b16 %v5316
  %v5954 = vunpack.c.l.b16 %v5317
  %v5955 = vunpack.c.h.b16 %v5317
  %v5956 = vunpack.c.l.b16 %v5318
  %v5957 = vunpack.c.h.b16 %v5318
  %v5958 = vunpack.c.l.b16 %v5319
  %v5959 = vunpack.c.h.b16 %v5319
  %v5960 = vunpack.c.l.b16 %v5320
  %v5961 = vunpack.c.h.b16 %v5320
  %v5962 = vunpack.c.l.b16 %v5321
  %v5963 = vunpack.c.h.b16 %v5321
  %v5964 = vunpack.c.l.b16 %v5322
  %v5965 = vunpack.c.h.b16 %v5322
  %v5966 = vunpack.c.l.b16 %v5323
  %v5967 = vunpack.c.h.b16 %v5323
  %v5968 = vunpack.c.l.b16 %v5324
  %v5969 = vunpack.c.h.b16 %v5324
  %v5970 = vunpack.c.l.b16 %v5325
  %v5971 = vunpack.c.h.b16 %v5325
  %v5972 = vunpack.c.l.b16 %v5326
  %v5973 = vunpack.c.h.b16 %v5326
  %v5974 = vunpack.c.l.b16 %v5327
  %v5975 = vunpack.c.h.b16 %v5327
  %v5976 = vunpack.c.l.b16 %v5328
  %v5977 = vunpack.c.h.b16 %v5328
  %v5978 = vunpack.c.l.b16 %v5329
  %v5979 = vunpack.c.h.b16 %v5329
  %v5980 = vunpack.c.l.b16 %v5330
  %v5981 = vunpack.c.h.b16 %v5330
  %v5982 = vunpack.c.l.b16 %v5331
  %v5983 = vunpack.c.h.b16 %v5331
  %v5984 = vunpack.c.l.b16 %v5332
  %v5985 = vunpack.c.h.b16 %v5332
  %v5986 = vunpack.c.l.b16 %v5333
  %v5987 = vunpack.c.h.b16 %v5333
  %v5988 = vunpack.c.l.b16 %v5334
  %v5989 = vunpack.c.h.b16 %v5334
  %v5990 = vunpack.c.l.b16 %v5335
  %v5991 = vunpack.c.h.b16 %v5335
  %v5992 = vunpack.c.l.b16 %v5336
  %v5993 = vunpack.c.h.b16 %v5336
  %v5994 = vunpack.c.l.b16 %v5337
  %v5995 = vunpack.c.h.b16 %v5337
  %v5996 = vunpack.c.l.b16 %v5338
  %v5997 = vunpack.c.h.b16 %v5338
  %v5998 = vunpack.c.l.b16 %v5339
  %v5999 = vunpack.c.h.b16 %v5339
  %v6000 = vunpack.c.l.b16 %v5340
  %v6001 = vunpack.c.h.b16 %v5340
  %v6002 = vunpack.c.l.b16 %v5341
  %v6003 = vunpack.c.h.b16 %v5341
  %v6004 = vunpack.c.l.b16 %v5342
  %v6005 = vunpack.c.h.b16 %v5342
  %v6006 = vunpack.c.l.b16 %v5343
  %v6007 = vunpack.c.h.b16 %v5343
  %v6008 = vunpack.c.l.b16 %v5344
  %v6009 = vunpack.c.h.b16 %v5344
  %v6010 = vunpack.c.l.b16 %v5345
  %v6011 = vunpack.c.h.b16 %v5345
  %v6012 = vunpack.c.l.b16 %v5346
  %v6013 = vunpack.c.h.b16 %v5346
  %v6014 = vunpack.c.l.b16 %v5347
  %v6015 = vunpack.c.h.b16 %v5347
  %v6016 = vunpack.c.l.b16 %v5348
  %v6017 = vunpack.c.h.b16 %v5348
  %v6018 = vunpack.c.l.b16 %v5349
  %v6019 = vunpack.c.h.b16 %v5349
  %v6020 = vunpack.c.l.b16 %v5350
  %v6021 = vunpack.c.h.b16 %v5350
  %v6022 = vunpack.c.l.b16 %v5351
  %v6023 = vunpack.c.h.b16 %v5351
  %v6024 = vunpack.c.l.b16 %v5352
  %v6025 = vunpack.c.h.b16 %v5352
  %v6026 = vunpack.c.l.b16 %v5353
  %v6027 = vunpack.c.h.b16 %v5353
  %v6028 = vunpack.c.l.b16 %v5354
  %v6029 = vunpack.c.h.b16 %v5354
  %v6030 = vunpack.c.l.b16 %v5355
  %v6031 = vunpack.c.h.b16 %v5355
  %v6032 = vunpack.c.l.b16 %v5356
  %v6033 = vunpack.c.h.b16 %v5356
  %v6034 = vunpack.c.l.b16 %v5357
  %v6035 = vunpack.c.h.b16 %v5357
  %v6036 = vunpack.c.l.b16 %v5358
  %v6037 = vunpack.c.h.b16 %v5358
  %v6038 = vunpack.c.l.b16 %v5359
  %v6039 = vunpack.c.h.b16 %v5359
  %v6040 = vunpack.c.l.b16 %v5360
  %v6041 = vunpack.c.h.b16 %v5360
  %v6042 = vunpack.c.l.b16 %v5361
  %v6043 = vunpack.c.h.b16 %v5361
  %v6044 = vunpack.c.l.b16 %v5362
  %v6045 = vunpack.c.h.b16 %v5362
  %v6046 = vunpack.c.l.b16 %v5363
  %v6047 = vunpack.c.h.b16 %v5363
  %v6048 = vunpack.c.l.b16 %v5364
  %v6049 = vunpack.c.h.b16 %v5364
  %v6050 = vunpack.c.l.b16 %v5365
  %v6051 = vunpack.c.h.b16 %v5365
  %v6052 = vunpack.c.l.b16 %v5366
  %v6053 = vunpack.c.h.b16 %v5366
  %v6054 = vunpack.c.l.b16 %v5367
  %v6055 = vunpack.c.h.b16 %v5367
  %v6056 = vunpack.c.l.b16 %v5368
  %v6057 = vunpack.c.h.b16 %v5368
  %v6058 = vunpack.c.l.b16 %v5369
  %v6059 = vunpack.c.h.b16 %v5369
  %v6060 = vunpack.c.l.b16 %v5370
  %v6061 = vunpack.c.h.b16 %v5370
  %v6062 = vunpack.c.l.b16 %v5371
  %v6063 = vunpack.c.h.b16 %v5371
  %v6064 = vunpack.c.l.b16 %v5372
  %v6065 = vunpack.c.h.b16 %v5372
  %v6066 = vunpack.c.l.b16 %v5373
  %v6067 = vunpack.c.h.b16 %v5373
  %v6068 = vunpack.c.l.b16 %v5374
  %v6069 = vunpack.c.h.b16 %v5374
  %v6070 = vunpack.c.l.b16 %v5375
  %v6071 = vunpack.c.h.b16 %v5375
  %v6072 = vunpack.c.l.b16 %v5376
  %v6073 = vunpack.c.h.b16 %v5376
  %v6074 = vunpack.c.l.b16 %v5377
  %v6075 = vunpack.c.h.b16 %v5377
  %v6076 = vunpack.c.l.b16 %v5378
  %v6077 = vunpack.c.h.b16 %v5378
  %v6078 = vunpack.c.l.b16 %v5379
  %v6079 = vunpack.c.h.b16 %v5379
  %v6080 = vunpack.c.l.b16 %v5380
  %v6081 = vunpack.c.h.b16 %v5380
  %v6082 = vunpack.c.l.b16 %v5381
  %v6083 = vunpack.c.h.b16 %v5381
  %v6084 = vunpack.c.l.b16 %v5382
  %v6085 = vunpack.c.h.b16 %v5382
  %v6086 = vunpack.c.l.b16 %v5383
  %v6087 = vunpack.c.h.b16 %v5383
  %v6088 = vunpack.c.l.b16 %v5384
  %v6089 = vunpack.c.h.b16 %v5384
  %v6090 = vunpack.c.l.b16 %v5385
  %v6091 = vunpack.c.h.b16 %v5385
  %v6092 = vunpack.c.l.b16 %v5386
  %v6093 = vunpack.c.h.b16 %v5386
  %v6094 = vunpack.c.l.b16 %v5387
  %v6095 = vunpack.c.h.b16 %v5387
  %v6096 = vunpack.c.l.b16 %v5388
  %v6097 = vunpack.c.h.b16 %v5388
  %v6098 = vunpack.c.l.b16 %v5389
  %v6099 = vunpack.c.h.b16 %v5389
  %v6100 = vunpack.c.l.b16 %v5390
  %v6101 = vunpack.c.h.b16 %v5390
  %v6102 = vunpack.c.l.b16 %v5391
  %v6103 = vunpack.c.h.b16 %v5391
  %v6104 = vunpack.c.l.b16 %v5392
  %v6105 = vunpack.c.h.b16 %v5392
  %v6106 = vunpack.c.l.b16 %v5393
  %v6107 = vunpack.c.h.b16 %v5393
  %v6108 = vunpack.c.l.b16 %v5394
  %v6109 = vunpack.c.h.b16 %v5394
  %v6110 = vunpack.c.l.b16 %v5395
  %v6111 = vunpack.c.h.b16 %v5395
  %v6112 = vunpack.c.l.b16 %v5396
  %v6113 = vunpack.c.h.b16 %v5396
  %v6114 = vunpack.c.l.b16 %v5397
  %v6115 = vunpack.c.h.b16 %v5397
  %v6116 = vunpack.c.l.b16 %v5398
  %v6117 = vunpack.c.h.b16 %v5398
  %v6118 = vunpack.c.l.b16 %v5399
  %v6119 = vunpack.c.h.b16 %v5399
  %v6120 = vunpack.c.l.b16 %v5400
  %v6121 = vunpack.c.h.b16 %v5400
  %v6122 = vunpack.c.l.b16 %v5401
  %v6123 = vunpack.c.h.b16 %v5401
  %v6124 = vunpack.c.l.b16 %v5402
  %v6125 = vunpack.c.h.b16 %v5402
  %v6126 = vunpack.c.l.b16 %v5403
  %v6127 = vunpack.c.h.b16 %v5403
  %v6128 = vunpack.c.l.b16 %v5404
  %v6129 = vunpack.c.h.b16 %v5404
  %v6130 = vunpack.c.l.b16 %v5405
  %v6131 = vunpack.c.h.b16 %v5405
  %v6132 = vunpack.c.l.b16 %v5406
  %v6133 = vunpack.c.h.b16 %v5406
  %v6134 = vunpack.c.l.b16 %v5407
  %v6135 = vunpack.c.h.b16 %v5407
  %v6136 = vunpack.c.l.b16 %v5408
  %v6137 = vunpack.c.h.b16 %v5408
  %v6138 = vunpack.c.l.b16 %v5409
  %v6139 = vunpack.c.h.b16 %v5409
  %v6140 = vunpack.c.l.b16 %v5410
  %v6141 = vunpack.c.h.b16 %v5410
  %v6142 = vunpack.c.l.b16 %v5411
  %v6143 = vunpack.c.h.b16 %v5411
  %v6144 = vunpack.c.l.b16 %v5412
  %v6145 = vunpack.c.h.b16 %v5412
  %v6146 = vunpack.c.l.b16 %v5413
  %v6147 = vunpack.c.h.b16 %v5413
  %v6148 = vunpack.c.l.b16 %v5414
  %v6149 = vunpack.c.h.b16 %v5414
  %v6150 = vunpack.c.l.b16 %v5415
  %v6151 = vunpack.c.h.b16 %v5415
  %v6152 = vunpack.c.l.b16 %v5416
  %v6153 = vunpack.c.h.b16 %v5416
  %v6154 = vunpack.c.l.b16 %v5417
  %v6155 = vunpack.c.h.b16 %v5417
  %v6156 = vunpack.c.l.b16 %v5418
  %v6157 = vunpack.c.h.b16 %v5418
  %v6158 = vunpack.c.l.b16 %v5419
  %v6159 = vunpack.c.h.b16 %v5419
  %v6160 = vunpack.c.l.b16 %v5420
  %v6161 = vunpack.c.h.b16 %v5420
  %v6162 = vunpack.c.l.b16 %v5421
  %v6163 = vunpack.c.h.b16 %v5421
  %v6164 = vunpack.c.l.b16 %v5422
  %v6165 = vunpack.c.h.b16 %v5422
  %v6166 = vunpack.c.l.b16 %v5423
  %v6167 = vunpack.c.h.b16 %v5423
  %v6168 = vunpack.c.l.b16 %v5424
  %v6169 = vunpack.c.h.b16 %v5424
  %v6170 = vunpack.c.l.b16 %v5425
  %v6171 = vunpack.c.h.b16 %v5425
  %v6172 = vunpack.c.l.b16 %v5426
  %v6173 = vunpack.c.h.b16 %v5426
  %v6174 = vunpack.c.l.b16 %v5427
  %v6175 = vunpack.c.h.b16 %v5427
  %v6176 = vunpack.c.l.b16 %v5428
  %v6177 = vunpack.c.h.b16 %v5428
  %v6178 = vunpack.c.l.b16 %v5429
  %v6179 = vunpack.c.h.b16 %v5429
  %v6180 = vunpack.c.l.b16 %v5430
  %v6181 = vunpack.c.h.b16 %v5430
  %v6182 = vunpack.c.l.b16 %v5431
  %v6183 = vunpack.c.h.b16 %v5431
  %v6184 = vunpack.c.l.b16 %v5432
  %v6185 = vunpack.c.h.b16 %v5432
  %v6186 = vunpack.c.l.b16 %v5433
  %v6187 = vunpack.c.h.b16 %v5433
  %v6188 = vunpack.c.l.b16 %v5434
  %v6189 = vunpack.c.h.b16 %v5434
  %v6190 = vunpack.c.l.b16 %v5435
  %v6191 = vunpack.c.h.b16 %v5435
  %v6192 = vunpack.c.l.b16 %v5436
  %v6193 = vunpack.c.h.b16 %v5436
  %v6194 = vunpack.c.l.b16 %v5437
  %v6195 = vunpack.c.h.b16 %v5437
  %v6196 = vunpack.c.l.b16 %v5438
  %v6197 = vunpack.c.h.b16 %v5438
  %v6198 = vunpack.c.l.b16 %v5439
  %v6199 = vunpack.c.h.b16 %v5439
  %v6200 = vunpack.c.l.b16 %v5440
  %v6201 = vunpack.c.h.b16 %v5440
  %v6202 = vunpack.c.l.b16 %v5441
  %v6203 = vunpack.c.h.b16 %v5441
  %v6204 = vunpack.c.l.b16 %v5442
  %v6205 = vunpack.c.h.b16 %v5442
  %v6206 = vunpack.c.l.b16 %v5443
  %v6207 = vunpack.c.h.b16 %v5443
  %v6208 = vunpack.c.l.b16 %v5444
  %v6209 = vunpack.c.h.b16 %v5444
  %v6210 = vunpack.c.l.b16 %v5445
  %v6211 = vunpack.c.h.b16 %v5445
  %v6212 = vunpack.c.l.b16 %v5446
  %v6213 = vunpack.c.h.b16 %v5446
  %v6214 = vunpack.c.l.b16 %v5447
  %v6215 = vunpack.c.h.b16 %v5447
  %v6216 = vpack.c.b16 %v5704, %v5704
  %v6217 = vpack.c.b16 %v5705, %v5705
  %v6218 = vpack.c.b16 %v5706, %v5706
  %v6219 = vpack.c.b16 %v5707, %v5707
  %v6220 = vpack.c.b16 %v5708, %v5708
  %v6221 = vpack.c.b16 %v5709, %v5709
  %v6222 = vpack.c.b16 %v5710, %v5710
  %v6223 = vpack.c.b16 %v5711, %v5711
  %v6224 = vpack.c.b16 %v5712, %v5712
  %v6225 = vpack.c.b16 %v5713, %v5713
  %v6226 = vpack.c.b16 %v5714, %v5714
  %v6227 = vpack.c.b16 %v5715, %v5715
  %v6228 = vpack.c.b16 %v5716, %v5716
  %v6229 = vpack.c.b16 %v5717, %v5717
  %v6230 = vpack.c.b16 %v5718, %v5718
  %v6231 = vpack.c.b16 %v5719, %v5719
  %v6232 = vpack.c.b16 %v5720, %v5720
  %v6233 = vpack.c.b16 %v5721, %v5721
  %v6234 = vpack.c.b16 %v5722, %v5722
  %v6235 = vpack.c.b16 %v5723, %v5723
  %v6236 = vpack.c.b16 %v5724, %v5724
  %v6237 = vpack.c.b16 %v5725, %v5725
  %v6238 = vpack.c.b16 %v5726, %v5726
  %v6239 = vpack.c.b16 %v5727, %v5727
  %v6240 = vpack.c.b16 %v5728, %v5728
  %v6241 = vpack.c.b16 %v5729, %v5729
  %v6242 = vpack.c.b16 %v5730, %v5730
  %v6243 = vpack.c.b16 %v5731, %v5731
  %v6244 = vpack.c.b16 %v5732, %v5732
  %v6245 = vpack.c.b16 %v5733, %v5733
  %v6246 = vpack.c.b16 %v5734, %v5734
  %v6247 = vpack.c.b16 %v5735, %v5735
  %v6248 = vpack.c.b16 %v5736, %v5736
  %v6249 = vpack.c.b16 %v5737, %v5737
  %v6250 = vpack.c.b16 %v5738, %v5738
  %v6251 = vpack.c.b16 %v5739, %v5739
  %v6252 = vpack.c.b16 %v5740, %v5740
  %v6253 = vpack.c.b16 %v5741, %v5741
  %v6254 = vpack.c.b16 %v5742, %v5742
  %v6255 = vpack.c.b16 %v5743, %v5743
  %v6256 = vpack.c.b16 %v5744, %v5744
  %v6257 = vpack.c.b16 %v5745, %v5745
  %v6258 = vpack.c.b16 %v5746, %v5746
  %v6259 = vpack.c.b16 %v5747, %v5747
  %v6260 = vpack.c.b16 %v5748, %v5748
  %v6261 = vpack.c.b16 %v5749, %v5749
  %v6262 = vpack.c.b16 %v5750, %v5750
  %v6263 = vpack.c.b16 %v5751, %v5751
  %v6264 = vpack.c.b16 %v5752, %v5752
  %v6265 = vpack.c.b16 %v5753, %v5753
  %v6266 = vpack.c.b16 %v5754, %v5754
  %v6267 = vpack.c.b16 %v5755, %v5755
  %v6268 = vpack.c.b16 %v5756, %v5756
  %v6269 = vpack.c.b16 %v5757, %v5757
  %v6270 = vpack.c.b16 %v5758, %v5758
  %v6271 = vpack.c.b16 %v5759, %v5759
  %v6272 = vpack.c.b16 %v5760, %v5760
  %v6273 = vpack.c.b16 %v5761, %v5761
  %v6274 = vpack.c.b16 %v5762, %v5762
  %v6275 = vpack.c.b16 %v5763, %v5763
  %v6276 = vpack.c.b16 %v5764, %v5764
  %v6277 = vpack.c.b16 %v5765, %v5765
  %v6278 = vpack.c.b16 %v5766, %v5766
  %v6279 = vpack.c.b16 %v5767, %v5767
  %v6280 = vpack.c.b16 %v5768, %v5768
  %v6281 = vpack.c.b16 %v5769, %v5769
  %v6282 = vpack.c.b16 %v5770, %v5770
  %v6283 = vpack.c.b16 %v5771, %v5771
  %v6284 = vpack.c.b16 %v5772, %v5772
  %v6285 = vpack.c.b16 %v5773, %v5773
  %v6286 = vpack.c.b16 %v5774, %v5774
  %v6287 = vpack.c.b16 %v5775, %v5775
  %v6288 = vpack.c.b16 %v5776, %v5776
  %v6289 = vpack.c.b16 %v5777, %v5777
  %v6290 = vpack.c.b16 %v5778, %v5778
  %v6291 = vpack.c.b16 %v5779, %v5779
  %v6292 = vpack.c.b16 %v5780, %v5780
  %v6293 = vpack.c.b16 %v5781, %v5781
  %v6294 = vpack.c.b16 %v5782, %v5782
  %v6295 = vpack.c.b16 %v5783, %v5783
  %v6296 = vpack.c.b16 %v5784, %v5784
  %v6297 = vpack.c.b16 %v5785, %v5785
  %v6298 = vpack.c.b16 %v5786, %v5786
  %v6299 = vpack.c.b16 %v5787, %v5787
  %v6300 = vpack.c.b16 %v5788, %v5788
  %v6301 = vpack.c.b16 %v5789, %v5789
  %v6302 = vpack.c.b16 %v5790, %v5790
  %v6303 = vpack.c.b16 %v5791, %v5791
  %v6304 = vpack.c.b16 %v5792, %v5792
  %v6305 = vpack.c.b16 %v5793, %v5793
  %v6306 = vpack.c.b16 %v5794, %v5794
  %v6307 = vpack.c.b16 %v5795, %v5795
  %v6308 = vpack.c.b16 %v5796, %v5796
  %v6309 = vpack.c.b16 %v5797, %v5797
  %v6310 = vpack.c.b16 %v5798, %v5798
  %v6311 = vpack.c.b16 %v5799, %v5799
  %v6312 = vpack.c.b16 %v5800, %v5800
  %v6313 = vpack.c.b16 %v5801, %v5801
  %v6314 = vpack.c.b16 %v5802, %v5802
  %v6315 = vpack.c.b16 %v5803, %v5803
  %v6316 = vpack.c.b16 %v5804, %v5804
  %v6317 = vpack.c.b16 %v5805, %v5805
  %v6318 = vpack.c.b16 %v5806, %v5806
  %v6319 = vpack.c.b16 %v5807, %v5807
  %v6320 = vpack.c.b16 %v5808, %v5808
  %v6321 = vpack.c.b16 %v5809, %v5809
  %v6322 = vpack.c.b16 %v5810, %v5810
  %v6323 = vpack.c.b16 %v5811, %v5811
  %v6324 = vpack.c.b16 %v5812, %v5812
  %v6325 = vpack.c.b16 %v5813, %v5813
  %v6326 = vpack.c.b16 %v5814, %v5814
  %v6327 = vpack.c.b16 %v5815, %v5815
  %v6328 = vpack.c.b16 %v5816, %v5816
  %v6329 = vpack.c.b16 %v5817, %v5817
  %v6330 = vpack.c.b16 %v5818, %v5818
  %v6331 = vpack.c.b16 %v5819, %v5819
  %v6332 = vpack.c.b16 %v5820, %v5820
  %v6333 = vpack.c.b16 %v5821, %v5821
  %v6334 = vpack.c.b16 %v5822, %v5822
  %v6335 = vpack.c.b16 %v5823, %v5823
  %v6336 = vpack.c.b16 %v5824, %v5824
  %v6337 = vpack.c.b16 %v5825, %v5825
  %v6338 = vpack.c.b16 %v5826, %v5826
  %v6339 = vpack.c.b16 %v5827, %v5827
  %v6340 = vpack.c.b16 %v5828, %v5828
  %v6341 = vpack.c.b16 %v5829, %v5829
  %v6342 = vpack.c.b16 %v5830, %v5830
  %v6343 = vpack.c.b16 %v5831, %v5831
  %v6344 = vpack.c.b16 %v5832, %v5832
  %v6345 = vpack.c.b16 %v5833, %v5833
  %v6346 = vpack.c.b16 %v5834, %v5834
  %v6347 = vpack.c.b16 %v5835, %v5835
  %v6348 = vpack.c.b16 %v5836, %v5836
  %v6349 = vpack.c.b16 %v5837, %v5837
  %v6350 = vpack.c.b16 %v5838, %v5838
  %v6351 = vpack.c.b16 %v5839, %v5839
  %v6352 = vpack.c.b16 %v5840, %v5840
  %v6353 = vpack.c.b16 %v5841, %v5841
  %v6354 = vpack.c.b16 %v5842, %v5842
  %v6355 = vpack.c.b16 %v5843, %v5843
  %v6356 = vpack.c.b16 %v5844, %v5844
  %v6357 = vpack.c.b16 %v5845, %v5845
  %v6358 = vpack.c.b16 %v5846, %v5846
  %v6359 = vpack.c.b16 %v5847, %v5847
  %v6360 = vpack.c.b16 %v5848, %v5848
  %v6361 = vpack.c.b16 %v5849, %v5849
  %v6362 = vpack.c.b16 %v5850, %v5850
  %v6363 = vpack.c.b16 %v5851, %v5851
  %v6364 = vpack.c.b16 %v5852, %v5852
  %v6365 = vpack.c.b16 %v5853, %v5853
  %v6366 = vpack.c.b16 %v5854, %v5854
  %v6367 = vpack.c.b16 %v5855, %v5855
  %v6368 = vpack.c.b16 %v5856, %v5856
  %v6369 = vpack.c.b16 %v5857, %v5857
  %v6370 = vpack.c.b16 %v5858, %v5858
  %v6371 = vpack.c.b16 %v5859, %v5859
  %v6372 = vpack.c.b16 %v5860, %v5860
  %v6373 = vpack.c.b16 %v5861, %v5861
  %v6374 = vpack.c.b16 %v5862, %v5862
  %v6375 = vpack.c.b16 %v5863, %v5863
  %v6376 = vpack.c.b16 %v5864, %v5864
  %v6377 = vpack.c.b16 %v5865, %v5865
  %v6378 = vpack.c.b16 %v5866, %v5866
  %v6379 = vpack.c.b16 %v5867, %v5867
  %v6380 = vpack.c.b16 %v5868, %v5868
  %v6381 = vpack.c.b16 %v5869, %v5869
  %v6382 = vpack.c.b16 %v5870, %v5870
  %v6383 = vpack.c.b16 %v5871, %v5871
  %v6384 = vpack.c.b16 %v5872, %v5872
  %v6385 = vpack.c.b16 %v5873, %v5873
  %v6386 = vpack.c.b16 %v5874, %v5874
  %v6387 = vpack.c.b16 %v5875, %v5875
  %v6388 = vpack.c.b16 %v5876, %v5876
  %v6389 = vpack.c.b16 %v5877, %v5877
  %v6390 = vpack.c.b16 %v5878, %v5878
  %v6391 = vpack.c.b16 %v5879, %v5879
  %v6392 = vpack.c.b16 %v5880, %v5880
  %v6393 = vpack.c.b16 %v5881, %v5881
  %v6394 = vpack.c.b16 %v5882, %v5882
  %v6395 = vpack.c.b16 %v5883, %v5883
  %v6396 = vpack.c.b16 %v5884, %v5884
  %v6397 = vpack.c.b16 %v5885, %v5885
  %v6398 = vpack.c.b16 %v5886, %v5886
  %v6399 = vpack.c.b16 %v5887, %v5887
  %v6400 = vpack.c.b16 %v5888, %v5888
  %v6401 = vpack.c.b16 %v5889, %v5889
  %v6402 = vpack.c.b16 %v5890, %v5890
  %v6403 = vpack.c.b16 %v5891, %v5891
  %v6404 = vpack.c.b16 %v5892, %v5892
  %v6405 = vpack.c.b16 %v5893, %v5893
  %v6406 = vpack.c.b16 %v5894, %v5894
  %v6407 = vpack.c.b16 %v5895, %v5895
  %v6408 = vpack.c.b16 %v5896, %v5896
  %v6409 = vpack.c.b16 %v5897, %v5897
  %v6410 = vpack.c.b16 %v5898, %v5898
  %v6411 = vpack.c.b16 %v5899, %v5899
  %v6412 = vpack.c.b16 %v5900, %v5900
  %v6413 = vpack.c.b16 %v5901, %v5901
  %v6414 = vpack.c.b16 %v5902, %v5902
  %v6415 = vpack.c.b16 %v5903, %v5903
  %v6416 = vpack.c.b16 %v5904, %v5904
  %v6417 = vpack.c.b16 %v5905, %v5905
  %v6418 = vpack.c.b16 %v5906, %v5906
  %v6419 = vpack.c.b16 %v5907, %v5907
  %v6420 = vpack.c.b16 %v5908, %v5908
  %v6421 = vpack.c.b16 %v5909, %v5909
  %v6422 = vpack.c.b16 %v5910, %v5910
  %v6423 = vpack.c.b16 %v5911, %v5911
  %v6424 = vpack.c.b16 %v5912, %v5912
  %v6425 = vpack.c.b16 %v5913, %v5913
  %v6426 = vpack.c.b16 %v5914, %v5914
  %v6427 = vpack.c.b16 %v5915, %v5915
  %v6428 = vpack.c.b16 %v5916, %v5916
  %v6429 = vpack.c.b16 %v5917, %v5917
  %v6430 = vpack.c.b16 %v5918, %v5918
  %v6431 = vpack.c.b16 %v5919, %v5919
  %v6432 = vpack.c.b16 %v5920, %v5920
  %v6433 = vpack.c.b16 %v5921, %v5921
  %v6434 = vpack.c.b16 %v5922, %v5922
  %v6435 = vpack.c.b16 %v5923, %v5923
  %v6436 = vpack.c.b16 %v5924, %v5924
  %v6437 = vpack.c.b16 %v5925, %v5925
  %v6438 = vpack.c.b16 %v5926, %v5926
  %v6439 = vpack.c.b16 %v5927, %v5927
  %v6440 = vpack.c.b16 %v5928, %v5928
  %v6441 = vpack.c.b16 %v5929, %v5929
  %v6442 = vpack.c.b16 %v5930, %v5930
  %v6443 = vpack.c.b16 %v5931, %v5931
  %v6444 = vpack.c.b16 %v5932, %v5932
  %v6445 = vpack.c.b16 %v5933, %v5933
  %v6446 = vpack.c.b16 %v5934, %v5934
  %v6447 = vpack.c.b16 %v5935, %v5935
  %v6448 = vpack.c.b16 %v5936, %v5936
  %v6449 = vpack.c.b16 %v5937, %v5937
  %v6450 = vpack.c.b16 %v5938, %v5938
  %v6451 = vpack.c.b16 %v5939, %v5939
  %v6452 = vpack.c.b16 %v5940, %v5940
  %v6453 = vpack.c.b16 %v5941, %v5941
  %v6454 = vpack.c.b16 %v5942, %v5942
  %v6455 = vpack.c.b16 %v5943, %v5943
  %v6456 = vpack.c.b16 %v5944, %v5944
  %v6457 = vpack.c.b16 %v5945, %v5945
  %v6458 = vpack.c.b16 %v5946, %v5946
  %v6459 = vpack.c.b16 %v5947, %v5947
  %v6460 = vpack.c.b16 %v5948, %v5948
  %v6461 = vpack.c.b16 %v5949, %v5949
  %v6462 = vpack.c.b16 %v5950, %v5950
  %v6463 = vpack.c.b16 %v5951, %v5951
  %v6464 = vpack.c.b16 %v5952, %v5952
  %v6465 = vpack.c.b16 %v5953, %v5953
  %v6466 = vpack.c.b16 %v5954, %v5954
  %v6467 = vpack.c.b16 %v5955, %v5955
  %v6468 = vpack.c.b16 %v5956, %v5956
  %v6469 = vpack.c.b16 %v5957, %v5957
  %v6470 = vpack.c.b16 %v5958, %v5958
  %v6471 = vpack.c.b16 %v5959, %v5959
  %v6472 = vpack.c.b16 %v5960, %v5960
  %v6473 = vpack.c.b16 %v5961, %v5961
  %v6474 = vpack.c.b16 %v5962, %v5962
  %v6475 = vpack.c.b16 %v5963, %v5963
  %v6476 = vpack.c.b16 %v5964, %v5964
  %v6477 = vpack.c.b16 %v5965, %v5965
  %v6478 = vpack.c.b16 %v5966, %v5966
  %v6479 = vpack.c.b16 %v5967, %v5967
  %v6480 = vpack.c.b16 %v5968, %v5968
  %v6481 = vpack.c.b16 %v5969, %v5969
  %v6482 = vpack.c.b16 %v5970, %v5970
  %v6483 = vpack.c.b16 %v5971, %v5971
  %v6484 = vpack.c.b16 %v5972, %v5972
  %v6485 = vpack.c.b16 %v5973, %v5973
  %v6486 = vpack.c.b16 %v5974, %v5974
  %v6487 = vpack.c.b16 %v5975, %v5975
  %v6488 = vpack.c.b16 %v5976, %v5976
  %v6489 = vpack.c.b16 %v5977, %v5977
  %v6490 = vpack.c.b16 %v5978, %v5978
  %v6491 = vpack.c.b16 %v5979, %v5979
  %v6492 = vpack.c.b16 %v5980, %v5980
  %v6493 = vpack.c.b16 %v5981, %v5981
  %v6494 = vpack.c.b16 %v5982, %v5982
  %v6495 = vpack.c.b16 %v5983, %v5983
  %v6496 = vpack.c.b16 %v5984, %v5984
  %v6497 = vpack.c.b16 %v5985, %v5985
  %v6498 = vpack.c.b16 %v5986, %v5986
  %v6499 = vpack.c.b16 %v5987, %v5987
  %v6500 = vpack.c.b16 %v5988, %v5988
  %v6501 = vpack.c.b16 %v5989, %v5989
  %v6502 = vpack.c.b16 %v5990, %v5990
  %v6503 = vpack.c.b16 %v5991, %v5991
  %v6504 = vpack.c.b16 %v5992, %v5992
  %v6505 = vpack.c.b16 %v5993, %v5993
  %v6506 = vpack.c.b16 %v5994, %v5994
  %v6507 = vpack.c.b16 %v5995, %v5995
  %v6508 = vpack.c.b16 %v5996, %v5996
  %v6509 = vpack.c.b16 %v5997, %v5997
  %v6510 = vpack.c.b16 %v5998, %v5998
  %v6511 = vpack.c.b16 %v5999, %v5999
  %v6512 = vpack.c.b16 %v6000, %v6000
  %v6513 = vpack.c.b16 %v6001, %v6001
  %v6514 = vpack.c.b16 %v6002, %v6002
  %v6515 = vpack.c.b16 %v6003, %v6003
  %v6516 = vpack.c.b16 %v6004, %v6004
  %v6517 = vpack.c.b16 %v6005, %v6005
  %v6518 = vpack.c.b16 %v6006, %v6006
  %v6519 = vpack.c.b16 %v6007, %v6007
  %v6520 = vpack.c.b16 %v6008, %v6008
  %v6521 = vpack.c.b16 %v6009, %v6009
  %v6522 = vpack.c.b16 %v6010, %v6010
  %v6523 = vpack.c.b16 %v6011, %v6011
  %v6524 = vpack.c.b16 %v6012, %v6012
  %v6525 = vpack.c.b16 %v6013, %v6013
  %v6526 = vpack.c.b16 %v6014, %v6014
  %v6527 = vpack.c.b16 %v6015, %v6015
  %v6528 = vpack.c.b16 %v6016, %v6016
  %v6529 = vpack.c.b16 %v6017, %v6017
  %v6530 = vpack.c.b16 %v6018, %v6018
  %v6531 = vpack.c.b16 %v6019, %v6019
  %v6532 = vpack.c.b16 %v6020, %v6020
  %v6533 = vpack.c.b16 %v6021, %v6021
  %v6534 = vpack.c.b16 %v6022, %v6022
  %v6535 = vpack.c.b16 %v6023, %v6023
  %v6536 = vpack.c.b16 %v6024, %v6024
  %v6537 = vpack.c.b16 %v6025, %v6025
  %v6538 = vpack.c.b16 %v6026, %v6026
  %v6539 = vpack.c.b16 %v6027, %v6027
  %v6540 = vpack.c.b16 %v6028, %v6028
  %v6541 = vpack.c.b16 %v6029, %v6029
  %v6542 = vpack.c.b16 %v6030, %v6030
  %v6543 = vpack.c.b16 %v6031, %v6031
  %v6544 = vpack.c.b16 %v6032, %v6032
  %v6545 = vpack.c.b16 %v6033, %v6033
  %v6546 = vpack.c.b16 %v6034, %v6034
  %v6547 = vpack.c.b16 %v6035, %v6035
  %v6548 = vpack.c.b16 %v6036, %v6036
  %v6549 = vpack.c.b16 %v6037, %v6037
  %v6550 = vpack.c.b16 %v6038, %v6038
  %v6551 = vpack.c.b16 %v6039, %v6039
  %v6552 = vpack.c.b16 %v6040, %v6040
  %v6553 = vpack.c.b16 %v6041, %v6041
  %v6554 = vpack.c.b16 %v6042, %v6042
  %v6555 = vpack.c.b16 %v6043, %v6043
  %v6556 = vpack.c.b16 %v6044, %v6044
  %v6557 = vpack.c.b16 %v6045, %v6045
  %v6558 = vpack.c.b16 %v6046, %v6046
  %v6559 = vpack.c.b16 %v6047, %v6047
  %v6560 = vpack.c.b16 %v6048, %v6048
  %v6561 = vpack.c.b16 %v6049, %v6049
  %v6562 = vpack.c.b16 %v6050, %v6050
  %v6563 = vpack.c.b16 %v6051, %v6051
  %v6564 = vpack.c.b16 %v6052, %v6052
  %v6565 = vpack.c.b16 %v6053, %v6053
  %v6566 = vpack.c.b16 %v6054, %v6054
  %v6567 = vpack.c.b16 %v6055, %v6055
  %v6568 = vpack.c.b16 %v6056, %v6056
  %v6569 = vpack.c.b16 %v6057, %v6057
  %v6570 = vpack.c.b16 %v6058, %v6058
  %v6571 = vpack.c.b16 %v6059, %v6059
  %v6572 = vpack.c.b16 %v6060, %v6060
  %v6573 = vpack.c.b16 %v6061, %v6061
  %v6574 = vpack.c.b16 %v6062, %v6062
  %v6575 = vpack.c.b16 %v6063, %v6063
  %v6576 = vpack.c.b16 %v6064, %v6064
  %v6577 = vpack.c.b16 %v6065, %v6065
  %v6578 = vpack.c.b16 %v6066, %v6066
  %v6579 = vpack.c.b16 %v6067, %v6067
  %v6580 = vpack.c.b16 %v6068, %v6068
  %v6581 = vpack.c.b16 %v6069, %v6069
  %v6582 = vpack.c.b16 %v6070, %v6070
  %v6583 = vpack.c.b16 %v6071, %v6071
  %v6584 = vpack.c.b16 %v6072, %v6072
  %v6585 = vpack.c.b16 %v6073, %v6073
  %v6586 = vpack.c.b16 %v6074, %v6074
  %v6587 = vpack.c.b16 %v6075, %v6075
  %v6588 = vpack.c.b16 %v6076, %v6076
  %v6589 = vpack.c.b16 %v6077, %v6077
  %v6590 = vpack.c.b16 %v6078, %v6078
  %v6591 = vpack.c.b16 %v6079, %v6079
  %v6592 = vpack.c.b16 %v6080, %v6080
  %v6593 = vpack.c.b16 %v6081, %v6081
  %v6594 = vpack.c.b16 %v6082, %v6082
  %v6595 = vpack.c.b16 %v6083, %v6083
  %v6596 = vpack.c.b16 %v6084, %v6084
  %v6597 = vpack.c.b16 %v6085, %v6085
  %v6598 = vpack.c.b16 %v6086, %v6086
  %v6599 = vpack.c.b16 %v6087, %v6087
  %v6600 = vpack.c.b16 %v6088, %v6088
  %v6601 = vpack.c.b16 %v6089, %v6089
  %v6602 = vpack.c.b16 %v6090, %v6090
  %v6603 = vpack.c.b16 %v6091, %v6091
  %v6604 = vpack.c.b16 %v6092, %v6092
  %v6605 = vpack.c.b16 %v6093, %v6093
  %v6606 = vpack.c.b16 %v6094, %v6094
  %v6607 = vpack.c.b16 %v6095, %v6095
  %v6608 = vpack.c.b16 %v6096, %v6096
  %v6609 = vpack.c.b16 %v6097, %v6097
  %v6610 = vpack.c.b16 %v6098, %v6098
  %v6611 = vpack.c.b16 %v6099, %v6099
  %v6612 = vpack.c.b16 %v6100, %v6100
  %v6613 = vpack.c.b16 %v6101, %v6101
  %v6614 = vpack.c.b16 %v6102, %v6102
  %v6615 = vpack.c.b16 %v6103, %v6103
  %v6616 = vpack.c.b16 %v6104, %v6104
  %v6617 = vpack.c.b16 %v6105, %v6105
  %v6618 = vpack.c.b16 %v6106, %v6106
  %v6619 = vpack.c.b16 %v6107, %v6107
  %v6620 = vpack.c.b16 %v6108, %v6108
  %v6621 = vpack.c.b16 %v6109, %v6109
  %v6622 = vpack.c.b16 %v6110, %v6110
  %v6623 = vpack.c.b16 %v6111, %v6111
  %v6624 = vpack.c.b16 %v6112, %v6112
  %v6625 = vpack.c.b16 %v6113, %v6113
  %v6626 = vpack.c.b16 %v6114, %v6114
  %v6627 = vpack.c.b16 %v6115, %v6115
  %v6628 = vpack.c.b16 %v6116, %v6116
  %v6629 = vpack.c.b16 %v6117, %v6117
  %v6630 = vpack.c.b16 %v6118, %v6118
  %v6631 = vpack.c.b16 %v6119, %v6119
  %v6632 = vpack.c.b16 %v6120, %v6120
  %v6633 = vpack.c.b16 %v6121, %v6121
  %v6634 = vpack.c.b16 %v6122, %v6122
  %v6635 = vpack.c.b16 %v6123, %v6123
  %v6636 = vpack.c.b16 %v6124, %v6124
  %v6637 = vpack.c.b16 %v6125, %v6125
  %v6638 = vpack.c.b16 %v6126, %v6126
  %v6639 = vpack.c.b16 %v6127, %v6127
  %v6640 = vpack.c.b16 %v6128, %v6128
  %v6641 = vpack.c.b16 %v6129, %v6129
  %v6642 = vpack.c.b16 %v6130, %v6130
  %v6643 = vpack.c.b16 %v6131, %v6131
  %v6644 = vpack.c.b16 %v6132, %v6132
  %v6645 = vpack.c.b16 %v6133, %v6133
  %v6646 = vpack.c.b16 %v6134, %v6134
  %v6647 = vpack.c.b16 %v6135, %v6135
  %v6648 = vpack.c.b16 %v6136, %v6136
  %v6649 = vpack.c.b16 %v6137, %v6137
  %v6650 = vpack.c.b16 %v6138, %v6138
  %v6651 = vpack.c.b16 %v6139, %v6139
  %v6652 = vpack.c.b16 %v6140, %v6140
  %v6653 = vpack.c.b16 %v6141, %v6141
  %v6654 = vpack.c.b16 %v6142, %v6142
  %v6655 = vpack.c.b16 %v6143, %v6143
  %v6656 = vpack.c.b16 %v6144, %v6144
  %v6657 = vpack.c.b16 %v6145, %v6145
  %v6658 = vpack.c.b16 %v6146, %v6146
  %v6659 = vpack.c.b16 %v6147, %v6147
  %v6660 = vpack.c.b16 %v6148, %v6148
  %v6661 = vpack.c.b16 %v6149, %v6149
  %v6662 = vpack.c.b16 %v6150, %v6150
  %v6663 = vpack.c.b16 %v6151, %v6151
  %v6664 = vpack.c.b16 %v6152, %v6152
  %v6665 = vpack.c.b16 %v6153, %v6153
  %v6666 = vpack.c.b16 %v6154, %v6154
  %v6667 = vpack.c.b16 %v6155, %v6155
  %v6668 = vpack.c.b16 %v6156, %v6156
  %v6669 = vpack.c.b16 %v6157, %v6157
  %v6670 = vpack.c.b16 %v6158, %v6158
  %v6671 = vpack.c.b16 %v6159, %v6159
  %v6672 = vpack.c.b16 %v6160, %v6160
  %v6673 = vpack.c.b16 %v6161, %v6161
  %v6674 = vpack.c.b16 %v6162, %v6162
  %v6675 = vpack.c.b16 %v6163, %v6163
  %v6676 = vpack.c.b16 %v6164, %v6164
  %v6677 = vpack.c.b16 %v6165, %v6165
  %v6678 = vpack.c.b16 %v6166, %v6166
  %v6679 = vpack.c.b16 %v6167, %v6167
  %v6680 = vpack.c.b16 %v6168, %v6168
  %v6681 = vpack.c.b16 %v6169, %v6169
  %v6682 = vpack.c.b16 %v6170, %v6170
  %v6683 = vpack.c.b16 %v6171, %v6171
  %v6684 = vpack.c.b16 %v6172, %v6172
  %v6685 = vpack.c.b16 %v6173, %v6173
  %v6686 = vpack.c.b16 %v6174, %v6174
  %v6687 = vpack.c.b16 %v6175, %v6175
  %v6688 = vpack.c.b16 %v6176, %v6176
  %v6689 = vpack.c.b16 %v6177, %v6177
  %v6690 = vpack.c.b16 %v6178, %v6178
  %v6691 = vpack.c.b16 %v6179, %v6179
  %v6692 = vpack.c.b16 %v6180, %v6180
  %v6693 = vpack.c.b16 %v6181, %v6181
  %v6694 = vpack.c.b16 %v6182, %v6182
  %v6695 = vpack.c.b16 %v6183, %v6183
  %v6696 = vpack.c.b16 %v6184, %v6184
  %v6697 = vpack.c.b16 %v6185, %v6185
  %v6698 = vpack.c.b16 %v6186, %v6186
  %v6699 = vpack.c.b16 %v6187, %v6187
  %v6700 = vpack.c.b16 %v6188, %v6188
  %v6701 = vpack.c.b16 %v6189, %v6189
  %v6702 = vpack.c.b16 %v6190, %v6190
  %v6703 = vpack.c.b16 %v6191, %v6191
  %v6704 = vpack.c.b16 %v6192, %v6192
  %v6705 = vpack.c.b16 %v6193, %v6193
  %v6706 = vpack.c.b16 %v6194, %v6194
  %v6707 = vpack.c.b16 %v6195, %v6195
  %v6708 = vpack.c.b16 %v6196, %v6196
  %v6709 = vpack.c.b16 %v6197, %v6197
  %v6710 = vpack.c.b16 %v6198, %v6198
  %v6711 = vpack.c.b16 %v6199, %v6199
  %v6712 = vpack.c.b16 %v6200, %v6200
  %v6713 = vpack.c.b16 %v6201, %v6201
  %v6714 = vpack.c.b16 %v6202, %v6202
  %v6715 = vpack.c.b16 %v6203, %v6203
  %v6716 = vpack.c.b16 %v6204, %v6204
  %v6717 = vpack.c.b16 %v6205, %v6205
  %v6718 = vpack.c.b16 %v6206, %v6206
  %v6719 = vpack.c.b16 %v6207, %v6207
  %v6720 = vpack.c.b16 %v6208, %v6208
  %v6721 = vpack.c.b16 %v6209, %v6209
  %v6722 = vpack.c.b16 %v6210, %v6210
  %v6723 = vpack.c.b16 %v6211, %v6211
  %v6724 = vpack.c.b16 %v6212, %v6212
  %v6725 = vpack.c.b16 %v6213, %v6213
  %v6726 = vpack.c.b16 %v6214, %v6214
  %v6727 = vpack.c.b16 %v6215, %v6215
  %vm7240 = vcmask 125952
  %7241 = vst.msk [vmem:[%s3] sm:$0xf] %vm7240, %v6216
  %7242 = vst.msk [vmem:[%s3 + $0x4] sm:$0xf] %vm7240, %v6217
  %7243 = vst.msk [vmem:[%s3 + $0x8] sm:$0xf] %vm7240, %v6218
  %7244 = vst.msk [vmem:[%s3 + $0xc] sm:$0xf] %vm7240, %v6219
  %7245 = vst.msk [vmem:[%s3 + $0x10] sm:$0xf] %vm7240, %v6220
  %7246 = vst.msk [vmem:[%s3 + $0x14] sm:$0xf] %vm7240, %v6221
  %7247 = vst.msk [vmem:[%s3 + $0x18] sm:$0xf] %vm7240, %v6222
  %7248 = vst.msk [vmem:[%s3 + $0x1c] sm:$0xf] %vm7240, %v6223
  %7249 = vst.msk [vmem:[%s3 + $0x20] sm:$0xf] %vm7240, %v6224
  %7250 = vst.msk [vmem:[%s3 + $0x24] sm:$0xf] %vm7240, %v6225
  %7251 = vst.msk [vmem:[%s3 + $0x28] sm:$0xf] %vm7240, %v6226
  %7252 = vst.msk [vmem:[%s3 + $0x2c] sm:$0xf] %vm7240, %v6227
  %7253 = vst.msk [vmem:[%s3 + $0x30] sm:$0xf] %vm7240, %v6228
  %7254 = vst.msk [vmem:[%s3 + $0x34] sm:$0xf] %vm7240, %v6229
  %7255 = vst.msk [vmem:[%s3 + $0x38] sm:$0xf] %vm7240, %v6230
  %7256 = vst.msk [vmem:[%s3 + $0x3c] sm:$0xf] %vm7240, %v6231
  %7257 = vst.msk [vmem:[%s3 + $0x40] sm:$0xf] %vm7240, %v6232
  %7258 = vst.msk [vmem:[%s3 + $0x44] sm:$0xf] %vm7240, %v6233
  %7259 = vst.msk [vmem:[%s3 + $0x48] sm:$0xf] %vm7240, %v6234
  %7260 = vst.msk [vmem:[%s3 + $0x4c] sm:$0xf] %vm7240, %v6235
  %7261 = vst.msk [vmem:[%s3 + $0x50] sm:$0xf] %vm7240, %v6236
  %7262 = vst.msk [vmem:[%s3 + $0x54] sm:$0xf] %vm7240, %v6237
  %7263 = vst.msk [vmem:[%s3 + $0x58] sm:$0xf] %vm7240, %v6238
  %7264 = vst.msk [vmem:[%s3 + $0x5c] sm:$0xf] %vm7240, %v6239
  %7265 = vst.msk [vmem:[%s3 + $0x60] sm:$0xf] %vm7240, %v6240
  %7266 = vst.msk [vmem:[%s3 + $0x64] sm:$0xf] %vm7240, %v6241
  %7267 = vst.msk [vmem:[%s3 + $0x68] sm:$0xf] %vm7240, %v6242
  %7268 = vst.msk [vmem:[%s3 + $0x6c] sm:$0xf] %vm7240, %v6243
  %7269 = vst.msk [vmem:[%s3 + $0x70] sm:$0xf] %vm7240, %v6244
  %7270 = vst.msk [vmem:[%s3 + $0x74] sm:$0xf] %vm7240, %v6245
  %7271 = vst.msk [vmem:[%s3 + $0x78] sm:$0xf] %vm7240, %v6246
  %7272 = vst.msk [vmem:[%s3 + $0x7c] sm:$0xf] %vm7240, %v6247
  %7273 = vst.msk [vmem:[%s3 + $0x80] sm:$0xf] %vm7240, %v6248
  %7274 = vst.msk [vmem:[%s3 + $0x84] sm:$0xf] %vm7240, %v6249
  %7275 = vst.msk [vmem:[%s3 + $0x88] sm:$0xf] %vm7240, %v6250
  %7276 = vst.msk [vmem:[%s3 + $0x8c] sm:$0xf] %vm7240, %v6251
  %7277 = vst.msk [vmem:[%s3 + $0x90] sm:$0xf] %vm7240, %v6252
  %7278 = vst.msk [vmem:[%s3 + $0x94] sm:$0xf] %vm7240, %v6253
  %7279 = vst.msk [vmem:[%s3 + $0x98] sm:$0xf] %vm7240, %v6254
  %7280 = vst.msk [vmem:[%s3 + $0x9c] sm:$0xf] %vm7240, %v6255
  %7281 = vst.msk [vmem:[%s3 + $0xa0] sm:$0xf] %vm7240, %v6256
  %7282 = vst.msk [vmem:[%s3 + $0xa4] sm:$0xf] %vm7240, %v6257
  %7283 = vst.msk [vmem:[%s3 + $0xa8] sm:$0xf] %vm7240, %v6258
  %7284 = vst.msk [vmem:[%s3 + $0xac] sm:$0xf] %vm7240, %v6259
  %7285 = vst.msk [vmem:[%s3 + $0xb0] sm:$0xf] %vm7240, %v6260
  %7286 = vst.msk [vmem:[%s3 + $0xb4] sm:$0xf] %vm7240, %v6261
  %7287 = vst.msk [vmem:[%s3 + $0xb8] sm:$0xf] %vm7240, %v6262
  %7288 = vst.msk [vmem:[%s3 + $0xbc] sm:$0xf] %vm7240, %v6263
  %7289 = vst.msk [vmem:[%s3 + $0xc0] sm:$0xf] %vm7240, %v6264
  %7290 = vst.msk [vmem:[%s3 + $0xc4] sm:$0xf] %vm7240, %v6265
  %7291 = vst.msk [vmem:[%s3 + $0xc8] sm:$0xf] %vm7240, %v6266
  %7292 = vst.msk [vmem:[%s3 + $0xcc] sm:$0xf] %vm7240, %v6267
  %7293 = vst.msk [vmem:[%s3 + $0xd0] sm:$0xf] %vm7240, %v6268
  %7294 = vst.msk [vmem:[%s3 + $0xd4] sm:$0xf] %vm7240, %v6269
  %7295 = vst.msk [vmem:[%s3 + $0xd8] sm:$0xf] %vm7240, %v6270
  %7296 = vst.msk [vmem:[%s3 + $0xdc] sm:$0xf] %vm7240, %v6271
  %7297 = vst.msk [vmem:[%s3 + $0xe0] sm:$0xf] %vm7240, %v6272
  %7298 = vst.msk [vmem:[%s3 + $0xe4] sm:$0xf] %vm7240, %v6273
  %7299 = vst.msk [vmem:[%s3 + $0xe8] sm:$0xf] %vm7240, %v6274
  %7300 = vst.msk [vmem:[%s3 + $0xec] sm:$0xf] %vm7240, %v6275
  %7301 = vst.msk [vmem:[%s3 + $0xf0] sm:$0xf] %vm7240, %v6276
  %7302 = vst.msk [vmem:[%s3 + $0xf4] sm:$0xf] %vm7240, %v6277
  %7303 = vst.msk [vmem:[%s3 + $0xf8] sm:$0xf] %vm7240, %v6278
  %7304 = vst.msk [vmem:[%s3 + $0xfc] sm:$0xf] %vm7240, %v6279
  %7305 = vst.msk [vmem:[%s3 + $0x100] sm:$0xf] %vm7240, %v6280
  %7306 = vst.msk [vmem:[%s3 + $0x104] sm:$0xf] %vm7240, %v6281
  %7307 = vst.msk [vmem:[%s3 + $0x108] sm:$0xf] %vm7240, %v6282
  %7308 = vst.msk [vmem:[%s3 + $0x10c] sm:$0xf] %vm7240, %v6283
  %7309 = vst.msk [vmem:[%s3 + $0x110] sm:$0xf] %vm7240, %v6284
  %7310 = vst.msk [vmem:[%s3 + $0x114] sm:$0xf] %vm7240, %v6285
  %7311 = vst.msk [vmem:[%s3 + $0x118] sm:$0xf] %vm7240, %v6286
  %7312 = vst.msk [vmem:[%s3 + $0x11c] sm:$0xf] %vm7240, %v6287
  %7313 = vst.msk [vmem:[%s3 + $0x120] sm:$0xf] %vm7240, %v6288
  %7314 = vst.msk [vmem:[%s3 + $0x124] sm:$0xf] %vm7240, %v6289
  %7315 = vst.msk [vmem:[%s3 + $0x128] sm:$0xf] %vm7240, %v6290
  %7316 = vst.msk [vmem:[%s3 + $0x12c] sm:$0xf] %vm7240, %v6291
  %7317 = vst.msk [vmem:[%s3 + $0x130] sm:$0xf] %vm7240, %v6292
  %7318 = vst.msk [vmem:[%s3 + $0x134] sm:$0xf] %vm7240, %v6293
  %7319 = vst.msk [vmem:[%s3 + $0x138] sm:$0xf] %vm7240, %v6294
  %7320 = vst.msk [vmem:[%s3 + $0x13c] sm:$0xf] %vm7240, %v6295
  %7321 = vst.msk [vmem:[%s3 + $0x140] sm:$0xf] %vm7240, %v6296
  %7322 = vst.msk [vmem:[%s3 + $0x144] sm:$0xf] %vm7240, %v6297
  %7323 = vst.msk [vmem:[%s3 + $0x148] sm:$0xf] %vm7240, %v6298
  %7324 = vst.msk [vmem:[%s3 + $0x14c] sm:$0xf] %vm7240, %v6299
  %7325 = vst.msk [vmem:[%s3 + $0x150] sm:$0xf] %vm7240, %v6300
  %7326 = vst.msk [vmem:[%s3 + $0x154] sm:$0xf] %vm7240, %v6301
  %7327 = vst.msk [vmem:[%s3 + $0x158] sm:$0xf] %vm7240, %v6302
  %7328 = vst.msk [vmem:[%s3 + $0x15c] sm:$0xf] %vm7240, %v6303
  %7329 = vst.msk [vmem:[%s3 + $0x160] sm:$0xf] %vm7240, %v6304
  %7330 = vst.msk [vmem:[%s3 + $0x164] sm:$0xf] %vm7240, %v6305
  %7331 = vst.msk [vmem:[%s3 + $0x168] sm:$0xf] %vm7240, %v6306
  %7332 = vst.msk [vmem:[%s3 + $0x16c] sm:$0xf] %vm7240, %v6307
  %7333 = vst.msk [vmem:[%s3 + $0x170] sm:$0xf] %vm7240, %v6308
  %7334 = vst.msk [vmem:[%s3 + $0x174] sm:$0xf] %vm7240, %v6309
  %7335 = vst.msk [vmem:[%s3 + $0x178] sm:$0xf] %vm7240, %v6310
  %7336 = vst.msk [vmem:[%s3 + $0x17c] sm:$0xf] %vm7240, %v6311
  %7337 = vst.msk [vmem:[%s3 + $0x180] sm:$0xf] %vm7240, %v6312
  %7338 = vst.msk [vmem:[%s3 + $0x184] sm:$0xf] %vm7240, %v6313
  %7339 = vst.msk [vmem:[%s3 + $0x188] sm:$0xf] %vm7240, %v6314
  %7340 = vst.msk [vmem:[%s3 + $0x18c] sm:$0xf] %vm7240, %v6315
  %7341 = vst.msk [vmem:[%s3 + $0x190] sm:$0xf] %vm7240, %v6316
  %7342 = vst.msk [vmem:[%s3 + $0x194] sm:$0xf] %vm7240, %v6317
  %7343 = vst.msk [vmem:[%s3 + $0x198] sm:$0xf] %vm7240, %v6318
  %7344 = vst.msk [vmem:[%s3 + $0x19c] sm:$0xf] %vm7240, %v6319
  %7345 = vst.msk [vmem:[%s3 + $0x1a0] sm:$0xf] %vm7240, %v6320
  %7346 = vst.msk [vmem:[%s3 + $0x1a4] sm:$0xf] %vm7240, %v6321
  %7347 = vst.msk [vmem:[%s3 + $0x1a8] sm:$0xf] %vm7240, %v6322
  %7348 = vst.msk [vmem:[%s3 + $0x1ac] sm:$0xf] %vm7240, %v6323
  %7349 = vst.msk [vmem:[%s3 + $0x1b0] sm:$0xf] %vm7240, %v6324
  %7350 = vst.msk [vmem:[%s3 + $0x1b4] sm:$0xf] %vm7240, %v6325
  %7351 = vst.msk [vmem:[%s3 + $0x1b8] sm:$0xf] %vm7240, %v6326
  %7352 = vst.msk [vmem:[%s3 + $0x1bc] sm:$0xf] %vm7240, %v6327
  %7353 = vst.msk [vmem:[%s3 + $0x1c0] sm:$0xf] %vm7240, %v6328
  %7354 = vst.msk [vmem:[%s3 + $0x1c4] sm:$0xf] %vm7240, %v6329
  %7355 = vst.msk [vmem:[%s3 + $0x1c8] sm:$0xf] %vm7240, %v6330
  %7356 = vst.msk [vmem:[%s3 + $0x1cc] sm:$0xf] %vm7240, %v6331
  %7357 = vst.msk [vmem:[%s3 + $0x1d0] sm:$0xf] %vm7240, %v6332
  %7358 = vst.msk [vmem:[%s3 + $0x1d4] sm:$0xf] %vm7240, %v6333
  %7359 = vst.msk [vmem:[%s3 + $0x1d8] sm:$0xf] %vm7240, %v6334
  %7360 = vst.msk [vmem:[%s3 + $0x1dc] sm:$0xf] %vm7240, %v6335
  %7361 = vst.msk [vmem:[%s3 + $0x1e0] sm:$0xf] %vm7240, %v6336
  %7362 = vst.msk [vmem:[%s3 + $0x1e4] sm:$0xf] %vm7240, %v6337
  %7363 = vst.msk [vmem:[%s3 + $0x1e8] sm:$0xf] %vm7240, %v6338
  %7364 = vst.msk [vmem:[%s3 + $0x1ec] sm:$0xf] %vm7240, %v6339
  %7365 = vst.msk [vmem:[%s3 + $0x1f0] sm:$0xf] %vm7240, %v6340
  %7366 = vst.msk [vmem:[%s3 + $0x1f4] sm:$0xf] %vm7240, %v6341
  %7367 = vst.msk [vmem:[%s3 + $0x1f8] sm:$0xf] %vm7240, %v6342
  %7368 = vst.msk [vmem:[%s3 + $0x1fc] sm:$0xf] %vm7240, %v6343
  %7369 = vst.msk [vmem:[%s3 + $0x200] sm:$0xf] %vm7240, %v6344
  %7370 = vst.msk [vmem:[%s3 + $0x204] sm:$0xf] %vm7240, %v6345
  %7371 = vst.msk [vmem:[%s3 + $0x208] sm:$0xf] %vm7240, %v6346
  %7372 = vst.msk [vmem:[%s3 + $0x20c] sm:$0xf] %vm7240, %v6347
  %7373 = vst.msk [vmem:[%s3 + $0x210] sm:$0xf] %vm7240, %v6348
  %7374 = vst.msk [vmem:[%s3 + $0x214] sm:$0xf] %vm7240, %v6349
  %7375 = vst.msk [vmem:[%s3 + $0x218] sm:$0xf] %vm7240, %v6350
  %7376 = vst.msk [vmem:[%s3 + $0x21c] sm:$0xf] %vm7240, %v6351
  %7377 = vst.msk [vmem:[%s3 + $0x220] sm:$0xf] %vm7240, %v6352
  %7378 = vst.msk [vmem:[%s3 + $0x224] sm:$0xf] %vm7240, %v6353
  %7379 = vst.msk [vmem:[%s3 + $0x228] sm:$0xf] %vm7240, %v6354
  %7380 = vst.msk [vmem:[%s3 + $0x22c] sm:$0xf] %vm7240, %v6355
  %7381 = vst.msk [vmem:[%s3 + $0x230] sm:$0xf] %vm7240, %v6356
  %7382 = vst.msk [vmem:[%s3 + $0x234] sm:$0xf] %vm7240, %v6357
  %7383 = vst.msk [vmem:[%s3 + $0x238] sm:$0xf] %vm7240, %v6358
  %7384 = vst.msk [vmem:[%s3 + $0x23c] sm:$0xf] %vm7240, %v6359
  %7385 = vst.msk [vmem:[%s3 + $0x240] sm:$0xf] %vm7240, %v6360
  %7386 = vst.msk [vmem:[%s3 + $0x244] sm:$0xf] %vm7240, %v6361
  %7387 = vst.msk [vmem:[%s3 + $0x248] sm:$0xf] %vm7240, %v6362
  %7388 = vst.msk [vmem:[%s3 + $0x24c] sm:$0xf] %vm7240, %v6363
  %7389 = vst.msk [vmem:[%s3 + $0x250] sm:$0xf] %vm7240, %v6364
  %7390 = vst.msk [vmem:[%s3 + $0x254] sm:$0xf] %vm7240, %v6365
  %7391 = vst.msk [vmem:[%s3 + $0x258] sm:$0xf] %vm7240, %v6366
  %7392 = vst.msk [vmem:[%s3 + $0x25c] sm:$0xf] %vm7240, %v6367
  %7393 = vst.msk [vmem:[%s3 + $0x260] sm:$0xf] %vm7240, %v6368
  %7394 = vst.msk [vmem:[%s3 + $0x264] sm:$0xf] %vm7240, %v6369
  %7395 = vst.msk [vmem:[%s3 + $0x268] sm:$0xf] %vm7240, %v6370
  %7396 = vst.msk [vmem:[%s3 + $0x26c] sm:$0xf] %vm7240, %v6371
  %7397 = vst.msk [vmem:[%s3 + $0x270] sm:$0xf] %vm7240, %v6372
  %7398 = vst.msk [vmem:[%s3 + $0x274] sm:$0xf] %vm7240, %v6373
  %7399 = vst.msk [vmem:[%s3 + $0x278] sm:$0xf] %vm7240, %v6374
  %7400 = vst.msk [vmem:[%s3 + $0x27c] sm:$0xf] %vm7240, %v6375
  %7401 = vst.msk [vmem:[%s3 + $0x280] sm:$0xf] %vm7240, %v6376
  %7402 = vst.msk [vmem:[%s3 + $0x284] sm:$0xf] %vm7240, %v6377
  %7403 = vst.msk [vmem:[%s3 + $0x288] sm:$0xf] %vm7240, %v6378
  %7404 = vst.msk [vmem:[%s3 + $0x28c] sm:$0xf] %vm7240, %v6379
  %7405 = vst.msk [vmem:[%s3 + $0x290] sm:$0xf] %vm7240, %v6380
  %7406 = vst.msk [vmem:[%s3 + $0x294] sm:$0xf] %vm7240, %v6381
  %7407 = vst.msk [vmem:[%s3 + $0x298] sm:$0xf] %vm7240, %v6382
  %7408 = vst.msk [vmem:[%s3 + $0x29c] sm:$0xf] %vm7240, %v6383
  %7409 = vst.msk [vmem:[%s3 + $0x2a0] sm:$0xf] %vm7240, %v6384
  %7410 = vst.msk [vmem:[%s3 + $0x2a4] sm:$0xf] %vm7240, %v6385
  %7411 = vst.msk [vmem:[%s3 + $0x2a8] sm:$0xf] %vm7240, %v6386
  %7412 = vst.msk [vmem:[%s3 + $0x2ac] sm:$0xf] %vm7240, %v6387
  %7413 = vst.msk [vmem:[%s3 + $0x2b0] sm:$0xf] %vm7240, %v6388
  %7414 = vst.msk [vmem:[%s3 + $0x2b4] sm:$0xf] %vm7240, %v6389
  %7415 = vst.msk [vmem:[%s3 + $0x2b8] sm:$0xf] %vm7240, %v6390
  %7416 = vst.msk [vmem:[%s3 + $0x2bc] sm:$0xf] %vm7240, %v6391
  %7417 = vst.msk [vmem:[%s3 + $0x2c0] sm:$0xf] %vm7240, %v6392
  %7418 = vst.msk [vmem:[%s3 + $0x2c4] sm:$0xf] %vm7240, %v6393
  %7419 = vst.msk [vmem:[%s3 + $0x2c8] sm:$0xf] %vm7240, %v6394
  %7420 = vst.msk [vmem:[%s3 + $0x2cc] sm:$0xf] %vm7240, %v6395
  %7421 = vst.msk [vmem:[%s3 + $0x2d0] sm:$0xf] %vm7240, %v6396
  %7422 = vst.msk [vmem:[%s3 + $0x2d4] sm:$0xf] %vm7240, %v6397
  %7423 = vst.msk [vmem:[%s3 + $0x2d8] sm:$0xf] %vm7240, %v6398
  %7424 = vst.msk [vmem:[%s3 + $0x2dc] sm:$0xf] %vm7240, %v6399
  %7425 = vst.msk [vmem:[%s3 + $0x2e0] sm:$0xf] %vm7240, %v6400
  %7426 = vst.msk [vmem:[%s3 + $0x2e4] sm:$0xf] %vm7240, %v6401
  %7427 = vst.msk [vmem:[%s3 + $0x2e8] sm:$0xf] %vm7240, %v6402
  %7428 = vst.msk [vmem:[%s3 + $0x2ec] sm:$0xf] %vm7240, %v6403
  %7429 = vst.msk [vmem:[%s3 + $0x2f0] sm:$0xf] %vm7240, %v6404
  %7430 = vst.msk [vmem:[%s3 + $0x2f4] sm:$0xf] %vm7240, %v6405
  %7431 = vst.msk [vmem:[%s3 + $0x2f8] sm:$0xf] %vm7240, %v6406
  %7432 = vst.msk [vmem:[%s3 + $0x2fc] sm:$0xf] %vm7240, %v6407
  %7433 = vst.msk [vmem:[%s3 + $0x300] sm:$0xf] %vm7240, %v6408
  %7434 = vst.msk [vmem:[%s3 + $0x304] sm:$0xf] %vm7240, %v6409
  %7435 = vst.msk [vmem:[%s3 + $0x308] sm:$0xf] %vm7240, %v6410
  %7436 = vst.msk [vmem:[%s3 + $0x30c] sm:$0xf] %vm7240, %v6411
  %7437 = vst.msk [vmem:[%s3 + $0x310] sm:$0xf] %vm7240, %v6412
  %7438 = vst.msk [vmem:[%s3 + $0x314] sm:$0xf] %vm7240, %v6413
  %7439 = vst.msk [vmem:[%s3 + $0x318] sm:$0xf] %vm7240, %v6414
  %7440 = vst.msk [vmem:[%s3 + $0x31c] sm:$0xf] %vm7240, %v6415
  %7441 = vst.msk [vmem:[%s3 + $0x320] sm:$0xf] %vm7240, %v6416
  %7442 = vst.msk [vmem:[%s3 + $0x324] sm:$0xf] %vm7240, %v6417
  %7443 = vst.msk [vmem:[%s3 + $0x328] sm:$0xf] %vm7240, %v6418
  %7444 = vst.msk [vmem:[%s3 + $0x32c] sm:$0xf] %vm7240, %v6419
  %7445 = vst.msk [vmem:[%s3 + $0x330] sm:$0xf] %vm7240, %v6420
  %7446 = vst.msk [vmem:[%s3 + $0x334] sm:$0xf] %vm7240, %v6421
  %7447 = vst.msk [vmem:[%s3 + $0x338] sm:$0xf] %vm7240, %v6422
  %7448 = vst.msk [vmem:[%s3 + $0x33c] sm:$0xf] %vm7240, %v6423
  %7449 = vst.msk [vmem:[%s3 + $0x340] sm:$0xf] %vm7240, %v6424
  %7450 = vst.msk [vmem:[%s3 + $0x344] sm:$0xf] %vm7240, %v6425
  %7451 = vst.msk [vmem:[%s3 + $0x348] sm:$0xf] %vm7240, %v6426
  %7452 = vst.msk [vmem:[%s3 + $0x34c] sm:$0xf] %vm7240, %v6427
  %7453 = vst.msk [vmem:[%s3 + $0x350] sm:$0xf] %vm7240, %v6428
  %7454 = vst.msk [vmem:[%s3 + $0x354] sm:$0xf] %vm7240, %v6429
  %7455 = vst.msk [vmem:[%s3 + $0x358] sm:$0xf] %vm7240, %v6430
  %7456 = vst.msk [vmem:[%s3 + $0x35c] sm:$0xf] %vm7240, %v6431
  %7457 = vst.msk [vmem:[%s3 + $0x360] sm:$0xf] %vm7240, %v6432
  %7458 = vst.msk [vmem:[%s3 + $0x364] sm:$0xf] %vm7240, %v6433
  %7459 = vst.msk [vmem:[%s3 + $0x368] sm:$0xf] %vm7240, %v6434
  %7460 = vst.msk [vmem:[%s3 + $0x36c] sm:$0xf] %vm7240, %v6435
  %7461 = vst.msk [vmem:[%s3 + $0x370] sm:$0xf] %vm7240, %v6436
  %7462 = vst.msk [vmem:[%s3 + $0x374] sm:$0xf] %vm7240, %v6437
  %7463 = vst.msk [vmem:[%s3 + $0x378] sm:$0xf] %vm7240, %v6438
  %7464 = vst.msk [vmem:[%s3 + $0x37c] sm:$0xf] %vm7240, %v6439
  %7465 = vst.msk [vmem:[%s3 + $0x380] sm:$0xf] %vm7240, %v6440
  %7466 = vst.msk [vmem:[%s3 + $0x384] sm:$0xf] %vm7240, %v6441
  %7467 = vst.msk [vmem:[%s3 + $0x388] sm:$0xf] %vm7240, %v6442
  %7468 = vst.msk [vmem:[%s3 + $0x38c] sm:$0xf] %vm7240, %v6443
  %7469 = vst.msk [vmem:[%s3 + $0x390] sm:$0xf] %vm7240, %v6444
  %7470 = vst.msk [vmem:[%s3 + $0x394] sm:$0xf] %vm7240, %v6445
  %7471 = vst.msk [vmem:[%s3 + $0x398] sm:$0xf] %vm7240, %v6446
  %7472 = vst.msk [vmem:[%s3 + $0x39c] sm:$0xf] %vm7240, %v6447
  %7473 = vst.msk [vmem:[%s3 + $0x3a0] sm:$0xf] %vm7240, %v6448
  %7474 = vst.msk [vmem:[%s3 + $0x3a4] sm:$0xf] %vm7240, %v6449
  %7475 = vst.msk [vmem:[%s3 + $0x3a8] sm:$0xf] %vm7240, %v6450
  %7476 = vst.msk [vmem:[%s3 + $0x3ac] sm:$0xf] %vm7240, %v6451
  %7477 = vst.msk [vmem:[%s3 + $0x3b0] sm:$0xf] %vm7240, %v6452
  %7478 = vst.msk [vmem:[%s3 + $0x3b4] sm:$0xf] %vm7240, %v6453
  %7479 = vst.msk [vmem:[%s3 + $0x3b8] sm:$0xf] %vm7240, %v6454
  %7480 = vst.msk [vmem:[%s3 + $0x3bc] sm:$0xf] %vm7240, %v6455
  %7481 = vst.msk [vmem:[%s3 + $0x3c0] sm:$0xf] %vm7240, %v6456
  %7482 = vst.msk [vmem:[%s3 + $0x3c4] sm:$0xf] %vm7240, %v6457
  %7483 = vst.msk [vmem:[%s3 + $0x3c8] sm:$0xf] %vm7240, %v6458
  %7484 = vst.msk [vmem:[%s3 + $0x3cc] sm:$0xf] %vm7240, %v6459
  %7485 = vst.msk [vmem:[%s3 + $0x3d0] sm:$0xf] %vm7240, %v6460
  %7486 = vst.msk [vmem:[%s3 + $0x3d4] sm:$0xf] %vm7240, %v6461
  %7487 = vst.msk [vmem:[%s3 + $0x3d8] sm:$0xf] %vm7240, %v6462
  %7488 = vst.msk [vmem:[%s3 + $0x3dc] sm:$0xf] %vm7240, %v6463
  %7489 = vst.msk [vmem:[%s3 + $0x3e0] sm:$0xf] %vm7240, %v6464
  %7490 = vst.msk [vmem:[%s3 + $0x3e4] sm:$0xf] %vm7240, %v6465
  %7491 = vst.msk [vmem:[%s3 + $0x3e8] sm:$0xf] %vm7240, %v6466
  %7492 = vst.msk [vmem:[%s3 + $0x3ec] sm:$0xf] %vm7240, %v6467
  %7493 = vst.msk [vmem:[%s3 + $0x3f0] sm:$0xf] %vm7240, %v6468
  %7494 = vst.msk [vmem:[%s3 + $0x3f4] sm:$0xf] %vm7240, %v6469
  %7495 = vst.msk [vmem:[%s3 + $0x3f8] sm:$0xf] %vm7240, %v6470
  %7496 = vst.msk [vmem:[%s3 + $0x3fc] sm:$0xf] %vm7240, %v6471
  %7497 = vst.msk [vmem:[%s3 + $0x400] sm:$0xf] %vm7240, %v6472
  %7498 = vst.msk [vmem:[%s3 + $0x404] sm:$0xf] %vm7240, %v6473
  %7499 = vst.msk [vmem:[%s3 + $0x408] sm:$0xf] %vm7240, %v6474
  %7500 = vst.msk [vmem:[%s3 + $0x40c] sm:$0xf] %vm7240, %v6475
  %7501 = vst.msk [vmem:[%s3 + $0x410] sm:$0xf] %vm7240, %v6476
  %7502 = vst.msk [vmem:[%s3 + $0x414] sm:$0xf] %vm7240, %v6477
  %7503 = vst.msk [vmem:[%s3 + $0x418] sm:$0xf] %vm7240, %v6478
  %7504 = vst.msk [vmem:[%s3 + $0x41c] sm:$0xf] %vm7240, %v6479
  %7505 = vst.msk [vmem:[%s3 + $0x420] sm:$0xf] %vm7240, %v6480
  %7506 = vst.msk [vmem:[%s3 + $0x424] sm:$0xf] %vm7240, %v6481
  %7507 = vst.msk [vmem:[%s3 + $0x428] sm:$0xf] %vm7240, %v6482
  %7508 = vst.msk [vmem:[%s3 + $0x42c] sm:$0xf] %vm7240, %v6483
  %7509 = vst.msk [vmem:[%s3 + $0x430] sm:$0xf] %vm7240, %v6484
  %7510 = vst.msk [vmem:[%s3 + $0x434] sm:$0xf] %vm7240, %v6485
  %7511 = vst.msk [vmem:[%s3 + $0x438] sm:$0xf] %vm7240, %v6486
  %7512 = vst.msk [vmem:[%s3 + $0x43c] sm:$0xf] %vm7240, %v6487
  %7513 = vst.msk [vmem:[%s3 + $0x440] sm:$0xf] %vm7240, %v6488
  %7514 = vst.msk [vmem:[%s3 + $0x444] sm:$0xf] %vm7240, %v6489
  %7515 = vst.msk [vmem:[%s3 + $0x448] sm:$0xf] %vm7240, %v6490
  %7516 = vst.msk [vmem:[%s3 + $0x44c] sm:$0xf] %vm7240, %v6491
  %7517 = vst.msk [vmem:[%s3 + $0x450] sm:$0xf] %vm7240, %v6492
  %7518 = vst.msk [vmem:[%s3 + $0x454] sm:$0xf] %vm7240, %v6493
  %7519 = vst.msk [vmem:[%s3 + $0x458] sm:$0xf] %vm7240, %v6494
  %7520 = vst.msk [vmem:[%s3 + $0x45c] sm:$0xf] %vm7240, %v6495
  %7521 = vst.msk [vmem:[%s3 + $0x460] sm:$0xf] %vm7240, %v6496
  %7522 = vst.msk [vmem:[%s3 + $0x464] sm:$0xf] %vm7240, %v6497
  %7523 = vst.msk [vmem:[%s3 + $0x468] sm:$0xf] %vm7240, %v6498
  %7524 = vst.msk [vmem:[%s3 + $0x46c] sm:$0xf] %vm7240, %v6499
  %7525 = vst.msk [vmem:[%s3 + $0x470] sm:$0xf] %vm7240, %v6500
  %7526 = vst.msk [vmem:[%s3 + $0x474] sm:$0xf] %vm7240, %v6501
  %7527 = vst.msk [vmem:[%s3 + $0x478] sm:$0xf] %vm7240, %v6502
  %7528 = vst.msk [vmem:[%s3 + $0x47c] sm:$0xf] %vm7240, %v6503
  %7529 = vst.msk [vmem:[%s3 + $0x480] sm:$0xf] %vm7240, %v6504
  %7530 = vst.msk [vmem:[%s3 + $0x484] sm:$0xf] %vm7240, %v6505
  %7531 = vst.msk [vmem:[%s3 + $0x488] sm:$0xf] %vm7240, %v6506
  %7532 = vst.msk [vmem:[%s3 + $0x48c] sm:$0xf] %vm7240, %v6507
  %7533 = vst.msk [vmem:[%s3 + $0x490] sm:$0xf] %vm7240, %v6508
  %7534 = vst.msk [vmem:[%s3 + $0x494] sm:$0xf] %vm7240, %v6509
  %7535 = vst.msk [vmem:[%s3 + $0x498] sm:$0xf] %vm7240, %v6510
  %7536 = vst.msk [vmem:[%s3 + $0x49c] sm:$0xf] %vm7240, %v6511
  %7537 = vst.msk [vmem:[%s3 + $0x4a0] sm:$0xf] %vm7240, %v6512
  %7538 = vst.msk [vmem:[%s3 + $0x4a4] sm:$0xf] %vm7240, %v6513
  %7539 = vst.msk [vmem:[%s3 + $0x4a8] sm:$0xf] %vm7240, %v6514
  %7540 = vst.msk [vmem:[%s3 + $0x4ac] sm:$0xf] %vm7240, %v6515
  %7541 = vst.msk [vmem:[%s3 + $0x4b0] sm:$0xf] %vm7240, %v6516
  %7542 = vst.msk [vmem:[%s3 + $0x4b4] sm:$0xf] %vm7240, %v6517
  %7543 = vst.msk [vmem:[%s3 + $0x4b8] sm:$0xf] %vm7240, %v6518
  %7544 = vst.msk [vmem:[%s3 + $0x4bc] sm:$0xf] %vm7240, %v6519
  %7545 = vst.msk [vmem:[%s3 + $0x4c0] sm:$0xf] %vm7240, %v6520
  %7546 = vst.msk [vmem:[%s3 + $0x4c4] sm:$0xf] %vm7240, %v6521
  %7547 = vst.msk [vmem:[%s3 + $0x4c8] sm:$0xf] %vm7240, %v6522
  %7548 = vst.msk [vmem:[%s3 + $0x4cc] sm:$0xf] %vm7240, %v6523
  %7549 = vst.msk [vmem:[%s3 + $0x4d0] sm:$0xf] %vm7240, %v6524
  %7550 = vst.msk [vmem:[%s3 + $0x4d4] sm:$0xf] %vm7240, %v6525
  %7551 = vst.msk [vmem:[%s3 + $0x4d8] sm:$0xf] %vm7240, %v6526
  %7552 = vst.msk [vmem:[%s3 + $0x4dc] sm:$0xf] %vm7240, %v6527
  %7553 = vst.msk [vmem:[%s3 + $0x4e0] sm:$0xf] %vm7240, %v6528
  %7554 = vst.msk [vmem:[%s3 + $0x4e4] sm:$0xf] %vm7240, %v6529
  %7555 = vst.msk [vmem:[%s3 + $0x4e8] sm:$0xf] %vm7240, %v6530
  %7556 = vst.msk [vmem:[%s3 + $0x4ec] sm:$0xf] %vm7240, %v6531
  %7557 = vst.msk [vmem:[%s3 + $0x4f0] sm:$0xf] %vm7240, %v6532
  %7558 = vst.msk [vmem:[%s3 + $0x4f4] sm:$0xf] %vm7240, %v6533
  %7559 = vst.msk [vmem:[%s3 + $0x4f8] sm:$0xf] %vm7240, %v6534
  %7560 = vst.msk [vmem:[%s3 + $0x4fc] sm:$0xf] %vm7240, %v6535
  %7561 = vst.msk [vmem:[%s3 + $0x500] sm:$0xf] %vm7240, %v6536
  %7562 = vst.msk [vmem:[%s3 + $0x504] sm:$0xf] %vm7240, %v6537
  %7563 = vst.msk [vmem:[%s3 + $0x508] sm:$0xf] %vm7240, %v6538
  %7564 = vst.msk [vmem:[%s3 + $0x50c] sm:$0xf] %vm7240, %v6539
  %7565 = vst.msk [vmem:[%s3 + $0x510] sm:$0xf] %vm7240, %v6540
  %7566 = vst.msk [vmem:[%s3 + $0x514] sm:$0xf] %vm7240, %v6541
  %7567 = vst.msk [vmem:[%s3 + $0x518] sm:$0xf] %vm7240, %v6542
  %7568 = vst.msk [vmem:[%s3 + $0x51c] sm:$0xf] %vm7240, %v6543
  %7569 = vst.msk [vmem:[%s3 + $0x520] sm:$0xf] %vm7240, %v6544
  %7570 = vst.msk [vmem:[%s3 + $0x524] sm:$0xf] %vm7240, %v6545
  %7571 = vst.msk [vmem:[%s3 + $0x528] sm:$0xf] %vm7240, %v6546
  %7572 = vst.msk [vmem:[%s3 + $0x52c] sm:$0xf] %vm7240, %v6547
  %7573 = vst.msk [vmem:[%s3 + $0x530] sm:$0xf] %vm7240, %v6548
  %7574 = vst.msk [vmem:[%s3 + $0x534] sm:$0xf] %vm7240, %v6549
  %7575 = vst.msk [vmem:[%s3 + $0x538] sm:$0xf] %vm7240, %v6550
  %7576 = vst.msk [vmem:[%s3 + $0x53c] sm:$0xf] %vm7240, %v6551
  %7577 = vst.msk [vmem:[%s3 + $0x540] sm:$0xf] %vm7240, %v6552
  %7578 = vst.msk [vmem:[%s3 + $0x544] sm:$0xf] %vm7240, %v6553
  %7579 = vst.msk [vmem:[%s3 + $0x548] sm:$0xf] %vm7240, %v6554
  %7580 = vst.msk [vmem:[%s3 + $0x54c] sm:$0xf] %vm7240, %v6555
  %7581 = vst.msk [vmem:[%s3 + $0x550] sm:$0xf] %vm7240, %v6556
  %7582 = vst.msk [vmem:[%s3 + $0x554] sm:$0xf] %vm7240, %v6557
  %7583 = vst.msk [vmem:[%s3 + $0x558] sm:$0xf] %vm7240, %v6558
  %7584 = vst.msk [vmem:[%s3 + $0x55c] sm:$0xf] %vm7240, %v6559
  %7585 = vst.msk [vmem:[%s3 + $0x560] sm:$0xf] %vm7240, %v6560
  %7586 = vst.msk [vmem:[%s3 + $0x564] sm:$0xf] %vm7240, %v6561
  %7587 = vst.msk [vmem:[%s3 + $0x568] sm:$0xf] %vm7240, %v6562
  %7588 = vst.msk [vmem:[%s3 + $0x56c] sm:$0xf] %vm7240, %v6563
  %7589 = vst.msk [vmem:[%s3 + $0x570] sm:$0xf] %vm7240, %v6564
  %7590 = vst.msk [vmem:[%s3 + $0x574] sm:$0xf] %vm7240, %v6565
  %7591 = vst.msk [vmem:[%s3 + $0x578] sm:$0xf] %vm7240, %v6566
  %7592 = vst.msk [vmem:[%s3 + $0x57c] sm:$0xf] %vm7240, %v6567
  %7593 = vst.msk [vmem:[%s3 + $0x580] sm:$0xf] %vm7240, %v6568
  %7594 = vst.msk [vmem:[%s3 + $0x584] sm:$0xf] %vm7240, %v6569
  %7595 = vst.msk [vmem:[%s3 + $0x588] sm:$0xf] %vm7240, %v6570
  %7596 = vst.msk [vmem:[%s3 + $0x58c] sm:$0xf] %vm7240, %v6571
  %7597 = vst.msk [vmem:[%s3 + $0x590] sm:$0xf] %vm7240, %v6572
  %7598 = vst.msk [vmem:[%s3 + $0x594] sm:$0xf] %vm7240, %v6573
  %7599 = vst.msk [vmem:[%s3 + $0x598] sm:$0xf] %vm7240, %v6574
  %7600 = vst.msk [vmem:[%s3 + $0x59c] sm:$0xf] %vm7240, %v6575
  %7601 = vst.msk [vmem:[%s3 + $0x5a0] sm:$0xf] %vm7240, %v6576
  %7602 = vst.msk [vmem:[%s3 + $0x5a4] sm:$0xf] %vm7240, %v6577
  %7603 = vst.msk [vmem:[%s3 + $0x5a8] sm:$0xf] %vm7240, %v6578
  %7604 = vst.msk [vmem:[%s3 + $0x5ac] sm:$0xf] %vm7240, %v6579
  %7605 = vst.msk [vmem:[%s3 + $0x5b0] sm:$0xf] %vm7240, %v6580
  %7606 = vst.msk [vmem:[%s3 + $0x5b4] sm:$0xf] %vm7240, %v6581
  %7607 = vst.msk [vmem:[%s3 + $0x5b8] sm:$0xf] %vm7240, %v6582
  %7608 = vst.msk [vmem:[%s3 + $0x5bc] sm:$0xf] %vm7240, %v6583
  %7609 = vst.msk [vmem:[%s3 + $0x5c0] sm:$0xf] %vm7240, %v6584
  %7610 = vst.msk [vmem:[%s3 + $0x5c4] sm:$0xf] %vm7240, %v6585
  %7611 = vst.msk [vmem:[%s3 + $0x5c8] sm:$0xf] %vm7240, %v6586
  %7612 = vst.msk [vmem:[%s3 + $0x5cc] sm:$0xf] %vm7240, %v6587
  %7613 = vst.msk [vmem:[%s3 + $0x5d0] sm:$0xf] %vm7240, %v6588
  %7614 = vst.msk [vmem:[%s3 + $0x5d4] sm:$0xf] %vm7240, %v6589
  %7615 = vst.msk [vmem:[%s3 + $0x5d8] sm:$0xf] %vm7240, %v6590
  %7616 = vst.msk [vmem:[%s3 + $0x5dc] sm:$0xf] %vm7240, %v6591
  %7617 = vst.msk [vmem:[%s3 + $0x5e0] sm:$0xf] %vm7240, %v6592
  %7618 = vst.msk [vmem:[%s3 + $0x5e4] sm:$0xf] %vm7240, %v6593
  %7619 = vst.msk [vmem:[%s3 + $0x5e8] sm:$0xf] %vm7240, %v6594
  %7620 = vst.msk [vmem:[%s3 + $0x5ec] sm:$0xf] %vm7240, %v6595
  %7621 = vst.msk [vmem:[%s3 + $0x5f0] sm:$0xf] %vm7240, %v6596
  %7622 = vst.msk [vmem:[%s3 + $0x5f4] sm:$0xf] %vm7240, %v6597
  %7623 = vst.msk [vmem:[%s3 + $0x5f8] sm:$0xf] %vm7240, %v6598
  %7624 = vst.msk [vmem:[%s3 + $0x5fc] sm:$0xf] %vm7240, %v6599
  %7625 = vst.msk [vmem:[%s3 + $0x600] sm:$0xf] %vm7240, %v6600
  %7626 = vst.msk [vmem:[%s3 + $0x604] sm:$0xf] %vm7240, %v6601
  %7627 = vst.msk [vmem:[%s3 + $0x608] sm:$0xf] %vm7240, %v6602
  %7628 = vst.msk [vmem:[%s3 + $0x60c] sm:$0xf] %vm7240, %v6603
  %7629 = vst.msk [vmem:[%s3 + $0x610] sm:$0xf] %vm7240, %v6604
  %7630 = vst.msk [vmem:[%s3 + $0x614] sm:$0xf] %vm7240, %v6605
  %7631 = vst.msk [vmem:[%s3 + $0x618] sm:$0xf] %vm7240, %v6606
  %7632 = vst.msk [vmem:[%s3 + $0x61c] sm:$0xf] %vm7240, %v6607
  %7633 = vst.msk [vmem:[%s3 + $0x620] sm:$0xf] %vm7240, %v6608
  %7634 = vst.msk [vmem:[%s3 + $0x624] sm:$0xf] %vm7240, %v6609
  %7635 = vst.msk [vmem:[%s3 + $0x628] sm:$0xf] %vm7240, %v6610
  %7636 = vst.msk [vmem:[%s3 + $0x62c] sm:$0xf] %vm7240, %v6611
  %7637 = vst.msk [vmem:[%s3 + $0x630] sm:$0xf] %vm7240, %v6612
  %7638 = vst.msk [vmem:[%s3 + $0x634] sm:$0xf] %vm7240, %v6613
  %7639 = vst.msk [vmem:[%s3 + $0x638] sm:$0xf] %vm7240, %v6614
  %7640 = vst.msk [vmem:[%s3 + $0x63c] sm:$0xf] %vm7240, %v6615
  %7641 = vst.msk [vmem:[%s3 + $0x640] sm:$0xf] %vm7240, %v6616
  %7642 = vst.msk [vmem:[%s3 + $0x644] sm:$0xf] %vm7240, %v6617
  %7643 = vst.msk [vmem:[%s3 + $0x648] sm:$0xf] %vm7240, %v6618
  %7644 = vst.msk [vmem:[%s3 + $0x64c] sm:$0xf] %vm7240, %v6619
  %7645 = vst.msk [vmem:[%s3 + $0x650] sm:$0xf] %vm7240, %v6620
  %7646 = vst.msk [vmem:[%s3 + $0x654] sm:$0xf] %vm7240, %v6621
  %7647 = vst.msk [vmem:[%s3 + $0x658] sm:$0xf] %vm7240, %v6622
  %7648 = vst.msk [vmem:[%s3 + $0x65c] sm:$0xf] %vm7240, %v6623
  %7649 = vst.msk [vmem:[%s3 + $0x660] sm:$0xf] %vm7240, %v6624
  %7650 = vst.msk [vmem:[%s3 + $0x664] sm:$0xf] %vm7240, %v6625
  %7651 = vst.msk [vmem:[%s3 + $0x668] sm:$0xf] %vm7240, %v6626
  %7652 = vst.msk [vmem:[%s3 + $0x66c] sm:$0xf] %vm7240, %v6627
  %7653 = vst.msk [vmem:[%s3 + $0x670] sm:$0xf] %vm7240, %v6628
  %7654 = vst.msk [vmem:[%s3 + $0x674] sm:$0xf] %vm7240, %v6629
  %7655 = vst.msk [vmem:[%s3 + $0x678] sm:$0xf] %vm7240, %v6630
  %7656 = vst.msk [vmem:[%s3 + $0x67c] sm:$0xf] %vm7240, %v6631
  %7657 = vst.msk [vmem:[%s3 + $0x680] sm:$0xf] %vm7240, %v6632
  %7658 = vst.msk [vmem:[%s3 + $0x684] sm:$0xf] %vm7240, %v6633
  %7659 = vst.msk [vmem:[%s3 + $0x688] sm:$0xf] %vm7240, %v6634
  %7660 = vst.msk [vmem:[%s3 + $0x68c] sm:$0xf] %vm7240, %v6635
  %7661 = vst.msk [vmem:[%s3 + $0x690] sm:$0xf] %vm7240, %v6636
  %7662 = vst.msk [vmem:[%s3 + $0x694] sm:$0xf] %vm7240, %v6637
  %7663 = vst.msk [vmem:[%s3 + $0x698] sm:$0xf] %vm7240, %v6638
  %7664 = vst.msk [vmem:[%s3 + $0x69c] sm:$0xf] %vm7240, %v6639
  %7665 = vst.msk [vmem:[%s3 + $0x6a0] sm:$0xf] %vm7240, %v6640
  %7666 = vst.msk [vmem:[%s3 + $0x6a4] sm:$0xf] %vm7240, %v6641
  %7667 = vst.msk [vmem:[%s3 + $0x6a8] sm:$0xf] %vm7240, %v6642
  %7668 = vst.msk [vmem:[%s3 + $0x6ac] sm:$0xf] %vm7240, %v6643
  %7669 = vst.msk [vmem:[%s3 + $0x6b0] sm:$0xf] %vm7240, %v6644
  %7670 = vst.msk [vmem:[%s3 + $0x6b4] sm:$0xf] %vm7240, %v6645
  %7671 = vst.msk [vmem:[%s3 + $0x6b8] sm:$0xf] %vm7240, %v6646
  %7672 = vst.msk [vmem:[%s3 + $0x6bc] sm:$0xf] %vm7240, %v6647
  %7673 = vst.msk [vmem:[%s3 + $0x6c0] sm:$0xf] %vm7240, %v6648
  %7674 = vst.msk [vmem:[%s3 + $0x6c4] sm:$0xf] %vm7240, %v6649
  %7675 = vst.msk [vmem:[%s3 + $0x6c8] sm:$0xf] %vm7240, %v6650
  %7676 = vst.msk [vmem:[%s3 + $0x6cc] sm:$0xf] %vm7240, %v6651
  %7677 = vst.msk [vmem:[%s3 + $0x6d0] sm:$0xf] %vm7240, %v6652
  %7678 = vst.msk [vmem:[%s3 + $0x6d4] sm:$0xf] %vm7240, %v6653
  %7679 = vst.msk [vmem:[%s3 + $0x6d8] sm:$0xf] %vm7240, %v6654
  %7680 = vst.msk [vmem:[%s3 + $0x6dc] sm:$0xf] %vm7240, %v6655
  %7681 = vst.msk [vmem:[%s3 + $0x6e0] sm:$0xf] %vm7240, %v6656
  %7682 = vst.msk [vmem:[%s3 + $0x6e4] sm:$0xf] %vm7240, %v6657
  %7683 = vst.msk [vmem:[%s3 + $0x6e8] sm:$0xf] %vm7240, %v6658
  %7684 = vst.msk [vmem:[%s3 + $0x6ec] sm:$0xf] %vm7240, %v6659
  %7685 = vst.msk [vmem:[%s3 + $0x6f0] sm:$0xf] %vm7240, %v6660
  %7686 = vst.msk [vmem:[%s3 + $0x6f4] sm:$0xf] %vm7240, %v6661
  %7687 = vst.msk [vmem:[%s3 + $0x6f8] sm:$0xf] %vm7240, %v6662
  %7688 = vst.msk [vmem:[%s3 + $0x6fc] sm:$0xf] %vm7240, %v6663
  %7689 = vst.msk [vmem:[%s3 + $0x700] sm:$0xf] %vm7240, %v6664
  %7690 = vst.msk [vmem:[%s3 + $0x704] sm:$0xf] %vm7240, %v6665
  %7691 = vst.msk [vmem:[%s3 + $0x708] sm:$0xf] %vm7240, %v6666
  %7692 = vst.msk [vmem:[%s3 + $0x70c] sm:$0xf] %vm7240, %v6667
  %7693 = vst.msk [vmem:[%s3 + $0x710] sm:$0xf] %vm7240, %v6668
  %7694 = vst.msk [vmem:[%s3 + $0x714] sm:$0xf] %vm7240, %v6669
  %7695 = vst.msk [vmem:[%s3 + $0x718] sm:$0xf] %vm7240, %v6670
  %7696 = vst.msk [vmem:[%s3 + $0x71c] sm:$0xf] %vm7240, %v6671
  %7697 = vst.msk [vmem:[%s3 + $0x720] sm:$0xf] %vm7240, %v6672
  %7698 = vst.msk [vmem:[%s3 + $0x724] sm:$0xf] %vm7240, %v6673
  %7699 = vst.msk [vmem:[%s3 + $0x728] sm:$0xf] %vm7240, %v6674
  %7700 = vst.msk [vmem:[%s3 + $0x72c] sm:$0xf] %vm7240, %v6675
  %7701 = vst.msk [vmem:[%s3 + $0x730] sm:$0xf] %vm7240, %v6676
  %7702 = vst.msk [vmem:[%s3 + $0x734] sm:$0xf] %vm7240, %v6677
  %7703 = vst.msk [vmem:[%s3 + $0x738] sm:$0xf] %vm7240, %v6678
  %7704 = vst.msk [vmem:[%s3 + $0x73c] sm:$0xf] %vm7240, %v6679
  %7705 = vst.msk [vmem:[%s3 + $0x740] sm:$0xf] %vm7240, %v6680
  %7706 = vst.msk [vmem:[%s3 + $0x744] sm:$0xf] %vm7240, %v6681
  %7707 = vst.msk [vmem:[%s3 + $0x748] sm:$0xf] %vm7240, %v6682
  %7708 = vst.msk [vmem:[%s3 + $0x74c] sm:$0xf] %vm7240, %v6683
  %7709 = vst.msk [vmem:[%s3 + $0x750] sm:$0xf] %vm7240, %v6684
  %7710 = vst.msk [vmem:[%s3 + $0x754] sm:$0xf] %vm7240, %v6685
  %7711 = vst.msk [vmem:[%s3 + $0x758] sm:$0xf] %vm7240, %v6686
  %7712 = vst.msk [vmem:[%s3 + $0x75c] sm:$0xf] %vm7240, %v6687
  %7713 = vst.msk [vmem:[%s3 + $0x760] sm:$0xf] %vm7240, %v6688
  %7714 = vst.msk [vmem:[%s3 + $0x764] sm:$0xf] %vm7240, %v6689
  %7715 = vst.msk [vmem:[%s3 + $0x768] sm:$0xf] %vm7240, %v6690
  %7716 = vst.msk [vmem:[%s3 + $0x76c] sm:$0xf] %vm7240, %v6691
  %7717 = vst.msk [vmem:[%s3 + $0x770] sm:$0xf] %vm7240, %v6692
  %7718 = vst.msk [vmem:[%s3 + $0x774] sm:$0xf] %vm7240, %v6693
  %7719 = vst.msk [vmem:[%s3 + $0x778] sm:$0xf] %vm7240, %v6694
  %7720 = vst.msk [vmem:[%s3 + $0x77c] sm:$0xf] %vm7240, %v6695
  %7721 = vst.msk [vmem:[%s3 + $0x780] sm:$0xf] %vm7240, %v6696
  %7722 = vst.msk [vmem:[%s3 + $0x784] sm:$0xf] %vm7240, %v6697
  %7723 = vst.msk [vmem:[%s3 + $0x788] sm:$0xf] %vm7240, %v6698
  %7724 = vst.msk [vmem:[%s3 + $0x78c] sm:$0xf] %vm7240, %v6699
  %7725 = vst.msk [vmem:[%s3 + $0x790] sm:$0xf] %vm7240, %v6700
  %7726 = vst.msk [vmem:[%s3 + $0x794] sm:$0xf] %vm7240, %v6701
  %7727 = vst.msk [vmem:[%s3 + $0x798] sm:$0xf] %vm7240, %v6702
  %7728 = vst.msk [vmem:[%s3 + $0x79c] sm:$0xf] %vm7240, %v6703
  %7729 = vst.msk [vmem:[%s3 + $0x7a0] sm:$0xf] %vm7240, %v6704
  %7730 = vst.msk [vmem:[%s3 + $0x7a4] sm:$0xf] %vm7240, %v6705
  %7731 = vst.msk [vmem:[%s3 + $0x7a8] sm:$0xf] %vm7240, %v6706
  %7732 = vst.msk [vmem:[%s3 + $0x7ac] sm:$0xf] %vm7240, %v6707
  %7733 = vst.msk [vmem:[%s3 + $0x7b0] sm:$0xf] %vm7240, %v6708
  %7734 = vst.msk [vmem:[%s3 + $0x7b4] sm:$0xf] %vm7240, %v6709
  %7735 = vst.msk [vmem:[%s3 + $0x7b8] sm:$0xf] %vm7240, %v6710
  %7736 = vst.msk [vmem:[%s3 + $0x7bc] sm:$0xf] %vm7240, %v6711
  %7737 = vst.msk [vmem:[%s3 + $0x7c0] sm:$0xf] %vm7240, %v6712
  %7738 = vst.msk [vmem:[%s3 + $0x7c4] sm:$0xf] %vm7240, %v6713
  %7739 = vst.msk [vmem:[%s3 + $0x7c8] sm:$0xf] %vm7240, %v6714
  %7740 = vst.msk [vmem:[%s3 + $0x7cc] sm:$0xf] %vm7240, %v6715
  %7741 = vst.msk [vmem:[%s3 + $0x7d0] sm:$0xf] %vm7240, %v6716
  %7742 = vst.msk [vmem:[%s3 + $0x7d4] sm:$0xf] %vm7240, %v6717
  %7743 = vst.msk [vmem:[%s3 + $0x7d8] sm:$0xf] %vm7240, %v6718
  %7744 = vst.msk [vmem:[%s3 + $0x7dc] sm:$0xf] %vm7240, %v6719
  %7745 = vst.msk [vmem:[%s3 + $0x7e0] sm:$0xf] %vm7240, %v6720
  %7746 = vst.msk [vmem:[%s3 + $0x7e4] sm:$0xf] %vm7240, %v6721
  %7747 = vst.msk [vmem:[%s3 + $0x7e8] sm:$0xf] %vm7240, %v6722
  %7748 = vst.msk [vmem:[%s3 + $0x7ec] sm:$0xf] %vm7240, %v6723
  %7749 = vst.msk [vmem:[%s3 + $0x7f0] sm:$0xf] %vm7240, %v6724
  %7750 = vst.msk [vmem:[%s3 + $0x7f4] sm:$0xf] %vm7240, %v6725
  %7751 = vst.msk [vmem:[%s3 + $0x7f8] sm:$0xf] %vm7240, %v6726
  %7752 = vst.msk [vmem:[%s3 + $0x7fc] sm:$0xf] %vm7240, %v6727
  // Predicated region
  $region14: #{siamese_forward.3} parent=0 // pred_check
    _
  $region15: #{siamese_forward.3} parent=0 // pred_check_branch
    %7754 = sbr.rel (0) target = $region17
  $region16: #{siamese_forward.3} parent=0 // pred_region
    _
  $region17: #{siamese_forward.3} parent=0 // pred_fallthru
    _
  // Predicated region
  $region18: #{siamese_forward.3} parent=0 // pred_check
    _
  $region19: #{siamese_forward.3} parent=0 // pred_check_branch
    %7756 = sbr.rel (0) target = $region21
  $region20: #{siamese_forward.3} parent=0 // pred_region
    _
  $region21: #{siamese_forward.3} parent=0 // pred_fallthru
    _

// kernel: siamese_forward.4
$region0: #{siamese_forward.4}
  #allocation0 [shape = 'u32[]', space=smem, size = 0x4, offset = 0x4, fixed_abs, tag = 'smem constant byte address 0x4 - core index']
  #allocation1 [shape = 'u32[144,128]{1,0:T(1,128)}', space=vmem, size = 0x12000, scoped, tag = 'internal scratch']
  %s0 = inlined_call_operand.vmem [shape: bf16[1024,144], index: 0, kind: input, shape index: {}]
  %s1 = inlined_call_operand.vmem [shape: bf16[144,32], index: 1, kind: input, shape index: {}]
  %s2 = inlined_call_operand.vmem [shape: f32[1,32], index: 2, kind: input, shape index: {}]
  %s3 = inlined_call_operand.vmem [shape: bf16[1024,32], index: 3, kind: output, shape index: {}]
  %s4 = sld [smem:[#allocation0]]
  $region22: #{siamese_forward.4} parent=0
    _
  %s6 = ssub.s32 1, %s4
  %s7 = scalar_select 0, %s6, %s4
  // Predicated region
  $region2: #{siamese_forward.4} parent=0 // pred_check
    _
  $region3: #{siamese_forward.4} parent=0 // pred_check_branch
    %9 = sbr.rel (0) target = $region5
  $region4: #{siamese_forward.4} parent=0 // pred_region
    _
  $region5: #{siamese_forward.4} parent=0 // pred_fallthru
    _
  // Predicated region
  $region6: #{siamese_forward.4} parent=0 // pred_check
    _
  $region7: #{siamese_forward.4} parent=0 // pred_check_branch
    %11 = sbr.rel (0) target = $region9
  $region8: #{siamese_forward.4} parent=0 // pred_region
    _
  $region9: #{siamese_forward.4} parent=0 // pred_fallthru
    _
  // Predicated region
  $region10: #{siamese_forward.4} parent=0 // pred_check
    _
  $region11: #{siamese_forward.4} parent=0 // pred_check_branch
    %13 = sbr.rel (0) target = $region13
  $region12: #{siamese_forward.4} parent=0 // pred_region
    _
  $region13: #{siamese_forward.4} parent=0 // pred_fallthru
    _
  %v15 = vld [vmem:[%s0] sm:$0xff]
  %v16 = vld [vmem:[%s0 + $0x8] sm:$0xff]
  %v17 = vld [vmem:[%s0 + $0x10] sm:$0xff]
  %v18 = vld [vmem:[%s0 + $0x18] sm:$0xff]
  %v19 = vld [vmem:[%s0 + $0x20] sm:$0xff]
  %v20 = vld [vmem:[%s0 + $0x28] sm:$0xff]
  %v21 = vld [vmem:[%s0 + $0x30] sm:$0xff]
  %v22 = vld [vmem:[%s0 + $0x38] sm:$0xff]
  %v23 = vld [vmem:[%s0 + $0x40] sm:$0xff]
  %v24 = vld [vmem:[%s0 + $0x48] sm:$0xff]
  %v25 = vld [vmem:[%s0 + $0x50] sm:$0xff]
  %v26 = vld [vmem:[%s0 + $0x58] sm:$0xff]
  %v27 = vld [vmem:[%s0 + $0x60] sm:$0xff]
  %v28 = vld [vmem:[%s0 + $0x68] sm:$0xff]
  %v29 = vld [vmem:[%s0 + $0x70] sm:$0xff]
  %v30 = vld [vmem:[%s0 + $0x78] sm:$0xff]
  %v31 = vld [vmem:[%s0 + $0x80] sm:$0xff]
  %v32 = vld [vmem:[%s0 + $0x88] sm:$0xff]
  %v33 = vld [vmem:[%s0 + $0x90] sm:$0xff]
  %v34 = vld [vmem:[%s0 + $0x98] sm:$0xff]
  %v35 = vld [vmem:[%s0 + $0xa0] sm:$0xff]
  %v36 = vld [vmem:[%s0 + $0xa8] sm:$0xff]
  %v37 = vld [vmem:[%s0 + $0xb0] sm:$0xff]
  %v38 = vld [vmem:[%s0 + $0xb8] sm:$0xff]
  %v39 = vld [vmem:[%s0 + $0xc0] sm:$0xff]
  %v40 = vld [vmem:[%s0 + $0xc8] sm:$0xff]
  %v41 = vld [vmem:[%s0 + $0xd0] sm:$0xff]
  %v42 = vld [vmem:[%s0 + $0xd8] sm:$0xff]
  %v43 = vld [vmem:[%s0 + $0xe0] sm:$0xff]
  %v44 = vld [vmem:[%s0 + $0xe8] sm:$0xff]
  %v45 = vld [vmem:[%s0 + $0xf0] sm:$0xff]
  %v46 = vld [vmem:[%s0 + $0xf8] sm:$0xff]
  %v47 = vld [vmem:[%s0 + $0x100] sm:$0xff]
  %v48 = vld [vmem:[%s0 + $0x108] sm:$0xff]
  %v49 = vld [vmem:[%s0 + $0x110] sm:$0xff]
  %v50 = vld [vmem:[%s0 + $0x118] sm:$0xff]
  %v51 = vld [vmem:[%s0 + $0x120] sm:$0xff]
  %v52 = vld [vmem:[%s0 + $0x128] sm:$0xff]
  %v53 = vld [vmem:[%s0 + $0x130] sm:$0xff]
  %v54 = vld [vmem:[%s0 + $0x138] sm:$0xff]
  %v55 = vld [vmem:[%s0 + $0x140] sm:$0xff]
  %v56 = vld [vmem:[%s0 + $0x148] sm:$0xff]
  %v57 = vld [vmem:[%s0 + $0x150] sm:$0xff]
  %v58 = vld [vmem:[%s0 + $0x158] sm:$0xff]
  %v59 = vld [vmem:[%s0 + $0x160] sm:$0xff]
  %v60 = vld [vmem:[%s0 + $0x168] sm:$0xff]
  %v61 = vld [vmem:[%s0 + $0x170] sm:$0xff]
  %v62 = vld [vmem:[%s0 + $0x178] sm:$0xff]
  %v63 = vld [vmem:[%s0 + $0x180] sm:$0xff]
  %v64 = vld [vmem:[%s0 + $0x188] sm:$0xff]
  %v65 = vld [vmem:[%s0 + $0x190] sm:$0xff]
  %v66 = vld [vmem:[%s0 + $0x198] sm:$0xff]
  %v67 = vld [vmem:[%s0 + $0x1a0] sm:$0xff]
  %v68 = vld [vmem:[%s0 + $0x1a8] sm:$0xff]
  %v69 = vld [vmem:[%s0 + $0x1b0] sm:$0xff]
  %v70 = vld [vmem:[%s0 + $0x1b8] sm:$0xff]
  %v71 = vld [vmem:[%s0 + $0x1c0] sm:$0xff]
  %v72 = vld [vmem:[%s0 + $0x1c8] sm:$0xff]
  %v73 = vld [vmem:[%s0 + $0x1d0] sm:$0xff]
  %v74 = vld [vmem:[%s0 + $0x1d8] sm:$0xff]
  %v75 = vld [vmem:[%s0 + $0x1e0] sm:$0xff]
  %v76 = vld [vmem:[%s0 + $0x1e8] sm:$0xff]
  %v77 = vld [vmem:[%s0 + $0x1f0] sm:$0xff]
  %v78 = vld [vmem:[%s0 + $0x1f8] sm:$0xff]
  %v79 = vld [vmem:[%s0 + $0x200] sm:$0xff]
  %v80 = vld [vmem:[%s0 + $0x208] sm:$0xff]
  %v81 = vld [vmem:[%s0 + $0x210] sm:$0xff]
  %v82 = vld [vmem:[%s0 + $0x218] sm:$0xff]
  %v83 = vld [vmem:[%s0 + $0x220] sm:$0xff]
  %v84 = vld [vmem:[%s0 + $0x228] sm:$0xff]
  %v85 = vld [vmem:[%s0 + $0x230] sm:$0xff]
  %v86 = vld [vmem:[%s0 + $0x238] sm:$0xff]
  %v87 = vld [vmem:[%s0 + $0x240] sm:$0xff]
  %v88 = vld [vmem:[%s0 + $0x248] sm:$0xff]
  %v89 = vld [vmem:[%s0 + $0x250] sm:$0xff]
  %v90 = vld [vmem:[%s0 + $0x258] sm:$0xff]
  %v91 = vld [vmem:[%s0 + $0x260] sm:$0xff]
  %v92 = vld [vmem:[%s0 + $0x268] sm:$0xff]
  %v93 = vld [vmem:[%s0 + $0x270] sm:$0xff]
  %v94 = vld [vmem:[%s0 + $0x278] sm:$0xff]
  %v95 = vld [vmem:[%s0 + $0x280] sm:$0xff]
  %v96 = vld [vmem:[%s0 + $0x288] sm:$0xff]
  %v97 = vld [vmem:[%s0 + $0x290] sm:$0xff]
  %v98 = vld [vmem:[%s0 + $0x298] sm:$0xff]
  %v99 = vld [vmem:[%s0 + $0x2a0] sm:$0xff]
  %v100 = vld [vmem:[%s0 + $0x2a8] sm:$0xff]
  %v101 = vld [vmem:[%s0 + $0x2b0] sm:$0xff]
  %v102 = vld [vmem:[%s0 + $0x2b8] sm:$0xff]
  %v103 = vld [vmem:[%s0 + $0x2c0] sm:$0xff]
  %v104 = vld [vmem:[%s0 + $0x2c8] sm:$0xff]
  %v105 = vld [vmem:[%s0 + $0x2d0] sm:$0xff]
  %v106 = vld [vmem:[%s0 + $0x2d8] sm:$0xff]
  %v107 = vld [vmem:[%s0 + $0x2e0] sm:$0xff]
  %v108 = vld [vmem:[%s0 + $0x2e8] sm:$0xff]
  %v109 = vld [vmem:[%s0 + $0x2f0] sm:$0xff]
  %v110 = vld [vmem:[%s0 + $0x2f8] sm:$0xff]
  %v111 = vld [vmem:[%s0 + $0x300] sm:$0xff]
  %v112 = vld [vmem:[%s0 + $0x308] sm:$0xff]
  %v113 = vld [vmem:[%s0 + $0x310] sm:$0xff]
  %v114 = vld [vmem:[%s0 + $0x318] sm:$0xff]
  %v115 = vld [vmem:[%s0 + $0x320] sm:$0xff]
  %v116 = vld [vmem:[%s0 + $0x328] sm:$0xff]
  %v117 = vld [vmem:[%s0 + $0x330] sm:$0xff]
  %v118 = vld [vmem:[%s0 + $0x338] sm:$0xff]
  %v119 = vld [vmem:[%s0 + $0x340] sm:$0xff]
  %v120 = vld [vmem:[%s0 + $0x348] sm:$0xff]
  %v121 = vld [vmem:[%s0 + $0x350] sm:$0xff]
  %v122 = vld [vmem:[%s0 + $0x358] sm:$0xff]
  %v123 = vld [vmem:[%s0 + $0x360] sm:$0xff]
  %v124 = vld [vmem:[%s0 + $0x368] sm:$0xff]
  %v125 = vld [vmem:[%s0 + $0x370] sm:$0xff]
  %v126 = vld [vmem:[%s0 + $0x378] sm:$0xff]
  %v127 = vld [vmem:[%s0 + $0x380] sm:$0xff]
  %v128 = vld [vmem:[%s0 + $0x388] sm:$0xff]
  %v129 = vld [vmem:[%s0 + $0x390] sm:$0xff]
  %v130 = vld [vmem:[%s0 + $0x398] sm:$0xff]
  %v131 = vld [vmem:[%s0 + $0x3a0] sm:$0xff]
  %v132 = vld [vmem:[%s0 + $0x3a8] sm:$0xff]
  %v133 = vld [vmem:[%s0 + $0x3b0] sm:$0xff]
  %v134 = vld [vmem:[%s0 + $0x3b8] sm:$0xff]
  %v135 = vld [vmem:[%s0 + $0x3c0] sm:$0xff]
  %v136 = vld [vmem:[%s0 + $0x3c8] sm:$0xff]
  %v137 = vld [vmem:[%s0 + $0x3d0] sm:$0xff]
  %v138 = vld [vmem:[%s0 + $0x3d8] sm:$0xff]
  %v139 = vld [vmem:[%s0 + $0x3e0] sm:$0xff]
  %v140 = vld [vmem:[%s0 + $0x3e8] sm:$0xff]
  %v141 = vld [vmem:[%s0 + $0x3f0] sm:$0xff]
  %v142 = vld [vmem:[%s0 + $0x3f8] sm:$0xff]
  %v143 = vld [vmem:[%s1] sm:$0xf]
  %v144 = vld [vmem:[%s1 + $0x4] sm:$0xf]
  %v145 = vld [vmem:[%s1 + $0x8] sm:$0xf]
  %v146 = vld [vmem:[%s1 + $0xc] sm:$0xf]
  %v147 = vld [vmem:[%s1 + $0x10] sm:$0xf]
  %v148 = vld [vmem:[%s1 + $0x14] sm:$0xf]
  %v149 = vld [vmem:[%s1 + $0x18] sm:$0xf]
  %v150 = vld [vmem:[%s1 + $0x1c] sm:$0xf]
  %v151 = vld [vmem:[%s1 + $0x20] sm:$0xf]
  %v152 = vld [vmem:[%s1 + $0x24] sm:$0xf]
  %v153 = vld [vmem:[%s1 + $0x28] sm:$0xf]
  %v154 = vld [vmem:[%s1 + $0x2c] sm:$0xf]
  %v155 = vld [vmem:[%s1 + $0x30] sm:$0xf]
  %v156 = vld [vmem:[%s1 + $0x34] sm:$0xf]
  %v157 = vld [vmem:[%s1 + $0x38] sm:$0xf]
  %v158 = vld [vmem:[%s1 + $0x3c] sm:$0xf]
  %v159 = vld [vmem:[%s1 + $0x40] sm:$0xf]
  %v160 = vld [vmem:[%s1 + $0x44] sm:$0xf]
  %v161 = vld [vmem:[%s2] sm:$0x1]
  %v163 = vlaneseq
  %v164 = vshrl.u32 %v163, 7
  %v165 = vsub.s32 0, %v164
  %v166 = vrot.slane %v161, %v165
  %v296 = vunpack.c.l.b16 %v15
  %v297 = vunpack.c.h.b16 %v15
  %v298 = vunpack.c.l.b16 %v16
  %v299 = vunpack.c.h.b16 %v16
  %v300 = vunpack.c.l.b16 %v17
  %v301 = vunpack.c.h.b16 %v17
  %v302 = vunpack.c.l.b16 %v18
  %v303 = vunpack.c.h.b16 %v18
  %v304 = vunpack.c.l.b16 %v19
  %v305 = vunpack.c.h.b16 %v19
  %v306 = vunpack.c.l.b16 %v20
  %v307 = vunpack.c.h.b16 %v20
  %v308 = vunpack.c.l.b16 %v21
  %v309 = vunpack.c.h.b16 %v21
  %v310 = vunpack.c.l.b16 %v22
  %v311 = vunpack.c.h.b16 %v22
  %v312 = vunpack.c.l.b16 %v23
  %v313 = vunpack.c.h.b16 %v23
  %v314 = vunpack.c.l.b16 %v24
  %v315 = vunpack.c.h.b16 %v24
  %v316 = vunpack.c.l.b16 %v25
  %v317 = vunpack.c.h.b16 %v25
  %v318 = vunpack.c.l.b16 %v26
  %v319 = vunpack.c.h.b16 %v26
  %v320 = vunpack.c.l.b16 %v27
  %v321 = vunpack.c.h.b16 %v27
  %v322 = vunpack.c.l.b16 %v28
  %v323 = vunpack.c.h.b16 %v28
  %v324 = vunpack.c.l.b16 %v29
  %v325 = vunpack.c.h.b16 %v29
  %v326 = vunpack.c.l.b16 %v30
  %v327 = vunpack.c.h.b16 %v30
  %v328 = vunpack.c.l.b16 %v31
  %v329 = vunpack.c.h.b16 %v31
  %v330 = vunpack.c.l.b16 %v32
  %v331 = vunpack.c.h.b16 %v32
  %v332 = vunpack.c.l.b16 %v33
  %v333 = vunpack.c.h.b16 %v33
  %v334 = vunpack.c.l.b16 %v34
  %v335 = vunpack.c.h.b16 %v34
  %v336 = vunpack.c.l.b16 %v35
  %v337 = vunpack.c.h.b16 %v35
  %v338 = vunpack.c.l.b16 %v36
  %v339 = vunpack.c.h.b16 %v36
  %v340 = vunpack.c.l.b16 %v37
  %v341 = vunpack.c.h.b16 %v37
  %v342 = vunpack.c.l.b16 %v38
  %v343 = vunpack.c.h.b16 %v38
  %v344 = vunpack.c.l.b16 %v39
  %v345 = vunpack.c.h.b16 %v39
  %v346 = vunpack.c.l.b16 %v40
  %v347 = vunpack.c.h.b16 %v40
  %v348 = vunpack.c.l.b16 %v41
  %v349 = vunpack.c.h.b16 %v41
  %v350 = vunpack.c.l.b16 %v42
  %v351 = vunpack.c.h.b16 %v42
  %v352 = vunpack.c.l.b16 %v43
  %v353 = vunpack.c.h.b16 %v43
  %v354 = vunpack.c.l.b16 %v44
  %v355 = vunpack.c.h.b16 %v44
  %v356 = vunpack.c.l.b16 %v45
  %v357 = vunpack.c.h.b16 %v45
  %v358 = vunpack.c.l.b16 %v46
  %v359 = vunpack.c.h.b16 %v46
  %v360 = vunpack.c.l.b16 %v47
  %v361 = vunpack.c.h.b16 %v47
  %v362 = vunpack.c.l.b16 %v48
  %v363 = vunpack.c.h.b16 %v48
  %v364 = vunpack.c.l.b16 %v49
  %v365 = vunpack.c.h.b16 %v49
  %v366 = vunpack.c.l.b16 %v50
  %v367 = vunpack.c.h.b16 %v50
  %v368 = vunpack.c.l.b16 %v51
  %v369 = vunpack.c.h.b16 %v51
  %v370 = vunpack.c.l.b16 %v52
  %v371 = vunpack.c.h.b16 %v52
  %v372 = vunpack.c.l.b16 %v53
  %v373 = vunpack.c.h.b16 %v53
  %v374 = vunpack.c.l.b16 %v54
  %v375 = vunpack.c.h.b16 %v54
  %v376 = vunpack.c.l.b16 %v55
  %v377 = vunpack.c.h.b16 %v55
  %v378 = vunpack.c.l.b16 %v56
  %v379 = vunpack.c.h.b16 %v56
  %v380 = vunpack.c.l.b16 %v57
  %v381 = vunpack.c.h.b16 %v57
  %v382 = vunpack.c.l.b16 %v58
  %v383 = vunpack.c.h.b16 %v58
  %v384 = vunpack.c.l.b16 %v59
  %v385 = vunpack.c.h.b16 %v59
  %v386 = vunpack.c.l.b16 %v60
  %v387 = vunpack.c.h.b16 %v60
  %v388 = vunpack.c.l.b16 %v61
  %v389 = vunpack.c.h.b16 %v61
  %v390 = vunpack.c.l.b16 %v62
  %v391 = vunpack.c.h.b16 %v62
  %v392 = vunpack.c.l.b16 %v63
  %v393 = vunpack.c.h.b16 %v63
  %v394 = vunpack.c.l.b16 %v64
  %v395 = vunpack.c.h.b16 %v64
  %v396 = vunpack.c.l.b16 %v65
  %v397 = vunpack.c.h.b16 %v65
  %v398 = vunpack.c.l.b16 %v66
  %v399 = vunpack.c.h.b16 %v66
  %v400 = vunpack.c.l.b16 %v67
  %v401 = vunpack.c.h.b16 %v67
  %v402 = vunpack.c.l.b16 %v68
  %v403 = vunpack.c.h.b16 %v68
  %v404 = vunpack.c.l.b16 %v69
  %v405 = vunpack.c.h.b16 %v69
  %v406 = vunpack.c.l.b16 %v70
  %v407 = vunpack.c.h.b16 %v70
  %v408 = vunpack.c.l.b16 %v71
  %v409 = vunpack.c.h.b16 %v71
  %v410 = vunpack.c.l.b16 %v72
  %v411 = vunpack.c.h.b16 %v72
  %v412 = vunpack.c.l.b16 %v73
  %v413 = vunpack.c.h.b16 %v73
  %v414 = vunpack.c.l.b16 %v74
  %v415 = vunpack.c.h.b16 %v74
  %v416 = vunpack.c.l.b16 %v75
  %v417 = vunpack.c.h.b16 %v75
  %v418 = vunpack.c.l.b16 %v76
  %v419 = vunpack.c.h.b16 %v76
  %v420 = vunpack.c.l.b16 %v77
  %v421 = vunpack.c.h.b16 %v77
  %v422 = vunpack.c.l.b16 %v78
  %v423 = vunpack.c.h.b16 %v78
  %v424 = vunpack.c.l.b16 %v79
  %v425 = vunpack.c.h.b16 %v79
  %v426 = vunpack.c.l.b16 %v80
  %v427 = vunpack.c.h.b16 %v80
  %v428 = vunpack.c.l.b16 %v81
  %v429 = vunpack.c.h.b16 %v81
  %v430 = vunpack.c.l.b16 %v82
  %v431 = vunpack.c.h.b16 %v82
  %v432 = vunpack.c.l.b16 %v83
  %v433 = vunpack.c.h.b16 %v83
  %v434 = vunpack.c.l.b16 %v84
  %v435 = vunpack.c.h.b16 %v84
  %v436 = vunpack.c.l.b16 %v85
  %v437 = vunpack.c.h.b16 %v85
  %v438 = vunpack.c.l.b16 %v86
  %v439 = vunpack.c.h.b16 %v86
  %v440 = vunpack.c.l.b16 %v87
  %v441 = vunpack.c.h.b16 %v87
  %v442 = vunpack.c.l.b16 %v88
  %v443 = vunpack.c.h.b16 %v88
  %v444 = vunpack.c.l.b16 %v89
  %v445 = vunpack.c.h.b16 %v89
  %v446 = vunpack.c.l.b16 %v90
  %v447 = vunpack.c.h.b16 %v90
  %v448 = vunpack.c.l.b16 %v91
  %v449 = vunpack.c.h.b16 %v91
  %v450 = vunpack.c.l.b16 %v92
  %v451 = vunpack.c.h.b16 %v92
  %v452 = vunpack.c.l.b16 %v93
  %v453 = vunpack.c.h.b16 %v93
  %v454 = vunpack.c.l.b16 %v94
  %v455 = vunpack.c.h.b16 %v94
  %v456 = vunpack.c.l.b16 %v95
  %v457 = vunpack.c.h.b16 %v95
  %v458 = vunpack.c.l.b16 %v96
  %v459 = vunpack.c.h.b16 %v96
  %v460 = vunpack.c.l.b16 %v97
  %v461 = vunpack.c.h.b16 %v97
  %v462 = vunpack.c.l.b16 %v98
  %v463 = vunpack.c.h.b16 %v98
  %v464 = vunpack.c.l.b16 %v99
  %v465 = vunpack.c.h.b16 %v99
  %v466 = vunpack.c.l.b16 %v100
  %v467 = vunpack.c.h.b16 %v100
  %v468 = vunpack.c.l.b16 %v101
  %v469 = vunpack.c.h.b16 %v101
  %v470 = vunpack.c.l.b16 %v102
  %v471 = vunpack.c.h.b16 %v102
  %v472 = vunpack.c.l.b16 %v103
  %v473 = vunpack.c.h.b16 %v103
  %v474 = vunpack.c.l.b16 %v104
  %v475 = vunpack.c.h.b16 %v104
  %v476 = vunpack.c.l.b16 %v105
  %v477 = vunpack.c.h.b16 %v105
  %v478 = vunpack.c.l.b16 %v106
  %v479 = vunpack.c.h.b16 %v106
  %v480 = vunpack.c.l.b16 %v107
  %v481 = vunpack.c.h.b16 %v107
  %v482 = vunpack.c.l.b16 %v108
  %v483 = vunpack.c.h.b16 %v108
  %v484 = vunpack.c.l.b16 %v109
  %v485 = vunpack.c.h.b16 %v109
  %v486 = vunpack.c.l.b16 %v110
  %v487 = vunpack.c.h.b16 %v110
  %v488 = vunpack.c.l.b16 %v111
  %v489 = vunpack.c.h.b16 %v111
  %v490 = vunpack.c.l.b16 %v112
  %v491 = vunpack.c.h.b16 %v112
  %v492 = vunpack.c.l.b16 %v113
  %v493 = vunpack.c.h.b16 %v113
  %v494 = vunpack.c.l.b16 %v114
  %v495 = vunpack.c.h.b16 %v114
  %v496 = vunpack.c.l.b16 %v115
  %v497 = vunpack.c.h.b16 %v115
  %v498 = vunpack.c.l.b16 %v116
  %v499 = vunpack.c.h.b16 %v116
  %v500 = vunpack.c.l.b16 %v117
  %v501 = vunpack.c.h.b16 %v117
  %v502 = vunpack.c.l.b16 %v118
  %v503 = vunpack.c.h.b16 %v118
  %v504 = vunpack.c.l.b16 %v119
  %v505 = vunpack.c.h.b16 %v119
  %v506 = vunpack.c.l.b16 %v120
  %v507 = vunpack.c.h.b16 %v120
  %v508 = vunpack.c.l.b16 %v121
  %v509 = vunpack.c.h.b16 %v121
  %v510 = vunpack.c.l.b16 %v122
  %v511 = vunpack.c.h.b16 %v122
  %v512 = vunpack.c.l.b16 %v123
  %v513 = vunpack.c.h.b16 %v123
  %v514 = vunpack.c.l.b16 %v124
  %v515 = vunpack.c.h.b16 %v124
  %v516 = vunpack.c.l.b16 %v125
  %v517 = vunpack.c.h.b16 %v125
  %v518 = vunpack.c.l.b16 %v126
  %v519 = vunpack.c.h.b16 %v126
  %v520 = vunpack.c.l.b16 %v127
  %v521 = vunpack.c.h.b16 %v127
  %v522 = vunpack.c.l.b16 %v128
  %v523 = vunpack.c.h.b16 %v128
  %v524 = vunpack.c.l.b16 %v129
  %v525 = vunpack.c.h.b16 %v129
  %v526 = vunpack.c.l.b16 %v130
  %v527 = vunpack.c.h.b16 %v130
  %v528 = vunpack.c.l.b16 %v131
  %v529 = vunpack.c.h.b16 %v131
  %v530 = vunpack.c.l.b16 %v132
  %v531 = vunpack.c.h.b16 %v132
  %v532 = vunpack.c.l.b16 %v133
  %v533 = vunpack.c.h.b16 %v133
  %v534 = vunpack.c.l.b16 %v134
  %v535 = vunpack.c.h.b16 %v134
  %v536 = vunpack.c.l.b16 %v135
  %v537 = vunpack.c.h.b16 %v135
  %v538 = vunpack.c.l.b16 %v136
  %v539 = vunpack.c.h.b16 %v136
  %v540 = vunpack.c.l.b16 %v137
  %v541 = vunpack.c.h.b16 %v137
  %v542 = vunpack.c.l.b16 %v138
  %v543 = vunpack.c.h.b16 %v138
  %v544 = vunpack.c.l.b16 %v139
  %v545 = vunpack.c.h.b16 %v139
  %v546 = vunpack.c.l.b16 %v140
  %v547 = vunpack.c.h.b16 %v140
  %v548 = vunpack.c.l.b16 %v141
  %v549 = vunpack.c.h.b16 %v141
  %v550 = vunpack.c.l.b16 %v142
  %v551 = vunpack.c.h.b16 %v142
  %v552 = vpack.c.b16 %v298, %v296
  %v553 = vpack.c.b16 %v299, %v297
  %v554 = vpack.c.b16 %v302, %v300
  %v555 = vpack.c.b16 %v303, %v301
  %v556 = vpack.c.b16 %v306, %v304
  %v557 = vpack.c.b16 %v307, %v305
  %v558 = vpack.c.b16 %v310, %v308
  %v559 = vpack.c.b16 %v311, %v309
  %v560 = vpack.c.b16 %v314, %v312
  %v561 = vpack.c.b16 %v315, %v313
  %v562 = vpack.c.b16 %v318, %v316
  %v563 = vpack.c.b16 %v319, %v317
  %v564 = vpack.c.b16 %v322, %v320
  %v565 = vpack.c.b16 %v323, %v321
  %v566 = vpack.c.b16 %v326, %v324
  %v567 = vpack.c.b16 %v327, %v325
  %v568 = vpack.c.b16 %v330, %v328
  %v569 = vpack.c.b16 %v331, %v329
  %v570 = vpack.c.b16 %v334, %v332
  %v571 = vpack.c.b16 %v335, %v333
  %v572 = vpack.c.b16 %v338, %v336
  %v573 = vpack.c.b16 %v339, %v337
  %v574 = vpack.c.b16 %v342, %v340
  %v575 = vpack.c.b16 %v343, %v341
  %v576 = vpack.c.b16 %v346, %v344
  %v577 = vpack.c.b16 %v347, %v345
  %v578 = vpack.c.b16 %v350, %v348
  %v579 = vpack.c.b16 %v351, %v349
  %v580 = vpack.c.b16 %v354, %v352
  %v581 = vpack.c.b16 %v355, %v353
  %v582 = vpack.c.b16 %v358, %v356
  %v583 = vpack.c.b16 %v359, %v357
  %v584 = vpack.c.b16 %v362, %v360
  %v585 = vpack.c.b16 %v363, %v361
  %v586 = vpack.c.b16 %v366, %v364
  %v587 = vpack.c.b16 %v367, %v365
  %v588 = vpack.c.b16 %v370, %v368
  %v589 = vpack.c.b16 %v371, %v369
  %v590 = vpack.c.b16 %v374, %v372
  %v591 = vpack.c.b16 %v375, %v373
  %v592 = vpack.c.b16 %v378, %v376
  %v593 = vpack.c.b16 %v379, %v377
  %v594 = vpack.c.b16 %v382, %v380
  %v595 = vpack.c.b16 %v383, %v381
  %v596 = vpack.c.b16 %v386, %v384
  %v597 = vpack.c.b16 %v387, %v385
  %v598 = vpack.c.b16 %v390, %v388
  %v599 = vpack.c.b16 %v391, %v389
  %v600 = vpack.c.b16 %v394, %v392
  %v601 = vpack.c.b16 %v395, %v393
  %v602 = vpack.c.b16 %v398, %v396
  %v603 = vpack.c.b16 %v399, %v397
  %v604 = vpack.c.b16 %v402, %v400
  %v605 = vpack.c.b16 %v403, %v401
  %v606 = vpack.c.b16 %v406, %v404
  %v607 = vpack.c.b16 %v407, %v405
  %v608 = vpack.c.b16 %v410, %v408
  %v609 = vpack.c.b16 %v411, %v409
  %v610 = vpack.c.b16 %v414, %v412
  %v611 = vpack.c.b16 %v415, %v413
  %v612 = vpack.c.b16 %v418, %v416
  %v613 = vpack.c.b16 %v419, %v417
  %v614 = vpack.c.b16 %v422, %v420
  %v615 = vpack.c.b16 %v423, %v421
  %v616 = vpack.c.b16 %v426, %v424
  %v617 = vpack.c.b16 %v427, %v425
  %v618 = vpack.c.b16 %v430, %v428
  %v619 = vpack.c.b16 %v431, %v429
  %v620 = vpack.c.b16 %v434, %v432
  %v621 = vpack.c.b16 %v435, %v433
  %v622 = vpack.c.b16 %v438, %v436
  %v623 = vpack.c.b16 %v439, %v437
  %v624 = vpack.c.b16 %v442, %v440
  %v625 = vpack.c.b16 %v443, %v441
  %v626 = vpack.c.b16 %v446, %v444
  %v627 = vpack.c.b16 %v447, %v445
  %v628 = vpack.c.b16 %v450, %v448
  %v629 = vpack.c.b16 %v451, %v449
  %v630 = vpack.c.b16 %v454, %v452
  %v631 = vpack.c.b16 %v455, %v453
  %v632 = vpack.c.b16 %v458, %v456
  %v633 = vpack.c.b16 %v459, %v457
  %v634 = vpack.c.b16 %v462, %v460
  %v635 = vpack.c.b16 %v463, %v461
  %v636 = vpack.c.b16 %v466, %v464
  %v637 = vpack.c.b16 %v467, %v465
  %v638 = vpack.c.b16 %v470, %v468
  %v639 = vpack.c.b16 %v471, %v469
  %v640 = vpack.c.b16 %v474, %v472
  %v641 = vpack.c.b16 %v475, %v473
  %v642 = vpack.c.b16 %v478, %v476
  %v643 = vpack.c.b16 %v479, %v477
  %v644 = vpack.c.b16 %v482, %v480
  %v645 = vpack.c.b16 %v483, %v481
  %v646 = vpack.c.b16 %v486, %v484
  %v647 = vpack.c.b16 %v487, %v485
  %v648 = vpack.c.b16 %v490, %v488
  %v649 = vpack.c.b16 %v491, %v489
  %v650 = vpack.c.b16 %v494, %v492
  %v651 = vpack.c.b16 %v495, %v493
  %v652 = vpack.c.b16 %v498, %v496
  %v653 = vpack.c.b16 %v499, %v497
  %v654 = vpack.c.b16 %v502, %v500
  %v655 = vpack.c.b16 %v503, %v501
  %v656 = vpack.c.b16 %v506, %v504
  %v657 = vpack.c.b16 %v507, %v505
  %v658 = vpack.c.b16 %v510, %v508
  %v659 = vpack.c.b16 %v511, %v509
  %v660 = vpack.c.b16 %v514, %v512
  %v661 = vpack.c.b16 %v515, %v513
  %v662 = vpack.c.b16 %v518, %v516
  %v663 = vpack.c.b16 %v519, %v517
  %v664 = vpack.c.b16 %v522, %v520
  %v665 = vpack.c.b16 %v523, %v521
  %v666 = vpack.c.b16 %v526, %v524
  %v667 = vpack.c.b16 %v527, %v525
  %v668 = vpack.c.b16 %v530, %v528
  %v669 = vpack.c.b16 %v531, %v529
  %v670 = vpack.c.b16 %v534, %v532
  %v671 = vpack.c.b16 %v535, %v533
  %v672 = vpack.c.b16 %v538, %v536
  %v673 = vpack.c.b16 %v539, %v537
  %v674 = vpack.c.b16 %v542, %v540
  %v675 = vpack.c.b16 %v543, %v541
  %v676 = vpack.c.b16 %v546, %v544
  %v677 = vpack.c.b16 %v547, %v545
  %v678 = vpack.c.b16 %v550, %v548
  %v679 = vpack.c.b16 %v551, %v549
  %v762 = vunpack.c.l.b16 %v143
  %v763 = vunpack.c.l.b16 %v144
  %v764 = vunpack.c.l.b16 %v145
  %v765 = vunpack.c.l.b16 %v146
  %v766 = vunpack.c.l.b16 %v147
  %v767 = vunpack.c.l.b16 %v148
  %v768 = vunpack.c.l.b16 %v149
  %v769 = vunpack.c.l.b16 %v150
  %v770 = vunpack.c.l.b16 %v151
  %v771 = vunpack.c.l.b16 %v152
  %v772 = vunpack.c.l.b16 %v153
  %v773 = vunpack.c.l.b16 %v154
  %v774 = vunpack.c.l.b16 %v155
  %v775 = vunpack.c.l.b16 %v156
  %v776 = vunpack.c.l.b16 %v157
  %v777 = vunpack.c.l.b16 %v158
  %v778 = vunpack.c.l.b16 %v159
  %v779 = vunpack.c.l.b16 %v160
  %v780 = vpack.c.b16 %v763, %v762
  %v781 = vpack.c.b16 %v765, %v764
  %v782 = vpack.c.b16 %v767, %v766
  %v783 = vpack.c.b16 %v769, %v768
  %v784 = vpack.c.b16 %v771, %v770
  %v785 = vpack.c.b16 %v773, %v772
  %v786 = vpack.c.b16 %v775, %v774
  %v787 = vpack.c.b16 %v777, %v776
  %v788 = vpack.c.b16 %v779, %v778
  %vm798 = vcmask 130048
  %v800 = vsel %vm798, %v553, 0
  %v803 = vsel %vm798, %v555, 0
  %v806 = vsel %vm798, %v557, 0
  %v809 = vsel %vm798, %v559, 0
  %v812 = vsel %vm798, %v561, 0
  %v815 = vsel %vm798, %v563, 0
  %v818 = vsel %vm798, %v565, 0
  %v821 = vsel %vm798, %v567, 0
  %v824 = vsel %vm798, %v569, 0
  %v827 = vsel %vm798, %v571, 0
  %v830 = vsel %vm798, %v573, 0
  %v833 = vsel %vm798, %v575, 0
  %v836 = vsel %vm798, %v577, 0
  %v839 = vsel %vm798, %v579, 0
  %v842 = vsel %vm798, %v581, 0
  %v845 = vsel %vm798, %v583, 0
  %v848 = vsel %vm798, %v585, 0
  %v851 = vsel %vm798, %v587, 0
  %v854 = vsel %vm798, %v589, 0
  %v857 = vsel %vm798, %v591, 0
  %v860 = vsel %vm798, %v593, 0
  %v863 = vsel %vm798, %v595, 0
  %v866 = vsel %vm798, %v597, 0
  %v869 = vsel %vm798, %v599, 0
  %v872 = vsel %vm798, %v601, 0
  %v875 = vsel %vm798, %v603, 0
  %v878 = vsel %vm798, %v605, 0
  %v881 = vsel %vm798, %v607, 0
  %v884 = vsel %vm798, %v609, 0
  %v887 = vsel %vm798, %v611, 0
  %v890 = vsel %vm798, %v613, 0
  %v893 = vsel %vm798, %v615, 0
  %v896 = vsel %vm798, %v617, 0
  %v899 = vsel %vm798, %v619, 0
  %v902 = vsel %vm798, %v621, 0
  %v905 = vsel %vm798, %v623, 0
  %v908 = vsel %vm798, %v625, 0
  %v911 = vsel %vm798, %v627, 0
  %v914 = vsel %vm798, %v629, 0
  %v917 = vsel %vm798, %v631, 0
  %v920 = vsel %vm798, %v633, 0
  %v923 = vsel %vm798, %v635, 0
  %v926 = vsel %vm798, %v637, 0
  %v929 = vsel %vm798, %v639, 0
  %v932 = vsel %vm798, %v641, 0
  %v935 = vsel %vm798, %v643, 0
  %v938 = vsel %vm798, %v645, 0
  %v941 = vsel %vm798, %v647, 0
  %v944 = vsel %vm798, %v649, 0
  %v947 = vsel %vm798, %v651, 0
  %v950 = vsel %vm798, %v653, 0
  %v953 = vsel %vm798, %v655, 0
  %v956 = vsel %vm798, %v657, 0
  %v959 = vsel %vm798, %v659, 0
  %v962 = vsel %vm798, %v661, 0
  %v965 = vsel %vm798, %v663, 0
  %v968 = vsel %vm798, %v665, 0
  %v971 = vsel %vm798, %v667, 0
  %v974 = vsel %vm798, %v669, 0
  %v977 = vsel %vm798, %v671, 0
  %v980 = vsel %vm798, %v673, 0
  %v983 = vsel %vm798, %v675, 0
  %v986 = vsel %vm798, %v677, 0
  %v989 = vsel %vm798, %v679, 0
  %991 = vmatprep.subr.bf16.mxu0 0
  %992 = vmatpush1.bf16.msra.mxu0 %v787
  %993 = vmatprep.subr.bf16.mxu0 0
  %994 = vmatpush1.bf16.msra.mxu0 %v786
  %995 = vmatprep.subr.bf16.mxu0 0
  %996 = vmatpush1.bf16.msra.mxu0 %v785
  %997 = vmatprep.subr.bf16.mxu0 0
  %998 = vmatpush1.bf16.msra.mxu0 %v784
  %999 = vmatprep.subr.bf16.mxu0 0
  %1000 = vmatpush1.bf16.msra.mxu0 %v783
  %1001 = vmatprep.subr.bf16.mxu0 0
  %1002 = vmatpush1.bf16.msra.mxu0 %v782
  %1003 = vmatprep.subr.bf16.mxu0 0
  %1004 = vmatpush1.bf16.msra.mxu0 %v781
  %1005 = vmatprep.subr.bf16.mxu0 0
  %1006 = vmatpush1.bf16.msra.mxu0 %v780
  %1007 = vmatprep.subr.bf16.mxu0 0
  %1008 = vmatpush2.bf16.msra.mxu0 0
  %1009 = vmatprep.subr.bf16.mxu0 0
  %1010 = vmatpush2.bf16.msra.mxu0 0
  %1011 = vmatprep.subr.bf16.mxu0 0
  %1012 = vmatpush2.bf16.msra.mxu0 0
  %1013 = vmatprep.subr.bf16.mxu0 0
  %1014 = vmatpush2.bf16.msra.mxu0 0
  %1015 = vmatprep.subr.bf16.mxu0 0
  %1016 = vmatpush2.bf16.msra.mxu0 0
  %1017 = vmatprep.subr.bf16.mxu0 0
  %1018 = vmatpush2.bf16.msra.mxu0 0
  %1019 = vmatprep.subr.bf16.mxu0 0
  %1020 = vmatpush2.bf16.msra.mxu0 0
  %1021 = vmatprep.subr.bf16.mxu0 0
  %1022 = vmatpush2.bf16.msra.mxu0 %v788
  %1023 = vmatprep.mubr.bf16.mxu0 %v800
  %1024 = vmatmul.mubr.bf16.gmra.mxu0 %v552
  %v1025 = vpop.f32.mrf.mxu0
  %v1026 = vadd.f32 %v166, %v1025
  %v1027 = vpop.f32.mrf.mxu0
  %v1028 = vpop.f32.mrf.mxu0
  %v1029 = vadd.f32 %v166, %v1028
  %v1030 = vpop.f32.mrf.mxu0
  %1031 = vmatprep.mubr.bf16.mxu0 %v803
  %1032 = vmatmul.mubr.bf16.gmra.mxu0 %v554
  %v1033 = vpop.f32.mrf.mxu0
  %v1034 = vadd.f32 %v166, %v1033
  %v1035 = vpop.f32.mrf.mxu0
  %v1036 = vpop.f32.mrf.mxu0
  %v1037 = vadd.f32 %v166, %v1036
  %v1038 = vpop.f32.mrf.mxu0
  %1039 = vmatprep.mubr.bf16.mxu0 %v806
  %1040 = vmatmul.mubr.bf16.gmra.mxu0 %v556
  %v1041 = vpop.f32.mrf.mxu0
  %v1042 = vadd.f32 %v166, %v1041
  %v1043 = vpop.f32.mrf.mxu0
  %v1044 = vpop.f32.mrf.mxu0
  %v1045 = vadd.f32 %v166, %v1044
  %v1046 = vpop.f32.mrf.mxu0
  %1047 = vmatprep.mubr.bf16.mxu0 %v809
  %1048 = vmatmul.mubr.bf16.gmra.mxu0 %v558
  %v1049 = vpop.f32.mrf.mxu0
  %v1050 = vadd.f32 %v166, %v1049
  %v1051 = vpop.f32.mrf.mxu0
  %v1052 = vpop.f32.mrf.mxu0
  %v1053 = vadd.f32 %v166, %v1052
  %v1054 = vpop.f32.mrf.mxu0
  %1055 = vmatprep.mubr.bf16.mxu0 %v812
  %1056 = vmatmul.mubr.bf16.gmra.mxu0 %v560
  %v1057 = vpop.f32.mrf.mxu0
  %v1058 = vadd.f32 %v166, %v1057
  %v1059 = vpop.f32.mrf.mxu0
  %v1060 = vpop.f32.mrf.mxu0
  %v1061 = vadd.f32 %v166, %v1060
  %v1062 = vpop.f32.mrf.mxu0
  %1063 = vmatprep.mubr.bf16.mxu0 %v815
  %1064 = vmatmul.mubr.bf16.gmra.mxu0 %v562
  %v1065 = vpop.f32.mrf.mxu0
  %v1066 = vadd.f32 %v166, %v1065
  %v1067 = vpop.f32.mrf.mxu0
  %v1068 = vpop.f32.mrf.mxu0
  %v1069 = vadd.f32 %v166, %v1068
  %v1070 = vpop.f32.mrf.mxu0
  %1071 = vmatprep.mubr.bf16.mxu0 %v818
  %1072 = vmatmul.mubr.bf16.gmra.mxu0 %v564
  %v1073 = vpop.f32.mrf.mxu0
  %v1074 = vadd.f32 %v166, %v1073
  %v1075 = vpop.f32.mrf.mxu0
  %v1076 = vpop.f32.mrf.mxu0
  %v1077 = vadd.f32 %v166, %v1076
  %v1078 = vpop.f32.mrf.mxu0
  %1079 = vmatprep.mubr.bf16.mxu0 %v821
  %1080 = vmatmul.mubr.bf16.gmra.mxu0 %v566
  %v1081 = vpop.f32.mrf.mxu0
  %v1082 = vadd.f32 %v166, %v1081
  %v1083 = vpop.f32.mrf.mxu0
  %v1084 = vpop.f32.mrf.mxu0
  %v1085 = vadd.f32 %v166, %v1084
  %v1086 = vpop.f32.mrf.mxu0
  %1087 = vmatprep.mubr.bf16.mxu0 %v824
  %1088 = vmatmul.mubr.bf16.gmra.mxu0 %v568
  %v1089 = vpop.f32.mrf.mxu0
  %v1090 = vadd.f32 %v166, %v1089
  %v1091 = vpop.f32.mrf.mxu0
  %v1092 = vpop.f32.mrf.mxu0
  %v1093 = vadd.f32 %v166, %v1092
  %v1094 = vpop.f32.mrf.mxu0
  %1095 = vmatprep.mubr.bf16.mxu0 %v827
  %1096 = vmatmul.mubr.bf16.gmra.mxu0 %v570
  %v1097 = vpop.f32.mrf.mxu0
  %v1098 = vadd.f32 %v166, %v1097
  %v1099 = vpop.f32.mrf.mxu0
  %v1100 = vpop.f32.mrf.mxu0
  %v1101 = vadd.f32 %v166, %v1100
  %v1102 = vpop.f32.mrf.mxu0
  %1103 = vmatprep.mubr.bf16.mxu0 %v830
  %1104 = vmatmul.mubr.bf16.gmra.mxu0 %v572
  %v1105 = vpop.f32.mrf.mxu0
  %v1106 = vadd.f32 %v166, %v1105
  %v1107 = vpop.f32.mrf.mxu0
  %v1108 = vpop.f32.mrf.mxu0
  %v1109 = vadd.f32 %v166, %v1108
  %v1110 = vpop.f32.mrf.mxu0
  %1111 = vmatprep.mubr.bf16.mxu0 %v833
  %1112 = vmatmul.mubr.bf16.gmra.mxu0 %v574
  %v1113 = vpop.f32.mrf.mxu0
  %v1114 = vadd.f32 %v166, %v1113
  %v1115 = vpop.f32.mrf.mxu0
  %v1116 = vpop.f32.mrf.mxu0
  %v1117 = vadd.f32 %v166, %v1116
  %v1118 = vpop.f32.mrf.mxu0
  %1119 = vmatprep.mubr.bf16.mxu0 %v836
  %1120 = vmatmul.mubr.bf16.gmra.mxu0 %v576
  %v1121 = vpop.f32.mrf.mxu0
  %v1122 = vadd.f32 %v166, %v1121
  %v1123 = vpop.f32.mrf.mxu0
  %v1124 = vpop.f32.mrf.mxu0
  %v1125 = vadd.f32 %v166, %v1124
  %v1126 = vpop.f32.mrf.mxu0
  %1127 = vmatprep.mubr.bf16.mxu0 %v839
  %1128 = vmatmul.mubr.bf16.gmra.mxu0 %v578
  %v1129 = vpop.f32.mrf.mxu0
  %v1130 = vadd.f32 %v166, %v1129
  %v1131 = vpop.f32.mrf.mxu0
  %v1132 = vpop.f32.mrf.mxu0
  %v1133 = vadd.f32 %v166, %v1132
  %v1134 = vpop.f32.mrf.mxu0
  %1135 = vmatprep.mubr.bf16.mxu0 %v842
  %1136 = vmatmul.mubr.bf16.gmra.mxu0 %v580
  %v1137 = vpop.f32.mrf.mxu0
  %v1138 = vadd.f32 %v166, %v1137
  %v1139 = vpop.f32.mrf.mxu0
  %v1140 = vpop.f32.mrf.mxu0
  %v1141 = vadd.f32 %v166, %v1140
  %v1142 = vpop.f32.mrf.mxu0
  %1143 = vmatprep.mubr.bf16.mxu0 %v845
  %1144 = vmatmul.mubr.bf16.gmra.mxu0 %v582
  %v1145 = vpop.f32.mrf.mxu0
  %v1146 = vadd.f32 %v166, %v1145
  %v1147 = vpop.f32.mrf.mxu0
  %v1148 = vpop.f32.mrf.mxu0
  %v1149 = vadd.f32 %v166, %v1148
  %v1150 = vpop.f32.mrf.mxu0
  %1151 = vmatprep.mubr.bf16.mxu0 %v848
  %1152 = vmatmul.mubr.bf16.gmra.mxu0 %v584
  %v1153 = vpop.f32.mrf.mxu0
  %v1154 = vadd.f32 %v166, %v1153
  %v1155 = vpop.f32.mrf.mxu0
  %v1156 = vpop.f32.mrf.mxu0
  %v1157 = vadd.f32 %v166, %v1156
  %v1158 = vpop.f32.mrf.mxu0
  %1159 = vmatprep.mubr.bf16.mxu0 %v851
  %1160 = vmatmul.mubr.bf16.gmra.mxu0 %v586
  %v1161 = vpop.f32.mrf.mxu0
  %v1162 = vadd.f32 %v166, %v1161
  %v1163 = vpop.f32.mrf.mxu0
  %v1164 = vpop.f32.mrf.mxu0
  %v1165 = vadd.f32 %v166, %v1164
  %v1166 = vpop.f32.mrf.mxu0
  %1167 = vmatprep.mubr.bf16.mxu0 %v854
  %1168 = vmatmul.mubr.bf16.gmra.mxu0 %v588
  %v1169 = vpop.f32.mrf.mxu0
  %v1170 = vadd.f32 %v166, %v1169
  %v1171 = vpop.f32.mrf.mxu0
  %v1172 = vpop.f32.mrf.mxu0
  %v1173 = vadd.f32 %v166, %v1172
  %v1174 = vpop.f32.mrf.mxu0
  %1175 = vmatprep.mubr.bf16.mxu0 %v857
  %1176 = vmatmul.mubr.bf16.gmra.mxu0 %v590
  %v1177 = vpop.f32.mrf.mxu0
  %v1178 = vadd.f32 %v166, %v1177
  %v1179 = vpop.f32.mrf.mxu0
  %v1180 = vpop.f32.mrf.mxu0
  %v1181 = vadd.f32 %v166, %v1180
  %v1182 = vpop.f32.mrf.mxu0
  %1183 = vmatprep.mubr.bf16.mxu0 %v860
  %1184 = vmatmul.mubr.bf16.gmra.mxu0 %v592
  %v1185 = vpop.f32.mrf.mxu0
  %v1186 = vadd.f32 %v166, %v1185
  %v1187 = vpop.f32.mrf.mxu0
  %v1188 = vpop.f32.mrf.mxu0
  %v1189 = vadd.f32 %v166, %v1188
  %v1190 = vpop.f32.mrf.mxu0
  %1191 = vmatprep.mubr.bf16.mxu0 %v863
  %1192 = vmatmul.mubr.bf16.gmra.mxu0 %v594
  %v1193 = vpop.f32.mrf.mxu0
  %v1194 = vadd.f32 %v166, %v1193
  %v1195 = vpop.f32.mrf.mxu0
  %v1196 = vpop.f32.mrf.mxu0
  %v1197 = vadd.f32 %v166, %v1196
  %v1198 = vpop.f32.mrf.mxu0
  %1199 = vmatprep.mubr.bf16.mxu0 %v866
  %1200 = vmatmul.mubr.bf16.gmra.mxu0 %v596
  %v1201 = vpop.f32.mrf.mxu0
  %v1202 = vadd.f32 %v166, %v1201
  %v1203 = vpop.f32.mrf.mxu0
  %v1204 = vpop.f32.mrf.mxu0
  %v1205 = vadd.f32 %v166, %v1204
  %v1206 = vpop.f32.mrf.mxu0
  %1207 = vmatprep.mubr.bf16.mxu0 %v869
  %1208 = vmatmul.mubr.bf16.gmra.mxu0 %v598
  %v1209 = vpop.f32.mrf.mxu0
  %v1210 = vadd.f32 %v166, %v1209
  %v1211 = vpop.f32.mrf.mxu0
  %v1212 = vpop.f32.mrf.mxu0
  %v1213 = vadd.f32 %v166, %v1212
  %v1214 = vpop.f32.mrf.mxu0
  %1215 = vmatprep.mubr.bf16.mxu0 %v872
  %1216 = vmatmul.mubr.bf16.gmra.mxu0 %v600
  %v1217 = vpop.f32.mrf.mxu0
  %v1218 = vadd.f32 %v166, %v1217
  %v1219 = vpop.f32.mrf.mxu0
  %v1220 = vpop.f32.mrf.mxu0
  %v1221 = vadd.f32 %v166, %v1220
  %v1222 = vpop.f32.mrf.mxu0
  %1223 = vmatprep.mubr.bf16.mxu0 %v875
  %1224 = vmatmul.mubr.bf16.gmra.mxu0 %v602
  %v1225 = vpop.f32.mrf.mxu0
  %v1226 = vadd.f32 %v166, %v1225
  %v1227 = vpop.f32.mrf.mxu0
  %v1228 = vpop.f32.mrf.mxu0
  %v1229 = vadd.f32 %v166, %v1228
  %v1230 = vpop.f32.mrf.mxu0
  %1231 = vmatprep.mubr.bf16.mxu0 %v878
  %1232 = vmatmul.mubr.bf16.gmra.mxu0 %v604
  %v1233 = vpop.f32.mrf.mxu0
  %v1234 = vadd.f32 %v166, %v1233
  %v1235 = vpop.f32.mrf.mxu0
  %v1236 = vpop.f32.mrf.mxu0
  %v1237 = vadd.f32 %v166, %v1236
  %v1238 = vpop.f32.mrf.mxu0
  %1239 = vmatprep.mubr.bf16.mxu0 %v881
  %1240 = vmatmul.mubr.bf16.gmra.mxu0 %v606
  %v1241 = vpop.f32.mrf.mxu0
  %v1242 = vadd.f32 %v166, %v1241
  %v1243 = vpop.f32.mrf.mxu0
  %v1244 = vpop.f32.mrf.mxu0
  %v1245 = vadd.f32 %v166, %v1244
  %v1246 = vpop.f32.mrf.mxu0
  %1247 = vmatprep.mubr.bf16.mxu0 %v884
  %1248 = vmatmul.mubr.bf16.gmra.mxu0 %v608
  %v1249 = vpop.f32.mrf.mxu0
  %v1250 = vadd.f32 %v166, %v1249
  %v1251 = vpop.f32.mrf.mxu0
  %v1252 = vpop.f32.mrf.mxu0
  %v1253 = vadd.f32 %v166, %v1252
  %v1254 = vpop.f32.mrf.mxu0
  %1255 = vmatprep.mubr.bf16.mxu0 %v887
  %1256 = vmatmul.mubr.bf16.gmra.mxu0 %v610
  %v1257 = vpop.f32.mrf.mxu0
  %v1258 = vadd.f32 %v166, %v1257
  %v1259 = vpop.f32.mrf.mxu0
  %v1260 = vpop.f32.mrf.mxu0
  %v1261 = vadd.f32 %v166, %v1260
  %v1262 = vpop.f32.mrf.mxu0
  %1263 = vmatprep.mubr.bf16.mxu0 %v890
  %1264 = vmatmul.mubr.bf16.gmra.mxu0 %v612
  %v1265 = vpop.f32.mrf.mxu0
  %v1266 = vadd.f32 %v166, %v1265
  %v1267 = vpop.f32.mrf.mxu0
  %v1268 = vpop.f32.mrf.mxu0
  %v1269 = vadd.f32 %v166, %v1268
  %v1270 = vpop.f32.mrf.mxu0
  %1271 = vmatprep.mubr.bf16.mxu0 %v893
  %1272 = vmatmul.mubr.bf16.gmra.mxu0 %v614
  %v1273 = vpop.f32.mrf.mxu0
  %v1274 = vadd.f32 %v166, %v1273
  %v1275 = vpop.f32.mrf.mxu0
  %v1276 = vpop.f32.mrf.mxu0
  %v1277 = vadd.f32 %v166, %v1276
  %v1278 = vpop.f32.mrf.mxu0
  %1279 = vmatprep.mubr.bf16.mxu0 %v896
  %1280 = vmatmul.mubr.bf16.gmra.mxu0 %v616
  %v1281 = vpop.f32.mrf.mxu0
  %v1282 = vadd.f32 %v166, %v1281
  %v1283 = vpop.f32.mrf.mxu0
  %v1284 = vpop.f32.mrf.mxu0
  %v1285 = vadd.f32 %v166, %v1284
  %v1286 = vpop.f32.mrf.mxu0
  %1287 = vmatprep.mubr.bf16.mxu0 %v899
  %1288 = vmatmul.mubr.bf16.gmra.mxu0 %v618
  %v1289 = vpop.f32.mrf.mxu0
  %v1290 = vadd.f32 %v166, %v1289
  %v1291 = vpop.f32.mrf.mxu0
  %v1292 = vpop.f32.mrf.mxu0
  %v1293 = vadd.f32 %v166, %v1292
  %v1294 = vpop.f32.mrf.mxu0
  %1295 = vmatprep.mubr.bf16.mxu0 %v902
  %1296 = vmatmul.mubr.bf16.gmra.mxu0 %v620
  %v1297 = vpop.f32.mrf.mxu0
  %v1298 = vadd.f32 %v166, %v1297
  %v1299 = vpop.f32.mrf.mxu0
  %v1300 = vpop.f32.mrf.mxu0
  %v1301 = vadd.f32 %v166, %v1300
  %v1302 = vpop.f32.mrf.mxu0
  %1303 = vmatprep.mubr.bf16.mxu0 %v905
  %1304 = vmatmul.mubr.bf16.gmra.mxu0 %v622
  %v1305 = vpop.f32.mrf.mxu0
  %v1306 = vadd.f32 %v166, %v1305
  %v1307 = vpop.f32.mrf.mxu0
  %v1308 = vpop.f32.mrf.mxu0
  %v1309 = vadd.f32 %v166, %v1308
  %v1310 = vpop.f32.mrf.mxu0
  %1311 = vmatprep.mubr.bf16.mxu0 %v908
  %1312 = vmatmul.mubr.bf16.gmra.mxu0 %v624
  %v1313 = vpop.f32.mrf.mxu0
  %v1314 = vadd.f32 %v166, %v1313
  %v1315 = vpop.f32.mrf.mxu0
  %v1316 = vpop.f32.mrf.mxu0
  %v1317 = vadd.f32 %v166, %v1316
  %v1318 = vpop.f32.mrf.mxu0
  %1319 = vmatprep.mubr.bf16.mxu0 %v911
  %1320 = vmatmul.mubr.bf16.gmra.mxu0 %v626
  %v1321 = vpop.f32.mrf.mxu0
  %v1322 = vadd.f32 %v166, %v1321
  %v1323 = vpop.f32.mrf.mxu0
  %v1324 = vpop.f32.mrf.mxu0
  %v1325 = vadd.f32 %v166, %v1324
  %v1326 = vpop.f32.mrf.mxu0
  %1327 = vmatprep.mubr.bf16.mxu0 %v914
  %1328 = vmatmul.mubr.bf16.gmra.mxu0 %v628
  %v1329 = vpop.f32.mrf.mxu0
  %v1330 = vadd.f32 %v166, %v1329
  %v1331 = vpop.f32.mrf.mxu0
  %v1332 = vpop.f32.mrf.mxu0
  %v1333 = vadd.f32 %v166, %v1332
  %v1334 = vpop.f32.mrf.mxu0
  %1335 = vmatprep.mubr.bf16.mxu0 %v917
  %1336 = vmatmul.mubr.bf16.gmra.mxu0 %v630
  %v1337 = vpop.f32.mrf.mxu0
  %v1338 = vadd.f32 %v166, %v1337
  %v1339 = vpop.f32.mrf.mxu0
  %v1340 = vpop.f32.mrf.mxu0
  %v1341 = vadd.f32 %v166, %v1340
  %v1342 = vpop.f32.mrf.mxu0
  %1343 = vmatprep.mubr.bf16.mxu0 %v920
  %1344 = vmatmul.mubr.bf16.gmra.mxu0 %v632
  %v1345 = vpop.f32.mrf.mxu0
  %v1346 = vadd.f32 %v166, %v1345
  %v1347 = vpop.f32.mrf.mxu0
  %v1348 = vpop.f32.mrf.mxu0
  %v1349 = vadd.f32 %v166, %v1348
  %v1350 = vpop.f32.mrf.mxu0
  %1351 = vmatprep.mubr.bf16.mxu0 %v923
  %1352 = vmatmul.mubr.bf16.gmra.mxu0 %v634
  %v1353 = vpop.f32.mrf.mxu0
  %v1354 = vadd.f32 %v166, %v1353
  %v1355 = vpop.f32.mrf.mxu0
  %v1356 = vpop.f32.mrf.mxu0
  %v1357 = vadd.f32 %v166, %v1356
  %v1358 = vpop.f32.mrf.mxu0
  %1359 = vmatprep.mubr.bf16.mxu0 %v926
  %1360 = vmatmul.mubr.bf16.gmra.mxu0 %v636
  %v1361 = vpop.f32.mrf.mxu0
  %v1362 = vadd.f32 %v166, %v1361
  %v1363 = vpop.f32.mrf.mxu0
  %v1364 = vpop.f32.mrf.mxu0
  %v1365 = vadd.f32 %v166, %v1364
  %v1366 = vpop.f32.mrf.mxu0
  %1367 = vmatprep.mubr.bf16.mxu0 %v929
  %1368 = vmatmul.mubr.bf16.gmra.mxu0 %v638
  %v1369 = vpop.f32.mrf.mxu0
  %v1370 = vadd.f32 %v166, %v1369
  %v1371 = vpop.f32.mrf.mxu0
  %v1372 = vpop.f32.mrf.mxu0
  %v1373 = vadd.f32 %v166, %v1372
  %v1374 = vpop.f32.mrf.mxu0
  %1375 = vmatprep.mubr.bf16.mxu0 %v932
  %1376 = vmatmul.mubr.bf16.gmra.mxu0 %v640
  %v1377 = vpop.f32.mrf.mxu0
  %v1378 = vadd.f32 %v166, %v1377
  %v1379 = vpop.f32.mrf.mxu0
  %v1380 = vpop.f32.mrf.mxu0
  %v1381 = vadd.f32 %v166, %v1380
  %v1382 = vpop.f32.mrf.mxu0
  %1383 = vmatprep.mubr.bf16.mxu0 %v935
  %1384 = vmatmul.mubr.bf16.gmra.mxu0 %v642
  %v1385 = vpop.f32.mrf.mxu0
  %v1386 = vadd.f32 %v166, %v1385
  %v1387 = vpop.f32.mrf.mxu0
  %v1388 = vpop.f32.mrf.mxu0
  %v1389 = vadd.f32 %v166, %v1388
  %v1390 = vpop.f32.mrf.mxu0
  %1391 = vmatprep.mubr.bf16.mxu0 %v938
  %1392 = vmatmul.mubr.bf16.gmra.mxu0 %v644
  %v1393 = vpop.f32.mrf.mxu0
  %v1394 = vadd.f32 %v166, %v1393
  %v1395 = vpop.f32.mrf.mxu0
  %v1396 = vpop.f32.mrf.mxu0
  %v1397 = vadd.f32 %v166, %v1396
  %v1398 = vpop.f32.mrf.mxu0
  %1399 = vmatprep.mubr.bf16.mxu0 %v941
  %1400 = vmatmul.mubr.bf16.gmra.mxu0 %v646
  %v1401 = vpop.f32.mrf.mxu0
  %v1402 = vadd.f32 %v166, %v1401
  %v1403 = vpop.f32.mrf.mxu0
  %v1404 = vpop.f32.mrf.mxu0
  %v1405 = vadd.f32 %v166, %v1404
  %v1406 = vpop.f32.mrf.mxu0
  %1407 = vmatprep.mubr.bf16.mxu0 %v944
  %1408 = vmatmul.mubr.bf16.gmra.mxu0 %v648
  %v1409 = vpop.f32.mrf.mxu0
  %v1410 = vadd.f32 %v166, %v1409
  %v1411 = vpop.f32.mrf.mxu0
  %v1412 = vpop.f32.mrf.mxu0
  %v1413 = vadd.f32 %v166, %v1412
  %v1414 = vpop.f32.mrf.mxu0
  %1415 = vmatprep.mubr.bf16.mxu0 %v947
  %1416 = vmatmul.mubr.bf16.gmra.mxu0 %v650
  %v1417 = vpop.f32.mrf.mxu0
  %v1418 = vadd.f32 %v166, %v1417
  %v1419 = vpop.f32.mrf.mxu0
  %v1420 = vpop.f32.mrf.mxu0
  %v1421 = vadd.f32 %v166, %v1420
  %v1422 = vpop.f32.mrf.mxu0
  %1423 = vmatprep.mubr.bf16.mxu0 %v950
  %1424 = vmatmul.mubr.bf16.gmra.mxu0 %v652
  %v1425 = vpop.f32.mrf.mxu0
  %v1426 = vadd.f32 %v166, %v1425
  %v1427 = vpop.f32.mrf.mxu0
  %v1428 = vpop.f32.mrf.mxu0
  %v1429 = vadd.f32 %v166, %v1428
  %v1430 = vpop.f32.mrf.mxu0
  %1431 = vmatprep.mubr.bf16.mxu0 %v953
  %1432 = vmatmul.mubr.bf16.gmra.mxu0 %v654
  %v1433 = vpop.f32.mrf.mxu0
  %v1434 = vadd.f32 %v166, %v1433
  %v1435 = vpop.f32.mrf.mxu0
  %v1436 = vpop.f32.mrf.mxu0
  %v1437 = vadd.f32 %v166, %v1436
  %v1438 = vpop.f32.mrf.mxu0
  %1439 = vmatprep.mubr.bf16.mxu0 %v956
  %1440 = vmatmul.mubr.bf16.gmra.mxu0 %v656
  %v1441 = vpop.f32.mrf.mxu0
  %v1442 = vadd.f32 %v166, %v1441
  %v1443 = vpop.f32.mrf.mxu0
  %v1444 = vpop.f32.mrf.mxu0
  %v1445 = vadd.f32 %v166, %v1444
  %v1446 = vpop.f32.mrf.mxu0
  %1447 = vmatprep.mubr.bf16.mxu0 %v959
  %1448 = vmatmul.mubr.bf16.gmra.mxu0 %v658
  %v1449 = vpop.f32.mrf.mxu0
  %v1450 = vadd.f32 %v166, %v1449
  %v1451 = vpop.f32.mrf.mxu0
  %v1452 = vpop.f32.mrf.mxu0
  %v1453 = vadd.f32 %v166, %v1452
  %v1454 = vpop.f32.mrf.mxu0
  %1455 = vmatprep.mubr.bf16.mxu0 %v962
  %1456 = vmatmul.mubr.bf16.gmra.mxu0 %v660
  %v1457 = vpop.f32.mrf.mxu0
  %v1458 = vadd.f32 %v166, %v1457
  %v1459 = vpop.f32.mrf.mxu0
  %v1460 = vpop.f32.mrf.mxu0
  %v1461 = vadd.f32 %v166, %v1460
  %v1462 = vpop.f32.mrf.mxu0
  %1463 = vmatprep.mubr.bf16.mxu0 %v965
  %1464 = vmatmul.mubr.bf16.gmra.mxu0 %v662
  %v1465 = vpop.f32.mrf.mxu0
  %v1466 = vadd.f32 %v166, %v1465
  %v1467 = vpop.f32.mrf.mxu0
  %v1468 = vpop.f32.mrf.mxu0
  %v1469 = vadd.f32 %v166, %v1468
  %v1470 = vpop.f32.mrf.mxu0
  %1471 = vmatprep.mubr.bf16.mxu0 %v968
  %1472 = vmatmul.mubr.bf16.gmra.mxu0 %v664
  %v1473 = vpop.f32.mrf.mxu0
  %v1474 = vadd.f32 %v166, %v1473
  %v1475 = vpop.f32.mrf.mxu0
  %v1476 = vpop.f32.mrf.mxu0
  %v1477 = vadd.f32 %v166, %v1476
  %v1478 = vpop.f32.mrf.mxu0
  %1479 = vmatprep.mubr.bf16.mxu0 %v971
  %1480 = vmatmul.mubr.bf16.gmra.mxu0 %v666
  %v1481 = vpop.f32.mrf.mxu0
  %v1482 = vadd.f32 %v166, %v1481
  %v1483 = vpop.f32.mrf.mxu0
  %v1484 = vpop.f32.mrf.mxu0
  %v1485 = vadd.f32 %v166, %v1484
  %v1486 = vpop.f32.mrf.mxu0
  %1487 = vmatprep.mubr.bf16.mxu0 %v974
  %1488 = vmatmul.mubr.bf16.gmra.mxu0 %v668
  %v1489 = vpop.f32.mrf.mxu0
  %v1490 = vadd.f32 %v166, %v1489
  %v1491 = vpop.f32.mrf.mxu0
  %v1492 = vpop.f32.mrf.mxu0
  %v1493 = vadd.f32 %v166, %v1492
  %v1494 = vpop.f32.mrf.mxu0
  %1495 = vmatprep.mubr.bf16.mxu0 %v977
  %1496 = vmatmul.mubr.bf16.gmra.mxu0 %v670
  %v1497 = vpop.f32.mrf.mxu0
  %v1498 = vadd.f32 %v166, %v1497
  %v1499 = vpop.f32.mrf.mxu0
  %v1500 = vpop.f32.mrf.mxu0
  %v1501 = vadd.f32 %v166, %v1500
  %v1502 = vpop.f32.mrf.mxu0
  %1503 = vmatprep.mubr.bf16.mxu0 %v980
  %1504 = vmatmul.mubr.bf16.gmra.mxu0 %v672
  %v1505 = vpop.f32.mrf.mxu0
  %v1506 = vadd.f32 %v166, %v1505
  %v1507 = vpop.f32.mrf.mxu0
  %v1508 = vpop.f32.mrf.mxu0
  %v1509 = vadd.f32 %v166, %v1508
  %v1510 = vpop.f32.mrf.mxu0
  %1511 = vmatprep.mubr.bf16.mxu0 %v983
  %1512 = vmatmul.mubr.bf16.gmra.mxu0 %v674
  %v1513 = vpop.f32.mrf.mxu0
  %v1514 = vadd.f32 %v166, %v1513
  %v1515 = vpop.f32.mrf.mxu0
  %v1516 = vpop.f32.mrf.mxu0
  %v1517 = vadd.f32 %v166, %v1516
  %v1518 = vpop.f32.mrf.mxu0
  %1519 = vmatprep.mubr.bf16.mxu0 %v986
  %1520 = vmatmul.mubr.bf16.gmra.mxu0 %v676
  %v1521 = vpop.f32.mrf.mxu0
  %v1522 = vadd.f32 %v166, %v1521
  %v1523 = vpop.f32.mrf.mxu0
  %v1524 = vpop.f32.mrf.mxu0
  %v1525 = vadd.f32 %v166, %v1524
  %v1526 = vpop.f32.mrf.mxu0
  %1527 = vmatprep.mubr.bf16.mxu0 %v989
  %1528 = vmatmul.mubr.bf16.gmra.mxu0 %v678
  %v1529 = vpop.f32.mrf.mxu0
  %v1530 = vadd.f32 %v166, %v1529
  %v1531 = vpop.f32.mrf.mxu0
  %v1532 = vpop.f32.mrf.mxu0
  %v1533 = vadd.f32 %v166, %v1532
  %v1534 = vpop.f32.mrf.mxu0
  %1535 = vdwg.mxu0
  %v1536 = vmax.f32 %v1026, 0.0
  %v1537 = vmax.f32 %v1029, 0.0
  %v1538 = vmax.f32 %v1034, 0.0
  %v1539 = vmax.f32 %v1037, 0.0
  %v1540 = vmax.f32 %v1042, 0.0
  %v1541 = vmax.f32 %v1045, 0.0
  %v1542 = vmax.f32 %v1050, 0.0
  %v1543 = vmax.f32 %v1053, 0.0
  %v1544 = vmax.f32 %v1058, 0.0
  %v1545 = vmax.f32 %v1061, 0.0
  %v1546 = vmax.f32 %v1066, 0.0
  %v1547 = vmax.f32 %v1069, 0.0
  %v1548 = vmax.f32 %v1074, 0.0
  %v1549 = vmax.f32 %v1077, 0.0
  %v1550 = vmax.f32 %v1082, 0.0
  %v1551 = vmax.f32 %v1085, 0.0
  %v1552 = vmax.f32 %v1090, 0.0
  %v1553 = vmax.f32 %v1093, 0.0
  %v1554 = vmax.f32 %v1098, 0.0
  %v1555 = vmax.f32 %v1101, 0.0
  %v1556 = vmax.f32 %v1106, 0.0
  %v1557 = vmax.f32 %v1109, 0.0
  %v1558 = vmax.f32 %v1114, 0.0
  %v1559 = vmax.f32 %v1117, 0.0
  %v1560 = vmax.f32 %v1122, 0.0
  %v1561 = vmax.f32 %v1125, 0.0
  %v1562 = vmax.f32 %v1130, 0.0
  %v1563 = vmax.f32 %v1133, 0.0
  %v1564 = vmax.f32 %v1138, 0.0
  %v1565 = vmax.f32 %v1141, 0.0
  %v1566 = vmax.f32 %v1146, 0.0
  %v1567 = vmax.f32 %v1149, 0.0
  %v1568 = vmax.f32 %v1154, 0.0
  %v1569 = vmax.f32 %v1157, 0.0
  %v1570 = vmax.f32 %v1162, 0.0
  %v1571 = vmax.f32 %v1165, 0.0
  %v1572 = vmax.f32 %v1170, 0.0
  %v1573 = vmax.f32 %v1173, 0.0
  %v1574 = vmax.f32 %v1178, 0.0
  %v1575 = vmax.f32 %v1181, 0.0
  %v1576 = vmax.f32 %v1186, 0.0
  %v1577 = vmax.f32 %v1189, 0.0
  %v1578 = vmax.f32 %v1194, 0.0
  %v1579 = vmax.f32 %v1197, 0.0
  %v1580 = vmax.f32 %v1202, 0.0
  %v1581 = vmax.f32 %v1205, 0.0
  %v1582 = vmax.f32 %v1210, 0.0
  %v1583 = vmax.f32 %v1213, 0.0
  %v1584 = vmax.f32 %v1218, 0.0
  %v1585 = vmax.f32 %v1221, 0.0
  %v1586 = vmax.f32 %v1226, 0.0
  %v1587 = vmax.f32 %v1229, 0.0
  %v1588 = vmax.f32 %v1234, 0.0
  %v1589 = vmax.f32 %v1237, 0.0
  %v1590 = vmax.f32 %v1242, 0.0
  %v1591 = vmax.f32 %v1245, 0.0
  %v1592 = vmax.f32 %v1250, 0.0
  %v1593 = vmax.f32 %v1253, 0.0
  %v1594 = vmax.f32 %v1258, 0.0
  %v1595 = vmax.f32 %v1261, 0.0
  %v1596 = vmax.f32 %v1266, 0.0
  %v1597 = vmax.f32 %v1269, 0.0
  %v1598 = vmax.f32 %v1274, 0.0
  %v1599 = vmax.f32 %v1277, 0.0
  %v1600 = vmax.f32 %v1282, 0.0
  %v1601 = vmax.f32 %v1285, 0.0
  %v1602 = vmax.f32 %v1290, 0.0
  %v1603 = vmax.f32 %v1293, 0.0
  %v1604 = vmax.f32 %v1298, 0.0
  %v1605 = vmax.f32 %v1301, 0.0
  %v1606 = vmax.f32 %v1306, 0.0
  %v1607 = vmax.f32 %v1309, 0.0
  %v1608 = vmax.f32 %v1314, 0.0
  %v1609 = vmax.f32 %v1317, 0.0
  %v1610 = vmax.f32 %v1322, 0.0
  %v1611 = vmax.f32 %v1325, 0.0
  %v1612 = vmax.f32 %v1330, 0.0
  %v1613 = vmax.f32 %v1333, 0.0
  %v1614 = vmax.f32 %v1338, 0.0
  %v1615 = vmax.f32 %v1341, 0.0
  %v1616 = vmax.f32 %v1346, 0.0
  %v1617 = vmax.f32 %v1349, 0.0
  %v1618 = vmax.f32 %v1354, 0.0
  %v1619 = vmax.f32 %v1357, 0.0
  %v1620 = vmax.f32 %v1362, 0.0
  %v1621 = vmax.f32 %v1365, 0.0
  %v1622 = vmax.f32 %v1370, 0.0
  %v1623 = vmax.f32 %v1373, 0.0
  %v1624 = vmax.f32 %v1378, 0.0
  %v1625 = vmax.f32 %v1381, 0.0
  %v1626 = vmax.f32 %v1386, 0.0
  %v1627 = vmax.f32 %v1389, 0.0
  %v1628 = vmax.f32 %v1394, 0.0
  %v1629 = vmax.f32 %v1397, 0.0
  %v1630 = vmax.f32 %v1402, 0.0
  %v1631 = vmax.f32 %v1405, 0.0
  %v1632 = vmax.f32 %v1410, 0.0
  %v1633 = vmax.f32 %v1413, 0.0
  %v1634 = vmax.f32 %v1418, 0.0
  %v1635 = vmax.f32 %v1421, 0.0
  %v1636 = vmax.f32 %v1426, 0.0
  %v1637 = vmax.f32 %v1429, 0.0
  %v1638 = vmax.f32 %v1434, 0.0
  %v1639 = vmax.f32 %v1437, 0.0
  %v1640 = vmax.f32 %v1442, 0.0
  %v1641 = vmax.f32 %v1445, 0.0
  %v1642 = vmax.f32 %v1450, 0.0
  %v1643 = vmax.f32 %v1453, 0.0
  %v1644 = vmax.f32 %v1458, 0.0
  %v1645 = vmax.f32 %v1461, 0.0
  %v1646 = vmax.f32 %v1466, 0.0
  %v1647 = vmax.f32 %v1469, 0.0
  %v1648 = vmax.f32 %v1474, 0.0
  %v1649 = vmax.f32 %v1477, 0.0
  %v1650 = vmax.f32 %v1482, 0.0
  %v1651 = vmax.f32 %v1485, 0.0
  %v1652 = vmax.f32 %v1490, 0.0
  %v1653 = vmax.f32 %v1493, 0.0
  %v1654 = vmax.f32 %v1498, 0.0
  %v1655 = vmax.f32 %v1501, 0.0
  %v1656 = vmax.f32 %v1506, 0.0
  %v1657 = vmax.f32 %v1509, 0.0
  %v1658 = vmax.f32 %v1514, 0.0
  %v1659 = vmax.f32 %v1517, 0.0
  %v1660 = vmax.f32 %v1522, 0.0
  %v1661 = vmax.f32 %v1525, 0.0
  %v1662 = vmax.f32 %v1530, 0.0
  %v1663 = vmax.f32 %v1533, 0.0
  %v1664 = vpack.c.bf16 %v1537, %v1536
  %v1665 = vpack.c.bf16 %v1539, %v1538
  %v1666 = vpack.c.bf16 %v1541, %v1540
  %v1667 = vpack.c.bf16 %v1543, %v1542
  %v1668 = vpack.c.bf16 %v1545, %v1544
  %v1669 = vpack.c.bf16 %v1547, %v1546
  %v1670 = vpack.c.bf16 %v1549, %v1548
  %v1671 = vpack.c.bf16 %v1551, %v1550
  %v1672 = vpack.c.bf16 %v1553, %v1552
  %v1673 = vpack.c.bf16 %v1555, %v1554
  %v1674 = vpack.c.bf16 %v1557, %v1556
  %v1675 = vpack.c.bf16 %v1559, %v1558
  %v1676 = vpack.c.bf16 %v1561, %v1560
  %v1677 = vpack.c.bf16 %v1563, %v1562
  %v1678 = vpack.c.bf16 %v1565, %v1564
  %v1679 = vpack.c.bf16 %v1567, %v1566
  %v1680 = vpack.c.bf16 %v1569, %v1568
  %v1681 = vpack.c.bf16 %v1571, %v1570
  %v1682 = vpack.c.bf16 %v1573, %v1572
  %v1683 = vpack.c.bf16 %v1575, %v1574
  %v1684 = vpack.c.bf16 %v1577, %v1576
  %v1685 = vpack.c.bf16 %v1579, %v1578
  %v1686 = vpack.c.bf16 %v1581, %v1580
  %v1687 = vpack.c.bf16 %v1583, %v1582
  %v1688 = vpack.c.bf16 %v1585, %v1584
  %v1689 = vpack.c.bf16 %v1587, %v1586
  %v1690 = vpack.c.bf16 %v1589, %v1588
  %v1691 = vpack.c.bf16 %v1591, %v1590
  %v1692 = vpack.c.bf16 %v1593, %v1592
  %v1693 = vpack.c.bf16 %v1595, %v1594
  %v1694 = vpack.c.bf16 %v1597, %v1596
  %v1695 = vpack.c.bf16 %v1599, %v1598
  %v1696 = vpack.c.bf16 %v1601, %v1600
  %v1697 = vpack.c.bf16 %v1603, %v1602
  %v1698 = vpack.c.bf16 %v1605, %v1604
  %v1699 = vpack.c.bf16 %v1607, %v1606
  %v1700 = vpack.c.bf16 %v1609, %v1608
  %v1701 = vpack.c.bf16 %v1611, %v1610
  %v1702 = vpack.c.bf16 %v1613, %v1612
  %v1703 = vpack.c.bf16 %v1615, %v1614
  %v1704 = vpack.c.bf16 %v1617, %v1616
  %v1705 = vpack.c.bf16 %v1619, %v1618
  %v1706 = vpack.c.bf16 %v1621, %v1620
  %v1707 = vpack.c.bf16 %v1623, %v1622
  %v1708 = vpack.c.bf16 %v1625, %v1624
  %v1709 = vpack.c.bf16 %v1627, %v1626
  %v1710 = vpack.c.bf16 %v1629, %v1628
  %v1711 = vpack.c.bf16 %v1631, %v1630
  %v1712 = vpack.c.bf16 %v1633, %v1632
  %v1713 = vpack.c.bf16 %v1635, %v1634
  %v1714 = vpack.c.bf16 %v1637, %v1636
  %v1715 = vpack.c.bf16 %v1639, %v1638
  %v1716 = vpack.c.bf16 %v1641, %v1640
  %v1717 = vpack.c.bf16 %v1643, %v1642
  %v1718 = vpack.c.bf16 %v1645, %v1644
  %v1719 = vpack.c.bf16 %v1647, %v1646
  %v1720 = vpack.c.bf16 %v1649, %v1648
  %v1721 = vpack.c.bf16 %v1651, %v1650
  %v1722 = vpack.c.bf16 %v1653, %v1652
  %v1723 = vpack.c.bf16 %v1655, %v1654
  %v1724 = vpack.c.bf16 %v1657, %v1656
  %v1725 = vpack.c.bf16 %v1659, %v1658
  %v1726 = vpack.c.bf16 %v1661, %v1660
  %v1727 = vpack.c.bf16 %v1663, %v1662
  %v1792 = vunpack.c.l.b16 %v1664
  %v1793 = vunpack.c.h.b16 %v1664
  %v1794 = vunpack.c.l.b16 %v1665
  %v1795 = vunpack.c.h.b16 %v1665
  %v1796 = vunpack.c.l.b16 %v1666
  %v1797 = vunpack.c.h.b16 %v1666
  %v1798 = vunpack.c.l.b16 %v1667
  %v1799 = vunpack.c.h.b16 %v1667
  %v1800 = vunpack.c.l.b16 %v1668
  %v1801 = vunpack.c.h.b16 %v1668
  %v1802 = vunpack.c.l.b16 %v1669
  %v1803 = vunpack.c.h.b16 %v1669
  %v1804 = vunpack.c.l.b16 %v1670
  %v1805 = vunpack.c.h.b16 %v1670
  %v1806 = vunpack.c.l.b16 %v1671
  %v1807 = vunpack.c.h.b16 %v1671
  %v1808 = vunpack.c.l.b16 %v1672
  %v1809 = vunpack.c.h.b16 %v1672
  %v1810 = vunpack.c.l.b16 %v1673
  %v1811 = vunpack.c.h.b16 %v1673
  %v1812 = vunpack.c.l.b16 %v1674
  %v1813 = vunpack.c.h.b16 %v1674
  %v1814 = vunpack.c.l.b16 %v1675
  %v1815 = vunpack.c.h.b16 %v1675
  %v1816 = vunpack.c.l.b16 %v1676
  %v1817 = vunpack.c.h.b16 %v1676
  %v1818 = vunpack.c.l.b16 %v1677
  %v1819 = vunpack.c.h.b16 %v1677
  %v1820 = vunpack.c.l.b16 %v1678
  %v1821 = vunpack.c.h.b16 %v1678
  %v1822 = vunpack.c.l.b16 %v1679
  %v1823 = vunpack.c.h.b16 %v1679
  %v1824 = vunpack.c.l.b16 %v1680
  %v1825 = vunpack.c.h.b16 %v1680
  %v1826 = vunpack.c.l.b16 %v1681
  %v1827 = vunpack.c.h.b16 %v1681
  %v1828 = vunpack.c.l.b16 %v1682
  %v1829 = vunpack.c.h.b16 %v1682
  %v1830 = vunpack.c.l.b16 %v1683
  %v1831 = vunpack.c.h.b16 %v1683
  %v1832 = vunpack.c.l.b16 %v1684
  %v1833 = vunpack.c.h.b16 %v1684
  %v1834 = vunpack.c.l.b16 %v1685
  %v1835 = vunpack.c.h.b16 %v1685
  %v1836 = vunpack.c.l.b16 %v1686
  %v1837 = vunpack.c.h.b16 %v1686
  %v1838 = vunpack.c.l.b16 %v1687
  %v1839 = vunpack.c.h.b16 %v1687
  %v1840 = vunpack.c.l.b16 %v1688
  %v1841 = vunpack.c.h.b16 %v1688
  %v1842 = vunpack.c.l.b16 %v1689
  %v1843 = vunpack.c.h.b16 %v1689
  %v1844 = vunpack.c.l.b16 %v1690
  %v1845 = vunpack.c.h.b16 %v1690
  %v1846 = vunpack.c.l.b16 %v1691
  %v1847 = vunpack.c.h.b16 %v1691
  %v1848 = vunpack.c.l.b16 %v1692
  %v1849 = vunpack.c.h.b16 %v1692
  %v1850 = vunpack.c.l.b16 %v1693
  %v1851 = vunpack.c.h.b16 %v1693
  %v1852 = vunpack.c.l.b16 %v1694
  %v1853 = vunpack.c.h.b16 %v1694
  %v1854 = vunpack.c.l.b16 %v1695
  %v1855 = vunpack.c.h.b16 %v1695
  %v1856 = vunpack.c.l.b16 %v1696
  %v1857 = vunpack.c.h.b16 %v1696
  %v1858 = vunpack.c.l.b16 %v1697
  %v1859 = vunpack.c.h.b16 %v1697
  %v1860 = vunpack.c.l.b16 %v1698
  %v1861 = vunpack.c.h.b16 %v1698
  %v1862 = vunpack.c.l.b16 %v1699
  %v1863 = vunpack.c.h.b16 %v1699
  %v1864 = vunpack.c.l.b16 %v1700
  %v1865 = vunpack.c.h.b16 %v1700
  %v1866 = vunpack.c.l.b16 %v1701
  %v1867 = vunpack.c.h.b16 %v1701
  %v1868 = vunpack.c.l.b16 %v1702
  %v1869 = vunpack.c.h.b16 %v1702
  %v1870 = vunpack.c.l.b16 %v1703
  %v1871 = vunpack.c.h.b16 %v1703
  %v1872 = vunpack.c.l.b16 %v1704
  %v1873 = vunpack.c.h.b16 %v1704
  %v1874 = vunpack.c.l.b16 %v1705
  %v1875 = vunpack.c.h.b16 %v1705
  %v1876 = vunpack.c.l.b16 %v1706
  %v1877 = vunpack.c.h.b16 %v1706
  %v1878 = vunpack.c.l.b16 %v1707
  %v1879 = vunpack.c.h.b16 %v1707
  %v1880 = vunpack.c.l.b16 %v1708
  %v1881 = vunpack.c.h.b16 %v1708
  %v1882 = vunpack.c.l.b16 %v1709
  %v1883 = vunpack.c.h.b16 %v1709
  %v1884 = vunpack.c.l.b16 %v1710
  %v1885 = vunpack.c.h.b16 %v1710
  %v1886 = vunpack.c.l.b16 %v1711
  %v1887 = vunpack.c.h.b16 %v1711
  %v1888 = vunpack.c.l.b16 %v1712
  %v1889 = vunpack.c.h.b16 %v1712
  %v1890 = vunpack.c.l.b16 %v1713
  %v1891 = vunpack.c.h.b16 %v1713
  %v1892 = vunpack.c.l.b16 %v1714
  %v1893 = vunpack.c.h.b16 %v1714
  %v1894 = vunpack.c.l.b16 %v1715
  %v1895 = vunpack.c.h.b16 %v1715
  %v1896 = vunpack.c.l.b16 %v1716
  %v1897 = vunpack.c.h.b16 %v1716
  %v1898 = vunpack.c.l.b16 %v1717
  %v1899 = vunpack.c.h.b16 %v1717
  %v1900 = vunpack.c.l.b16 %v1718
  %v1901 = vunpack.c.h.b16 %v1718
  %v1902 = vunpack.c.l.b16 %v1719
  %v1903 = vunpack.c.h.b16 %v1719
  %v1904 = vunpack.c.l.b16 %v1720
  %v1905 = vunpack.c.h.b16 %v1720
  %v1906 = vunpack.c.l.b16 %v1721
  %v1907 = vunpack.c.h.b16 %v1721
  %v1908 = vunpack.c.l.b16 %v1722
  %v1909 = vunpack.c.h.b16 %v1722
  %v1910 = vunpack.c.l.b16 %v1723
  %v1911 = vunpack.c.h.b16 %v1723
  %v1912 = vunpack.c.l.b16 %v1724
  %v1913 = vunpack.c.h.b16 %v1724
  %v1914 = vunpack.c.l.b16 %v1725
  %v1915 = vunpack.c.h.b16 %v1725
  %v1916 = vunpack.c.l.b16 %v1726
  %v1917 = vunpack.c.h.b16 %v1726
  %v1918 = vunpack.c.l.b16 %v1727
  %v1919 = vunpack.c.h.b16 %v1727
  %v1920 = vpack.c.b16 %v1792, %v1792
  %v1921 = vpack.c.b16 %v1793, %v1793
  %v1922 = vpack.c.b16 %v1794, %v1794
  %v1923 = vpack.c.b16 %v1795, %v1795
  %v1924 = vpack.c.b16 %v1796, %v1796
  %v1925 = vpack.c.b16 %v1797, %v1797
  %v1926 = vpack.c.b16 %v1798, %v1798
  %v1927 = vpack.c.b16 %v1799, %v1799
  %v1928 = vpack.c.b16 %v1800, %v1800
  %v1929 = vpack.c.b16 %v1801, %v1801
  %v1930 = vpack.c.b16 %v1802, %v1802
  %v1931 = vpack.c.b16 %v1803, %v1803
  %v1932 = vpack.c.b16 %v1804, %v1804
  %v1933 = vpack.c.b16 %v1805, %v1805
  %v1934 = vpack.c.b16 %v1806, %v1806
  %v1935 = vpack.c.b16 %v1807, %v1807
  %v1936 = vpack.c.b16 %v1808, %v1808
  %v1937 = vpack.c.b16 %v1809, %v1809
  %v1938 = vpack.c.b16 %v1810, %v1810
  %v1939 = vpack.c.b16 %v1811, %v1811
  %v1940 = vpack.c.b16 %v1812, %v1812
  %v1941 = vpack.c.b16 %v1813, %v1813
  %v1942 = vpack.c.b16 %v1814, %v1814
  %v1943 = vpack.c.b16 %v1815, %v1815
  %v1944 = vpack.c.b16 %v1816, %v1816
  %v1945 = vpack.c.b16 %v1817, %v1817
  %v1946 = vpack.c.b16 %v1818, %v1818
  %v1947 = vpack.c.b16 %v1819, %v1819
  %v1948 = vpack.c.b16 %v1820, %v1820
  %v1949 = vpack.c.b16 %v1821, %v1821
  %v1950 = vpack.c.b16 %v1822, %v1822
  %v1951 = vpack.c.b16 %v1823, %v1823
  %v1952 = vpack.c.b16 %v1824, %v1824
  %v1953 = vpack.c.b16 %v1825, %v1825
  %v1954 = vpack.c.b16 %v1826, %v1826
  %v1955 = vpack.c.b16 %v1827, %v1827
  %v1956 = vpack.c.b16 %v1828, %v1828
  %v1957 = vpack.c.b16 %v1829, %v1829
  %v1958 = vpack.c.b16 %v1830, %v1830
  %v1959 = vpack.c.b16 %v1831, %v1831
  %v1960 = vpack.c.b16 %v1832, %v1832
  %v1961 = vpack.c.b16 %v1833, %v1833
  %v1962 = vpack.c.b16 %v1834, %v1834
  %v1963 = vpack.c.b16 %v1835, %v1835
  %v1964 = vpack.c.b16 %v1836, %v1836
  %v1965 = vpack.c.b16 %v1837, %v1837
  %v1966 = vpack.c.b16 %v1838, %v1838
  %v1967 = vpack.c.b16 %v1839, %v1839
  %v1968 = vpack.c.b16 %v1840, %v1840
  %v1969 = vpack.c.b16 %v1841, %v1841
  %v1970 = vpack.c.b16 %v1842, %v1842
  %v1971 = vpack.c.b16 %v1843, %v1843
  %v1972 = vpack.c.b16 %v1844, %v1844
  %v1973 = vpack.c.b16 %v1845, %v1845
  %v1974 = vpack.c.b16 %v1846, %v1846
  %v1975 = vpack.c.b16 %v1847, %v1847
  %v1976 = vpack.c.b16 %v1848, %v1848
  %v1977 = vpack.c.b16 %v1849, %v1849
  %v1978 = vpack.c.b16 %v1850, %v1850
  %v1979 = vpack.c.b16 %v1851, %v1851
  %v1980 = vpack.c.b16 %v1852, %v1852
  %v1981 = vpack.c.b16 %v1853, %v1853
  %v1982 = vpack.c.b16 %v1854, %v1854
  %v1983 = vpack.c.b16 %v1855, %v1855
  %v1984 = vpack.c.b16 %v1856, %v1856
  %v1985 = vpack.c.b16 %v1857, %v1857
  %v1986 = vpack.c.b16 %v1858, %v1858
  %v1987 = vpack.c.b16 %v1859, %v1859
  %v1988 = vpack.c.b16 %v1860, %v1860
  %v1989 = vpack.c.b16 %v1861, %v1861
  %v1990 = vpack.c.b16 %v1862, %v1862
  %v1991 = vpack.c.b16 %v1863, %v1863
  %v1992 = vpack.c.b16 %v1864, %v1864
  %v1993 = vpack.c.b16 %v1865, %v1865
  %v1994 = vpack.c.b16 %v1866, %v1866
  %v1995 = vpack.c.b16 %v1867, %v1867
  %v1996 = vpack.c.b16 %v1868, %v1868
  %v1997 = vpack.c.b16 %v1869, %v1869
  %v1998 = vpack.c.b16 %v1870, %v1870
  %v1999 = vpack.c.b16 %v1871, %v1871
  %v2000 = vpack.c.b16 %v1872, %v1872
  %v2001 = vpack.c.b16 %v1873, %v1873
  %v2002 = vpack.c.b16 %v1874, %v1874
  %v2003 = vpack.c.b16 %v1875, %v1875
  %v2004 = vpack.c.b16 %v1876, %v1876
  %v2005 = vpack.c.b16 %v1877, %v1877
  %v2006 = vpack.c.b16 %v1878, %v1878
  %v2007 = vpack.c.b16 %v1879, %v1879
  %v2008 = vpack.c.b16 %v1880, %v1880
  %v2009 = vpack.c.b16 %v1881, %v1881
  %v2010 = vpack.c.b16 %v1882, %v1882
  %v2011 = vpack.c.b16 %v1883, %v1883
  %v2012 = vpack.c.b16 %v1884, %v1884
  %v2013 = vpack.c.b16 %v1885, %v1885
  %v2014 = vpack.c.b16 %v1886, %v1886
  %v2015 = vpack.c.b16 %v1887, %v1887
  %v2016 = vpack.c.b16 %v1888, %v1888
  %v2017 = vpack.c.b16 %v1889, %v1889
  %v2018 = vpack.c.b16 %v1890, %v1890
  %v2019 = vpack.c.b16 %v1891, %v1891
  %v2020 = vpack.c.b16 %v1892, %v1892
  %v2021 = vpack.c.b16 %v1893, %v1893
  %v2022 = vpack.c.b16 %v1894, %v1894
  %v2023 = vpack.c.b16 %v1895, %v1895
  %v2024 = vpack.c.b16 %v1896, %v1896
  %v2025 = vpack.c.b16 %v1897, %v1897
  %v2026 = vpack.c.b16 %v1898, %v1898
  %v2027 = vpack.c.b16 %v1899, %v1899
  %v2028 = vpack.c.b16 %v1900, %v1900
  %v2029 = vpack.c.b16 %v1901, %v1901
  %v2030 = vpack.c.b16 %v1902, %v1902
  %v2031 = vpack.c.b16 %v1903, %v1903
  %v2032 = vpack.c.b16 %v1904, %v1904
  %v2033 = vpack.c.b16 %v1905, %v1905
  %v2034 = vpack.c.b16 %v1906, %v1906
  %v2035 = vpack.c.b16 %v1907, %v1907
  %v2036 = vpack.c.b16 %v1908, %v1908
  %v2037 = vpack.c.b16 %v1909, %v1909
  %v2038 = vpack.c.b16 %v1910, %v1910
  %v2039 = vpack.c.b16 %v1911, %v1911
  %v2040 = vpack.c.b16 %v1912, %v1912
  %v2041 = vpack.c.b16 %v1913, %v1913
  %v2042 = vpack.c.b16 %v1914, %v1914
  %v2043 = vpack.c.b16 %v1915, %v1915
  %v2044 = vpack.c.b16 %v1916, %v1916
  %v2045 = vpack.c.b16 %v1917, %v1917
  %v2046 = vpack.c.b16 %v1918, %v1918
  %v2047 = vpack.c.b16 %v1919, %v1919
  %vm2176 = vcmask 257024
  %2177 = vst.msk [vmem:[%s3] sm:$0xf] %vm2176, %v1920
  %2178 = vst.msk [vmem:[%s3 + $0x4] sm:$0xf] %vm2176, %v1921
  %2179 = vst.msk [vmem:[%s3 + $0x8] sm:$0xf] %vm2176, %v1922
  %2180 = vst.msk [vmem:[%s3 + $0xc] sm:$0xf] %vm2176, %v1923
  %2181 = vst.msk [vmem:[%s3 + $0x10] sm:$0xf] %vm2176, %v1924
  %2182 = vst.msk [vmem:[%s3 + $0x14] sm:$0xf] %vm2176, %v1925
  %2183 = vst.msk [vmem:[%s3 + $0x18] sm:$0xf] %vm2176, %v1926
  %2184 = vst.msk [vmem:[%s3 + $0x1c] sm:$0xf] %vm2176, %v1927
  %2185 = vst.msk [vmem:[%s3 + $0x20] sm:$0xf] %vm2176, %v1928
  %2186 = vst.msk [vmem:[%s3 + $0x24] sm:$0xf] %vm2176, %v1929
  %2187 = vst.msk [vmem:[%s3 + $0x28] sm:$0xf] %vm2176, %v1930
  %2188 = vst.msk [vmem:[%s3 + $0x2c] sm:$0xf] %vm2176, %v1931
  %2189 = vst.msk [vmem:[%s3 + $0x30] sm:$0xf] %vm2176, %v1932
  %2190 = vst.msk [vmem:[%s3 + $0x34] sm:$0xf] %vm2176, %v1933
  %2191 = vst.msk [vmem:[%s3 + $0x38] sm:$0xf] %vm2176, %v1934
  %2192 = vst.msk [vmem:[%s3 + $0x3c] sm:$0xf] %vm2176, %v1935
  %2193 = vst.msk [vmem:[%s3 + $0x40] sm:$0xf] %vm2176, %v1936
  %2194 = vst.msk [vmem:[%s3 + $0x44] sm:$0xf] %vm2176, %v1937
  %2195 = vst.msk [vmem:[%s3 + $0x48] sm:$0xf] %vm2176, %v1938
  %2196 = vst.msk [vmem:[%s3 + $0x4c] sm:$0xf] %vm2176, %v1939
  %2197 = vst.msk [vmem:[%s3 + $0x50] sm:$0xf] %vm2176, %v1940
  %2198 = vst.msk [vmem:[%s3 + $0x54] sm:$0xf] %vm2176, %v1941
  %2199 = vst.msk [vmem:[%s3 + $0x58] sm:$0xf] %vm2176, %v1942
  %2200 = vst.msk [vmem:[%s3 + $0x5c] sm:$0xf] %vm2176, %v1943
  %2201 = vst.msk [vmem:[%s3 + $0x60] sm:$0xf] %vm2176, %v1944
  %2202 = vst.msk [vmem:[%s3 + $0x64] sm:$0xf] %vm2176, %v1945
  %2203 = vst.msk [vmem:[%s3 + $0x68] sm:$0xf] %vm2176, %v1946
  %2204 = vst.msk [vmem:[%s3 + $0x6c] sm:$0xf] %vm2176, %v1947
  %2205 = vst.msk [vmem:[%s3 + $0x70] sm:$0xf] %vm2176, %v1948
  %2206 = vst.msk [vmem:[%s3 + $0x74] sm:$0xf] %vm2176, %v1949
  %2207 = vst.msk [vmem:[%s3 + $0x78] sm:$0xf] %vm2176, %v1950
  %2208 = vst.msk [vmem:[%s3 + $0x7c] sm:$0xf] %vm2176, %v1951
  %2209 = vst.msk [vmem:[%s3 + $0x80] sm:$0xf] %vm2176, %v1952
  %2210 = vst.msk [vmem:[%s3 + $0x84] sm:$0xf] %vm2176, %v1953
  %2211 = vst.msk [vmem:[%s3 + $0x88] sm:$0xf] %vm2176, %v1954
  %2212 = vst.msk [vmem:[%s3 + $0x8c] sm:$0xf] %vm2176, %v1955
  %2213 = vst.msk [vmem:[%s3 + $0x90] sm:$0xf] %vm2176, %v1956
  %2214 = vst.msk [vmem:[%s3 + $0x94] sm:$0xf] %vm2176, %v1957
  %2215 = vst.msk [vmem:[%s3 + $0x98] sm:$0xf] %vm2176, %v1958
  %2216 = vst.msk [vmem:[%s3 + $0x9c] sm:$0xf] %vm2176, %v1959
  %2217 = vst.msk [vmem:[%s3 + $0xa0] sm:$0xf] %vm2176, %v1960
  %2218 = vst.msk [vmem:[%s3 + $0xa4] sm:$0xf] %vm2176, %v1961
  %2219 = vst.msk [vmem:[%s3 + $0xa8] sm:$0xf] %vm2176, %v1962
  %2220 = vst.msk [vmem:[%s3 + $0xac] sm:$0xf] %vm2176, %v1963
  %2221 = vst.msk [vmem:[%s3 + $0xb0] sm:$0xf] %vm2176, %v1964
  %2222 = vst.msk [vmem:[%s3 + $0xb4] sm:$0xf] %vm2176, %v1965
  %2223 = vst.msk [vmem:[%s3 + $0xb8] sm:$0xf] %vm2176, %v1966
  %2224 = vst.msk [vmem:[%s3 + $0xbc] sm:$0xf] %vm2176, %v1967
  %2225 = vst.msk [vmem:[%s3 + $0xc0] sm:$0xf] %vm2176, %v1968
  %2226 = vst.msk [vmem:[%s3 + $0xc4] sm:$0xf] %vm2176, %v1969
  %2227 = vst.msk [vmem:[%s3 + $0xc8] sm:$0xf] %vm2176, %v1970
  %2228 = vst.msk [vmem:[%s3 + $0xcc] sm:$0xf] %vm2176, %v1971
  %2229 = vst.msk [vmem:[%s3 + $0xd0] sm:$0xf] %vm2176, %v1972
  %2230 = vst.msk [vmem:[%s3 + $0xd4] sm:$0xf] %vm2176, %v1973
  %2231 = vst.msk [vmem:[%s3 + $0xd8] sm:$0xf] %vm2176, %v1974
  %2232 = vst.msk [vmem:[%s3 + $0xdc] sm:$0xf] %vm2176, %v1975
  %2233 = vst.msk [vmem:[%s3 + $0xe0] sm:$0xf] %vm2176, %v1976
  %2234 = vst.msk [vmem:[%s3 + $0xe4] sm:$0xf] %vm2176, %v1977
  %2235 = vst.msk [vmem:[%s3 + $0xe8] sm:$0xf] %vm2176, %v1978
  %2236 = vst.msk [vmem:[%s3 + $0xec] sm:$0xf] %vm2176, %v1979
  %2237 = vst.msk [vmem:[%s3 + $0xf0] sm:$0xf] %vm2176, %v1980
  %2238 = vst.msk [vmem:[%s3 + $0xf4] sm:$0xf] %vm2176, %v1981
  %2239 = vst.msk [vmem:[%s3 + $0xf8] sm:$0xf] %vm2176, %v1982
  %2240 = vst.msk [vmem:[%s3 + $0xfc] sm:$0xf] %vm2176, %v1983
  %2241 = vst.msk [vmem:[%s3 + $0x100] sm:$0xf] %vm2176, %v1984
  %2242 = vst.msk [vmem:[%s3 + $0x104] sm:$0xf] %vm2176, %v1985
  %2243 = vst.msk [vmem:[%s3 + $0x108] sm:$0xf] %vm2176, %v1986
  %2244 = vst.msk [vmem:[%s3 + $0x10c] sm:$0xf] %vm2176, %v1987
  %2245 = vst.msk [vmem:[%s3 + $0x110] sm:$0xf] %vm2176, %v1988
  %2246 = vst.msk [vmem:[%s3 + $0x114] sm:$0xf] %vm2176, %v1989
  %2247 = vst.msk [vmem:[%s3 + $0x118] sm:$0xf] %vm2176, %v1990
  %2248 = vst.msk [vmem:[%s3 + $0x11c] sm:$0xf] %vm2176, %v1991
  %2249 = vst.msk [vmem:[%s3 + $0x120] sm:$0xf] %vm2176, %v1992
  %2250 = vst.msk [vmem:[%s3 + $0x124] sm:$0xf] %vm2176, %v1993
  %2251 = vst.msk [vmem:[%s3 + $0x128] sm:$0xf] %vm2176, %v1994
  %2252 = vst.msk [vmem:[%s3 + $0x12c] sm:$0xf] %vm2176, %v1995
  %2253 = vst.msk [vmem:[%s3 + $0x130] sm:$0xf] %vm2176, %v1996
  %2254 = vst.msk [vmem:[%s3 + $0x134] sm:$0xf] %vm2176, %v1997
  %2255 = vst.msk [vmem:[%s3 + $0x138] sm:$0xf] %vm2176, %v1998
  %2256 = vst.msk [vmem:[%s3 + $0x13c] sm:$0xf] %vm2176, %v1999
  %2257 = vst.msk [vmem:[%s3 + $0x140] sm:$0xf] %vm2176, %v2000
  %2258 = vst.msk [vmem:[%s3 + $0x144] sm:$0xf] %vm2176, %v2001
  %2259 = vst.msk [vmem:[%s3 + $0x148] sm:$0xf] %vm2176, %v2002
  %2260 = vst.msk [vmem:[%s3 + $0x14c] sm:$0xf] %vm2176, %v2003
  %2261 = vst.msk [vmem:[%s3 + $0x150] sm:$0xf] %vm2176, %v2004
  %2262 = vst.msk [vmem:[%s3 + $0x154] sm:$0xf] %vm2176, %v2005
  %2263 = vst.msk [vmem:[%s3 + $0x158] sm:$0xf] %vm2176, %v2006
  %2264 = vst.msk [vmem:[%s3 + $0x15c] sm:$0xf] %vm2176, %v2007
  %2265 = vst.msk [vmem:[%s3 + $0x160] sm:$0xf] %vm2176, %v2008
  %2266 = vst.msk [vmem:[%s3 + $0x164] sm:$0xf] %vm2176, %v2009
  %2267 = vst.msk [vmem:[%s3 + $0x168] sm:$0xf] %vm2176, %v2010
  %2268 = vst.msk [vmem:[%s3 + $0x16c] sm:$0xf] %vm2176, %v2011
  %2269 = vst.msk [vmem:[%s3 + $0x170] sm:$0xf] %vm2176, %v2012
  %2270 = vst.msk [vmem:[%s3 + $0x174] sm:$0xf] %vm2176, %v2013
  %2271 = vst.msk [vmem:[%s3 + $0x178] sm:$0xf] %vm2176, %v2014
  %2272 = vst.msk [vmem:[%s3 + $0x17c] sm:$0xf] %vm2176, %v2015
  %2273 = vst.msk [vmem:[%s3 + $0x180] sm:$0xf] %vm2176, %v2016
  %2274 = vst.msk [vmem:[%s3 + $0x184] sm:$0xf] %vm2176, %v2017
  %2275 = vst.msk [vmem:[%s3 + $0x188] sm:$0xf] %vm2176, %v2018
  %2276 = vst.msk [vmem:[%s3 + $0x18c] sm:$0xf] %vm2176, %v2019
  %2277 = vst.msk [vmem:[%s3 + $0x190] sm:$0xf] %vm2176, %v2020
  %2278 = vst.msk [vmem:[%s3 + $0x194] sm:$0xf] %vm2176, %v2021
  %2279 = vst.msk [vmem:[%s3 + $0x198] sm:$0xf] %vm2176, %v2022
  %2280 = vst.msk [vmem:[%s3 + $0x19c] sm:$0xf] %vm2176, %v2023
  %2281 = vst.msk [vmem:[%s3 + $0x1a0] sm:$0xf] %vm2176, %v2024
  %2282 = vst.msk [vmem:[%s3 + $0x1a4] sm:$0xf] %vm2176, %v2025
  %2283 = vst.msk [vmem:[%s3 + $0x1a8] sm:$0xf] %vm2176, %v2026
  %2284 = vst.msk [vmem:[%s3 + $0x1ac] sm:$0xf] %vm2176, %v2027
  %2285 = vst.msk [vmem:[%s3 + $0x1b0] sm:$0xf] %vm2176, %v2028
  %2286 = vst.msk [vmem:[%s3 + $0x1b4] sm:$0xf] %vm2176, %v2029
  %2287 = vst.msk [vmem:[%s3 + $0x1b8] sm:$0xf] %vm2176, %v2030
  %2288 = vst.msk [vmem:[%s3 + $0x1bc] sm:$0xf] %vm2176, %v2031
  %2289 = vst.msk [vmem:[%s3 + $0x1c0] sm:$0xf] %vm2176, %v2032
  %2290 = vst.msk [vmem:[%s3 + $0x1c4] sm:$0xf] %vm2176, %v2033
  %2291 = vst.msk [vmem:[%s3 + $0x1c8] sm:$0xf] %vm2176, %v2034
  %2292 = vst.msk [vmem:[%s3 + $0x1cc] sm:$0xf] %vm2176, %v2035
  %2293 = vst.msk [vmem:[%s3 + $0x1d0] sm:$0xf] %vm2176, %v2036
  %2294 = vst.msk [vmem:[%s3 + $0x1d4] sm:$0xf] %vm2176, %v2037
  %2295 = vst.msk [vmem:[%s3 + $0x1d8] sm:$0xf] %vm2176, %v2038
  %2296 = vst.msk [vmem:[%s3 + $0x1dc] sm:$0xf] %vm2176, %v2039
  %2297 = vst.msk [vmem:[%s3 + $0x1e0] sm:$0xf] %vm2176, %v2040
  %2298 = vst.msk [vmem:[%s3 + $0x1e4] sm:$0xf] %vm2176, %v2041
  %2299 = vst.msk [vmem:[%s3 + $0x1e8] sm:$0xf] %vm2176, %v2042
  %2300 = vst.msk [vmem:[%s3 + $0x1ec] sm:$0xf] %vm2176, %v2043
  %2301 = vst.msk [vmem:[%s3 + $0x1f0] sm:$0xf] %vm2176, %v2044
  %2302 = vst.msk [vmem:[%s3 + $0x1f4] sm:$0xf] %vm2176, %v2045
  %2303 = vst.msk [vmem:[%s3 + $0x1f8] sm:$0xf] %vm2176, %v2046
  %2304 = vst.msk [vmem:[%s3 + $0x1fc] sm:$0xf] %vm2176, %v2047
  // Predicated region
  $region14: #{siamese_forward.4} parent=0 // pred_check
    _
  $region15: #{siamese_forward.4} parent=0 // pred_check_branch
    %2306 = sbr.rel (0) target = $region17
  $region16: #{siamese_forward.4} parent=0 // pred_region
    _
  $region17: #{siamese_forward.4} parent=0 // pred_fallthru
    _
  // Predicated region
  $region18: #{siamese_forward.4} parent=0 // pred_check
    _
  $region19: #{siamese_forward.4} parent=0 // pred_check_branch
    %2308 = sbr.rel (0) target = $region21
  $region20: #{siamese_forward.4} parent=0 // pred_region
    _
  $region21: #{siamese_forward.4} parent=0 // pred_fallthru
    _

// kernel: siamese_forward.5
$region0: #{siamese_forward.5}
  #allocation0 [shape = 'u32[]', space=smem, size = 0x4, offset = 0x4, fixed_abs, tag = 'smem constant byte address 0x4 - core index']
  #allocation1 [shape = 'u32[144,128]{1,0:T(1,128)}', space=vmem, size = 0x12000, scoped, tag = 'internal scratch']
  %s0 = inlined_call_operand.vmem [shape: bf16[4,8192], index: 0, kind: input, shape index: {}]
  %s1 = inlined_call_operand.vmem [shape: bf16[8192,64], index: 1, kind: input, shape index: {}]
  %s2 = inlined_call_operand.vmem [shape: f32[1,64], index: 2, kind: input, shape index: {}]
  %s3 = inlined_call_operand.vmem [shape: f32[4,64], index: 3, kind: output, shape index: {}]
  %s4 = sld [smem:[#allocation0]]
  $region22: #{siamese_forward.5} parent=0
    _
  %s6 = ssub.s32 1, %s4
  %s7 = scalar_select 0, %s6, %s4
  // Predicated region
  $region2: #{siamese_forward.5} parent=0 // pred_check
    _
  $region3: #{siamese_forward.5} parent=0 // pred_check_branch
    %9 = sbr.rel (0) target = $region5
  $region4: #{siamese_forward.5} parent=0 // pred_region
    _
  $region5: #{siamese_forward.5} parent=0 // pred_fallthru
    _
  // Predicated region
  $region6: #{siamese_forward.5} parent=0 // pred_check
    _
  $region7: #{siamese_forward.5} parent=0 // pred_check_branch
    %11 = sbr.rel (0) target = $region9
  $region8: #{siamese_forward.5} parent=0 // pred_region
    _
  $region9: #{siamese_forward.5} parent=0 // pred_fallthru
    _
  // Predicated region
  $region10: #{siamese_forward.5} parent=0 // pred_check
    _
  $region11: #{siamese_forward.5} parent=0 // pred_check_branch
    %13 = sbr.rel (0) target = $region13
  $region12: #{siamese_forward.5} parent=0 // pred_region
    _
  $region13: #{siamese_forward.5} parent=0 // pred_fallthru
    _
  %v15 = vld [vmem:[%s0] sm:$0xff]
  %v16 = vld [vmem:[%s0 + $0x8] sm:$0xff]
  %v17 = vld [vmem:[%s0 + $0x10] sm:$0xff]
  %v18 = vld [vmem:[%s0 + $0x18] sm:$0xff]
  %v19 = vld [vmem:[%s0 + $0x20] sm:$0xff]
  %v20 = vld [vmem:[%s0 + $0x28] sm:$0xff]
  %v21 = vld [vmem:[%s0 + $0x30] sm:$0xff]
  %v22 = vld [vmem:[%s0 + $0x38] sm:$0xff]
  %v23 = vld [vmem:[%s0 + $0x40] sm:$0xff]
  %v24 = vld [vmem:[%s0 + $0x48] sm:$0xff]
  %v25 = vld [vmem:[%s0 + $0x50] sm:$0xff]
  %v26 = vld [vmem:[%s0 + $0x58] sm:$0xff]
  %v27 = vld [vmem:[%s0 + $0x60] sm:$0xff]
  %v28 = vld [vmem:[%s0 + $0x68] sm:$0xff]
  %v29 = vld [vmem:[%s0 + $0x70] sm:$0xff]
  %v30 = vld [vmem:[%s0 + $0x78] sm:$0xff]
  %v31 = vld [vmem:[%s1] sm:$0xf]
  %v32 = vld [vmem:[%s1 + $0x4] sm:$0xf]
  %v33 = vld [vmem:[%s1 + $0x8] sm:$0xf]
  %v34 = vld [vmem:[%s1 + $0xc] sm:$0xf]
  %v35 = vld [vmem:[%s1 + $0x10] sm:$0xf]
  %v36 = vld [vmem:[%s1 + $0x14] sm:$0xf]
  %v37 = vld [vmem:[%s1 + $0x18] sm:$0xf]
  %v38 = vld [vmem:[%s1 + $0x1c] sm:$0xf]
  %v39 = vld [vmem:[%s1 + $0x20] sm:$0xf]
  %v40 = vld [vmem:[%s1 + $0x24] sm:$0xf]
  %v41 = vld [vmem:[%s1 + $0x28] sm:$0xf]
  %v42 = vld [vmem:[%s1 + $0x2c] sm:$0xf]
  %v43 = vld [vmem:[%s1 + $0x30] sm:$0xf]
  %v44 = vld [vmem:[%s1 + $0x34] sm:$0xf]
  %v45 = vld [vmem:[%s1 + $0x38] sm:$0xf]
  %v46 = vld [vmem:[%s1 + $0x3c] sm:$0xf]
  %v47 = vld [vmem:[%s1 + $0x40] sm:$0xf]
  %v48 = vld [vmem:[%s1 + $0x44] sm:$0xf]
  %v49 = vld [vmem:[%s1 + $0x48] sm:$0xf]
  %v50 = vld [vmem:[%s1 + $0x4c] sm:$0xf]
  %v51 = vld [vmem:[%s1 + $0x50] sm:$0xf]
  %v52 = vld [vmem:[%s1 + $0x54] sm:$0xf]
  %v53 = vld [vmem:[%s1 + $0x58] sm:$0xf]
  %v54 = vld [vmem:[%s1 + $0x5c] sm:$0xf]
  %v55 = vld [vmem:[%s1 + $0x60] sm:$0xf]
  %v56 = vld [vmem:[%s1 + $0x64] sm:$0xf]
  %v57 = vld [vmem:[%s1 + $0x68] sm:$0xf]
  %v58 = vld [vmem:[%s1 + $0x6c] sm:$0xf]
  %v59 = vld [vmem:[%s1 + $0x70] sm:$0xf]
  %v60 = vld [vmem:[%s1 + $0x74] sm:$0xf]
  %v61 = vld [vmem:[%s1 + $0x78] sm:$0xf]
  %v62 = vld [vmem:[%s1 + $0x7c] sm:$0xf]
  %v63 = vld [vmem:[%s1 + $0x80] sm:$0xf]
  %v64 = vld [vmem:[%s1 + $0x84] sm:$0xf]
  %v65 = vld [vmem:[%s1 + $0x88] sm:$0xf]
  %v66 = vld [vmem:[%s1 + $0x8c] sm:$0xf]
  %v67 = vld [vmem:[%s1 + $0x90] sm:$0xf]
  %v68 = vld [vmem:[%s1 + $0x94] sm:$0xf]
  %v69 = vld [vmem:[%s1 + $0x98] sm:$0xf]
  %v70 = vld [vmem:[%s1 + $0x9c] sm:$0xf]
  %v71 = vld [vmem:[%s1 + $0xa0] sm:$0xf]
  %v72 = vld [vmem:[%s1 + $0xa4] sm:$0xf]
  %v73 = vld [vmem:[%s1 + $0xa8] sm:$0xf]
  %v74 = vld [vmem:[%s1 + $0xac] sm:$0xf]
  %v75 = vld [vmem:[%s1 + $0xb0] sm:$0xf]
  %v76 = vld [vmem:[%s1 + $0xb4] sm:$0xf]
  %v77 = vld [vmem:[%s1 + $0xb8] sm:$0xf]
  %v78 = vld [vmem:[%s1 + $0xbc] sm:$0xf]
  %v79 = vld [vmem:[%s1 + $0xc0] sm:$0xf]
  %v80 = vld [vmem:[%s1 + $0xc4] sm:$0xf]
  %v81 = vld [vmem:[%s1 + $0xc8] sm:$0xf]
  %v82 = vld [vmem:[%s1 + $0xcc] sm:$0xf]
  %v83 = vld [vmem:[%s1 + $0xd0] sm:$0xf]
  %v84 = vld [vmem:[%s1 + $0xd4] sm:$0xf]
  %v85 = vld [vmem:[%s1 + $0xd8] sm:$0xf]
  %v86 = vld [vmem:[%s1 + $0xdc] sm:$0xf]
  %v87 = vld [vmem:[%s1 + $0xe0] sm:$0xf]
  %v88 = vld [vmem:[%s1 + $0xe4] sm:$0xf]
  %v89 = vld [vmem:[%s1 + $0xe8] sm:$0xf]
  %v90 = vld [vmem:[%s1 + $0xec] sm:$0xf]
  %v91 = vld [vmem:[%s1 + $0xf0] sm:$0xf]
  %v92 = vld [vmem:[%s1 + $0xf4] sm:$0xf]
  %v93 = vld [vmem:[%s1 + $0xf8] sm:$0xf]
  %v94 = vld [vmem:[%s1 + $0xfc] sm:$0xf]
  %v95 = vld [vmem:[%s1 + $0x100] sm:$0xf]
  %v96 = vld [vmem:[%s1 + $0x104] sm:$0xf]
  %v97 = vld [vmem:[%s1 + $0x108] sm:$0xf]
  %v98 = vld [vmem:[%s1 + $0x10c] sm:$0xf]
  %v99 = vld [vmem:[%s1 + $0x110] sm:$0xf]
  %v100 = vld [vmem:[%s1 + $0x114] sm:$0xf]
  %v101 = vld [vmem:[%s1 + $0x118] sm:$0xf]
  %v102 = vld [vmem:[%s1 + $0x11c] sm:$0xf]
  %v103 = vld [vmem:[%s1 + $0x120] sm:$0xf]
  %v104 = vld [vmem:[%s1 + $0x124] sm:$0xf]
  %v105 = vld [vmem:[%s1 + $0x128] sm:$0xf]
  %v106 = vld [vmem:[%s1 + $0x12c] sm:$0xf]
  %v107 = vld [vmem:[%s1 + $0x130] sm:$0xf]
  %v108 = vld [vmem:[%s1 + $0x134] sm:$0xf]
  %v109 = vld [vmem:[%s1 + $0x138] sm:$0xf]
  %v110 = vld [vmem:[%s1 + $0x13c] sm:$0xf]
  %v111 = vld [vmem:[%s1 + $0x140] sm:$0xf]
  %v112 = vld [vmem:[%s1 + $0x144] sm:$0xf]
  %v113 = vld [vmem:[%s1 + $0x148] sm:$0xf]
  %v114 = vld [vmem:[%s1 + $0x14c] sm:$0xf]
  %v115 = vld [vmem:[%s1 + $0x150] sm:$0xf]
  %v116 = vld [vmem:[%s1 + $0x154] sm:$0xf]
  %v117 = vld [vmem:[%s1 + $0x158] sm:$0xf]
  %v118 = vld [vmem:[%s1 + $0x15c] sm:$0xf]
  %v119 = vld [vmem:[%s1 + $0x160] sm:$0xf]
  %v120 = vld [vmem:[%s1 + $0x164] sm:$0xf]
  %v121 = vld [vmem:[%s1 + $0x168] sm:$0xf]
  %v122 = vld [vmem:[%s1 + $0x16c] sm:$0xf]
  %v123 = vld [vmem:[%s1 + $0x170] sm:$0xf]
  %v124 = vld [vmem:[%s1 + $0x174] sm:$0xf]
  %v125 = vld [vmem:[%s1 + $0x178] sm:$0xf]
  %v126 = vld [vmem:[%s1 + $0x17c] sm:$0xf]
  %v127 = vld [vmem:[%s1 + $0x180] sm:$0xf]
  %v128 = vld [vmem:[%s1 + $0x184] sm:$0xf]
  %v129 = vld [vmem:[%s1 + $0x188] sm:$0xf]
  %v130 = vld [vmem:[%s1 + $0x18c] sm:$0xf]
  %v131 = vld [vmem:[%s1 + $0x190] sm:$0xf]
  %v132 = vld [vmem:[%s1 + $0x194] sm:$0xf]
  %v133 = vld [vmem:[%s1 + $0x198] sm:$0xf]
  %v134 = vld [vmem:[%s1 + $0x19c] sm:$0xf]
  %v135 = vld [vmem:[%s1 + $0x1a0] sm:$0xf]
  %v136 = vld [vmem:[%s1 + $0x1a4] sm:$0xf]
  %v137 = vld [vmem:[%s1 + $0x1a8] sm:$0xf]
  %v138 = vld [vmem:[%s1 + $0x1ac] sm:$0xf]
  %v139 = vld [vmem:[%s1 + $0x1b0] sm:$0xf]
  %v140 = vld [vmem:[%s1 + $0x1b4] sm:$0xf]
  %v141 = vld [vmem:[%s1 + $0x1b8] sm:$0xf]
  %v142 = vld [vmem:[%s1 + $0x1bc] sm:$0xf]
  %v143 = vld [vmem:[%s1 + $0x1c0] sm:$0xf]
  %v144 = vld [vmem:[%s1 + $0x1c4] sm:$0xf]
  %v145 = vld [vmem:[%s1 + $0x1c8] sm:$0xf]
  %v146 = vld [vmem:[%s1 + $0x1cc] sm:$0xf]
  %v147 = vld [vmem:[%s1 + $0x1d0] sm:$0xf]
  %v148 = vld [vmem:[%s1 + $0x1d4] sm:$0xf]
  %v149 = vld [vmem:[%s1 + $0x1d8] sm:$0xf]
  %v150 = vld [vmem:[%s1 + $0x1dc] sm:$0xf]
  %v151 = vld [vmem:[%s1 + $0x1e0] sm:$0xf]
  %v152 = vld [vmem:[%s1 + $0x1e4] sm:$0xf]
  %v153 = vld [vmem:[%s1 + $0x1e8] sm:$0xf]
  %v154 = vld [vmem:[%s1 + $0x1ec] sm:$0xf]
  %v155 = vld [vmem:[%s1 + $0x1f0] sm:$0xf]
  %v156 = vld [vmem:[%s1 + $0x1f4] sm:$0xf]
  %v157 = vld [vmem:[%s1 + $0x1f8] sm:$0xf]
  %v158 = vld [vmem:[%s1 + $0x1fc] sm:$0xf]
  %v159 = vld [vmem:[%s1 + $0x200] sm:$0xf]
  %v160 = vld [vmem:[%s1 + $0x204] sm:$0xf]
  %v161 = vld [vmem:[%s1 + $0x208] sm:$0xf]
  %v162 = vld [vmem:[%s1 + $0x20c] sm:$0xf]
  %v163 = vld [vmem:[%s1 + $0x210] sm:$0xf]
  %v164 = vld [vmem:[%s1 + $0x214] sm:$0xf]
  %v165 = vld [vmem:[%s1 + $0x218] sm:$0xf]
  %v166 = vld [vmem:[%s1 + $0x21c] sm:$0xf]
  %v167 = vld [vmem:[%s1 + $0x220] sm:$0xf]
  %v168 = vld [vmem:[%s1 + $0x224] sm:$0xf]
  %v169 = vld [vmem:[%s1 + $0x228] sm:$0xf]
  %v170 = vld [vmem:[%s1 + $0x22c] sm:$0xf]
  %v171 = vld [vmem:[%s1 + $0x230] sm:$0xf]
  %v172 = vld [vmem:[%s1 + $0x234] sm:$0xf]
  %v173 = vld [vmem:[%s1 + $0x238] sm:$0xf]
  %v174 = vld [vmem:[%s1 + $0x23c] sm:$0xf]
  %v175 = vld [vmem:[%s1 + $0x240] sm:$0xf]
  %v176 = vld [vmem:[%s1 + $0x244] sm:$0xf]
  %v177 = vld [vmem:[%s1 + $0x248] sm:$0xf]
  %v178 = vld [vmem:[%s1 + $0x24c] sm:$0xf]
  %v179 = vld [vmem:[%s1 + $0x250] sm:$0xf]
  %v180 = vld [vmem:[%s1 + $0x254] sm:$0xf]
  %v181 = vld [vmem:[%s1 + $0x258] sm:$0xf]
  %v182 = vld [vmem:[%s1 + $0x25c] sm:$0xf]
  %v183 = vld [vmem:[%s1 + $0x260] sm:$0xf]
  %v184 = vld [vmem:[%s1 + $0x264] sm:$0xf]
  %v185 = vld [vmem:[%s1 + $0x268] sm:$0xf]
  %v186 = vld [vmem:[%s1 + $0x26c] sm:$0xf]
  %v187 = vld [vmem:[%s1 + $0x270] sm:$0xf]
  %v188 = vld [vmem:[%s1 + $0x274] sm:$0xf]
  %v189 = vld [vmem:[%s1 + $0x278] sm:$0xf]
  %v190 = vld [vmem:[%s1 + $0x27c] sm:$0xf]
  %v191 = vld [vmem:[%s1 + $0x280] sm:$0xf]
  %v192 = vld [vmem:[%s1 + $0x284] sm:$0xf]
  %v193 = vld [vmem:[%s1 + $0x288] sm:$0xf]
  %v194 = vld [vmem:[%s1 + $0x28c] sm:$0xf]
  %v195 = vld [vmem:[%s1 + $0x290] sm:$0xf]
  %v196 = vld [vmem:[%s1 + $0x294] sm:$0xf]
  %v197 = vld [vmem:[%s1 + $0x298] sm:$0xf]
  %v198 = vld [vmem:[%s1 + $0x29c] sm:$0xf]
  %v199 = vld [vmem:[%s1 + $0x2a0] sm:$0xf]
  %v200 = vld [vmem:[%s1 + $0x2a4] sm:$0xf]
  %v201 = vld [vmem:[%s1 + $0x2a8] sm:$0xf]
  %v202 = vld [vmem:[%s1 + $0x2ac] sm:$0xf]
  %v203 = vld [vmem:[%s1 + $0x2b0] sm:$0xf]
  %v204 = vld [vmem:[%s1 + $0x2b4] sm:$0xf]
  %v205 = vld [vmem:[%s1 + $0x2b8] sm:$0xf]
  %v206 = vld [vmem:[%s1 + $0x2bc] sm:$0xf]
  %v207 = vld [vmem:[%s1 + $0x2c0] sm:$0xf]
  %v208 = vld [vmem:[%s1 + $0x2c4] sm:$0xf]
  %v209 = vld [vmem:[%s1 + $0x2c8] sm:$0xf]
  %v210 = vld [vmem:[%s1 + $0x2cc] sm:$0xf]
  %v211 = vld [vmem:[%s1 + $0x2d0] sm:$0xf]
  %v212 = vld [vmem:[%s1 + $0x2d4] sm:$0xf]
  %v213 = vld [vmem:[%s1 + $0x2d8] sm:$0xf]
  %v214 = vld [vmem:[%s1 + $0x2dc] sm:$0xf]
  %v215 = vld [vmem:[%s1 + $0x2e0] sm:$0xf]
  %v216 = vld [vmem:[%s1 + $0x2e4] sm:$0xf]
  %v217 = vld [vmem:[%s1 + $0x2e8] sm:$0xf]
  %v218 = vld [vmem:[%s1 + $0x2ec] sm:$0xf]
  %v219 = vld [vmem:[%s1 + $0x2f0] sm:$0xf]
  %v220 = vld [vmem:[%s1 + $0x2f4] sm:$0xf]
  %v221 = vld [vmem:[%s1 + $0x2f8] sm:$0xf]
  %v222 = vld [vmem:[%s1 + $0x2fc] sm:$0xf]
  %v223 = vld [vmem:[%s1 + $0x300] sm:$0xf]
  %v224 = vld [vmem:[%s1 + $0x304] sm:$0xf]
  %v225 = vld [vmem:[%s1 + $0x308] sm:$0xf]
  %v226 = vld [vmem:[%s1 + $0x30c] sm:$0xf]
  %v227 = vld [vmem:[%s1 + $0x310] sm:$0xf]
  %v228 = vld [vmem:[%s1 + $0x314] sm:$0xf]
  %v229 = vld [vmem:[%s1 + $0x318] sm:$0xf]
  %v230 = vld [vmem:[%s1 + $0x31c] sm:$0xf]
  %v231 = vld [vmem:[%s1 + $0x320] sm:$0xf]
  %v232 = vld [vmem:[%s1 + $0x324] sm:$0xf]
  %v233 = vld [vmem:[%s1 + $0x328] sm:$0xf]
  %v234 = vld [vmem:[%s1 + $0x32c] sm:$0xf]
  %v235 = vld [vmem:[%s1 + $0x330] sm:$0xf]
  %v236 = vld [vmem:[%s1 + $0x334] sm:$0xf]
  %v237 = vld [vmem:[%s1 + $0x338] sm:$0xf]
  %v238 = vld [vmem:[%s1 + $0x33c] sm:$0xf]
  %v239 = vld [vmem:[%s1 + $0x340] sm:$0xf]
  %v240 = vld [vmem:[%s1 + $0x344] sm:$0xf]
  %v241 = vld [vmem:[%s1 + $0x348] sm:$0xf]
  %v242 = vld [vmem:[%s1 + $0x34c] sm:$0xf]
  %v243 = vld [vmem:[%s1 + $0x350] sm:$0xf]
  %v244 = vld [vmem:[%s1 + $0x354] sm:$0xf]
  %v245 = vld [vmem:[%s1 + $0x358] sm:$0xf]
  %v246 = vld [vmem:[%s1 + $0x35c] sm:$0xf]
  %v247 = vld [vmem:[%s1 + $0x360] sm:$0xf]
  %v248 = vld [vmem:[%s1 + $0x364] sm:$0xf]
  %v249 = vld [vmem:[%s1 + $0x368] sm:$0xf]
  %v250 = vld [vmem:[%s1 + $0x36c] sm:$0xf]
  %v251 = vld [vmem:[%s1 + $0x370] sm:$0xf]
  %v252 = vld [vmem:[%s1 + $0x374] sm:$0xf]
  %v253 = vld [vmem:[%s1 + $0x378] sm:$0xf]
  %v254 = vld [vmem:[%s1 + $0x37c] sm:$0xf]
  %v255 = vld [vmem:[%s1 + $0x380] sm:$0xf]
  %v256 = vld [vmem:[%s1 + $0x384] sm:$0xf]
  %v257 = vld [vmem:[%s1 + $0x388] sm:$0xf]
  %v258 = vld [vmem:[%s1 + $0x38c] sm:$0xf]
  %v259 = vld [vmem:[%s1 + $0x390] sm:$0xf]
  %v260 = vld [vmem:[%s1 + $0x394] sm:$0xf]
  %v261 = vld [vmem:[%s1 + $0x398] sm:$0xf]
  %v262 = vld [vmem:[%s1 + $0x39c] sm:$0xf]
  %v263 = vld [vmem:[%s1 + $0x3a0] sm:$0xf]
  %v264 = vld [vmem:[%s1 + $0x3a4] sm:$0xf]
  %v265 = vld [vmem:[%s1 + $0x3a8] sm:$0xf]
  %v266 = vld [vmem:[%s1 + $0x3ac] sm:$0xf]
  %v267 = vld [vmem:[%s1 + $0x3b0] sm:$0xf]
  %v268 = vld [vmem:[%s1 + $0x3b4] sm:$0xf]
  %v269 = vld [vmem:[%s1 + $0x3b8] sm:$0xf]
  %v270 = vld [vmem:[%s1 + $0x3bc] sm:$0xf]
  %v271 = vld [vmem:[%s1 + $0x3c0] sm:$0xf]
  %v272 = vld [vmem:[%s1 + $0x3c4] sm:$0xf]
  %v273 = vld [vmem:[%s1 + $0x3c8] sm:$0xf]
  %v274 = vld [vmem:[%s1 + $0x3cc] sm:$0xf]
  %v275 = vld [vmem:[%s1 + $0x3d0] sm:$0xf]
  %v276 = vld [vmem:[%s1 + $0x3d4] sm:$0xf]
  %v277 = vld [vmem:[%s1 + $0x3d8] sm:$0xf]
  %v278 = vld [vmem:[%s1 + $0x3dc] sm:$0xf]
  %v279 = vld [vmem:[%s1 + $0x3e0] sm:$0xf]
  %v280 = vld [vmem:[%s1 + $0x3e4] sm:$0xf]
  %v281 = vld [vmem:[%s1 + $0x3e8] sm:$0xf]
  %v282 = vld [vmem:[%s1 + $0x3ec] sm:$0xf]
  %v283 = vld [vmem:[%s1 + $0x3f0] sm:$0xf]
  %v284 = vld [vmem:[%s1 + $0x3f4] sm:$0xf]
  %v285 = vld [vmem:[%s1 + $0x3f8] sm:$0xf]
  %v286 = vld [vmem:[%s1 + $0x3fc] sm:$0xf]
  %v287 = vld [vmem:[%s1 + $0x400] sm:$0xf]
  %v288 = vld [vmem:[%s1 + $0x404] sm:$0xf]
  %v289 = vld [vmem:[%s1 + $0x408] sm:$0xf]
  %v290 = vld [vmem:[%s1 + $0x40c] sm:$0xf]
  %v291 = vld [vmem:[%s1 + $0x410] sm:$0xf]
  %v292 = vld [vmem:[%s1 + $0x414] sm:$0xf]
  %v293 = vld [vmem:[%s1 + $0x418] sm:$0xf]
  %v294 = vld [vmem:[%s1 + $0x41c] sm:$0xf]
  %v295 = vld [vmem:[%s1 + $0x420] sm:$0xf]
  %v296 = vld [vmem:[%s1 + $0x424] sm:$0xf]
  %v297 = vld [vmem:[%s1 + $0x428] sm:$0xf]
  %v298 = vld [vmem:[%s1 + $0x42c] sm:$0xf]
  %v299 = vld [vmem:[%s1 + $0x430] sm:$0xf]
  %v300 = vld [vmem:[%s1 + $0x434] sm:$0xf]
  %v301 = vld [vmem:[%s1 + $0x438] sm:$0xf]
  %v302 = vld [vmem:[%s1 + $0x43c] sm:$0xf]
  %v303 = vld [vmem:[%s1 + $0x440] sm:$0xf]
  %v304 = vld [vmem:[%s1 + $0x444] sm:$0xf]
  %v305 = vld [vmem:[%s1 + $0x448] sm:$0xf]
  %v306 = vld [vmem:[%s1 + $0x44c] sm:$0xf]
  %v307 = vld [vmem:[%s1 + $0x450] sm:$0xf]
  %v308 = vld [vmem:[%s1 + $0x454] sm:$0xf]
  %v309 = vld [vmem:[%s1 + $0x458] sm:$0xf]
  %v310 = vld [vmem:[%s1 + $0x45c] sm:$0xf]
  %v311 = vld [vmem:[%s1 + $0x460] sm:$0xf]
  %v312 = vld [vmem:[%s1 + $0x464] sm:$0xf]
  %v313 = vld [vmem:[%s1 + $0x468] sm:$0xf]
  %v314 = vld [vmem:[%s1 + $0x46c] sm:$0xf]
  %v315 = vld [vmem:[%s1 + $0x470] sm:$0xf]
  %v316 = vld [vmem:[%s1 + $0x474] sm:$0xf]
  %v317 = vld [vmem:[%s1 + $0x478] sm:$0xf]
  %v318 = vld [vmem:[%s1 + $0x47c] sm:$0xf]
  %v319 = vld [vmem:[%s1 + $0x480] sm:$0xf]
  %v320 = vld [vmem:[%s1 + $0x484] sm:$0xf]
  %v321 = vld [vmem:[%s1 + $0x488] sm:$0xf]
  %v322 = vld [vmem:[%s1 + $0x48c] sm:$0xf]
  %v323 = vld [vmem:[%s1 + $0x490] sm:$0xf]
  %v324 = vld [vmem:[%s1 + $0x494] sm:$0xf]
  %v325 = vld [vmem:[%s1 + $0x498] sm:$0xf]
  %v326 = vld [vmem:[%s1 + $0x49c] sm:$0xf]
  %v327 = vld [vmem:[%s1 + $0x4a0] sm:$0xf]
  %v328 = vld [vmem:[%s1 + $0x4a4] sm:$0xf]
  %v329 = vld [vmem:[%s1 + $0x4a8] sm:$0xf]
  %v330 = vld [vmem:[%s1 + $0x4ac] sm:$0xf]
  %v331 = vld [vmem:[%s1 + $0x4b0] sm:$0xf]
  %v332 = vld [vmem:[%s1 + $0x4b4] sm:$0xf]
  %v333 = vld [vmem:[%s1 + $0x4b8] sm:$0xf]
  %v334 = vld [vmem:[%s1 + $0x4bc] sm:$0xf]
  %v335 = vld [vmem:[%s1 + $0x4c0] sm:$0xf]
  %v336 = vld [vmem:[%s1 + $0x4c4] sm:$0xf]
  %v337 = vld [vmem:[%s1 + $0x4c8] sm:$0xf]
  %v338 = vld [vmem:[%s1 + $0x4cc] sm:$0xf]
  %v339 = vld [vmem:[%s1 + $0x4d0] sm:$0xf]
  %v340 = vld [vmem:[%s1 + $0x4d4] sm:$0xf]
  %v341 = vld [vmem:[%s1 + $0x4d8] sm:$0xf]
  %v342 = vld [vmem:[%s1 + $0x4dc] sm:$0xf]
  %v343 = vld [vmem:[%s1 + $0x4e0] sm:$0xf]
  %v344 = vld [vmem:[%s1 + $0x4e4] sm:$0xf]
  %v345 = vld [vmem:[%s1 + $0x4e8] sm:$0xf]
  %v346 = vld [vmem:[%s1 + $0x4ec] sm:$0xf]
  %v347 = vld [vmem:[%s1 + $0x4f0] sm:$0xf]
  %v348 = vld [vmem:[%s1 + $0x4f4] sm:$0xf]
  %v349 = vld [vmem:[%s1 + $0x4f8] sm:$0xf]
  %v350 = vld [vmem:[%s1 + $0x4fc] sm:$0xf]
  %v351 = vld [vmem:[%s1 + $0x500] sm:$0xf]
  %v352 = vld [vmem:[%s1 + $0x504] sm:$0xf]
  %v353 = vld [vmem:[%s1 + $0x508] sm:$0xf]
  %v354 = vld [vmem:[%s1 + $0x50c] sm:$0xf]
  %v355 = vld [vmem:[%s1 + $0x510] sm:$0xf]
  %v356 = vld [vmem:[%s1 + $0x514] sm:$0xf]
  %v357 = vld [vmem:[%s1 + $0x518] sm:$0xf]
  %v358 = vld [vmem:[%s1 + $0x51c] sm:$0xf]
  %v359 = vld [vmem:[%s1 + $0x520] sm:$0xf]
  %v360 = vld [vmem:[%s1 + $0x524] sm:$0xf]
  %v361 = vld [vmem:[%s1 + $0x528] sm:$0xf]
  %v362 = vld [vmem:[%s1 + $0x52c] sm:$0xf]
  %v363 = vld [vmem:[%s1 + $0x530] sm:$0xf]
  %v364 = vld [vmem:[%s1 + $0x534] sm:$0xf]
  %v365 = vld [vmem:[%s1 + $0x538] sm:$0xf]
  %v366 = vld [vmem:[%s1 + $0x53c] sm:$0xf]
  %v367 = vld [vmem:[%s1 + $0x540] sm:$0xf]
  %v368 = vld [vmem:[%s1 + $0x544] sm:$0xf]
  %v369 = vld [vmem:[%s1 + $0x548] sm:$0xf]
  %v370 = vld [vmem:[%s1 + $0x54c] sm:$0xf]
  %v371 = vld [vmem:[%s1 + $0x550] sm:$0xf]
  %v372 = vld [vmem:[%s1 + $0x554] sm:$0xf]
  %v373 = vld [vmem:[%s1 + $0x558] sm:$0xf]
  %v374 = vld [vmem:[%s1 + $0x55c] sm:$0xf]
  %v375 = vld [vmem:[%s1 + $0x560] sm:$0xf]
  %v376 = vld [vmem:[%s1 + $0x564] sm:$0xf]
  %v377 = vld [vmem:[%s1 + $0x568] sm:$0xf]
  %v378 = vld [vmem:[%s1 + $0x56c] sm:$0xf]
  %v379 = vld [vmem:[%s1 + $0x570] sm:$0xf]
  %v380 = vld [vmem:[%s1 + $0x574] sm:$0xf]
  %v381 = vld [vmem:[%s1 + $0x578] sm:$0xf]
  %v382 = vld [vmem:[%s1 + $0x57c] sm:$0xf]
  %v383 = vld [vmem:[%s1 + $0x580] sm:$0xf]
  %v384 = vld [vmem:[%s1 + $0x584] sm:$0xf]
  %v385 = vld [vmem:[%s1 + $0x588] sm:$0xf]
  %v386 = vld [vmem:[%s1 + $0x58c] sm:$0xf]
  %v387 = vld [vmem:[%s1 + $0x590] sm:$0xf]
  %v388 = vld [vmem:[%s1 + $0x594] sm:$0xf]
  %v389 = vld [vmem:[%s1 + $0x598] sm:$0xf]
  %v390 = vld [vmem:[%s1 + $0x59c] sm:$0xf]
  %v391 = vld [vmem:[%s1 + $0x5a0] sm:$0xf]
  %v392 = vld [vmem:[%s1 + $0x5a4] sm:$0xf]
  %v393 = vld [vmem:[%s1 + $0x5a8] sm:$0xf]
  %v394 = vld [vmem:[%s1 + $0x5ac] sm:$0xf]
  %v395 = vld [vmem:[%s1 + $0x5b0] sm:$0xf]
  %v396 = vld [vmem:[%s1 + $0x5b4] sm:$0xf]
  %v397 = vld [vmem:[%s1 + $0x5b8] sm:$0xf]
  %v398 = vld [vmem:[%s1 + $0x5bc] sm:$0xf]
  %v399 = vld [vmem:[%s1 + $0x5c0] sm:$0xf]
  %v400 = vld [vmem:[%s1 + $0x5c4] sm:$0xf]
  %v401 = vld [vmem:[%s1 + $0x5c8] sm:$0xf]
  %v402 = vld [vmem:[%s1 + $0x5cc] sm:$0xf]
  %v403 = vld [vmem:[%s1 + $0x5d0] sm:$0xf]
  %v404 = vld [vmem:[%s1 + $0x5d4] sm:$0xf]
  %v405 = vld [vmem:[%s1 + $0x5d8] sm:$0xf]
  %v406 = vld [vmem:[%s1 + $0x5dc] sm:$0xf]
  %v407 = vld [vmem:[%s1 + $0x5e0] sm:$0xf]
  %v408 = vld [vmem:[%s1 + $0x5e4] sm:$0xf]
  %v409 = vld [vmem:[%s1 + $0x5e8] sm:$0xf]
  %v410 = vld [vmem:[%s1 + $0x5ec] sm:$0xf]
  %v411 = vld [vmem:[%s1 + $0x5f0] sm:$0xf]
  %v412 = vld [vmem:[%s1 + $0x5f4] sm:$0xf]
  %v413 = vld [vmem:[%s1 + $0x5f8] sm:$0xf]
  %v414 = vld [vmem:[%s1 + $0x5fc] sm:$0xf]
  %v415 = vld [vmem:[%s1 + $0x600] sm:$0xf]
  %v416 = vld [vmem:[%s1 + $0x604] sm:$0xf]
  %v417 = vld [vmem:[%s1 + $0x608] sm:$0xf]
  %v418 = vld [vmem:[%s1 + $0x60c] sm:$0xf]
  %v419 = vld [vmem:[%s1 + $0x610] sm:$0xf]
  %v420 = vld [vmem:[%s1 + $0x614] sm:$0xf]
  %v421 = vld [vmem:[%s1 + $0x618] sm:$0xf]
  %v422 = vld [vmem:[%s1 + $0x61c] sm:$0xf]
  %v423 = vld [vmem:[%s1 + $0x620] sm:$0xf]
  %v424 = vld [vmem:[%s1 + $0x624] sm:$0xf]
  %v425 = vld [vmem:[%s1 + $0x628] sm:$0xf]
  %v426 = vld [vmem:[%s1 + $0x62c] sm:$0xf]
  %v427 = vld [vmem:[%s1 + $0x630] sm:$0xf]
  %v428 = vld [vmem:[%s1 + $0x634] sm:$0xf]
  %v429 = vld [vmem:[%s1 + $0x638] sm:$0xf]
  %v430 = vld [vmem:[%s1 + $0x63c] sm:$0xf]
  %v431 = vld [vmem:[%s1 + $0x640] sm:$0xf]
  %v432 = vld [vmem:[%s1 + $0x644] sm:$0xf]
  %v433 = vld [vmem:[%s1 + $0x648] sm:$0xf]
  %v434 = vld [vmem:[%s1 + $0x64c] sm:$0xf]
  %v435 = vld [vmem:[%s1 + $0x650] sm:$0xf]
  %v436 = vld [vmem:[%s1 + $0x654] sm:$0xf]
  %v437 = vld [vmem:[%s1 + $0x658] sm:$0xf]
  %v438 = vld [vmem:[%s1 + $0x65c] sm:$0xf]
  %v439 = vld [vmem:[%s1 + $0x660] sm:$0xf]
  %v440 = vld [vmem:[%s1 + $0x664] sm:$0xf]
  %v441 = vld [vmem:[%s1 + $0x668] sm:$0xf]
  %v442 = vld [vmem:[%s1 + $0x66c] sm:$0xf]
  %v443 = vld [vmem:[%s1 + $0x670] sm:$0xf]
  %v444 = vld [vmem:[%s1 + $0x674] sm:$0xf]
  %v445 = vld [vmem:[%s1 + $0x678] sm:$0xf]
  %v446 = vld [vmem:[%s1 + $0x67c] sm:$0xf]
  %v447 = vld [vmem:[%s1 + $0x680] sm:$0xf]
  %v448 = vld [vmem:[%s1 + $0x684] sm:$0xf]
  %v449 = vld [vmem:[%s1 + $0x688] sm:$0xf]
  %v450 = vld [vmem:[%s1 + $0x68c] sm:$0xf]
  %v451 = vld [vmem:[%s1 + $0x690] sm:$0xf]
  %v452 = vld [vmem:[%s1 + $0x694] sm:$0xf]
  %v453 = vld [vmem:[%s1 + $0x698] sm:$0xf]
  %v454 = vld [vmem:[%s1 + $0x69c] sm:$0xf]
  %v455 = vld [vmem:[%s1 + $0x6a0] sm:$0xf]
  %v456 = vld [vmem:[%s1 + $0x6a4] sm:$0xf]
  %v457 = vld [vmem:[%s1 + $0x6a8] sm:$0xf]
  %v458 = vld [vmem:[%s1 + $0x6ac] sm:$0xf]
  %v459 = vld [vmem:[%s1 + $0x6b0] sm:$0xf]
  %v460 = vld [vmem:[%s1 + $0x6b4] sm:$0xf]
  %v461 = vld [vmem:[%s1 + $0x6b8] sm:$0xf]
  %v462 = vld [vmem:[%s1 + $0x6bc] sm:$0xf]
  %v463 = vld [vmem:[%s1 + $0x6c0] sm:$0xf]
  %v464 = vld [vmem:[%s1 + $0x6c4] sm:$0xf]
  %v465 = vld [vmem:[%s1 + $0x6c8] sm:$0xf]
  %v466 = vld [vmem:[%s1 + $0x6cc] sm:$0xf]
  %v467 = vld [vmem:[%s1 + $0x6d0] sm:$0xf]
  %v468 = vld [vmem:[%s1 + $0x6d4] sm:$0xf]
  %v469 = vld [vmem:[%s1 + $0x6d8] sm:$0xf]
  %v470 = vld [vmem:[%s1 + $0x6dc] sm:$0xf]
  %v471 = vld [vmem:[%s1 + $0x6e0] sm:$0xf]
  %v472 = vld [vmem:[%s1 + $0x6e4] sm:$0xf]
  %v473 = vld [vmem:[%s1 + $0x6e8] sm:$0xf]
  %v474 = vld [vmem:[%s1 + $0x6ec] sm:$0xf]
  %v475 = vld [vmem:[%s1 + $0x6f0] sm:$0xf]
  %v476 = vld [vmem:[%s1 + $0x6f4] sm:$0xf]
  %v477 = vld [vmem:[%s1 + $0x6f8] sm:$0xf]
  %v478 = vld [vmem:[%s1 + $0x6fc] sm:$0xf]
  %v479 = vld [vmem:[%s1 + $0x700] sm:$0xf]
  %v480 = vld [vmem:[%s1 + $0x704] sm:$0xf]
  %v481 = vld [vmem:[%s1 + $0x708] sm:$0xf]
  %v482 = vld [vmem:[%s1 + $0x70c] sm:$0xf]
  %v483 = vld [vmem:[%s1 + $0x710] sm:$0xf]
  %v484 = vld [vmem:[%s1 + $0x714] sm:$0xf]
  %v485 = vld [vmem:[%s1 + $0x718] sm:$0xf]
  %v486 = vld [vmem:[%s1 + $0x71c] sm:$0xf]
  %v487 = vld [vmem:[%s1 + $0x720] sm:$0xf]
  %v488 = vld [vmem:[%s1 + $0x724] sm:$0xf]
  %v489 = vld [vmem:[%s1 + $0x728] sm:$0xf]
  %v490 = vld [vmem:[%s1 + $0x72c] sm:$0xf]
  %v491 = vld [vmem:[%s1 + $0x730] sm:$0xf]
  %v492 = vld [vmem:[%s1 + $0x734] sm:$0xf]
  %v493 = vld [vmem:[%s1 + $0x738] sm:$0xf]
  %v494 = vld [vmem:[%s1 + $0x73c] sm:$0xf]
  %v495 = vld [vmem:[%s1 + $0x740] sm:$0xf]
  %v496 = vld [vmem:[%s1 + $0x744] sm:$0xf]
  %v497 = vld [vmem:[%s1 + $0x748] sm:$0xf]
  %v498 = vld [vmem:[%s1 + $0x74c] sm:$0xf]
  %v499 = vld [vmem:[%s1 + $0x750] sm:$0xf]
  %v500 = vld [vmem:[%s1 + $0x754] sm:$0xf]
  %v501 = vld [vmem:[%s1 + $0x758] sm:$0xf]
  %v502 = vld [vmem:[%s1 + $0x75c] sm:$0xf]
  %v503 = vld [vmem:[%s1 + $0x760] sm:$0xf]
  %v504 = vld [vmem:[%s1 + $0x764] sm:$0xf]
  %v505 = vld [vmem:[%s1 + $0x768] sm:$0xf]
  %v506 = vld [vmem:[%s1 + $0x76c] sm:$0xf]
  %v507 = vld [vmem:[%s1 + $0x770] sm:$0xf]
  %v508 = vld [vmem:[%s1 + $0x774] sm:$0xf]
  %v509 = vld [vmem:[%s1 + $0x778] sm:$0xf]
  %v510 = vld [vmem:[%s1 + $0x77c] sm:$0xf]
  %v511 = vld [vmem:[%s1 + $0x780] sm:$0xf]
  %v512 = vld [vmem:[%s1 + $0x784] sm:$0xf]
  %v513 = vld [vmem:[%s1 + $0x788] sm:$0xf]
  %v514 = vld [vmem:[%s1 + $0x78c] sm:$0xf]
  %v515 = vld [vmem:[%s1 + $0x790] sm:$0xf]
  %v516 = vld [vmem:[%s1 + $0x794] sm:$0xf]
  %v517 = vld [vmem:[%s1 + $0x798] sm:$0xf]
  %v518 = vld [vmem:[%s1 + $0x79c] sm:$0xf]
  %v519 = vld [vmem:[%s1 + $0x7a0] sm:$0xf]
  %v520 = vld [vmem:[%s1 + $0x7a4] sm:$0xf]
  %v521 = vld [vmem:[%s1 + $0x7a8] sm:$0xf]
  %v522 = vld [vmem:[%s1 + $0x7ac] sm:$0xf]
  %v523 = vld [vmem:[%s1 + $0x7b0] sm:$0xf]
  %v524 = vld [vmem:[%s1 + $0x7b4] sm:$0xf]
  %v525 = vld [vmem:[%s1 + $0x7b8] sm:$0xf]
  %v526 = vld [vmem:[%s1 + $0x7bc] sm:$0xf]
  %v527 = vld [vmem:[%s1 + $0x7c0] sm:$0xf]
  %v528 = vld [vmem:[%s1 + $0x7c4] sm:$0xf]
  %v529 = vld [vmem:[%s1 + $0x7c8] sm:$0xf]
  %v530 = vld [vmem:[%s1 + $0x7cc] sm:$0xf]
  %v531 = vld [vmem:[%s1 + $0x7d0] sm:$0xf]
  %v532 = vld [vmem:[%s1 + $0x7d4] sm:$0xf]
  %v533 = vld [vmem:[%s1 + $0x7d8] sm:$0xf]
  %v534 = vld [vmem:[%s1 + $0x7dc] sm:$0xf]
  %v535 = vld [vmem:[%s1 + $0x7e0] sm:$0xf]
  %v536 = vld [vmem:[%s1 + $0x7e4] sm:$0xf]
  %v537 = vld [vmem:[%s1 + $0x7e8] sm:$0xf]
  %v538 = vld [vmem:[%s1 + $0x7ec] sm:$0xf]
  %v539 = vld [vmem:[%s1 + $0x7f0] sm:$0xf]
  %v540 = vld [vmem:[%s1 + $0x7f4] sm:$0xf]
  %v541 = vld [vmem:[%s1 + $0x7f8] sm:$0xf]
  %v542 = vld [vmem:[%s1 + $0x7fc] sm:$0xf]
  %v543 = vld [vmem:[%s1 + $0x800] sm:$0xf]
  %v544 = vld [vmem:[%s1 + $0x804] sm:$0xf]
  %v545 = vld [vmem:[%s1 + $0x808] sm:$0xf]
  %v546 = vld [vmem:[%s1 + $0x80c] sm:$0xf]
  %v547 = vld [vmem:[%s1 + $0x810] sm:$0xf]
  %v548 = vld [vmem:[%s1 + $0x814] sm:$0xf]
  %v549 = vld [vmem:[%s1 + $0x818] sm:$0xf]
  %v550 = vld [vmem:[%s1 + $0x81c] sm:$0xf]
  %v551 = vld [vmem:[%s1 + $0x820] sm:$0xf]
  %v552 = vld [vmem:[%s1 + $0x824] sm:$0xf]
  %v553 = vld [vmem:[%s1 + $0x828] sm:$0xf]
  %v554 = vld [vmem:[%s1 + $0x82c] sm:$0xf]
  %v555 = vld [vmem:[%s1 + $0x830] sm:$0xf]
  %v556 = vld [vmem:[%s1 + $0x834] sm:$0xf]
  %v557 = vld [vmem:[%s1 + $0x838] sm:$0xf]
  %v558 = vld [vmem:[%s1 + $0x83c] sm:$0xf]
  %v559 = vld [vmem:[%s1 + $0x840] sm:$0xf]
  %v560 = vld [vmem:[%s1 + $0x844] sm:$0xf]
  %v561 = vld [vmem:[%s1 + $0x848] sm:$0xf]
  %v562 = vld [vmem:[%s1 + $0x84c] sm:$0xf]
  %v563 = vld [vmem:[%s1 + $0x850] sm:$0xf]
  %v564 = vld [vmem:[%s1 + $0x854] sm:$0xf]
  %v565 = vld [vmem:[%s1 + $0x858] sm:$0xf]
  %v566 = vld [vmem:[%s1 + $0x85c] sm:$0xf]
  %v567 = vld [vmem:[%s1 + $0x860] sm:$0xf]
  %v568 = vld [vmem:[%s1 + $0x864] sm:$0xf]
  %v569 = vld [vmem:[%s1 + $0x868] sm:$0xf]
  %v570 = vld [vmem:[%s1 + $0x86c] sm:$0xf]
  %v571 = vld [vmem:[%s1 + $0x870] sm:$0xf]
  %v572 = vld [vmem:[%s1 + $0x874] sm:$0xf]
  %v573 = vld [vmem:[%s1 + $0x878] sm:$0xf]
  %v574 = vld [vmem:[%s1 + $0x87c] sm:$0xf]
  %v575 = vld [vmem:[%s1 + $0x880] sm:$0xf]
  %v576 = vld [vmem:[%s1 + $0x884] sm:$0xf]
  %v577 = vld [vmem:[%s1 + $0x888] sm:$0xf]
  %v578 = vld [vmem:[%s1 + $0x88c] sm:$0xf]
  %v579 = vld [vmem:[%s1 + $0x890] sm:$0xf]
  %v580 = vld [vmem:[%s1 + $0x894] sm:$0xf]
  %v581 = vld [vmem:[%s1 + $0x898] sm:$0xf]
  %v582 = vld [vmem:[%s1 + $0x89c] sm:$0xf]
  %v583 = vld [vmem:[%s1 + $0x8a0] sm:$0xf]
  %v584 = vld [vmem:[%s1 + $0x8a4] sm:$0xf]
  %v585 = vld [vmem:[%s1 + $0x8a8] sm:$0xf]
  %v586 = vld [vmem:[%s1 + $0x8ac] sm:$0xf]
  %v587 = vld [vmem:[%s1 + $0x8b0] sm:$0xf]
  %v588 = vld [vmem:[%s1 + $0x8b4] sm:$0xf]
  %v589 = vld [vmem:[%s1 + $0x8b8] sm:$0xf]
  %v590 = vld [vmem:[%s1 + $0x8bc] sm:$0xf]
  %v591 = vld [vmem:[%s1 + $0x8c0] sm:$0xf]
  %v592 = vld [vmem:[%s1 + $0x8c4] sm:$0xf]
  %v593 = vld [vmem:[%s1 + $0x8c8] sm:$0xf]
  %v594 = vld [vmem:[%s1 + $0x8cc] sm:$0xf]
  %v595 = vld [vmem:[%s1 + $0x8d0] sm:$0xf]
  %v596 = vld [vmem:[%s1 + $0x8d4] sm:$0xf]
  %v597 = vld [vmem:[%s1 + $0x8d8] sm:$0xf]
  %v598 = vld [vmem:[%s1 + $0x8dc] sm:$0xf]
  %v599 = vld [vmem:[%s1 + $0x8e0] sm:$0xf]
  %v600 = vld [vmem:[%s1 + $0x8e4] sm:$0xf]
  %v601 = vld [vmem:[%s1 + $0x8e8] sm:$0xf]
  %v602 = vld [vmem:[%s1 + $0x8ec] sm:$0xf]
  %v603 = vld [vmem:[%s1 + $0x8f0] sm:$0xf]
  %v604 = vld [vmem:[%s1 + $0x8f4] sm:$0xf]
  %v605 = vld [vmem:[%s1 + $0x8f8] sm:$0xf]
  %v606 = vld [vmem:[%s1 + $0x8fc] sm:$0xf]
  %v607 = vld [vmem:[%s1 + $0x900] sm:$0xf]
  %v608 = vld [vmem:[%s1 + $0x904] sm:$0xf]
  %v609 = vld [vmem:[%s1 + $0x908] sm:$0xf]
  %v610 = vld [vmem:[%s1 + $0x90c] sm:$0xf]
  %v611 = vld [vmem:[%s1 + $0x910] sm:$0xf]
  %v612 = vld [vmem:[%s1 + $0x914] sm:$0xf]
  %v613 = vld [vmem:[%s1 + $0x918] sm:$0xf]
  %v614 = vld [vmem:[%s1 + $0x91c] sm:$0xf]
  %v615 = vld [vmem:[%s1 + $0x920] sm:$0xf]
  %v616 = vld [vmem:[%s1 + $0x924] sm:$0xf]
  %v617 = vld [vmem:[%s1 + $0x928] sm:$0xf]
  %v618 = vld [vmem:[%s1 + $0x92c] sm:$0xf]
  %v619 = vld [vmem:[%s1 + $0x930] sm:$0xf]
  %v620 = vld [vmem:[%s1 + $0x934] sm:$0xf]
  %v621 = vld [vmem:[%s1 + $0x938] sm:$0xf]
  %v622 = vld [vmem:[%s1 + $0x93c] sm:$0xf]
  %v623 = vld [vmem:[%s1 + $0x940] sm:$0xf]
  %v624 = vld [vmem:[%s1 + $0x944] sm:$0xf]
  %v625 = vld [vmem:[%s1 + $0x948] sm:$0xf]
  %v626 = vld [vmem:[%s1 + $0x94c] sm:$0xf]
  %v627 = vld [vmem:[%s1 + $0x950] sm:$0xf]
  %v628 = vld [vmem:[%s1 + $0x954] sm:$0xf]
  %v629 = vld [vmem:[%s1 + $0x958] sm:$0xf]
  %v630 = vld [vmem:[%s1 + $0x95c] sm:$0xf]
  %v631 = vld [vmem:[%s1 + $0x960] sm:$0xf]
  %v632 = vld [vmem:[%s1 + $0x964] sm:$0xf]
  %v633 = vld [vmem:[%s1 + $0x968] sm:$0xf]
  %v634 = vld [vmem:[%s1 + $0x96c] sm:$0xf]
  %v635 = vld [vmem:[%s1 + $0x970] sm:$0xf]
  %v636 = vld [vmem:[%s1 + $0x974] sm:$0xf]
  %v637 = vld [vmem:[%s1 + $0x978] sm:$0xf]
  %v638 = vld [vmem:[%s1 + $0x97c] sm:$0xf]
  %v639 = vld [vmem:[%s1 + $0x980] sm:$0xf]
  %v640 = vld [vmem:[%s1 + $0x984] sm:$0xf]
  %v641 = vld [vmem:[%s1 + $0x988] sm:$0xf]
  %v642 = vld [vmem:[%s1 + $0x98c] sm:$0xf]
  %v643 = vld [vmem:[%s1 + $0x990] sm:$0xf]
  %v644 = vld [vmem:[%s1 + $0x994] sm:$0xf]
  %v645 = vld [vmem:[%s1 + $0x998] sm:$0xf]
  %v646 = vld [vmem:[%s1 + $0x99c] sm:$0xf]
  %v647 = vld [vmem:[%s1 + $0x9a0] sm:$0xf]
  %v648 = vld [vmem:[%s1 + $0x9a4] sm:$0xf]
  %v649 = vld [vmem:[%s1 + $0x9a8] sm:$0xf]
  %v650 = vld [vmem:[%s1 + $0x9ac] sm:$0xf]
  %v651 = vld [vmem:[%s1 + $0x9b0] sm:$0xf]
  %v652 = vld [vmem:[%s1 + $0x9b4] sm:$0xf]
  %v653 = vld [vmem:[%s1 + $0x9b8] sm:$0xf]
  %v654 = vld [vmem:[%s1 + $0x9bc] sm:$0xf]
  %v655 = vld [vmem:[%s1 + $0x9c0] sm:$0xf]
  %v656 = vld [vmem:[%s1 + $0x9c4] sm:$0xf]
  %v657 = vld [vmem:[%s1 + $0x9c8] sm:$0xf]
  %v658 = vld [vmem:[%s1 + $0x9cc] sm:$0xf]
  %v659 = vld [vmem:[%s1 + $0x9d0] sm:$0xf]
  %v660 = vld [vmem:[%s1 + $0x9d4] sm:$0xf]
  %v661 = vld [vmem:[%s1 + $0x9d8] sm:$0xf]
  %v662 = vld [vmem:[%s1 + $0x9dc] sm:$0xf]
  %v663 = vld [vmem:[%s1 + $0x9e0] sm:$0xf]
  %v664 = vld [vmem:[%s1 + $0x9e4] sm:$0xf]
  %v665 = vld [vmem:[%s1 + $0x9e8] sm:$0xf]
  %v666 = vld [vmem:[%s1 + $0x9ec] sm:$0xf]
  %v667 = vld [vmem:[%s1 + $0x9f0] sm:$0xf]
  %v668 = vld [vmem:[%s1 + $0x9f4] sm:$0xf]
  %v669 = vld [vmem:[%s1 + $0x9f8] sm:$0xf]
  %v670 = vld [vmem:[%s1 + $0x9fc] sm:$0xf]
  %v671 = vld [vmem:[%s1 + $0xa00] sm:$0xf]
  %v672 = vld [vmem:[%s1 + $0xa04] sm:$0xf]
  %v673 = vld [vmem:[%s1 + $0xa08] sm:$0xf]
  %v674 = vld [vmem:[%s1 + $0xa0c] sm:$0xf]
  %v675 = vld [vmem:[%s1 + $0xa10] sm:$0xf]
  %v676 = vld [vmem:[%s1 + $0xa14] sm:$0xf]
  %v677 = vld [vmem:[%s1 + $0xa18] sm:$0xf]
  %v678 = vld [vmem:[%s1 + $0xa1c] sm:$0xf]
  %v679 = vld [vmem:[%s1 + $0xa20] sm:$0xf]
  %v680 = vld [vmem:[%s1 + $0xa24] sm:$0xf]
  %v681 = vld [vmem:[%s1 + $0xa28] sm:$0xf]
  %v682 = vld [vmem:[%s1 + $0xa2c] sm:$0xf]
  %v683 = vld [vmem:[%s1 + $0xa30] sm:$0xf]
  %v684 = vld [vmem:[%s1 + $0xa34] sm:$0xf]
  %v685 = vld [vmem:[%s1 + $0xa38] sm:$0xf]
  %v686 = vld [vmem:[%s1 + $0xa3c] sm:$0xf]
  %v687 = vld [vmem:[%s1 + $0xa40] sm:$0xf]
  %v688 = vld [vmem:[%s1 + $0xa44] sm:$0xf]
  %v689 = vld [vmem:[%s1 + $0xa48] sm:$0xf]
  %v690 = vld [vmem:[%s1 + $0xa4c] sm:$0xf]
  %v691 = vld [vmem:[%s1 + $0xa50] sm:$0xf]
  %v692 = vld [vmem:[%s1 + $0xa54] sm:$0xf]
  %v693 = vld [vmem:[%s1 + $0xa58] sm:$0xf]
  %v694 = vld [vmem:[%s1 + $0xa5c] sm:$0xf]
  %v695 = vld [vmem:[%s1 + $0xa60] sm:$0xf]
  %v696 = vld [vmem:[%s1 + $0xa64] sm:$0xf]
  %v697 = vld [vmem:[%s1 + $0xa68] sm:$0xf]
  %v698 = vld [vmem:[%s1 + $0xa6c] sm:$0xf]
  %v699 = vld [vmem:[%s1 + $0xa70] sm:$0xf]
  %v700 = vld [vmem:[%s1 + $0xa74] sm:$0xf]
  %v701 = vld [vmem:[%s1 + $0xa78] sm:$0xf]
  %v702 = vld [vmem:[%s1 + $0xa7c] sm:$0xf]
  %v703 = vld [vmem:[%s1 + $0xa80] sm:$0xf]
  %v704 = vld [vmem:[%s1 + $0xa84] sm:$0xf]
  %v705 = vld [vmem:[%s1 + $0xa88] sm:$0xf]
  %v706 = vld [vmem:[%s1 + $0xa8c] sm:$0xf]
  %v707 = vld [vmem:[%s1 + $0xa90] sm:$0xf]
  %v708 = vld [vmem:[%s1 + $0xa94] sm:$0xf]
  %v709 = vld [vmem:[%s1 + $0xa98] sm:$0xf]
  %v710 = vld [vmem:[%s1 + $0xa9c] sm:$0xf]
  %v711 = vld [vmem:[%s1 + $0xaa0] sm:$0xf]
  %v712 = vld [vmem:[%s1 + $0xaa4] sm:$0xf]
  %v713 = vld [vmem:[%s1 + $0xaa8] sm:$0xf]
  %v714 = vld [vmem:[%s1 + $0xaac] sm:$0xf]
  %v715 = vld [vmem:[%s1 + $0xab0] sm:$0xf]
  %v716 = vld [vmem:[%s1 + $0xab4] sm:$0xf]
  %v717 = vld [vmem:[%s1 + $0xab8] sm:$0xf]
  %v718 = vld [vmem:[%s1 + $0xabc] sm:$0xf]
  %v719 = vld [vmem:[%s1 + $0xac0] sm:$0xf]
  %v720 = vld [vmem:[%s1 + $0xac4] sm:$0xf]
  %v721 = vld [vmem:[%s1 + $0xac8] sm:$0xf]
  %v722 = vld [vmem:[%s1 + $0xacc] sm:$0xf]
  %v723 = vld [vmem:[%s1 + $0xad0] sm:$0xf]
  %v724 = vld [vmem:[%s1 + $0xad4] sm:$0xf]
  %v725 = vld [vmem:[%s1 + $0xad8] sm:$0xf]
  %v726 = vld [vmem:[%s1 + $0xadc] sm:$0xf]
  %v727 = vld [vmem:[%s1 + $0xae0] sm:$0xf]
  %v728 = vld [vmem:[%s1 + $0xae4] sm:$0xf]
  %v729 = vld [vmem:[%s1 + $0xae8] sm:$0xf]
  %v730 = vld [vmem:[%s1 + $0xaec] sm:$0xf]
  %v731 = vld [vmem:[%s1 + $0xaf0] sm:$0xf]
  %v732 = vld [vmem:[%s1 + $0xaf4] sm:$0xf]
  %v733 = vld [vmem:[%s1 + $0xaf8] sm:$0xf]
  %v734 = vld [vmem:[%s1 + $0xafc] sm:$0xf]
  %v735 = vld [vmem:[%s1 + $0xb00] sm:$0xf]
  %v736 = vld [vmem:[%s1 + $0xb04] sm:$0xf]
  %v737 = vld [vmem:[%s1 + $0xb08] sm:$0xf]
  %v738 = vld [vmem:[%s1 + $0xb0c] sm:$0xf]
  %v739 = vld [vmem:[%s1 + $0xb10] sm:$0xf]
  %v740 = vld [vmem:[%s1 + $0xb14] sm:$0xf]
  %v741 = vld [vmem:[%s1 + $0xb18] sm:$0xf]
  %v742 = vld [vmem:[%s1 + $0xb1c] sm:$0xf]
  %v743 = vld [vmem:[%s1 + $0xb20] sm:$0xf]
  %v744 = vld [vmem:[%s1 + $0xb24] sm:$0xf]
  %v745 = vld [vmem:[%s1 + $0xb28] sm:$0xf]
  %v746 = vld [vmem:[%s1 + $0xb2c] sm:$0xf]
  %v747 = vld [vmem:[%s1 + $0xb30] sm:$0xf]
  %v748 = vld [vmem:[%s1 + $0xb34] sm:$0xf]
  %v749 = vld [vmem:[%s1 + $0xb38] sm:$0xf]
  %v750 = vld [vmem:[%s1 + $0xb3c] sm:$0xf]
  %v751 = vld [vmem:[%s1 + $0xb40] sm:$0xf]
  %v752 = vld [vmem:[%s1 + $0xb44] sm:$0xf]
  %v753 = vld [vmem:[%s1 + $0xb48] sm:$0xf]
  %v754 = vld [vmem:[%s1 + $0xb4c] sm:$0xf]
  %v755 = vld [vmem:[%s1 + $0xb50] sm:$0xf]
  %v756 = vld [vmem:[%s1 + $0xb54] sm:$0xf]
  %v757 = vld [vmem:[%s1 + $0xb58] sm:$0xf]
  %v758 = vld [vmem:[%s1 + $0xb5c] sm:$0xf]
  %v759 = vld [vmem:[%s1 + $0xb60] sm:$0xf]
  %v760 = vld [vmem:[%s1 + $0xb64] sm:$0xf]
  %v761 = vld [vmem:[%s1 + $0xb68] sm:$0xf]
  %v762 = vld [vmem:[%s1 + $0xb6c] sm:$0xf]
  %v763 = vld [vmem:[%s1 + $0xb70] sm:$0xf]
  %v764 = vld [vmem:[%s1 + $0xb74] sm:$0xf]
  %v765 = vld [vmem:[%s1 + $0xb78] sm:$0xf]
  %v766 = vld [vmem:[%s1 + $0xb7c] sm:$0xf]
  %v767 = vld [vmem:[%s1 + $0xb80] sm:$0xf]
  %v768 = vld [vmem:[%s1 + $0xb84] sm:$0xf]
  %v769 = vld [vmem:[%s1 + $0xb88] sm:$0xf]
  %v770 = vld [vmem:[%s1 + $0xb8c] sm:$0xf]
  %v771 = vld [vmem:[%s1 + $0xb90] sm:$0xf]
  %v772 = vld [vmem:[%s1 + $0xb94] sm:$0xf]
  %v773 = vld [vmem:[%s1 + $0xb98] sm:$0xf]
  %v774 = vld [vmem:[%s1 + $0xb9c] sm:$0xf]
  %v775 = vld [vmem:[%s1 + $0xba0] sm:$0xf]
  %v776 = vld [vmem:[%s1 + $0xba4] sm:$0xf]
  %v777 = vld [vmem:[%s1 + $0xba8] sm:$0xf]
  %v778 = vld [vmem:[%s1 + $0xbac] sm:$0xf]
  %v779 = vld [vmem:[%s1 + $0xbb0] sm:$0xf]
  %v780 = vld [vmem:[%s1 + $0xbb4] sm:$0xf]
  %v781 = vld [vmem:[%s1 + $0xbb8] sm:$0xf]
  %v782 = vld [vmem:[%s1 + $0xbbc] sm:$0xf]
  %v783 = vld [vmem:[%s1 + $0xbc0] sm:$0xf]
  %v784 = vld [vmem:[%s1 + $0xbc4] sm:$0xf]
  %v785 = vld [vmem:[%s1 + $0xbc8] sm:$0xf]
  %v786 = vld [vmem:[%s1 + $0xbcc] sm:$0xf]
  %v787 = vld [vmem:[%s1 + $0xbd0] sm:$0xf]
  %v788 = vld [vmem:[%s1 + $0xbd4] sm:$0xf]
  %v789 = vld [vmem:[%s1 + $0xbd8] sm:$0xf]
  %v790 = vld [vmem:[%s1 + $0xbdc] sm:$0xf]
  %v791 = vld [vmem:[%s1 + $0xbe0] sm:$0xf]
  %v792 = vld [vmem:[%s1 + $0xbe4] sm:$0xf]
  %v793 = vld [vmem:[%s1 + $0xbe8] sm:$0xf]
  %v794 = vld [vmem:[%s1 + $0xbec] sm:$0xf]
  %v795 = vld [vmem:[%s1 + $0xbf0] sm:$0xf]
  %v796 = vld [vmem:[%s1 + $0xbf4] sm:$0xf]
  %v797 = vld [vmem:[%s1 + $0xbf8] sm:$0xf]
  %v798 = vld [vmem:[%s1 + $0xbfc] sm:$0xf]
  %v799 = vld [vmem:[%s1 + $0xc00] sm:$0xf]
  %v800 = vld [vmem:[%s1 + $0xc04] sm:$0xf]
  %v801 = vld [vmem:[%s1 + $0xc08] sm:$0xf]
  %v802 = vld [vmem:[%s1 + $0xc0c] sm:$0xf]
  %v803 = vld [vmem:[%s1 + $0xc10] sm:$0xf]
  %v804 = vld [vmem:[%s1 + $0xc14] sm:$0xf]
  %v805 = vld [vmem:[%s1 + $0xc18] sm:$0xf]
  %v806 = vld [vmem:[%s1 + $0xc1c] sm:$0xf]
  %v807 = vld [vmem:[%s1 + $0xc20] sm:$0xf]
  %v808 = vld [vmem:[%s1 + $0xc24] sm:$0xf]
  %v809 = vld [vmem:[%s1 + $0xc28] sm:$0xf]
  %v810 = vld [vmem:[%s1 + $0xc2c] sm:$0xf]
  %v811 = vld [vmem:[%s1 + $0xc30] sm:$0xf]
  %v812 = vld [vmem:[%s1 + $0xc34] sm:$0xf]
  %v813 = vld [vmem:[%s1 + $0xc38] sm:$0xf]
  %v814 = vld [vmem:[%s1 + $0xc3c] sm:$0xf]
  %v815 = vld [vmem:[%s1 + $0xc40] sm:$0xf]
  %v816 = vld [vmem:[%s1 + $0xc44] sm:$0xf]
  %v817 = vld [vmem:[%s1 + $0xc48] sm:$0xf]
  %v818 = vld [vmem:[%s1 + $0xc4c] sm:$0xf]
  %v819 = vld [vmem:[%s1 + $0xc50] sm:$0xf]
  %v820 = vld [vmem:[%s1 + $0xc54] sm:$0xf]
  %v821 = vld [vmem:[%s1 + $0xc58] sm:$0xf]
  %v822 = vld [vmem:[%s1 + $0xc5c] sm:$0xf]
  %v823 = vld [vmem:[%s1 + $0xc60] sm:$0xf]
  %v824 = vld [vmem:[%s1 + $0xc64] sm:$0xf]
  %v825 = vld [vmem:[%s1 + $0xc68] sm:$0xf]
  %v826 = vld [vmem:[%s1 + $0xc6c] sm:$0xf]
  %v827 = vld [vmem:[%s1 + $0xc70] sm:$0xf]
  %v828 = vld [vmem:[%s1 + $0xc74] sm:$0xf]
  %v829 = vld [vmem:[%s1 + $0xc78] sm:$0xf]
  %v830 = vld [vmem:[%s1 + $0xc7c] sm:$0xf]
  %v831 = vld [vmem:[%s1 + $0xc80] sm:$0xf]
  %v832 = vld [vmem:[%s1 + $0xc84] sm:$0xf]
  %v833 = vld [vmem:[%s1 + $0xc88] sm:$0xf]
  %v834 = vld [vmem:[%s1 + $0xc8c] sm:$0xf]
  %v835 = vld [vmem:[%s1 + $0xc90] sm:$0xf]
  %v836 = vld [vmem:[%s1 + $0xc94] sm:$0xf]
  %v837 = vld [vmem:[%s1 + $0xc98] sm:$0xf]
  %v838 = vld [vmem:[%s1 + $0xc9c] sm:$0xf]
  %v839 = vld [vmem:[%s1 + $0xca0] sm:$0xf]
  %v840 = vld [vmem:[%s1 + $0xca4] sm:$0xf]
  %v841 = vld [vmem:[%s1 + $0xca8] sm:$0xf]
  %v842 = vld [vmem:[%s1 + $0xcac] sm:$0xf]
  %v843 = vld [vmem:[%s1 + $0xcb0] sm:$0xf]
  %v844 = vld [vmem:[%s1 + $0xcb4] sm:$0xf]
  %v845 = vld [vmem:[%s1 + $0xcb8] sm:$0xf]
  %v846 = vld [vmem:[%s1 + $0xcbc] sm:$0xf]
  %v847 = vld [vmem:[%s1 + $0xcc0] sm:$0xf]
  %v848 = vld [vmem:[%s1 + $0xcc4] sm:$0xf]
  %v849 = vld [vmem:[%s1 + $0xcc8] sm:$0xf]
  %v850 = vld [vmem:[%s1 + $0xccc] sm:$0xf]
  %v851 = vld [vmem:[%s1 + $0xcd0] sm:$0xf]
  %v852 = vld [vmem:[%s1 + $0xcd4] sm:$0xf]
  %v853 = vld [vmem:[%s1 + $0xcd8] sm:$0xf]
  %v854 = vld [vmem:[%s1 + $0xcdc] sm:$0xf]
  %v855 = vld [vmem:[%s1 + $0xce0] sm:$0xf]
  %v856 = vld [vmem:[%s1 + $0xce4] sm:$0xf]
  %v857 = vld [vmem:[%s1 + $0xce8] sm:$0xf]
  %v858 = vld [vmem:[%s1 + $0xcec] sm:$0xf]
  %v859 = vld [vmem:[%s1 + $0xcf0] sm:$0xf]
  %v860 = vld [vmem:[%s1 + $0xcf4] sm:$0xf]
  %v861 = vld [vmem:[%s1 + $0xcf8] sm:$0xf]
  %v862 = vld [vmem:[%s1 + $0xcfc] sm:$0xf]
  %v863 = vld [vmem:[%s1 + $0xd00] sm:$0xf]
  %v864 = vld [vmem:[%s1 + $0xd04] sm:$0xf]
  %v865 = vld [vmem:[%s1 + $0xd08] sm:$0xf]
  %v866 = vld [vmem:[%s1 + $0xd0c] sm:$0xf]
  %v867 = vld [vmem:[%s1 + $0xd10] sm:$0xf]
  %v868 = vld [vmem:[%s1 + $0xd14] sm:$0xf]
  %v869 = vld [vmem:[%s1 + $0xd18] sm:$0xf]
  %v870 = vld [vmem:[%s1 + $0xd1c] sm:$0xf]
  %v871 = vld [vmem:[%s1 + $0xd20] sm:$0xf]
  %v872 = vld [vmem:[%s1 + $0xd24] sm:$0xf]
  %v873 = vld [vmem:[%s1 + $0xd28] sm:$0xf]
  %v874 = vld [vmem:[%s1 + $0xd2c] sm:$0xf]
  %v875 = vld [vmem:[%s1 + $0xd30] sm:$0xf]
  %v876 = vld [vmem:[%s1 + $0xd34] sm:$0xf]
  %v877 = vld [vmem:[%s1 + $0xd38] sm:$0xf]
  %v878 = vld [vmem:[%s1 + $0xd3c] sm:$0xf]
  %v879 = vld [vmem:[%s1 + $0xd40] sm:$0xf]
  %v880 = vld [vmem:[%s1 + $0xd44] sm:$0xf]
  %v881 = vld [vmem:[%s1 + $0xd48] sm:$0xf]
  %v882 = vld [vmem:[%s1 + $0xd4c] sm:$0xf]
  %v883 = vld [vmem:[%s1 + $0xd50] sm:$0xf]
  %v884 = vld [vmem:[%s1 + $0xd54] sm:$0xf]
  %v885 = vld [vmem:[%s1 + $0xd58] sm:$0xf]
  %v886 = vld [vmem:[%s1 + $0xd5c] sm:$0xf]
  %v887 = vld [vmem:[%s1 + $0xd60] sm:$0xf]
  %v888 = vld [vmem:[%s1 + $0xd64] sm:$0xf]
  %v889 = vld [vmem:[%s1 + $0xd68] sm:$0xf]
  %v890 = vld [vmem:[%s1 + $0xd6c] sm:$0xf]
  %v891 = vld [vmem:[%s1 + $0xd70] sm:$0xf]
  %v892 = vld [vmem:[%s1 + $0xd74] sm:$0xf]
  %v893 = vld [vmem:[%s1 + $0xd78] sm:$0xf]
  %v894 = vld [vmem:[%s1 + $0xd7c] sm:$0xf]
  %v895 = vld [vmem:[%s1 + $0xd80] sm:$0xf]
  %v896 = vld [vmem:[%s1 + $0xd84] sm:$0xf]
  %v897 = vld [vmem:[%s1 + $0xd88] sm:$0xf]
  %v898 = vld [vmem:[%s1 + $0xd8c] sm:$0xf]
  %v899 = vld [vmem:[%s1 + $0xd90] sm:$0xf]
  %v900 = vld [vmem:[%s1 + $0xd94] sm:$0xf]
  %v901 = vld [vmem:[%s1 + $0xd98] sm:$0xf]
  %v902 = vld [vmem:[%s1 + $0xd9c] sm:$0xf]
  %v903 = vld [vmem:[%s1 + $0xda0] sm:$0xf]
  %v904 = vld [vmem:[%s1 + $0xda4] sm:$0xf]
  %v905 = vld [vmem:[%s1 + $0xda8] sm:$0xf]
  %v906 = vld [vmem:[%s1 + $0xdac] sm:$0xf]
  %v907 = vld [vmem:[%s1 + $0xdb0] sm:$0xf]
  %v908 = vld [vmem:[%s1 + $0xdb4] sm:$0xf]
  %v909 = vld [vmem:[%s1 + $0xdb8] sm:$0xf]
  %v910 = vld [vmem:[%s1 + $0xdbc] sm:$0xf]
  %v911 = vld [vmem:[%s1 + $0xdc0] sm:$0xf]
  %v912 = vld [vmem:[%s1 + $0xdc4] sm:$0xf]
  %v913 = vld [vmem:[%s1 + $0xdc8] sm:$0xf]
  %v914 = vld [vmem:[%s1 + $0xdcc] sm:$0xf]
  %v915 = vld [vmem:[%s1 + $0xdd0] sm:$0xf]
  %v916 = vld [vmem:[%s1 + $0xdd4] sm:$0xf]
  %v917 = vld [vmem:[%s1 + $0xdd8] sm:$0xf]
  %v918 = vld [vmem:[%s1 + $0xddc] sm:$0xf]
  %v919 = vld [vmem:[%s1 + $0xde0] sm:$0xf]
  %v920 = vld [vmem:[%s1 + $0xde4] sm:$0xf]
  %v921 = vld [vmem:[%s1 + $0xde8] sm:$0xf]
  %v922 = vld [vmem:[%s1 + $0xdec] sm:$0xf]
  %v923 = vld [vmem:[%s1 + $0xdf0] sm:$0xf]
  %v924 = vld [vmem:[%s1 + $0xdf4] sm:$0xf]
  %v925 = vld [vmem:[%s1 + $0xdf8] sm:$0xf]
  %v926 = vld [vmem:[%s1 + $0xdfc] sm:$0xf]
  %v927 = vld [vmem:[%s1 + $0xe00] sm:$0xf]
  %v928 = vld [vmem:[%s1 + $0xe04] sm:$0xf]
  %v929 = vld [vmem:[%s1 + $0xe08] sm:$0xf]
  %v930 = vld [vmem:[%s1 + $0xe0c] sm:$0xf]
  %v931 = vld [vmem:[%s1 + $0xe10] sm:$0xf]
  %v932 = vld [vmem:[%s1 + $0xe14] sm:$0xf]
  %v933 = vld [vmem:[%s1 + $0xe18] sm:$0xf]
  %v934 = vld [vmem:[%s1 + $0xe1c] sm:$0xf]
  %v935 = vld [vmem:[%s1 + $0xe20] sm:$0xf]
  %v936 = vld [vmem:[%s1 + $0xe24] sm:$0xf]
  %v937 = vld [vmem:[%s1 + $0xe28] sm:$0xf]
  %v938 = vld [vmem:[%s1 + $0xe2c] sm:$0xf]
  %v939 = vld [vmem:[%s1 + $0xe30] sm:$0xf]
  %v940 = vld [vmem:[%s1 + $0xe34] sm:$0xf]
  %v941 = vld [vmem:[%s1 + $0xe38] sm:$0xf]
  %v942 = vld [vmem:[%s1 + $0xe3c] sm:$0xf]
  %v943 = vld [vmem:[%s1 + $0xe40] sm:$0xf]
  %v944 = vld [vmem:[%s1 + $0xe44] sm:$0xf]
  %v945 = vld [vmem:[%s1 + $0xe48] sm:$0xf]
  %v946 = vld [vmem:[%s1 + $0xe4c] sm:$0xf]
  %v947 = vld [vmem:[%s1 + $0xe50] sm:$0xf]
  %v948 = vld [vmem:[%s1 + $0xe54] sm:$0xf]
  %v949 = vld [vmem:[%s1 + $0xe58] sm:$0xf]
  %v950 = vld [vmem:[%s1 + $0xe5c] sm:$0xf]
  %v951 = vld [vmem:[%s1 + $0xe60] sm:$0xf]
  %v952 = vld [vmem:[%s1 + $0xe64] sm:$0xf]
  %v953 = vld [vmem:[%s1 + $0xe68] sm:$0xf]
  %v954 = vld [vmem:[%s1 + $0xe6c] sm:$0xf]
  %v955 = vld [vmem:[%s1 + $0xe70] sm:$0xf]
  %v956 = vld [vmem:[%s1 + $0xe74] sm:$0xf]
  %v957 = vld [vmem:[%s1 + $0xe78] sm:$0xf]
  %v958 = vld [vmem:[%s1 + $0xe7c] sm:$0xf]
  %v959 = vld [vmem:[%s1 + $0xe80] sm:$0xf]
  %v960 = vld [vmem:[%s1 + $0xe84] sm:$0xf]
  %v961 = vld [vmem:[%s1 + $0xe88] sm:$0xf]
  %v962 = vld [vmem:[%s1 + $0xe8c] sm:$0xf]
  %v963 = vld [vmem:[%s1 + $0xe90] sm:$0xf]
  %v964 = vld [vmem:[%s1 + $0xe94] sm:$0xf]
  %v965 = vld [vmem:[%s1 + $0xe98] sm:$0xf]
  %v966 = vld [vmem:[%s1 + $0xe9c] sm:$0xf]
  %v967 = vld [vmem:[%s1 + $0xea0] sm:$0xf]
  %v968 = vld [vmem:[%s1 + $0xea4] sm:$0xf]
  %v969 = vld [vmem:[%s1 + $0xea8] sm:$0xf]
  %v970 = vld [vmem:[%s1 + $0xeac] sm:$0xf]
  %v971 = vld [vmem:[%s1 + $0xeb0] sm:$0xf]
  %v972 = vld [vmem:[%s1 + $0xeb4] sm:$0xf]
  %v973 = vld [vmem:[%s1 + $0xeb8] sm:$0xf]
  %v974 = vld [vmem:[%s1 + $0xebc] sm:$0xf]
  %v975 = vld [vmem:[%s1 + $0xec0] sm:$0xf]
  %v976 = vld [vmem:[%s1 + $0xec4] sm:$0xf]
  %v977 = vld [vmem:[%s1 + $0xec8] sm:$0xf]
  %v978 = vld [vmem:[%s1 + $0xecc] sm:$0xf]
  %v979 = vld [vmem:[%s1 + $0xed0] sm:$0xf]
  %v980 = vld [vmem:[%s1 + $0xed4] sm:$0xf]
  %v981 = vld [vmem:[%s1 + $0xed8] sm:$0xf]
  %v982 = vld [vmem:[%s1 + $0xedc] sm:$0xf]
  %v983 = vld [vmem:[%s1 + $0xee0] sm:$0xf]
  %v984 = vld [vmem:[%s1 + $0xee4] sm:$0xf]
  %v985 = vld [vmem:[%s1 + $0xee8] sm:$0xf]
  %v986 = vld [vmem:[%s1 + $0xeec] sm:$0xf]
  %v987 = vld [vmem:[%s1 + $0xef0] sm:$0xf]
  %v988 = vld [vmem:[%s1 + $0xef4] sm:$0xf]
  %v989 = vld [vmem:[%s1 + $0xef8] sm:$0xf]
  %v990 = vld [vmem:[%s1 + $0xefc] sm:$0xf]
  %v991 = vld [vmem:[%s1 + $0xf00] sm:$0xf]
  %v992 = vld [vmem:[%s1 + $0xf04] sm:$0xf]
  %v993 = vld [vmem:[%s1 + $0xf08] sm:$0xf]
  %v994 = vld [vmem:[%s1 + $0xf0c] sm:$0xf]
  %v995 = vld [vmem:[%s1 + $0xf10] sm:$0xf]
  %v996 = vld [vmem:[%s1 + $0xf14] sm:$0xf]
  %v997 = vld [vmem:[%s1 + $0xf18] sm:$0xf]
  %v998 = vld [vmem:[%s1 + $0xf1c] sm:$0xf]
  %v999 = vld [vmem:[%s1 + $0xf20] sm:$0xf]
  %v1000 = vld [vmem:[%s1 + $0xf24] sm:$0xf]
  %v1001 = vld [vmem:[%s1 + $0xf28] sm:$0xf]
  %v1002 = vld [vmem:[%s1 + $0xf2c] sm:$0xf]
  %v1003 = vld [vmem:[%s1 + $0xf30] sm:$0xf]
  %v1004 = vld [vmem:[%s1 + $0xf34] sm:$0xf]
  %v1005 = vld [vmem:[%s1 + $0xf38] sm:$0xf]
  %v1006 = vld [vmem:[%s1 + $0xf3c] sm:$0xf]
  %v1007 = vld [vmem:[%s1 + $0xf40] sm:$0xf]
  %v1008 = vld [vmem:[%s1 + $0xf44] sm:$0xf]
  %v1009 = vld [vmem:[%s1 + $0xf48] sm:$0xf]
  %v1010 = vld [vmem:[%s1 + $0xf4c] sm:$0xf]
  %v1011 = vld [vmem:[%s1 + $0xf50] sm:$0xf]
  %v1012 = vld [vmem:[%s1 + $0xf54] sm:$0xf]
  %v1013 = vld [vmem:[%s1 + $0xf58] sm:$0xf]
  %v1014 = vld [vmem:[%s1 + $0xf5c] sm:$0xf]
  %v1015 = vld [vmem:[%s1 + $0xf60] sm:$0xf]
  %v1016 = vld [vmem:[%s1 + $0xf64] sm:$0xf]
  %v1017 = vld [vmem:[%s1 + $0xf68] sm:$0xf]
  %v1018 = vld [vmem:[%s1 + $0xf6c] sm:$0xf]
  %v1019 = vld [vmem:[%s1 + $0xf70] sm:$0xf]
  %v1020 = vld [vmem:[%s1 + $0xf74] sm:$0xf]
  %v1021 = vld [vmem:[%s1 + $0xf78] sm:$0xf]
  %v1022 = vld [vmem:[%s1 + $0xf7c] sm:$0xf]
  %v1023 = vld [vmem:[%s1 + $0xf80] sm:$0xf]
  %v1024 = vld [vmem:[%s1 + $0xf84] sm:$0xf]
  %v1025 = vld [vmem:[%s1 + $0xf88] sm:$0xf]
  %v1026 = vld [vmem:[%s1 + $0xf8c] sm:$0xf]
  %v1027 = vld [vmem:[%s1 + $0xf90] sm:$0xf]
  %v1028 = vld [vmem:[%s1 + $0xf94] sm:$0xf]
  %v1029 = vld [vmem:[%s1 + $0xf98] sm:$0xf]
  %v1030 = vld [vmem:[%s1 + $0xf9c] sm:$0xf]
  %v1031 = vld [vmem:[%s1 + $0xfa0] sm:$0xf]
  %v1032 = vld [vmem:[%s1 + $0xfa4] sm:$0xf]
  %v1033 = vld [vmem:[%s1 + $0xfa8] sm:$0xf]
  %v1034 = vld [vmem:[%s1 + $0xfac] sm:$0xf]
  %v1035 = vld [vmem:[%s1 + $0xfb0] sm:$0xf]
  %v1036 = vld [vmem:[%s1 + $0xfb4] sm:$0xf]
  %v1037 = vld [vmem:[%s1 + $0xfb8] sm:$0xf]
  %v1038 = vld [vmem:[%s1 + $0xfbc] sm:$0xf]
  %v1039 = vld [vmem:[%s1 + $0xfc0] sm:$0xf]
  %v1040 = vld [vmem:[%s1 + $0xfc4] sm:$0xf]
  %v1041 = vld [vmem:[%s1 + $0xfc8] sm:$0xf]
  %v1042 = vld [vmem:[%s1 + $0xfcc] sm:$0xf]
  %v1043 = vld [vmem:[%s1 + $0xfd0] sm:$0xf]
  %v1044 = vld [vmem:[%s1 + $0xfd4] sm:$0xf]
  %v1045 = vld [vmem:[%s1 + $0xfd8] sm:$0xf]
  %v1046 = vld [vmem:[%s1 + $0xfdc] sm:$0xf]
  %v1047 = vld [vmem:[%s1 + $0xfe0] sm:$0xf]
  %v1048 = vld [vmem:[%s1 + $0xfe4] sm:$0xf]
  %v1049 = vld [vmem:[%s1 + $0xfe8] sm:$0xf]
  %v1050 = vld [vmem:[%s1 + $0xfec] sm:$0xf]
  %v1051 = vld [vmem:[%s1 + $0xff0] sm:$0xf]
  %v1052 = vld [vmem:[%s1 + $0xff4] sm:$0xf]
  %v1053 = vld [vmem:[%s1 + $0xff8] sm:$0xf]
  %v1054 = vld [vmem:[%s1 + $0xffc] sm:$0xf]
  %v1055 = vld [vmem:[%s2] sm:$0x1]
  %v1057 = vlaneseq
  %v1058 = vshrl.u32 %v1057, 7
  %v1059 = vsub.s32 0, %v1058
  %v1060 = vrot.slane %v1055, %v1059
  %v1078 = vcombine.high %v15, %v15
  %v1080 = vunpack.c.l.s4 1983009808
  %v1081 = vunpack.c.0.s8 %v1080
  %v1082 = vlaneseq
  %v1083 = vshrl.u32 %v1082, 7
  %v1084 = vsub.s32 %v1081, %v1083
  %v1085 = vrot.slane %v15, %v1084
  %v1087 = vunpack.c.l.s4 1983009808
  %v1088 = vunpack.c.0.s8 %v1087
  %v1089 = vlaneseq
  %v1090 = vshrl.u32 %v1089, 7
  %v1091 = vsub.s32 %v1088, %v1090
  %v1092 = vrot.slane %v1078, %v1091
  %v1093 = vcombine.high %v1085, %v1085
  %v1094 = vcombine.high %v1092, %v1092
  %v1095 = vcombine.high %v16, %v16
  %v1097 = vunpack.c.l.s4 1983009808
  %v1098 = vunpack.c.0.s8 %v1097
  %v1099 = vlaneseq
  %v1100 = vshrl.u32 %v1099, 7
  %v1101 = vsub.s32 %v1098, %v1100
  %v1102 = vrot.slane %v16, %v1101
  %v1104 = vunpack.c.l.s4 1983009808
  %v1105 = vunpack.c.0.s8 %v1104
  %v1106 = vlaneseq
  %v1107 = vshrl.u32 %v1106, 7
  %v1108 = vsub.s32 %v1105, %v1107
  %v1109 = vrot.slane %v1095, %v1108
  %v1110 = vcombine.high %v1102, %v1102
  %v1111 = vcombine.high %v1109, %v1109
  %v1112 = vcombine.high %v17, %v17
  %v1114 = vunpack.c.l.s4 1983009808
  %v1115 = vunpack.c.0.s8 %v1114
  %v1116 = vlaneseq
  %v1117 = vshrl.u32 %v1116, 7
  %v1118 = vsub.s32 %v1115, %v1117
  %v1119 = vrot.slane %v17, %v1118
  %v1121 = vunpack.c.l.s4 1983009808
  %v1122 = vunpack.c.0.s8 %v1121
  %v1123 = vlaneseq
  %v1124 = vshrl.u32 %v1123, 7
  %v1125 = vsub.s32 %v1122, %v1124
  %v1126 = vrot.slane %v1112, %v1125
  %v1127 = vcombine.high %v1119, %v1119
  %v1128 = vcombine.high %v1126, %v1126
  %v1129 = vcombine.high %v18, %v18
  %v1131 = vunpack.c.l.s4 1983009808
  %v1132 = vunpack.c.0.s8 %v1131
  %v1133 = vlaneseq
  %v1134 = vshrl.u32 %v1133, 7
  %v1135 = vsub.s32 %v1132, %v1134
  %v1136 = vrot.slane %v18, %v1135
  %v1138 = vunpack.c.l.s4 1983009808
  %v1139 = vunpack.c.0.s8 %v1138
  %v1140 = vlaneseq
  %v1141 = vshrl.u32 %v1140, 7
  %v1142 = vsub.s32 %v1139, %v1141
  %v1143 = vrot.slane %v1129, %v1142
  %v1144 = vcombine.high %v1136, %v1136
  %v1145 = vcombine.high %v1143, %v1143
  %v1146 = vcombine.high %v19, %v19
  %v1148 = vunpack.c.l.s4 1983009808
  %v1149 = vunpack.c.0.s8 %v1148
  %v1150 = vlaneseq
  %v1151 = vshrl.u32 %v1150, 7
  %v1152 = vsub.s32 %v1149, %v1151
  %v1153 = vrot.slane %v19, %v1152
  %v1155 = vunpack.c.l.s4 1983009808
  %v1156 = vunpack.c.0.s8 %v1155
  %v1157 = vlaneseq
  %v1158 = vshrl.u32 %v1157, 7
  %v1159 = vsub.s32 %v1156, %v1158
  %v1160 = vrot.slane %v1146, %v1159
  %v1161 = vcombine.high %v1153, %v1153
  %v1162 = vcombine.high %v1160, %v1160
  %v1163 = vcombine.high %v20, %v20
  %v1165 = vunpack.c.l.s4 1983009808
  %v1166 = vunpack.c.0.s8 %v1165
  %v1167 = vlaneseq
  %v1168 = vshrl.u32 %v1167, 7
  %v1169 = vsub.s32 %v1166, %v1168
  %v1170 = vrot.slane %v20, %v1169
  %v1172 = vunpack.c.l.s4 1983009808
  %v1173 = vunpack.c.0.s8 %v1172
  %v1174 = vlaneseq
  %v1175 = vshrl.u32 %v1174, 7
  %v1176 = vsub.s32 %v1173, %v1175
  %v1177 = vrot.slane %v1163, %v1176
  %v1178 = vcombine.high %v1170, %v1170
  %v1179 = vcombine.high %v1177, %v1177
  %v1180 = vcombine.high %v21, %v21
  %v1182 = vunpack.c.l.s4 1983009808
  %v1183 = vunpack.c.0.s8 %v1182
  %v1184 = vlaneseq
  %v1185 = vshrl.u32 %v1184, 7
  %v1186 = vsub.s32 %v1183, %v1185
  %v1187 = vrot.slane %v21, %v1186
  %v1189 = vunpack.c.l.s4 1983009808
  %v1190 = vunpack.c.0.s8 %v1189
  %v1191 = vlaneseq
  %v1192 = vshrl.u32 %v1191, 7
  %v1193 = vsub.s32 %v1190, %v1192
  %v1194 = vrot.slane %v1180, %v1193
  %v1195 = vcombine.high %v1187, %v1187
  %v1196 = vcombine.high %v1194, %v1194
  %v1197 = vcombine.high %v22, %v22
  %v1199 = vunpack.c.l.s4 1983009808
  %v1200 = vunpack.c.0.s8 %v1199
  %v1201 = vlaneseq
  %v1202 = vshrl.u32 %v1201, 7
  %v1203 = vsub.s32 %v1200, %v1202
  %v1204 = vrot.slane %v22, %v1203
  %v1206 = vunpack.c.l.s4 1983009808
  %v1207 = vunpack.c.0.s8 %v1206
  %v1208 = vlaneseq
  %v1209 = vshrl.u32 %v1208, 7
  %v1210 = vsub.s32 %v1207, %v1209
  %v1211 = vrot.slane %v1197, %v1210
  %v1212 = vcombine.high %v1204, %v1204
  %v1213 = vcombine.high %v1211, %v1211
  %v1214 = vcombine.high %v23, %v23
  %v1216 = vunpack.c.l.s4 1983009808
  %v1217 = vunpack.c.0.s8 %v1216
  %v1218 = vlaneseq
  %v1219 = vshrl.u32 %v1218, 7
  %v1220 = vsub.s32 %v1217, %v1219
  %v1221 = vrot.slane %v23, %v1220
  %v1223 = vunpack.c.l.s4 1983009808
  %v1224 = vunpack.c.0.s8 %v1223
  %v1225 = vlaneseq
  %v1226 = vshrl.u32 %v1225, 7
  %v1227 = vsub.s32 %v1224, %v1226
  %v1228 = vrot.slane %v1214, %v1227
  %v1229 = vcombine.high %v1221, %v1221
  %v1230 = vcombine.high %v1228, %v1228
  %v1231 = vcombine.high %v24, %v24
  %v1233 = vunpack.c.l.s4 1983009808
  %v1234 = vunpack.c.0.s8 %v1233
  %v1235 = vlaneseq
  %v1236 = vshrl.u32 %v1235, 7
  %v1237 = vsub.s32 %v1234, %v1236
  %v1238 = vrot.slane %v24, %v1237
  %v1240 = vunpack.c.l.s4 1983009808
  %v1241 = vunpack.c.0.s8 %v1240
  %v1242 = vlaneseq
  %v1243 = vshrl.u32 %v1242, 7
  %v1244 = vsub.s32 %v1241, %v1243
  %v1245 = vrot.slane %v1231, %v1244
  %v1246 = vcombine.high %v1238, %v1238
  %v1247 = vcombine.high %v1245, %v1245
  %v1248 = vcombine.high %v25, %v25
  %v1250 = vunpack.c.l.s4 1983009808
  %v1251 = vunpack.c.0.s8 %v1250
  %v1252 = vlaneseq
  %v1253 = vshrl.u32 %v1252, 7
  %v1254 = vsub.s32 %v1251, %v1253
  %v1255 = vrot.slane %v25, %v1254
  %v1257 = vunpack.c.l.s4 1983009808
  %v1258 = vunpack.c.0.s8 %v1257
  %v1259 = vlaneseq
  %v1260 = vshrl.u32 %v1259, 7
  %v1261 = vsub.s32 %v1258, %v1260
  %v1262 = vrot.slane %v1248, %v1261
  %v1263 = vcombine.high %v1255, %v1255
  %v1264 = vcombine.high %v1262, %v1262
  %v1265 = vcombine.high %v26, %v26
  %v1267 = vunpack.c.l.s4 1983009808
  %v1268 = vunpack.c.0.s8 %v1267
  %v1269 = vlaneseq
  %v1270 = vshrl.u32 %v1269, 7
  %v1271 = vsub.s32 %v1268, %v1270
  %v1272 = vrot.slane %v26, %v1271
  %v1274 = vunpack.c.l.s4 1983009808
  %v1275 = vunpack.c.0.s8 %v1274
  %v1276 = vlaneseq
  %v1277 = vshrl.u32 %v1276, 7
  %v1278 = vsub.s32 %v1275, %v1277
  %v1279 = vrot.slane %v1265, %v1278
  %v1280 = vcombine.high %v1272, %v1272
  %v1281 = vcombine.high %v1279, %v1279
  %v1282 = vcombine.high %v27, %v27
  %v1284 = vunpack.c.l.s4 1983009808
  %v1285 = vunpack.c.0.s8 %v1284
  %v1286 = vlaneseq
  %v1287 = vshrl.u32 %v1286, 7
  %v1288 = vsub.s32 %v1285, %v1287
  %v1289 = vrot.slane %v27, %v1288
  %v1291 = vunpack.c.l.s4 1983009808
  %v1292 = vunpack.c.0.s8 %v1291
  %v1293 = vlaneseq
  %v1294 = vshrl.u32 %v1293, 7
  %v1295 = vsub.s32 %v1292, %v1294
  %v1296 = vrot.slane %v1282, %v1295
  %v1297 = vcombine.high %v1289, %v1289
  %v1298 = vcombine.high %v1296, %v1296
  %v1299 = vcombine.high %v28, %v28
  %v1301 = vunpack.c.l.s4 1983009808
  %v1302 = vunpack.c.0.s8 %v1301
  %v1303 = vlaneseq
  %v1304 = vshrl.u32 %v1303, 7
  %v1305 = vsub.s32 %v1302, %v1304
  %v1306 = vrot.slane %v28, %v1305
  %v1308 = vunpack.c.l.s4 1983009808
  %v1309 = vunpack.c.0.s8 %v1308
  %v1310 = vlaneseq
  %v1311 = vshrl.u32 %v1310, 7
  %v1312 = vsub.s32 %v1309, %v1311
  %v1313 = vrot.slane %v1299, %v1312
  %v1314 = vcombine.high %v1306, %v1306
  %v1315 = vcombine.high %v1313, %v1313
  %v1316 = vcombine.high %v29, %v29
  %v1318 = vunpack.c.l.s4 1983009808
  %v1319 = vunpack.c.0.s8 %v1318
  %v1320 = vlaneseq
  %v1321 = vshrl.u32 %v1320, 7
  %v1322 = vsub.s32 %v1319, %v1321
  %v1323 = vrot.slane %v29, %v1322
  %v1325 = vunpack.c.l.s4 1983009808
  %v1326 = vunpack.c.0.s8 %v1325
  %v1327 = vlaneseq
  %v1328 = vshrl.u32 %v1327, 7
  %v1329 = vsub.s32 %v1326, %v1328
  %v1330 = vrot.slane %v1316, %v1329
  %v1331 = vcombine.high %v1323, %v1323
  %v1332 = vcombine.high %v1330, %v1330
  %v1333 = vcombine.high %v30, %v30
  %v1335 = vunpack.c.l.s4 1983009808
  %v1336 = vunpack.c.0.s8 %v1335
  %v1337 = vlaneseq
  %v1338 = vshrl.u32 %v1337, 7
  %v1339 = vsub.s32 %v1336, %v1338
  %v1340 = vrot.slane %v30, %v1339
  %v1342 = vunpack.c.l.s4 1983009808
  %v1343 = vunpack.c.0.s8 %v1342
  %v1344 = vlaneseq
  %v1345 = vshrl.u32 %v1344, 7
  %v1346 = vsub.s32 %v1343, %v1345
  %v1347 = vrot.slane %v1333, %v1346
  %v1348 = vcombine.high %v1340, %v1340
  %v1349 = vcombine.high %v1347, %v1347
  %v2438 = vunpack.c.l.b16 %v31
  %v2439 = vunpack.c.l.b16 %v32
  %v2440 = vunpack.c.l.b16 %v33
  %v2441 = vunpack.c.l.b16 %v34
  %v2442 = vunpack.c.l.b16 %v35
  %v2443 = vunpack.c.l.b16 %v36
  %v2444 = vunpack.c.l.b16 %v37
  %v2445 = vunpack.c.l.b16 %v38
  %v2446 = vunpack.c.l.b16 %v39
  %v2447 = vunpack.c.l.b16 %v40
  %v2448 = vunpack.c.l.b16 %v41
  %v2449 = vunpack.c.l.b16 %v42
  %v2450 = vunpack.c.l.b16 %v43
  %v2451 = vunpack.c.l.b16 %v44
  %v2452 = vunpack.c.l.b16 %v45
  %v2453 = vunpack.c.l.b16 %v46
  %v2454 = vunpack.c.l.b16 %v47
  %v2455 = vunpack.c.l.b16 %v48
  %v2456 = vunpack.c.l.b16 %v49
  %v2457 = vunpack.c.l.b16 %v50
  %v2458 = vunpack.c.l.b16 %v51
  %v2459 = vunpack.c.l.b16 %v52
  %v2460 = vunpack.c.l.b16 %v53
  %v2461 = vunpack.c.l.b16 %v54
  %v2462 = vunpack.c.l.b16 %v55
  %v2463 = vunpack.c.l.b16 %v56
  %v2464 = vunpack.c.l.b16 %v57
  %v2465 = vunpack.c.l.b16 %v58
  %v2466 = vunpack.c.l.b16 %v59
  %v2467 = vunpack.c.l.b16 %v60
  %v2468 = vunpack.c.l.b16 %v61
  %v2469 = vunpack.c.l.b16 %v62
  %v2470 = vunpack.c.l.b16 %v63
  %v2471 = vunpack.c.l.b16 %v64
  %v2472 = vunpack.c.l.b16 %v65
  %v2473 = vunpack.c.l.b16 %v66
  %v2474 = vunpack.c.l.b16 %v67
  %v2475 = vunpack.c.l.b16 %v68
  %v2476 = vunpack.c.l.b16 %v69
  %v2477 = vunpack.c.l.b16 %v70
  %v2478 = vunpack.c.l.b16 %v71
  %v2479 = vunpack.c.l.b16 %v72
  %v2480 = vunpack.c.l.b16 %v73
  %v2481 = vunpack.c.l.b16 %v74
  %v2482 = vunpack.c.l.b16 %v75
  %v2483 = vunpack.c.l.b16 %v76
  %v2484 = vunpack.c.l.b16 %v77
  %v2485 = vunpack.c.l.b16 %v78
  %v2486 = vunpack.c.l.b16 %v79
  %v2487 = vunpack.c.l.b16 %v80
  %v2488 = vunpack.c.l.b16 %v81
  %v2489 = vunpack.c.l.b16 %v82
  %v2490 = vunpack.c.l.b16 %v83
  %v2491 = vunpack.c.l.b16 %v84
  %v2492 = vunpack.c.l.b16 %v85
  %v2493 = vunpack.c.l.b16 %v86
  %v2494 = vunpack.c.l.b16 %v87
  %v2495 = vunpack.c.l.b16 %v88
  %v2496 = vunpack.c.l.b16 %v89
  %v2497 = vunpack.c.l.b16 %v90
  %v2498 = vunpack.c.l.b16 %v91
  %v2499 = vunpack.c.l.b16 %v92
  %v2500 = vunpack.c.l.b16 %v93
  %v2501 = vunpack.c.l.b16 %v94
  %v2502 = vunpack.c.l.b16 %v95
  %v2503 = vunpack.c.l.b16 %v96
  %v2504 = vunpack.c.l.b16 %v97
  %v2505 = vunpack.c.l.b16 %v98
  %v2506 = vunpack.c.l.b16 %v99
  %v2507 = vunpack.c.l.b16 %v100
  %v2508 = vunpack.c.l.b16 %v101
  %v2509 = vunpack.c.l.b16 %v102
  %v2510 = vunpack.c.l.b16 %v103
  %v2511 = vunpack.c.l.b16 %v104
  %v2512 = vunpack.c.l.b16 %v105
  %v2513 = vunpack.c.l.b16 %v106
  %v2514 = vunpack.c.l.b16 %v107
  %v2515 = vunpack.c.l.b16 %v108
  %v2516 = vunpack.c.l.b16 %v109
  %v2517 = vunpack.c.l.b16 %v110
  %v2518 = vunpack.c.l.b16 %v111
  %v2519 = vunpack.c.l.b16 %v112
  %v2520 = vunpack.c.l.b16 %v113
  %v2521 = vunpack.c.l.b16 %v114
  %v2522 = vunpack.c.l.b16 %v115
  %v2523 = vunpack.c.l.b16 %v116
  %v2524 = vunpack.c.l.b16 %v117
  %v2525 = vunpack.c.l.b16 %v118
  %v2526 = vunpack.c.l.b16 %v119
  %v2527 = vunpack.c.l.b16 %v120
  %v2528 = vunpack.c.l.b16 %v121
  %v2529 = vunpack.c.l.b16 %v122
  %v2530 = vunpack.c.l.b16 %v123
  %v2531 = vunpack.c.l.b16 %v124
  %v2532 = vunpack.c.l.b16 %v125
  %v2533 = vunpack.c.l.b16 %v126
  %v2534 = vunpack.c.l.b16 %v127
  %v2535 = vunpack.c.l.b16 %v128
  %v2536 = vunpack.c.l.b16 %v129
  %v2537 = vunpack.c.l.b16 %v130
  %v2538 = vunpack.c.l.b16 %v131
  %v2539 = vunpack.c.l.b16 %v132
  %v2540 = vunpack.c.l.b16 %v133
  %v2541 = vunpack.c.l.b16 %v134
  %v2542 = vunpack.c.l.b16 %v135
  %v2543 = vunpack.c.l.b16 %v136
  %v2544 = vunpack.c.l.b16 %v137
  %v2545 = vunpack.c.l.b16 %v138
  %v2546 = vunpack.c.l.b16 %v139
  %v2547 = vunpack.c.l.b16 %v140
  %v2548 = vunpack.c.l.b16 %v141
  %v2549 = vunpack.c.l.b16 %v142
  %v2550 = vunpack.c.l.b16 %v143
  %v2551 = vunpack.c.l.b16 %v144
  %v2552 = vunpack.c.l.b16 %v145
  %v2553 = vunpack.c.l.b16 %v146
  %v2554 = vunpack.c.l.b16 %v147
  %v2555 = vunpack.c.l.b16 %v148
  %v2556 = vunpack.c.l.b16 %v149
  %v2557 = vunpack.c.l.b16 %v150
  %v2558 = vunpack.c.l.b16 %v151
  %v2559 = vunpack.c.l.b16 %v152
  %v2560 = vunpack.c.l.b16 %v153
  %v2561 = vunpack.c.l.b16 %v154
  %v2562 = vunpack.c.l.b16 %v155
  %v2563 = vunpack.c.l.b16 %v156
  %v2564 = vunpack.c.l.b16 %v157
  %v2565 = vunpack.c.l.b16 %v158
  %v2566 = vunpack.c.l.b16 %v159
  %v2567 = vunpack.c.l.b16 %v160
  %v2568 = vunpack.c.l.b16 %v161
  %v2569 = vunpack.c.l.b16 %v162
  %v2570 = vunpack.c.l.b16 %v163
  %v2571 = vunpack.c.l.b16 %v164
  %v2572 = vunpack.c.l.b16 %v165
  %v2573 = vunpack.c.l.b16 %v166
  %v2574 = vunpack.c.l.b16 %v167
  %v2575 = vunpack.c.l.b16 %v168
  %v2576 = vunpack.c.l.b16 %v169
  %v2577 = vunpack.c.l.b16 %v170
  %v2578 = vunpack.c.l.b16 %v171
  %v2579 = vunpack.c.l.b16 %v172
  %v2580 = vunpack.c.l.b16 %v173
  %v2581 = vunpack.c.l.b16 %v174
  %v2582 = vunpack.c.l.b16 %v175
  %v2583 = vunpack.c.l.b16 %v176
  %v2584 = vunpack.c.l.b16 %v177
  %v2585 = vunpack.c.l.b16 %v178
  %v2586 = vunpack.c.l.b16 %v179
  %v2587 = vunpack.c.l.b16 %v180
  %v2588 = vunpack.c.l.b16 %v181
  %v2589 = vunpack.c.l.b16 %v182
  %v2590 = vunpack.c.l.b16 %v183
  %v2591 = vunpack.c.l.b16 %v184
  %v2592 = vunpack.c.l.b16 %v185
  %v2593 = vunpack.c.l.b16 %v186
  %v2594 = vunpack.c.l.b16 %v187
  %v2595 = vunpack.c.l.b16 %v188
  %v2596 = vunpack.c.l.b16 %v189
  %v2597 = vunpack.c.l.b16 %v190
  %v2598 = vunpack.c.l.b16 %v191
  %v2599 = vunpack.c.l.b16 %v192
  %v2600 = vunpack.c.l.b16 %v193
  %v2601 = vunpack.c.l.b16 %v194
  %v2602 = vunpack.c.l.b16 %v195
  %v2603 = vunpack.c.l.b16 %v196
  %v2604 = vunpack.c.l.b16 %v197
  %v2605 = vunpack.c.l.b16 %v198
  %v2606 = vunpack.c.l.b16 %v199
  %v2607 = vunpack.c.l.b16 %v200
  %v2608 = vunpack.c.l.b16 %v201
  %v2609 = vunpack.c.l.b16 %v202
  %v2610 = vunpack.c.l.b16 %v203
  %v2611 = vunpack.c.l.b16 %v204
  %v2612 = vunpack.c.l.b16 %v205
  %v2613 = vunpack.c.l.b16 %v206
  %v2614 = vunpack.c.l.b16 %v207
  %v2615 = vunpack.c.l.b16 %v208
  %v2616 = vunpack.c.l.b16 %v209
  %v2617 = vunpack.c.l.b16 %v210
  %v2618 = vunpack.c.l.b16 %v211
  %v2619 = vunpack.c.l.b16 %v212
  %v2620 = vunpack.c.l.b16 %v213
  %v2621 = vunpack.c.l.b16 %v214
  %v2622 = vunpack.c.l.b16 %v215
  %v2623 = vunpack.c.l.b16 %v216
  %v2624 = vunpack.c.l.b16 %v217
  %v2625 = vunpack.c.l.b16 %v218
  %v2626 = vunpack.c.l.b16 %v219
  %v2627 = vunpack.c.l.b16 %v220
  %v2628 = vunpack.c.l.b16 %v221
  %v2629 = vunpack.c.l.b16 %v222
  %v2630 = vunpack.c.l.b16 %v223
  %v2631 = vunpack.c.l.b16 %v224
  %v2632 = vunpack.c.l.b16 %v225
  %v2633 = vunpack.c.l.b16 %v226
  %v2634 = vunpack.c.l.b16 %v227
  %v2635 = vunpack.c.l.b16 %v228
  %v2636 = vunpack.c.l.b16 %v229
  %v2637 = vunpack.c.l.b16 %v230
  %v2638 = vunpack.c.l.b16 %v231
  %v2639 = vunpack.c.l.b16 %v232
  %v2640 = vunpack.c.l.b16 %v233
  %v2641 = vunpack.c.l.b16 %v234
  %v2642 = vunpack.c.l.b16 %v235
  %v2643 = vunpack.c.l.b16 %v236
  %v2644 = vunpack.c.l.b16 %v237
  %v2645 = vunpack.c.l.b16 %v238
  %v2646 = vunpack.c.l.b16 %v239
  %v2647 = vunpack.c.l.b16 %v240
  %v2648 = vunpack.c.l.b16 %v241
  %v2649 = vunpack.c.l.b16 %v242
  %v2650 = vunpack.c.l.b16 %v243
  %v2651 = vunpack.c.l.b16 %v244
  %v2652 = vunpack.c.l.b16 %v245
  %v2653 = vunpack.c.l.b16 %v246
  %v2654 = vunpack.c.l.b16 %v247
  %v2655 = vunpack.c.l.b16 %v248
  %v2656 = vunpack.c.l.b16 %v249
  %v2657 = vunpack.c.l.b16 %v250
  %v2658 = vunpack.c.l.b16 %v251
  %v2659 = vunpack.c.l.b16 %v252
  %v2660 = vunpack.c.l.b16 %v253
  %v2661 = vunpack.c.l.b16 %v254
  %v2662 = vunpack.c.l.b16 %v255
  %v2663 = vunpack.c.l.b16 %v256
  %v2664 = vunpack.c.l.b16 %v257
  %v2665 = vunpack.c.l.b16 %v258
  %v2666 = vunpack.c.l.b16 %v259
  %v2667 = vunpack.c.l.b16 %v260
  %v2668 = vunpack.c.l.b16 %v261
  %v2669 = vunpack.c.l.b16 %v262
  %v2670 = vunpack.c.l.b16 %v263
  %v2671 = vunpack.c.l.b16 %v264
  %v2672 = vunpack.c.l.b16 %v265
  %v2673 = vunpack.c.l.b16 %v266
  %v2674 = vunpack.c.l.b16 %v267
  %v2675 = vunpack.c.l.b16 %v268
  %v2676 = vunpack.c.l.b16 %v269
  %v2677 = vunpack.c.l.b16 %v270
  %v2678 = vunpack.c.l.b16 %v271
  %v2679 = vunpack.c.l.b16 %v272
  %v2680 = vunpack.c.l.b16 %v273
  %v2681 = vunpack.c.l.b16 %v274
  %v2682 = vunpack.c.l.b16 %v275
  %v2683 = vunpack.c.l.b16 %v276
  %v2684 = vunpack.c.l.b16 %v277
  %v2685 = vunpack.c.l.b16 %v278
  %v2686 = vunpack.c.l.b16 %v279
  %v2687 = vunpack.c.l.b16 %v280
  %v2688 = vunpack.c.l.b16 %v281
  %v2689 = vunpack.c.l.b16 %v282
  %v2690 = vunpack.c.l.b16 %v283
  %v2691 = vunpack.c.l.b16 %v284
  %v2692 = vunpack.c.l.b16 %v285
  %v2693 = vunpack.c.l.b16 %v286
  %v2694 = vunpack.c.l.b16 %v287
  %v2695 = vunpack.c.l.b16 %v288
  %v2696 = vunpack.c.l.b16 %v289
  %v2697 = vunpack.c.l.b16 %v290
  %v2698 = vunpack.c.l.b16 %v291
  %v2699 = vunpack.c.l.b16 %v292
  %v2700 = vunpack.c.l.b16 %v293
  %v2701 = vunpack.c.l.b16 %v294
  %v2702 = vunpack.c.l.b16 %v295
  %v2703 = vunpack.c.l.b16 %v296
  %v2704 = vunpack.c.l.b16 %v297
  %v2705 = vunpack.c.l.b16 %v298
  %v2706 = vunpack.c.l.b16 %v299
  %v2707 = vunpack.c.l.b16 %v300
  %v2708 = vunpack.c.l.b16 %v301
  %v2709 = vunpack.c.l.b16 %v302
  %v2710 = vunpack.c.l.b16 %v303
  %v2711 = vunpack.c.l.b16 %v304
  %v2712 = vunpack.c.l.b16 %v305
  %v2713 = vunpack.c.l.b16 %v306
  %v2714 = vunpack.c.l.b16 %v307
  %v2715 = vunpack.c.l.b16 %v308
  %v2716 = vunpack.c.l.b16 %v309
  %v2717 = vunpack.c.l.b16 %v310
  %v2718 = vunpack.c.l.b16 %v311
  %v2719 = vunpack.c.l.b16 %v312
  %v2720 = vunpack.c.l.b16 %v313
  %v2721 = vunpack.c.l.b16 %v314
  %v2722 = vunpack.c.l.b16 %v315
  %v2723 = vunpack.c.l.b16 %v316
  %v2724 = vunpack.c.l.b16 %v317
  %v2725 = vunpack.c.l.b16 %v318
  %v2726 = vunpack.c.l.b16 %v319
  %v2727 = vunpack.c.l.b16 %v320
  %v2728 = vunpack.c.l.b16 %v321
  %v2729 = vunpack.c.l.b16 %v322
  %v2730 = vunpack.c.l.b16 %v323
  %v2731 = vunpack.c.l.b16 %v324
  %v2732 = vunpack.c.l.b16 %v325
  %v2733 = vunpack.c.l.b16 %v326
  %v2734 = vunpack.c.l.b16 %v327
  %v2735 = vunpack.c.l.b16 %v328
  %v2736 = vunpack.c.l.b16 %v329
  %v2737 = vunpack.c.l.b16 %v330
  %v2738 = vunpack.c.l.b16 %v331
  %v2739 = vunpack.c.l.b16 %v332
  %v2740 = vunpack.c.l.b16 %v333
  %v2741 = vunpack.c.l.b16 %v334
  %v2742 = vunpack.c.l.b16 %v335
  %v2743 = vunpack.c.l.b16 %v336
  %v2744 = vunpack.c.l.b16 %v337
  %v2745 = vunpack.c.l.b16 %v338
  %v2746 = vunpack.c.l.b16 %v339
  %v2747 = vunpack.c.l.b16 %v340
  %v2748 = vunpack.c.l.b16 %v341
  %v2749 = vunpack.c.l.b16 %v342
  %v2750 = vunpack.c.l.b16 %v343
  %v2751 = vunpack.c.l.b16 %v344
  %v2752 = vunpack.c.l.b16 %v345
  %v2753 = vunpack.c.l.b16 %v346
  %v2754 = vunpack.c.l.b16 %v347
  %v2755 = vunpack.c.l.b16 %v348
  %v2756 = vunpack.c.l.b16 %v349
  %v2757 = vunpack.c.l.b16 %v350
  %v2758 = vunpack.c.l.b16 %v351
  %v2759 = vunpack.c.l.b16 %v352
  %v2760 = vunpack.c.l.b16 %v353
  %v2761 = vunpack.c.l.b16 %v354
  %v2762 = vunpack.c.l.b16 %v355
  %v2763 = vunpack.c.l.b16 %v356
  %v2764 = vunpack.c.l.b16 %v357
  %v2765 = vunpack.c.l.b16 %v358
  %v2766 = vunpack.c.l.b16 %v359
  %v2767 = vunpack.c.l.b16 %v360
  %v2768 = vunpack.c.l.b16 %v361
  %v2769 = vunpack.c.l.b16 %v362
  %v2770 = vunpack.c.l.b16 %v363
  %v2771 = vunpack.c.l.b16 %v364
  %v2772 = vunpack.c.l.b16 %v365
  %v2773 = vunpack.c.l.b16 %v366
  %v2774 = vunpack.c.l.b16 %v367
  %v2775 = vunpack.c.l.b16 %v368
  %v2776 = vunpack.c.l.b16 %v369
  %v2777 = vunpack.c.l.b16 %v370
  %v2778 = vunpack.c.l.b16 %v371
  %v2779 = vunpack.c.l.b16 %v372
  %v2780 = vunpack.c.l.b16 %v373
  %v2781 = vunpack.c.l.b16 %v374
  %v2782 = vunpack.c.l.b16 %v375
  %v2783 = vunpack.c.l.b16 %v376
  %v2784 = vunpack.c.l.b16 %v377
  %v2785 = vunpack.c.l.b16 %v378
  %v2786 = vunpack.c.l.b16 %v379
  %v2787 = vunpack.c.l.b16 %v380
  %v2788 = vunpack.c.l.b16 %v381
  %v2789 = vunpack.c.l.b16 %v382
  %v2790 = vunpack.c.l.b16 %v383
  %v2791 = vunpack.c.l.b16 %v384
  %v2792 = vunpack.c.l.b16 %v385
  %v2793 = vunpack.c.l.b16 %v386
  %v2794 = vunpack.c.l.b16 %v387
  %v2795 = vunpack.c.l.b16 %v388
  %v2796 = vunpack.c.l.b16 %v389
  %v2797 = vunpack.c.l.b16 %v390
  %v2798 = vunpack.c.l.b16 %v391
  %v2799 = vunpack.c.l.b16 %v392
  %v2800 = vunpack.c.l.b16 %v393
  %v2801 = vunpack.c.l.b16 %v394
  %v2802 = vunpack.c.l.b16 %v395
  %v2803 = vunpack.c.l.b16 %v396
  %v2804 = vunpack.c.l.b16 %v397
  %v2805 = vunpack.c.l.b16 %v398
  %v2806 = vunpack.c.l.b16 %v399
  %v2807 = vunpack.c.l.b16 %v400
  %v2808 = vunpack.c.l.b16 %v401
  %v2809 = vunpack.c.l.b16 %v402
  %v2810 = vunpack.c.l.b16 %v403
  %v2811 = vunpack.c.l.b16 %v404
  %v2812 = vunpack.c.l.b16 %v405
  %v2813 = vunpack.c.l.b16 %v406
  %v2814 = vunpack.c.l.b16 %v407
  %v2815 = vunpack.c.l.b16 %v408
  %v2816 = vunpack.c.l.b16 %v409
  %v2817 = vunpack.c.l.b16 %v410
  %v2818 = vunpack.c.l.b16 %v411
  %v2819 = vunpack.c.l.b16 %v412
  %v2820 = vunpack.c.l.b16 %v413
  %v2821 = vunpack.c.l.b16 %v414
  %v2822 = vunpack.c.l.b16 %v415
  %v2823 = vunpack.c.l.b16 %v416
  %v2824 = vunpack.c.l.b16 %v417
  %v2825 = vunpack.c.l.b16 %v418
  %v2826 = vunpack.c.l.b16 %v419
  %v2827 = vunpack.c.l.b16 %v420
  %v2828 = vunpack.c.l.b16 %v421
  %v2829 = vunpack.c.l.b16 %v422
  %v2830 = vunpack.c.l.b16 %v423
  %v2831 = vunpack.c.l.b16 %v424
  %v2832 = vunpack.c.l.b16 %v425
  %v2833 = vunpack.c.l.b16 %v426
  %v2834 = vunpack.c.l.b16 %v427
  %v2835 = vunpack.c.l.b16 %v428
  %v2836 = vunpack.c.l.b16 %v429
  %v2837 = vunpack.c.l.b16 %v430
  %v2838 = vunpack.c.l.b16 %v431
  %v2839 = vunpack.c.l.b16 %v432
  %v2840 = vunpack.c.l.b16 %v433
  %v2841 = vunpack.c.l.b16 %v434
  %v2842 = vunpack.c.l.b16 %v435
  %v2843 = vunpack.c.l.b16 %v436
  %v2844 = vunpack.c.l.b16 %v437
  %v2845 = vunpack.c.l.b16 %v438
  %v2846 = vunpack.c.l.b16 %v439
  %v2847 = vunpack.c.l.b16 %v440
  %v2848 = vunpack.c.l.b16 %v441
  %v2849 = vunpack.c.l.b16 %v442
  %v2850 = vunpack.c.l.b16 %v443
  %v2851 = vunpack.c.l.b16 %v444
  %v2852 = vunpack.c.l.b16 %v445
  %v2853 = vunpack.c.l.b16 %v446
  %v2854 = vunpack.c.l.b16 %v447
  %v2855 = vunpack.c.l.b16 %v448
  %v2856 = vunpack.c.l.b16 %v449
  %v2857 = vunpack.c.l.b16 %v450
  %v2858 = vunpack.c.l.b16 %v451
  %v2859 = vunpack.c.l.b16 %v452
  %v2860 = vunpack.c.l.b16 %v453
  %v2861 = vunpack.c.l.b16 %v454
  %v2862 = vunpack.c.l.b16 %v455
  %v2863 = vunpack.c.l.b16 %v456
  %v2864 = vunpack.c.l.b16 %v457
  %v2865 = vunpack.c.l.b16 %v458
  %v2866 = vunpack.c.l.b16 %v459
  %v2867 = vunpack.c.l.b16 %v460
  %v2868 = vunpack.c.l.b16 %v461
  %v2869 = vunpack.c.l.b16 %v462
  %v2870 = vunpack.c.l.b16 %v463
  %v2871 = vunpack.c.l.b16 %v464
  %v2872 = vunpack.c.l.b16 %v465
  %v2873 = vunpack.c.l.b16 %v466
  %v2874 = vunpack.c.l.b16 %v467
  %v2875 = vunpack.c.l.b16 %v468
  %v2876 = vunpack.c.l.b16 %v469
  %v2877 = vunpack.c.l.b16 %v470
  %v2878 = vunpack.c.l.b16 %v471
  %v2879 = vunpack.c.l.b16 %v472
  %v2880 = vunpack.c.l.b16 %v473
  %v2881 = vunpack.c.l.b16 %v474
  %v2882 = vunpack.c.l.b16 %v475
  %v2883 = vunpack.c.l.b16 %v476
  %v2884 = vunpack.c.l.b16 %v477
  %v2885 = vunpack.c.l.b16 %v478
  %v2886 = vunpack.c.l.b16 %v479
  %v2887 = vunpack.c.l.b16 %v480
  %v2888 = vunpack.c.l.b16 %v481
  %v2889 = vunpack.c.l.b16 %v482
  %v2890 = vunpack.c.l.b16 %v483
  %v2891 = vunpack.c.l.b16 %v484
  %v2892 = vunpack.c.l.b16 %v485
  %v2893 = vunpack.c.l.b16 %v486
  %v2894 = vunpack.c.l.b16 %v487
  %v2895 = vunpack.c.l.b16 %v488
  %v2896 = vunpack.c.l.b16 %v489
  %v2897 = vunpack.c.l.b16 %v490
  %v2898 = vunpack.c.l.b16 %v491
  %v2899 = vunpack.c.l.b16 %v492
  %v2900 = vunpack.c.l.b16 %v493
  %v2901 = vunpack.c.l.b16 %v494
  %v2902 = vunpack.c.l.b16 %v495
  %v2903 = vunpack.c.l.b16 %v496
  %v2904 = vunpack.c.l.b16 %v497
  %v2905 = vunpack.c.l.b16 %v498
  %v2906 = vunpack.c.l.b16 %v499
  %v2907 = vunpack.c.l.b16 %v500
  %v2908 = vunpack.c.l.b16 %v501
  %v2909 = vunpack.c.l.b16 %v502
  %v2910 = vunpack.c.l.b16 %v503
  %v2911 = vunpack.c.l.b16 %v504
  %v2912 = vunpack.c.l.b16 %v505
  %v2913 = vunpack.c.l.b16 %v506
  %v2914 = vunpack.c.l.b16 %v507
  %v2915 = vunpack.c.l.b16 %v508
  %v2916 = vunpack.c.l.b16 %v509
  %v2917 = vunpack.c.l.b16 %v510
  %v2918 = vunpack.c.l.b16 %v511
  %v2919 = vunpack.c.l.b16 %v512
  %v2920 = vunpack.c.l.b16 %v513
  %v2921 = vunpack.c.l.b16 %v514
  %v2922 = vunpack.c.l.b16 %v515
  %v2923 = vunpack.c.l.b16 %v516
  %v2924 = vunpack.c.l.b16 %v517
  %v2925 = vunpack.c.l.b16 %v518
  %v2926 = vunpack.c.l.b16 %v519
  %v2927 = vunpack.c.l.b16 %v520
  %v2928 = vunpack.c.l.b16 %v521
  %v2929 = vunpack.c.l.b16 %v522
  %v2930 = vunpack.c.l.b16 %v523
  %v2931 = vunpack.c.l.b16 %v524
  %v2932 = vunpack.c.l.b16 %v525
  %v2933 = vunpack.c.l.b16 %v526
  %v2934 = vunpack.c.l.b16 %v527
  %v2935 = vunpack.c.l.b16 %v528
  %v2936 = vunpack.c.l.b16 %v529
  %v2937 = vunpack.c.l.b16 %v530
  %v2938 = vunpack.c.l.b16 %v531
  %v2939 = vunpack.c.l.b16 %v532
  %v2940 = vunpack.c.l.b16 %v533
  %v2941 = vunpack.c.l.b16 %v534
  %v2942 = vunpack.c.l.b16 %v535
  %v2943 = vunpack.c.l.b16 %v536
  %v2944 = vunpack.c.l.b16 %v537
  %v2945 = vunpack.c.l.b16 %v538
  %v2946 = vunpack.c.l.b16 %v539
  %v2947 = vunpack.c.l.b16 %v540
  %v2948 = vunpack.c.l.b16 %v541
  %v2949 = vunpack.c.l.b16 %v542
  %v2950 = vunpack.c.l.b16 %v543
  %v2951 = vunpack.c.l.b16 %v544
  %v2952 = vunpack.c.l.b16 %v545
  %v2953 = vunpack.c.l.b16 %v546
  %v2954 = vunpack.c.l.b16 %v547
  %v2955 = vunpack.c.l.b16 %v548
  %v2956 = vunpack.c.l.b16 %v549
  %v2957 = vunpack.c.l.b16 %v550
  %v2958 = vunpack.c.l.b16 %v551
  %v2959 = vunpack.c.l.b16 %v552
  %v2960 = vunpack.c.l.b16 %v553
  %v2961 = vunpack.c.l.b16 %v554
  %v2962 = vunpack.c.l.b16 %v555
  %v2963 = vunpack.c.l.b16 %v556
  %v2964 = vunpack.c.l.b16 %v557
  %v2965 = vunpack.c.l.b16 %v558
  %v2966 = vunpack.c.l.b16 %v559
  %v2967 = vunpack.c.l.b16 %v560
  %v2968 = vunpack.c.l.b16 %v561
  %v2969 = vunpack.c.l.b16 %v562
  %v2970 = vunpack.c.l.b16 %v563
  %v2971 = vunpack.c.l.b16 %v564
  %v2972 = vunpack.c.l.b16 %v565
  %v2973 = vunpack.c.l.b16 %v566
  %v2974 = vunpack.c.l.b16 %v567
  %v2975 = vunpack.c.l.b16 %v568
  %v2976 = vunpack.c.l.b16 %v569
  %v2977 = vunpack.c.l.b16 %v570
  %v2978 = vunpack.c.l.b16 %v571
  %v2979 = vunpack.c.l.b16 %v572
  %v2980 = vunpack.c.l.b16 %v573
  %v2981 = vunpack.c.l.b16 %v574
  %v2982 = vunpack.c.l.b16 %v575
  %v2983 = vunpack.c.l.b16 %v576
  %v2984 = vunpack.c.l.b16 %v577
  %v2985 = vunpack.c.l.b16 %v578
  %v2986 = vunpack.c.l.b16 %v579
  %v2987 = vunpack.c.l.b16 %v580
  %v2988 = vunpack.c.l.b16 %v581
  %v2989 = vunpack.c.l.b16 %v582
  %v2990 = vunpack.c.l.b16 %v583
  %v2991 = vunpack.c.l.b16 %v584
  %v2992 = vunpack.c.l.b16 %v585
  %v2993 = vunpack.c.l.b16 %v586
  %v2994 = vunpack.c.l.b16 %v587
  %v2995 = vunpack.c.l.b16 %v588
  %v2996 = vunpack.c.l.b16 %v589
  %v2997 = vunpack.c.l.b16 %v590
  %v2998 = vunpack.c.l.b16 %v591
  %v2999 = vunpack.c.l.b16 %v592
  %v3000 = vunpack.c.l.b16 %v593
  %v3001 = vunpack.c.l.b16 %v594
  %v3002 = vunpack.c.l.b16 %v595
  %v3003 = vunpack.c.l.b16 %v596
  %v3004 = vunpack.c.l.b16 %v597
  %v3005 = vunpack.c.l.b16 %v598
  %v3006 = vunpack.c.l.b16 %v599
  %v3007 = vunpack.c.l.b16 %v600
  %v3008 = vunpack.c.l.b16 %v601
  %v3009 = vunpack.c.l.b16 %v602
  %v3010 = vunpack.c.l.b16 %v603
  %v3011 = vunpack.c.l.b16 %v604
  %v3012 = vunpack.c.l.b16 %v605
  %v3013 = vunpack.c.l.b16 %v606
  %v3014 = vunpack.c.l.b16 %v607
  %v3015 = vunpack.c.l.b16 %v608
  %v3016 = vunpack.c.l.b16 %v609
  %v3017 = vunpack.c.l.b16 %v610
  %v3018 = vunpack.c.l.b16 %v611
  %v3019 = vunpack.c.l.b16 %v612
  %v3020 = vunpack.c.l.b16 %v613
  %v3021 = vunpack.c.l.b16 %v614
  %v3022 = vunpack.c.l.b16 %v615
  %v3023 = vunpack.c.l.b16 %v616
  %v3024 = vunpack.c.l.b16 %v617
  %v3025 = vunpack.c.l.b16 %v618
  %v3026 = vunpack.c.l.b16 %v619
  %v3027 = vunpack.c.l.b16 %v620
  %v3028 = vunpack.c.l.b16 %v621
  %v3029 = vunpack.c.l.b16 %v622
  %v3030 = vunpack.c.l.b16 %v623
  %v3031 = vunpack.c.l.b16 %v624
  %v3032 = vunpack.c.l.b16 %v625
  %v3033 = vunpack.c.l.b16 %v626
  %v3034 = vunpack.c.l.b16 %v627
  %v3035 = vunpack.c.l.b16 %v628
  %v3036 = vunpack.c.l.b16 %v629
  %v3037 = vunpack.c.l.b16 %v630
  %v3038 = vunpack.c.l.b16 %v631
  %v3039 = vunpack.c.l.b16 %v632
  %v3040 = vunpack.c.l.b16 %v633
  %v3041 = vunpack.c.l.b16 %v634
  %v3042 = vunpack.c.l.b16 %v635
  %v3043 = vunpack.c.l.b16 %v636
  %v3044 = vunpack.c.l.b16 %v637
  %v3045 = vunpack.c.l.b16 %v638
  %v3046 = vunpack.c.l.b16 %v639
  %v3047 = vunpack.c.l.b16 %v640
  %v3048 = vunpack.c.l.b16 %v641
  %v3049 = vunpack.c.l.b16 %v642
  %v3050 = vunpack.c.l.b16 %v643
  %v3051 = vunpack.c.l.b16 %v644
  %v3052 = vunpack.c.l.b16 %v645
  %v3053 = vunpack.c.l.b16 %v646
  %v3054 = vunpack.c.l.b16 %v647
  %v3055 = vunpack.c.l.b16 %v648
  %v3056 = vunpack.c.l.b16 %v649
  %v3057 = vunpack.c.l.b16 %v650
  %v3058 = vunpack.c.l.b16 %v651
  %v3059 = vunpack.c.l.b16 %v652
  %v3060 = vunpack.c.l.b16 %v653
  %v3061 = vunpack.c.l.b16 %v654
  %v3062 = vunpack.c.l.b16 %v655
  %v3063 = vunpack.c.l.b16 %v656
  %v3064 = vunpack.c.l.b16 %v657
  %v3065 = vunpack.c.l.b16 %v658
  %v3066 = vunpack.c.l.b16 %v659
  %v3067 = vunpack.c.l.b16 %v660
  %v3068 = vunpack.c.l.b16 %v661
  %v3069 = vunpack.c.l.b16 %v662
  %v3070 = vunpack.c.l.b16 %v663
  %v3071 = vunpack.c.l.b16 %v664
  %v3072 = vunpack.c.l.b16 %v665
  %v3073 = vunpack.c.l.b16 %v666
  %v3074 = vunpack.c.l.b16 %v667
  %v3075 = vunpack.c.l.b16 %v668
  %v3076 = vunpack.c.l.b16 %v669
  %v3077 = vunpack.c.l.b16 %v670
  %v3078 = vunpack.c.l.b16 %v671
  %v3079 = vunpack.c.l.b16 %v672
  %v3080 = vunpack.c.l.b16 %v673
  %v3081 = vunpack.c.l.b16 %v674
  %v3082 = vunpack.c.l.b16 %v675
  %v3083 = vunpack.c.l.b16 %v676
  %v3084 = vunpack.c.l.b16 %v677
  %v3085 = vunpack.c.l.b16 %v678
  %v3086 = vunpack.c.l.b16 %v679
  %v3087 = vunpack.c.l.b16 %v680
  %v3088 = vunpack.c.l.b16 %v681
  %v3089 = vunpack.c.l.b16 %v682
  %v3090 = vunpack.c.l.b16 %v683
  %v3091 = vunpack.c.l.b16 %v684
  %v3092 = vunpack.c.l.b16 %v685
  %v3093 = vunpack.c.l.b16 %v686
  %v3094 = vunpack.c.l.b16 %v687
  %v3095 = vunpack.c.l.b16 %v688
  %v3096 = vunpack.c.l.b16 %v689
  %v3097 = vunpack.c.l.b16 %v690
  %v3098 = vunpack.c.l.b16 %v691
  %v3099 = vunpack.c.l.b16 %v692
  %v3100 = vunpack.c.l.b16 %v693
  %v3101 = vunpack.c.l.b16 %v694
  %v3102 = vunpack.c.l.b16 %v695
  %v3103 = vunpack.c.l.b16 %v696
  %v3104 = vunpack.c.l.b16 %v697
  %v3105 = vunpack.c.l.b16 %v698
  %v3106 = vunpack.c.l.b16 %v699
  %v3107 = vunpack.c.l.b16 %v700
  %v3108 = vunpack.c.l.b16 %v701
  %v3109 = vunpack.c.l.b16 %v702
  %v3110 = vunpack.c.l.b16 %v703
  %v3111 = vunpack.c.l.b16 %v704
  %v3112 = vunpack.c.l.b16 %v705
  %v3113 = vunpack.c.l.b16 %v706
  %v3114 = vunpack.c.l.b16 %v707
  %v3115 = vunpack.c.l.b16 %v708
  %v3116 = vunpack.c.l.b16 %v709
  %v3117 = vunpack.c.l.b16 %v710
  %v3118 = vunpack.c.l.b16 %v711
  %v3119 = vunpack.c.l.b16 %v712
  %v3120 = vunpack.c.l.b16 %v713
  %v3121 = vunpack.c.l.b16 %v714
  %v3122 = vunpack.c.l.b16 %v715
  %v3123 = vunpack.c.l.b16 %v716
  %v3124 = vunpack.c.l.b16 %v717
  %v3125 = vunpack.c.l.b16 %v718
  %v3126 = vunpack.c.l.b16 %v719
  %v3127 = vunpack.c.l.b16 %v720
  %v3128 = vunpack.c.l.b16 %v721
  %v3129 = vunpack.c.l.b16 %v722
  %v3130 = vunpack.c.l.b16 %v723
  %v3131 = vunpack.c.l.b16 %v724
  %v3132 = vunpack.c.l.b16 %v725
  %v3133 = vunpack.c.l.b16 %v726
  %v3134 = vunpack.c.l.b16 %v727
  %v3135 = vunpack.c.l.b16 %v728
  %v3136 = vunpack.c.l.b16 %v729
  %v3137 = vunpack.c.l.b16 %v730
  %v3138 = vunpack.c.l.b16 %v731
  %v3139 = vunpack.c.l.b16 %v732
  %v3140 = vunpack.c.l.b16 %v733
  %v3141 = vunpack.c.l.b16 %v734
  %v3142 = vunpack.c.l.b16 %v735
  %v3143 = vunpack.c.l.b16 %v736
  %v3144 = vunpack.c.l.b16 %v737
  %v3145 = vunpack.c.l.b16 %v738
  %v3146 = vunpack.c.l.b16 %v739
  %v3147 = vunpack.c.l.b16 %v740
  %v3148 = vunpack.c.l.b16 %v741
  %v3149 = vunpack.c.l.b16 %v742
  %v3150 = vunpack.c.l.b16 %v743
  %v3151 = vunpack.c.l.b16 %v744
  %v3152 = vunpack.c.l.b16 %v745
  %v3153 = vunpack.c.l.b16 %v746
  %v3154 = vunpack.c.l.b16 %v747
  %v3155 = vunpack.c.l.b16 %v748
  %v3156 = vunpack.c.l.b16 %v749
  %v3157 = vunpack.c.l.b16 %v750
  %v3158 = vunpack.c.l.b16 %v751
  %v3159 = vunpack.c.l.b16 %v752
  %v3160 = vunpack.c.l.b16 %v753
  %v3161 = vunpack.c.l.b16 %v754
  %v3162 = vunpack.c.l.b16 %v755
  %v3163 = vunpack.c.l.b16 %v756
  %v3164 = vunpack.c.l.b16 %v757
  %v3165 = vunpack.c.l.b16 %v758
  %v3166 = vunpack.c.l.b16 %v759
  %v3167 = vunpack.c.l.b16 %v760
  %v3168 = vunpack.c.l.b16 %v761
  %v3169 = vunpack.c.l.b16 %v762
  %v3170 = vunpack.c.l.b16 %v763
  %v3171 = vunpack.c.l.b16 %v764
  %v3172 = vunpack.c.l.b16 %v765
  %v3173 = vunpack.c.l.b16 %v766
  %v3174 = vunpack.c.l.b16 %v767
  %v3175 = vunpack.c.l.b16 %v768
  %v3176 = vunpack.c.l.b16 %v769
  %v3177 = vunpack.c.l.b16 %v770
  %v3178 = vunpack.c.l.b16 %v771
  %v3179 = vunpack.c.l.b16 %v772
  %v3180 = vunpack.c.l.b16 %v773
  %v3181 = vunpack.c.l.b16 %v774
  %v3182 = vunpack.c.l.b16 %v775
  %v3183 = vunpack.c.l.b16 %v776
  %v3184 = vunpack.c.l.b16 %v777
  %v3185 = vunpack.c.l.b16 %v778
  %v3186 = vunpack.c.l.b16 %v779
  %v3187 = vunpack.c.l.b16 %v780
  %v3188 = vunpack.c.l.b16 %v781
  %v3189 = vunpack.c.l.b16 %v782
  %v3190 = vunpack.c.l.b16 %v783
  %v3191 = vunpack.c.l.b16 %v784
  %v3192 = vunpack.c.l.b16 %v785
  %v3193 = vunpack.c.l.b16 %v786
  %v3194 = vunpack.c.l.b16 %v787
  %v3195 = vunpack.c.l.b16 %v788
  %v3196 = vunpack.c.l.b16 %v789
  %v3197 = vunpack.c.l.b16 %v790
  %v3198 = vunpack.c.l.b16 %v791
  %v3199 = vunpack.c.l.b16 %v792
  %v3200 = vunpack.c.l.b16 %v793
  %v3201 = vunpack.c.l.b16 %v794
  %v3202 = vunpack.c.l.b16 %v795
  %v3203 = vunpack.c.l.b16 %v796
  %v3204 = vunpack.c.l.b16 %v797
  %v3205 = vunpack.c.l.b16 %v798
  %v3206 = vunpack.c.l.b16 %v799
  %v3207 = vunpack.c.l.b16 %v800
  %v3208 = vunpack.c.l.b16 %v801
  %v3209 = vunpack.c.l.b16 %v802
  %v3210 = vunpack.c.l.b16 %v803
  %v3211 = vunpack.c.l.b16 %v804
  %v3212 = vunpack.c.l.b16 %v805
  %v3213 = vunpack.c.l.b16 %v806
  %v3214 = vunpack.c.l.b16 %v807
  %v3215 = vunpack.c.l.b16 %v808
  %v3216 = vunpack.c.l.b16 %v809
  %v3217 = vunpack.c.l.b16 %v810
  %v3218 = vunpack.c.l.b16 %v811
  %v3219 = vunpack.c.l.b16 %v812
  %v3220 = vunpack.c.l.b16 %v813
  %v3221 = vunpack.c.l.b16 %v814
  %v3222 = vunpack.c.l.b16 %v815
  %v3223 = vunpack.c.l.b16 %v816
  %v3224 = vunpack.c.l.b16 %v817
  %v3225 = vunpack.c.l.b16 %v818
  %v3226 = vunpack.c.l.b16 %v819
  %v3227 = vunpack.c.l.b16 %v820
  %v3228 = vunpack.c.l.b16 %v821
  %v3229 = vunpack.c.l.b16 %v822
  %v3230 = vunpack.c.l.b16 %v823
  %v3231 = vunpack.c.l.b16 %v824
  %v3232 = vunpack.c.l.b16 %v825
  %v3233 = vunpack.c.l.b16 %v826
  %v3234 = vunpack.c.l.b16 %v827
  %v3235 = vunpack.c.l.b16 %v828
  %v3236 = vunpack.c.l.b16 %v829
  %v3237 = vunpack.c.l.b16 %v830
  %v3238 = vunpack.c.l.b16 %v831
  %v3239 = vunpack.c.l.b16 %v832
  %v3240 = vunpack.c.l.b16 %v833
  %v3241 = vunpack.c.l.b16 %v834
  %v3242 = vunpack.c.l.b16 %v835
  %v3243 = vunpack.c.l.b16 %v836
  %v3244 = vunpack.c.l.b16 %v837
  %v3245 = vunpack.c.l.b16 %v838
  %v3246 = vunpack.c.l.b16 %v839
  %v3247 = vunpack.c.l.b16 %v840
  %v3248 = vunpack.c.l.b16 %v841
  %v3249 = vunpack.c.l.b16 %v842
  %v3250 = vunpack.c.l.b16 %v843
  %v3251 = vunpack.c.l.b16 %v844
  %v3252 = vunpack.c.l.b16 %v845
  %v3253 = vunpack.c.l.b16 %v846
  %v3254 = vunpack.c.l.b16 %v847
  %v3255 = vunpack.c.l.b16 %v848
  %v3256 = vunpack.c.l.b16 %v849
  %v3257 = vunpack.c.l.b16 %v850
  %v3258 = vunpack.c.l.b16 %v851
  %v3259 = vunpack.c.l.b16 %v852
  %v3260 = vunpack.c.l.b16 %v853
  %v3261 = vunpack.c.l.b16 %v854
  %v3262 = vunpack.c.l.b16 %v855
  %v3263 = vunpack.c.l.b16 %v856
  %v3264 = vunpack.c.l.b16 %v857
  %v3265 = vunpack.c.l.b16 %v858
  %v3266 = vunpack.c.l.b16 %v859
  %v3267 = vunpack.c.l.b16 %v860
  %v3268 = vunpack.c.l.b16 %v861
  %v3269 = vunpack.c.l.b16 %v862
  %v3270 = vunpack.c.l.b16 %v863
  %v3271 = vunpack.c.l.b16 %v864
  %v3272 = vunpack.c.l.b16 %v865
  %v3273 = vunpack.c.l.b16 %v866
  %v3274 = vunpack.c.l.b16 %v867
  %v3275 = vunpack.c.l.b16 %v868
  %v3276 = vunpack.c.l.b16 %v869
  %v3277 = vunpack.c.l.b16 %v870
  %v3278 = vunpack.c.l.b16 %v871
  %v3279 = vunpack.c.l.b16 %v872
  %v3280 = vunpack.c.l.b16 %v873
  %v3281 = vunpack.c.l.b16 %v874
  %v3282 = vunpack.c.l.b16 %v875
  %v3283 = vunpack.c.l.b16 %v876
  %v3284 = vunpack.c.l.b16 %v877
  %v3285 = vunpack.c.l.b16 %v878
  %v3286 = vunpack.c.l.b16 %v879
  %v3287 = vunpack.c.l.b16 %v880
  %v3288 = vunpack.c.l.b16 %v881
  %v3289 = vunpack.c.l.b16 %v882
  %v3290 = vunpack.c.l.b16 %v883
  %v3291 = vunpack.c.l.b16 %v884
  %v3292 = vunpack.c.l.b16 %v885
  %v3293 = vunpack.c.l.b16 %v886
  %v3294 = vunpack.c.l.b16 %v887
  %v3295 = vunpack.c.l.b16 %v888
  %v3296 = vunpack.c.l.b16 %v889
  %v3297 = vunpack.c.l.b16 %v890
  %v3298 = vunpack.c.l.b16 %v891
  %v3299 = vunpack.c.l.b16 %v892
  %v3300 = vunpack.c.l.b16 %v893
  %v3301 = vunpack.c.l.b16 %v894
  %v3302 = vunpack.c.l.b16 %v895
  %v3303 = vunpack.c.l.b16 %v896
  %v3304 = vunpack.c.l.b16 %v897
  %v3305 = vunpack.c.l.b16 %v898
  %v3306 = vunpack.c.l.b16 %v899
  %v3307 = vunpack.c.l.b16 %v900
  %v3308 = vunpack.c.l.b16 %v901
  %v3309 = vunpack.c.l.b16 %v902
  %v3310 = vunpack.c.l.b16 %v903
  %v3311 = vunpack.c.l.b16 %v904
  %v3312 = vunpack.c.l.b16 %v905
  %v3313 = vunpack.c.l.b16 %v906
  %v3314 = vunpack.c.l.b16 %v907
  %v3315 = vunpack.c.l.b16 %v908
  %v3316 = vunpack.c.l.b16 %v909
  %v3317 = vunpack.c.l.b16 %v910
  %v3318 = vunpack.c.l.b16 %v911
  %v3319 = vunpack.c.l.b16 %v912
  %v3320 = vunpack.c.l.b16 %v913
  %v3321 = vunpack.c.l.b16 %v914
  %v3322 = vunpack.c.l.b16 %v915
  %v3323 = vunpack.c.l.b16 %v916
  %v3324 = vunpack.c.l.b16 %v917
  %v3325 = vunpack.c.l.b16 %v918
  %v3326 = vunpack.c.l.b16 %v919
  %v3327 = vunpack.c.l.b16 %v920
  %v3328 = vunpack.c.l.b16 %v921
  %v3329 = vunpack.c.l.b16 %v922
  %v3330 = vunpack.c.l.b16 %v923
  %v3331 = vunpack.c.l.b16 %v924
  %v3332 = vunpack.c.l.b16 %v925
  %v3333 = vunpack.c.l.b16 %v926
  %v3334 = vunpack.c.l.b16 %v927
  %v3335 = vunpack.c.l.b16 %v928
  %v3336 = vunpack.c.l.b16 %v929
  %v3337 = vunpack.c.l.b16 %v930
  %v3338 = vunpack.c.l.b16 %v931
  %v3339 = vunpack.c.l.b16 %v932
  %v3340 = vunpack.c.l.b16 %v933
  %v3341 = vunpack.c.l.b16 %v934
  %v3342 = vunpack.c.l.b16 %v935
  %v3343 = vunpack.c.l.b16 %v936
  %v3344 = vunpack.c.l.b16 %v937
  %v3345 = vunpack.c.l.b16 %v938
  %v3346 = vunpack.c.l.b16 %v939
  %v3347 = vunpack.c.l.b16 %v940
  %v3348 = vunpack.c.l.b16 %v941
  %v3349 = vunpack.c.l.b16 %v942
  %v3350 = vunpack.c.l.b16 %v943
  %v3351 = vunpack.c.l.b16 %v944
  %v3352 = vunpack.c.l.b16 %v945
  %v3353 = vunpack.c.l.b16 %v946
  %v3354 = vunpack.c.l.b16 %v947
  %v3355 = vunpack.c.l.b16 %v948
  %v3356 = vunpack.c.l.b16 %v949
  %v3357 = vunpack.c.l.b16 %v950
  %v3358 = vunpack.c.l.b16 %v951
  %v3359 = vunpack.c.l.b16 %v952
  %v3360 = vunpack.c.l.b16 %v953
  %v3361 = vunpack.c.l.b16 %v954
  %v3362 = vunpack.c.l.b16 %v955
  %v3363 = vunpack.c.l.b16 %v956
  %v3364 = vunpack.c.l.b16 %v957
  %v3365 = vunpack.c.l.b16 %v958
  %v3366 = vunpack.c.l.b16 %v959
  %v3367 = vunpack.c.l.b16 %v960
  %v3368 = vunpack.c.l.b16 %v961
  %v3369 = vunpack.c.l.b16 %v962
  %v3370 = vunpack.c.l.b16 %v963
  %v3371 = vunpack.c.l.b16 %v964
  %v3372 = vunpack.c.l.b16 %v965
  %v3373 = vunpack.c.l.b16 %v966
  %v3374 = vunpack.c.l.b16 %v967
  %v3375 = vunpack.c.l.b16 %v968
  %v3376 = vunpack.c.l.b16 %v969
  %v3377 = vunpack.c.l.b16 %v970
  %v3378 = vunpack.c.l.b16 %v971
  %v3379 = vunpack.c.l.b16 %v972
  %v3380 = vunpack.c.l.b16 %v973
  %v3381 = vunpack.c.l.b16 %v974
  %v3382 = vunpack.c.l.b16 %v975
  %v3383 = vunpack.c.l.b16 %v976
  %v3384 = vunpack.c.l.b16 %v977
  %v3385 = vunpack.c.l.b16 %v978
  %v3386 = vunpack.c.l.b16 %v979
  %v3387 = vunpack.c.l.b16 %v980
  %v3388 = vunpack.c.l.b16 %v981
  %v3389 = vunpack.c.l.b16 %v982
  %v3390 = vunpack.c.l.b16 %v983
  %v3391 = vunpack.c.l.b16 %v984
  %v3392 = vunpack.c.l.b16 %v985
  %v3393 = vunpack.c.l.b16 %v986
  %v3394 = vunpack.c.l.b16 %v987
  %v3395 = vunpack.c.l.b16 %v988
  %v3396 = vunpack.c.l.b16 %v989
  %v3397 = vunpack.c.l.b16 %v990
  %v3398 = vunpack.c.l.b16 %v991
  %v3399 = vunpack.c.l.b16 %v992
  %v3400 = vunpack.c.l.b16 %v993
  %v3401 = vunpack.c.l.b16 %v994
  %v3402 = vunpack.c.l.b16 %v995
  %v3403 = vunpack.c.l.b16 %v996
  %v3404 = vunpack.c.l.b16 %v997
  %v3405 = vunpack.c.l.b16 %v998
  %v3406 = vunpack.c.l.b16 %v999
  %v3407 = vunpack.c.l.b16 %v1000
  %v3408 = vunpack.c.l.b16 %v1001
  %v3409 = vunpack.c.l.b16 %v1002
  %v3410 = vunpack.c.l.b16 %v1003
  %v3411 = vunpack.c.l.b16 %v1004
  %v3412 = vunpack.c.l.b16 %v1005
  %v3413 = vunpack.c.l.b16 %v1006
  %v3414 = vunpack.c.l.b16 %v1007
  %v3415 = vunpack.c.l.b16 %v1008
  %v3416 = vunpack.c.l.b16 %v1009
  %v3417 = vunpack.c.l.b16 %v1010
  %v3418 = vunpack.c.l.b16 %v1011
  %v3419 = vunpack.c.l.b16 %v1012
  %v3420 = vunpack.c.l.b16 %v1013
  %v3421 = vunpack.c.l.b16 %v1014
  %v3422 = vunpack.c.l.b16 %v1015
  %v3423 = vunpack.c.l.b16 %v1016
  %v3424 = vunpack.c.l.b16 %v1017
  %v3425 = vunpack.c.l.b16 %v1018
  %v3426 = vunpack.c.l.b16 %v1019
  %v3427 = vunpack.c.l.b16 %v1020
  %v3428 = vunpack.c.l.b16 %v1021
  %v3429 = vunpack.c.l.b16 %v1022
  %v3430 = vunpack.c.l.b16 %v1023
  %v3431 = vunpack.c.l.b16 %v1024
  %v3432 = vunpack.c.l.b16 %v1025
  %v3433 = vunpack.c.l.b16 %v1026
  %v3434 = vunpack.c.l.b16 %v1027
  %v3435 = vunpack.c.l.b16 %v1028
  %v3436 = vunpack.c.l.b16 %v1029
  %v3437 = vunpack.c.l.b16 %v1030
  %v3438 = vunpack.c.l.b16 %v1031
  %v3439 = vunpack.c.l.b16 %v1032
  %v3440 = vunpack.c.l.b16 %v1033
  %v3441 = vunpack.c.l.b16 %v1034
  %v3442 = vunpack.c.l.b16 %v1035
  %v3443 = vunpack.c.l.b16 %v1036
  %v3444 = vunpack.c.l.b16 %v1037
  %v3445 = vunpack.c.l.b16 %v1038
  %v3446 = vunpack.c.l.b16 %v1039
  %v3447 = vunpack.c.l.b16 %v1040
  %v3448 = vunpack.c.l.b16 %v1041
  %v3449 = vunpack.c.l.b16 %v1042
  %v3450 = vunpack.c.l.b16 %v1043
  %v3451 = vunpack.c.l.b16 %v1044
  %v3452 = vunpack.c.l.b16 %v1045
  %v3453 = vunpack.c.l.b16 %v1046
  %v3454 = vunpack.c.l.b16 %v1047
  %v3455 = vunpack.c.l.b16 %v1048
  %v3456 = vunpack.c.l.b16 %v1049
  %v3457 = vunpack.c.l.b16 %v1050
  %v3458 = vunpack.c.l.b16 %v1051
  %v3459 = vunpack.c.l.b16 %v1052
  %v3460 = vunpack.c.l.b16 %v1053
  %v3461 = vunpack.c.l.b16 %v1054
  %v3462 = vpack.c.b16 %v2439, %v2438
  %v3463 = vpack.c.b16 %v2441, %v2440
  %v3464 = vpack.c.b16 %v2443, %v2442
  %v3465 = vpack.c.b16 %v2445, %v2444
  %v3466 = vpack.c.b16 %v2447, %v2446
  %v3467 = vpack.c.b16 %v2449, %v2448
  %v3468 = vpack.c.b16 %v2451, %v2450
  %v3469 = vpack.c.b16 %v2453, %v2452
  %v3470 = vpack.c.b16 %v2455, %v2454
  %v3471 = vpack.c.b16 %v2457, %v2456
  %v3472 = vpack.c.b16 %v2459, %v2458
  %v3473 = vpack.c.b16 %v2461, %v2460
  %v3474 = vpack.c.b16 %v2463, %v2462
  %v3475 = vpack.c.b16 %v2465, %v2464
  %v3476 = vpack.c.b16 %v2467, %v2466
  %v3477 = vpack.c.b16 %v2469, %v2468
  %v3478 = vpack.c.b16 %v2471, %v2470
  %v3479 = vpack.c.b16 %v2473, %v2472
  %v3480 = vpack.c.b16 %v2475, %v2474
  %v3481 = vpack.c.b16 %v2477, %v2476
  %v3482 = vpack.c.b16 %v2479, %v2478
  %v3483 = vpack.c.b16 %v2481, %v2480
  %v3484 = vpack.c.b16 %v2483, %v2482
  %v3485 = vpack.c.b16 %v2485, %v2484
  %v3486 = vpack.c.b16 %v2487, %v2486
  %v3487 = vpack.c.b16 %v2489, %v2488
  %v3488 = vpack.c.b16 %v2491, %v2490
  %v3489 = vpack.c.b16 %v2493, %v2492
  %v3490 = vpack.c.b16 %v2495, %v2494
  %v3491 = vpack.c.b16 %v2497, %v2496
  %v3492 = vpack.c.b16 %v2499, %v2498
  %v3493 = vpack.c.b16 %v2501, %v2500
  %v3494 = vpack.c.b16 %v2503, %v2502
  %v3495 = vpack.c.b16 %v2505, %v2504
  %v3496 = vpack.c.b16 %v2507, %v2506
  %v3497 = vpack.c.b16 %v2509, %v2508
  %v3498 = vpack.c.b16 %v2511, %v2510
  %v3499 = vpack.c.b16 %v2513, %v2512
  %v3500 = vpack.c.b16 %v2515, %v2514
  %v3501 = vpack.c.b16 %v2517, %v2516
  %v3502 = vpack.c.b16 %v2519, %v2518
  %v3503 = vpack.c.b16 %v2521, %v2520
  %v3504 = vpack.c.b16 %v2523, %v2522
  %v3505 = vpack.c.b16 %v2525, %v2524
  %v3506 = vpack.c.b16 %v2527, %v2526
  %v3507 = vpack.c.b16 %v2529, %v2528
  %v3508 = vpack.c.b16 %v2531, %v2530
  %v3509 = vpack.c.b16 %v2533, %v2532
  %v3510 = vpack.c.b16 %v2535, %v2534
  %v3511 = vpack.c.b16 %v2537, %v2536
  %v3512 = vpack.c.b16 %v2539, %v2538
  %v3513 = vpack.c.b16 %v2541, %v2540
  %v3514 = vpack.c.b16 %v2543, %v2542
  %v3515 = vpack.c.b16 %v2545, %v2544
  %v3516 = vpack.c.b16 %v2547, %v2546
  %v3517 = vpack.c.b16 %v2549, %v2548
  %v3518 = vpack.c.b16 %v2551, %v2550
  %v3519 = vpack.c.b16 %v2553, %v2552
  %v3520 = vpack.c.b16 %v2555, %v2554
  %v3521 = vpack.c.b16 %v2557, %v2556
  %v3522 = vpack.c.b16 %v2559, %v2558
  %v3523 = vpack.c.b16 %v2561, %v2560
  %v3524 = vpack.c.b16 %v2563, %v2562
  %v3525 = vpack.c.b16 %v2565, %v2564
  %v3526 = vpack.c.b16 %v2567, %v2566
  %v3527 = vpack.c.b16 %v2569, %v2568
  %v3528 = vpack.c.b16 %v2571, %v2570
  %v3529 = vpack.c.b16 %v2573, %v2572
  %v3530 = vpack.c.b16 %v2575, %v2574
  %v3531 = vpack.c.b16 %v2577, %v2576
  %v3532 = vpack.c.b16 %v2579, %v2578
  %v3533 = vpack.c.b16 %v2581, %v2580
  %v3534 = vpack.c.b16 %v2583, %v2582
  %v3535 = vpack.c.b16 %v2585, %v2584
  %v3536 = vpack.c.b16 %v2587, %v2586
  %v3537 = vpack.c.b16 %v2589, %v2588
  %v3538 = vpack.c.b16 %v2591, %v2590
  %v3539 = vpack.c.b16 %v2593, %v2592
  %v3540 = vpack.c.b16 %v2595, %v2594
  %v3541 = vpack.c.b16 %v2597, %v2596
  %v3542 = vpack.c.b16 %v2599, %v2598
  %v3543 = vpack.c.b16 %v2601, %v2600
  %v3544 = vpack.c.b16 %v2603, %v2602
  %v3545 = vpack.c.b16 %v2605, %v2604
  %v3546 = vpack.c.b16 %v2607, %v2606
  %v3547 = vpack.c.b16 %v2609, %v2608
  %v3548 = vpack.c.b16 %v2611, %v2610
  %v3549 = vpack.c.b16 %v2613, %v2612
  %v3550 = vpack.c.b16 %v2615, %v2614
  %v3551 = vpack.c.b16 %v2617, %v2616
  %v3552 = vpack.c.b16 %v2619, %v2618
  %v3553 = vpack.c.b16 %v2621, %v2620
  %v3554 = vpack.c.b16 %v2623, %v2622
  %v3555 = vpack.c.b16 %v2625, %v2624
  %v3556 = vpack.c.b16 %v2627, %v2626
  %v3557 = vpack.c.b16 %v2629, %v2628
  %v3558 = vpack.c.b16 %v2631, %v2630
  %v3559 = vpack.c.b16 %v2633, %v2632
  %v3560 = vpack.c.b16 %v2635, %v2634
  %v3561 = vpack.c.b16 %v2637, %v2636
  %v3562 = vpack.c.b16 %v2639, %v2638
  %v3563 = vpack.c.b16 %v2641, %v2640
  %v3564 = vpack.c.b16 %v2643, %v2642
  %v3565 = vpack.c.b16 %v2645, %v2644
  %v3566 = vpack.c.b16 %v2647, %v2646
  %v3567 = vpack.c.b16 %v2649, %v2648
  %v3568 = vpack.c.b16 %v2651, %v2650
  %v3569 = vpack.c.b16 %v2653, %v2652
  %v3570 = vpack.c.b16 %v2655, %v2654
  %v3571 = vpack.c.b16 %v2657, %v2656
  %v3572 = vpack.c.b16 %v2659, %v2658
  %v3573 = vpack.c.b16 %v2661, %v2660
  %v3574 = vpack.c.b16 %v2663, %v2662
  %v3575 = vpack.c.b16 %v2665, %v2664
  %v3576 = vpack.c.b16 %v2667, %v2666
  %v3577 = vpack.c.b16 %v2669, %v2668
  %v3578 = vpack.c.b16 %v2671, %v2670
  %v3579 = vpack.c.b16 %v2673, %v2672
  %v3580 = vpack.c.b16 %v2675, %v2674
  %v3581 = vpack.c.b16 %v2677, %v2676
  %v3582 = vpack.c.b16 %v2679, %v2678
  %v3583 = vpack.c.b16 %v2681, %v2680
  %v3584 = vpack.c.b16 %v2683, %v2682
  %v3585 = vpack.c.b16 %v2685, %v2684
  %v3586 = vpack.c.b16 %v2687, %v2686
  %v3587 = vpack.c.b16 %v2689, %v2688
  %v3588 = vpack.c.b16 %v2691, %v2690
  %v3589 = vpack.c.b16 %v2693, %v2692
  %v3590 = vpack.c.b16 %v2695, %v2694
  %v3591 = vpack.c.b16 %v2697, %v2696
  %v3592 = vpack.c.b16 %v2699, %v2698
  %v3593 = vpack.c.b16 %v2701, %v2700
  %v3594 = vpack.c.b16 %v2703, %v2702
  %v3595 = vpack.c.b16 %v2705, %v2704
  %v3596 = vpack.c.b16 %v2707, %v2706
  %v3597 = vpack.c.b16 %v2709, %v2708
  %v3598 = vpack.c.b16 %v2711, %v2710
  %v3599 = vpack.c.b16 %v2713, %v2712
  %v3600 = vpack.c.b16 %v2715, %v2714
  %v3601 = vpack.c.b16 %v2717, %v2716
  %v3602 = vpack.c.b16 %v2719, %v2718
  %v3603 = vpack.c.b16 %v2721, %v2720
  %v3604 = vpack.c.b16 %v2723, %v2722
  %v3605 = vpack.c.b16 %v2725, %v2724
  %v3606 = vpack.c.b16 %v2727, %v2726
  %v3607 = vpack.c.b16 %v2729, %v2728
  %v3608 = vpack.c.b16 %v2731, %v2730
  %v3609 = vpack.c.b16 %v2733, %v2732
  %v3610 = vpack.c.b16 %v2735, %v2734
  %v3611 = vpack.c.b16 %v2737, %v2736
  %v3612 = vpack.c.b16 %v2739, %v2738
  %v3613 = vpack.c.b16 %v2741, %v2740
  %v3614 = vpack.c.b16 %v2743, %v2742
  %v3615 = vpack.c.b16 %v2745, %v2744
  %v3616 = vpack.c.b16 %v2747, %v2746
  %v3617 = vpack.c.b16 %v2749, %v2748
  %v3618 = vpack.c.b16 %v2751, %v2750
  %v3619 = vpack.c.b16 %v2753, %v2752
  %v3620 = vpack.c.b16 %v2755, %v2754
  %v3621 = vpack.c.b16 %v2757, %v2756
  %v3622 = vpack.c.b16 %v2759, %v2758
  %v3623 = vpack.c.b16 %v2761, %v2760
  %v3624 = vpack.c.b16 %v2763, %v2762
  %v3625 = vpack.c.b16 %v2765, %v2764
  %v3626 = vpack.c.b16 %v2767, %v2766
  %v3627 = vpack.c.b16 %v2769, %v2768
  %v3628 = vpack.c.b16 %v2771, %v2770
  %v3629 = vpack.c.b16 %v2773, %v2772
  %v3630 = vpack.c.b16 %v2775, %v2774
  %v3631 = vpack.c.b16 %v2777, %v2776
  %v3632 = vpack.c.b16 %v2779, %v2778
  %v3633 = vpack.c.b16 %v2781, %v2780
  %v3634 = vpack.c.b16 %v2783, %v2782
  %v3635 = vpack.c.b16 %v2785, %v2784
  %v3636 = vpack.c.b16 %v2787, %v2786
  %v3637 = vpack.c.b16 %v2789, %v2788
  %v3638 = vpack.c.b16 %v2791, %v2790
  %v3639 = vpack.c.b16 %v2793, %v2792
  %v3640 = vpack.c.b16 %v2795, %v2794
  %v3641 = vpack.c.b16 %v2797, %v2796
  %v3642 = vpack.c.b16 %v2799, %v2798
  %v3643 = vpack.c.b16 %v2801, %v2800
  %v3644 = vpack.c.b16 %v2803, %v2802
  %v3645 = vpack.c.b16 %v2805, %v2804
  %v3646 = vpack.c.b16 %v2807, %v2806
  %v3647 = vpack.c.b16 %v2809, %v2808
  %v3648 = vpack.c.b16 %v2811, %v2810
  %v3649 = vpack.c.b16 %v2813, %v2812
  %v3650 = vpack.c.b16 %v2815, %v2814
  %v3651 = vpack.c.b16 %v2817, %v2816
  %v3652 = vpack.c.b16 %v2819, %v2818
  %v3653 = vpack.c.b16 %v2821, %v2820
  %v3654 = vpack.c.b16 %v2823, %v2822
  %v3655 = vpack.c.b16 %v2825, %v2824
  %v3656 = vpack.c.b16 %v2827, %v2826
  %v3657 = vpack.c.b16 %v2829, %v2828
  %v3658 = vpack.c.b16 %v2831, %v2830
  %v3659 = vpack.c.b16 %v2833, %v2832
  %v3660 = vpack.c.b16 %v2835, %v2834
  %v3661 = vpack.c.b16 %v2837, %v2836
  %v3662 = vpack.c.b16 %v2839, %v2838
  %v3663 = vpack.c.b16 %v2841, %v2840
  %v3664 = vpack.c.b16 %v2843, %v2842
  %v3665 = vpack.c.b16 %v2845, %v2844
  %v3666 = vpack.c.b16 %v2847, %v2846
  %v3667 = vpack.c.b16 %v2849, %v2848
  %v3668 = vpack.c.b16 %v2851, %v2850
  %v3669 = vpack.c.b16 %v2853, %v2852
  %v3670 = vpack.c.b16 %v2855, %v2854
  %v3671 = vpack.c.b16 %v2857, %v2856
  %v3672 = vpack.c.b16 %v2859, %v2858
  %v3673 = vpack.c.b16 %v2861, %v2860
  %v3674 = vpack.c.b16 %v2863, %v2862
  %v3675 = vpack.c.b16 %v2865, %v2864
  %v3676 = vpack.c.b16 %v2867, %v2866
  %v3677 = vpack.c.b16 %v2869, %v2868
  %v3678 = vpack.c.b16 %v2871, %v2870
  %v3679 = vpack.c.b16 %v2873, %v2872
  %v3680 = vpack.c.b16 %v2875, %v2874
  %v3681 = vpack.c.b16 %v2877, %v2876
  %v3682 = vpack.c.b16 %v2879, %v2878
  %v3683 = vpack.c.b16 %v2881, %v2880
  %v3684 = vpack.c.b16 %v2883, %v2882
  %v3685 = vpack.c.b16 %v2885, %v2884
  %v3686 = vpack.c.b16 %v2887, %v2886
  %v3687 = vpack.c.b16 %v2889, %v2888
  %v3688 = vpack.c.b16 %v2891, %v2890
  %v3689 = vpack.c.b16 %v2893, %v2892
  %v3690 = vpack.c.b16 %v2895, %v2894
  %v3691 = vpack.c.b16 %v2897, %v2896
  %v3692 = vpack.c.b16 %v2899, %v2898
  %v3693 = vpack.c.b16 %v2901, %v2900
  %v3694 = vpack.c.b16 %v2903, %v2902
  %v3695 = vpack.c.b16 %v2905, %v2904
  %v3696 = vpack.c.b16 %v2907, %v2906
  %v3697 = vpack.c.b16 %v2909, %v2908
  %v3698 = vpack.c.b16 %v2911, %v2910
  %v3699 = vpack.c.b16 %v2913, %v2912
  %v3700 = vpack.c.b16 %v2915, %v2914
  %v3701 = vpack.c.b16 %v2917, %v2916
  %v3702 = vpack.c.b16 %v2919, %v2918
  %v3703 = vpack.c.b16 %v2921, %v2920
  %v3704 = vpack.c.b16 %v2923, %v2922
  %v3705 = vpack.c.b16 %v2925, %v2924
  %v3706 = vpack.c.b16 %v2927, %v2926
  %v3707 = vpack.c.b16 %v2929, %v2928
  %v3708 = vpack.c.b16 %v2931, %v2930
  %v3709 = vpack.c.b16 %v2933, %v2932
  %v3710 = vpack.c.b16 %v2935, %v2934
  %v3711 = vpack.c.b16 %v2937, %v2936
  %v3712 = vpack.c.b16 %v2939, %v2938
  %v3713 = vpack.c.b16 %v2941, %v2940
  %v3714 = vpack.c.b16 %v2943, %v2942
  %v3715 = vpack.c.b16 %v2945, %v2944
  %v3716 = vpack.c.b16 %v2947, %v2946
  %v3717 = vpack.c.b16 %v2949, %v2948
  %v3718 = vpack.c.b16 %v2951, %v2950
  %v3719 = vpack.c.b16 %v2953, %v2952
  %v3720 = vpack.c.b16 %v2955, %v2954
  %v3721 = vpack.c.b16 %v2957, %v2956
  %v3722 = vpack.c.b16 %v2959, %v2958
  %v3723 = vpack.c.b16 %v2961, %v2960
  %v3724 = vpack.c.b16 %v2963, %v2962
  %v3725 = vpack.c.b16 %v2965, %v2964
  %v3726 = vpack.c.b16 %v2967, %v2966
  %v3727 = vpack.c.b16 %v2969, %v2968
  %v3728 = vpack.c.b16 %v2971, %v2970
  %v3729 = vpack.c.b16 %v2973, %v2972
  %v3730 = vpack.c.b16 %v2975, %v2974
  %v3731 = vpack.c.b16 %v2977, %v2976
  %v3732 = vpack.c.b16 %v2979, %v2978
  %v3733 = vpack.c.b16 %v2981, %v2980
  %v3734 = vpack.c.b16 %v2983, %v2982
  %v3735 = vpack.c.b16 %v2985, %v2984
  %v3736 = vpack.c.b16 %v2987, %v2986
  %v3737 = vpack.c.b16 %v2989, %v2988
  %v3738 = vpack.c.b16 %v2991, %v2990
  %v3739 = vpack.c.b16 %v2993, %v2992
  %v3740 = vpack.c.b16 %v2995, %v2994
  %v3741 = vpack.c.b16 %v2997, %v2996
  %v3742 = vpack.c.b16 %v2999, %v2998
  %v3743 = vpack.c.b16 %v3001, %v3000
  %v3744 = vpack.c.b16 %v3003, %v3002
  %v3745 = vpack.c.b16 %v3005, %v3004
  %v3746 = vpack.c.b16 %v3007, %v3006
  %v3747 = vpack.c.b16 %v3009, %v3008
  %v3748 = vpack.c.b16 %v3011, %v3010
  %v3749 = vpack.c.b16 %v3013, %v3012
  %v3750 = vpack.c.b16 %v3015, %v3014
  %v3751 = vpack.c.b16 %v3017, %v3016
  %v3752 = vpack.c.b16 %v3019, %v3018
  %v3753 = vpack.c.b16 %v3021, %v3020
  %v3754 = vpack.c.b16 %v3023, %v3022
  %v3755 = vpack.c.b16 %v3025, %v3024
  %v3756 = vpack.c.b16 %v3027, %v3026
  %v3757 = vpack.c.b16 %v3029, %v3028
  %v3758 = vpack.c.b16 %v3031, %v3030
  %v3759 = vpack.c.b16 %v3033, %v3032
  %v3760 = vpack.c.b16 %v3035, %v3034
  %v3761 = vpack.c.b16 %v3037, %v3036
  %v3762 = vpack.c.b16 %v3039, %v3038
  %v3763 = vpack.c.b16 %v3041, %v3040
  %v3764 = vpack.c.b16 %v3043, %v3042
  %v3765 = vpack.c.b16 %v3045, %v3044
  %v3766 = vpack.c.b16 %v3047, %v3046
  %v3767 = vpack.c.b16 %v3049, %v3048
  %v3768 = vpack.c.b16 %v3051, %v3050
  %v3769 = vpack.c.b16 %v3053, %v3052
  %v3770 = vpack.c.b16 %v3055, %v3054
  %v3771 = vpack.c.b16 %v3057, %v3056
  %v3772 = vpack.c.b16 %v3059, %v3058
  %v3773 = vpack.c.b16 %v3061, %v3060
  %v3774 = vpack.c.b16 %v3063, %v3062
  %v3775 = vpack.c.b16 %v3065, %v3064
  %v3776 = vpack.c.b16 %v3067, %v3066
  %v3777 = vpack.c.b16 %v3069, %v3068
  %v3778 = vpack.c.b16 %v3071, %v3070
  %v3779 = vpack.c.b16 %v3073, %v3072
  %v3780 = vpack.c.b16 %v3075, %v3074
  %v3781 = vpack.c.b16 %v3077, %v3076
  %v3782 = vpack.c.b16 %v3079, %v3078
  %v3783 = vpack.c.b16 %v3081, %v3080
  %v3784 = vpack.c.b16 %v3083, %v3082
  %v3785 = vpack.c.b16 %v3085, %v3084
  %v3786 = vpack.c.b16 %v3087, %v3086
  %v3787 = vpack.c.b16 %v3089, %v3088
  %v3788 = vpack.c.b16 %v3091, %v3090
  %v3789 = vpack.c.b16 %v3093, %v3092
  %v3790 = vpack.c.b16 %v3095, %v3094
  %v3791 = vpack.c.b16 %v3097, %v3096
  %v3792 = vpack.c.b16 %v3099, %v3098
  %v3793 = vpack.c.b16 %v3101, %v3100
  %v3794 = vpack.c.b16 %v3103, %v3102
  %v3795 = vpack.c.b16 %v3105, %v3104
  %v3796 = vpack.c.b16 %v3107, %v3106
  %v3797 = vpack.c.b16 %v3109, %v3108
  %v3798 = vpack.c.b16 %v3111, %v3110
  %v3799 = vpack.c.b16 %v3113, %v3112
  %v3800 = vpack.c.b16 %v3115, %v3114
  %v3801 = vpack.c.b16 %v3117, %v3116
  %v3802 = vpack.c.b16 %v3119, %v3118
  %v3803 = vpack.c.b16 %v3121, %v3120
  %v3804 = vpack.c.b16 %v3123, %v3122
  %v3805 = vpack.c.b16 %v3125, %v3124
  %v3806 = vpack.c.b16 %v3127, %v3126
  %v3807 = vpack.c.b16 %v3129, %v3128
  %v3808 = vpack.c.b16 %v3131, %v3130
  %v3809 = vpack.c.b16 %v3133, %v3132
  %v3810 = vpack.c.b16 %v3135, %v3134
  %v3811 = vpack.c.b16 %v3137, %v3136
  %v3812 = vpack.c.b16 %v3139, %v3138
  %v3813 = vpack.c.b16 %v3141, %v3140
  %v3814 = vpack.c.b16 %v3143, %v3142
  %v3815 = vpack.c.b16 %v3145, %v3144
  %v3816 = vpack.c.b16 %v3147, %v3146
  %v3817 = vpack.c.b16 %v3149, %v3148
  %v3818 = vpack.c.b16 %v3151, %v3150
  %v3819 = vpack.c.b16 %v3153, %v3152
  %v3820 = vpack.c.b16 %v3155, %v3154
  %v3821 = vpack.c.b16 %v3157, %v3156
  %v3822 = vpack.c.b16 %v3159, %v3158
  %v3823 = vpack.c.b16 %v3161, %v3160
  %v3824 = vpack.c.b16 %v3163, %v3162
  %v3825 = vpack.c.b16 %v3165, %v3164
  %v3826 = vpack.c.b16 %v3167, %v3166
  %v3827 = vpack.c.b16 %v3169, %v3168
  %v3828 = vpack.c.b16 %v3171, %v3170
  %v3829 = vpack.c.b16 %v3173, %v3172
  %v3830 = vpack.c.b16 %v3175, %v3174
  %v3831 = vpack.c.b16 %v3177, %v3176
  %v3832 = vpack.c.b16 %v3179, %v3178
  %v3833 = vpack.c.b16 %v3181, %v3180
  %v3834 = vpack.c.b16 %v3183, %v3182
  %v3835 = vpack.c.b16 %v3185, %v3184
  %v3836 = vpack.c.b16 %v3187, %v3186
  %v3837 = vpack.c.b16 %v3189, %v3188
  %v3838 = vpack.c.b16 %v3191, %v3190
  %v3839 = vpack.c.b16 %v3193, %v3192
  %v3840 = vpack.c.b16 %v3195, %v3194
  %v3841 = vpack.c.b16 %v3197, %v3196
  %v3842 = vpack.c.b16 %v3199, %v3198
  %v3843 = vpack.c.b16 %v3201, %v3200
  %v3844 = vpack.c.b16 %v3203, %v3202
  %v3845 = vpack.c.b16 %v3205, %v3204
  %v3846 = vpack.c.b16 %v3207, %v3206
  %v3847 = vpack.c.b16 %v3209, %v3208
  %v3848 = vpack.c.b16 %v3211, %v3210
  %v3849 = vpack.c.b16 %v3213, %v3212
  %v3850 = vpack.c.b16 %v3215, %v3214
  %v3851 = vpack.c.b16 %v3217, %v3216
  %v3852 = vpack.c.b16 %v3219, %v3218
  %v3853 = vpack.c.b16 %v3221, %v3220
  %v3854 = vpack.c.b16 %v3223, %v3222
  %v3855 = vpack.c.b16 %v3225, %v3224
  %v3856 = vpack.c.b16 %v3227, %v3226
  %v3857 = vpack.c.b16 %v3229, %v3228
  %v3858 = vpack.c.b16 %v3231, %v3230
  %v3859 = vpack.c.b16 %v3233, %v3232
  %v3860 = vpack.c.b16 %v3235, %v3234
  %v3861 = vpack.c.b16 %v3237, %v3236
  %v3862 = vpack.c.b16 %v3239, %v3238
  %v3863 = vpack.c.b16 %v3241, %v3240
  %v3864 = vpack.c.b16 %v3243, %v3242
  %v3865 = vpack.c.b16 %v3245, %v3244
  %v3866 = vpack.c.b16 %v3247, %v3246
  %v3867 = vpack.c.b16 %v3249, %v3248
  %v3868 = vpack.c.b16 %v3251, %v3250
  %v3869 = vpack.c.b16 %v3253, %v3252
  %v3870 = vpack.c.b16 %v3255, %v3254
  %v3871 = vpack.c.b16 %v3257, %v3256
  %v3872 = vpack.c.b16 %v3259, %v3258
  %v3873 = vpack.c.b16 %v3261, %v3260
  %v3874 = vpack.c.b16 %v3263, %v3262
  %v3875 = vpack.c.b16 %v3265, %v3264
  %v3876 = vpack.c.b16 %v3267, %v3266
  %v3877 = vpack.c.b16 %v3269, %v3268
  %v3878 = vpack.c.b16 %v3271, %v3270
  %v3879 = vpack.c.b16 %v3273, %v3272
  %v3880 = vpack.c.b16 %v3275, %v3274
  %v3881 = vpack.c.b16 %v3277, %v3276
  %v3882 = vpack.c.b16 %v3279, %v3278
  %v3883 = vpack.c.b16 %v3281, %v3280
  %v3884 = vpack.c.b16 %v3283, %v3282
  %v3885 = vpack.c.b16 %v3285, %v3284
  %v3886 = vpack.c.b16 %v3287, %v3286
  %v3887 = vpack.c.b16 %v3289, %v3288
  %v3888 = vpack.c.b16 %v3291, %v3290
  %v3889 = vpack.c.b16 %v3293, %v3292
  %v3890 = vpack.c.b16 %v3295, %v3294
  %v3891 = vpack.c.b16 %v3297, %v3296
  %v3892 = vpack.c.b16 %v3299, %v3298
  %v3893 = vpack.c.b16 %v3301, %v3300
  %v3894 = vpack.c.b16 %v3303, %v3302
  %v3895 = vpack.c.b16 %v3305, %v3304
  %v3896 = vpack.c.b16 %v3307, %v3306
  %v3897 = vpack.c.b16 %v3309, %v3308
  %v3898 = vpack.c.b16 %v3311, %v3310
  %v3899 = vpack.c.b16 %v3313, %v3312
  %v3900 = vpack.c.b16 %v3315, %v3314
  %v3901 = vpack.c.b16 %v3317, %v3316
  %v3902 = vpack.c.b16 %v3319, %v3318
  %v3903 = vpack.c.b16 %v3321, %v3320
  %v3904 = vpack.c.b16 %v3323, %v3322
  %v3905 = vpack.c.b16 %v3325, %v3324
  %v3906 = vpack.c.b16 %v3327, %v3326
  %v3907 = vpack.c.b16 %v3329, %v3328
  %v3908 = vpack.c.b16 %v3331, %v3330
  %v3909 = vpack.c.b16 %v3333, %v3332
  %v3910 = vpack.c.b16 %v3335, %v3334
  %v3911 = vpack.c.b16 %v3337, %v3336
  %v3912 = vpack.c.b16 %v3339, %v3338
  %v3913 = vpack.c.b16 %v3341, %v3340
  %v3914 = vpack.c.b16 %v3343, %v3342
  %v3915 = vpack.c.b16 %v3345, %v3344
  %v3916 = vpack.c.b16 %v3347, %v3346
  %v3917 = vpack.c.b16 %v3349, %v3348
  %v3918 = vpack.c.b16 %v3351, %v3350
  %v3919 = vpack.c.b16 %v3353, %v3352
  %v3920 = vpack.c.b16 %v3355, %v3354
  %v3921 = vpack.c.b16 %v3357, %v3356
  %v3922 = vpack.c.b16 %v3359, %v3358
  %v3923 = vpack.c.b16 %v3361, %v3360
  %v3924 = vpack.c.b16 %v3363, %v3362
  %v3925 = vpack.c.b16 %v3365, %v3364
  %v3926 = vpack.c.b16 %v3367, %v3366
  %v3927 = vpack.c.b16 %v3369, %v3368
  %v3928 = vpack.c.b16 %v3371, %v3370
  %v3929 = vpack.c.b16 %v3373, %v3372
  %v3930 = vpack.c.b16 %v3375, %v3374
  %v3931 = vpack.c.b16 %v3377, %v3376
  %v3932 = vpack.c.b16 %v3379, %v3378
  %v3933 = vpack.c.b16 %v3381, %v3380
  %v3934 = vpack.c.b16 %v3383, %v3382
  %v3935 = vpack.c.b16 %v3385, %v3384
  %v3936 = vpack.c.b16 %v3387, %v3386
  %v3937 = vpack.c.b16 %v3389, %v3388
  %v3938 = vpack.c.b16 %v3391, %v3390
  %v3939 = vpack.c.b16 %v3393, %v3392
  %v3940 = vpack.c.b16 %v3395, %v3394
  %v3941 = vpack.c.b16 %v3397, %v3396
  %v3942 = vpack.c.b16 %v3399, %v3398
  %v3943 = vpack.c.b16 %v3401, %v3400
  %v3944 = vpack.c.b16 %v3403, %v3402
  %v3945 = vpack.c.b16 %v3405, %v3404
  %v3946 = vpack.c.b16 %v3407, %v3406
  %v3947 = vpack.c.b16 %v3409, %v3408
  %v3948 = vpack.c.b16 %v3411, %v3410
  %v3949 = vpack.c.b16 %v3413, %v3412
  %v3950 = vpack.c.b16 %v3415, %v3414
  %v3951 = vpack.c.b16 %v3417, %v3416
  %v3952 = vpack.c.b16 %v3419, %v3418
  %v3953 = vpack.c.b16 %v3421, %v3420
  %v3954 = vpack.c.b16 %v3423, %v3422
  %v3955 = vpack.c.b16 %v3425, %v3424
  %v3956 = vpack.c.b16 %v3427, %v3426
  %v3957 = vpack.c.b16 %v3429, %v3428
  %v3958 = vpack.c.b16 %v3431, %v3430
  %v3959 = vpack.c.b16 %v3433, %v3432
  %v3960 = vpack.c.b16 %v3435, %v3434
  %v3961 = vpack.c.b16 %v3437, %v3436
  %v3962 = vpack.c.b16 %v3439, %v3438
  %v3963 = vpack.c.b16 %v3441, %v3440
  %v3964 = vpack.c.b16 %v3443, %v3442
  %v3965 = vpack.c.b16 %v3445, %v3444
  %v3966 = vpack.c.b16 %v3447, %v3446
  %v3967 = vpack.c.b16 %v3449, %v3448
  %v3968 = vpack.c.b16 %v3451, %v3450
  %v3969 = vpack.c.b16 %v3453, %v3452
  %v3970 = vpack.c.b16 %v3455, %v3454
  %v3971 = vpack.c.b16 %v3457, %v3456
  %v3972 = vpack.c.b16 %v3459, %v3458
  %v3973 = vpack.c.b16 %v3461, %v3460
  %4486 = vmatprep.subr.bf16.mxu0 0
  %4487 = vmatpush1.bf16.msra.mxu0 %v3469
  %4488 = vmatprep.subr.bf16.mxu0 0
  %4489 = vmatpush1.bf16.msra.mxu0 %v3468
  %4490 = vmatprep.subr.bf16.mxu0 0
  %4491 = vmatpush1.bf16.msra.mxu0 %v3467
  %4492 = vmatprep.subr.bf16.mxu0 0
  %4493 = vmatpush1.bf16.msra.mxu0 %v3466
  %4494 = vmatprep.subr.bf16.mxu0 0
  %4495 = vmatpush1.bf16.msra.mxu0 %v3465
  %4496 = vmatprep.subr.bf16.mxu0 0
  %4497 = vmatpush1.bf16.msra.mxu0 %v3464
  %4498 = vmatprep.subr.bf16.mxu0 0
  %4499 = vmatpush1.bf16.msra.mxu0 %v3463
  %4500 = vmatprep.subr.bf16.mxu0 0
  %4501 = vmatpush1.bf16.msra.mxu0 %v3462
  %4502 = vmatprep.subr.bf16.mxu0 0
  %4503 = vmatpush2.bf16.msra.mxu0 %v3477
  %4504 = vmatprep.subr.bf16.mxu0 0
  %4505 = vmatpush2.bf16.msra.mxu0 %v3476
  %4506 = vmatprep.subr.bf16.mxu0 0
  %4507 = vmatpush2.bf16.msra.mxu0 %v3475
  %4508 = vmatprep.subr.bf16.mxu0 0
  %4509 = vmatpush2.bf16.msra.mxu0 %v3474
  %4510 = vmatprep.subr.bf16.mxu0 0
  %4511 = vmatpush2.bf16.msra.mxu0 %v3473
  %4512 = vmatprep.subr.bf16.mxu0 0
  %4513 = vmatpush2.bf16.msra.mxu0 %v3472
  %4514 = vmatprep.subr.bf16.mxu0 0
  %4515 = vmatpush2.bf16.msra.mxu0 %v3471
  %4516 = vmatprep.subr.bf16.mxu0 0
  %4517 = vmatpush2.bf16.msra.mxu0 %v3470
  %4518 = vmatprep.mubr.bf16.mxu0 %v1093
  %4519 = vmatmul.mubr.bf16.gmra.mxu0 %v1085
  %v4520 = vpop.f32.mrf.mxu0
  %v4521 = vadd.f32 %v1060, %v4520
  %v4522 = vpop.f32.mrf.mxu0
  %v4523 = vpop.f32.mrf.mxu0
  %v4524 = vpop.f32.mrf.mxu0
  %4525 = vdwg.mxu0
  %4526 = vmatprep.subr.bf16.mxu0 0
  %4527 = vmatpush1.bf16.msra.mxu0 %v3485
  %4528 = vmatprep.subr.bf16.mxu0 0
  %4529 = vmatpush1.bf16.msra.mxu0 %v3484
  %4530 = vmatprep.subr.bf16.mxu0 0
  %4531 = vmatpush1.bf16.msra.mxu0 %v3483
  %4532 = vmatprep.subr.bf16.mxu0 0
  %4533 = vmatpush1.bf16.msra.mxu0 %v3482
  %4534 = vmatprep.subr.bf16.mxu0 0
  %4535 = vmatpush1.bf16.msra.mxu0 %v3481
  %4536 = vmatprep.subr.bf16.mxu0 0
  %4537 = vmatpush1.bf16.msra.mxu0 %v3480
  %4538 = vmatprep.subr.bf16.mxu0 0
  %4539 = vmatpush1.bf16.msra.mxu0 %v3479
  %4540 = vmatprep.subr.bf16.mxu0 0
  %4541 = vmatpush1.bf16.msra.mxu0 %v3478
  %4542 = vmatprep.subr.bf16.mxu0 0
  %4543 = vmatpush2.bf16.msra.mxu0 %v3493
  %4544 = vmatprep.subr.bf16.mxu0 0
  %4545 = vmatpush2.bf16.msra.mxu0 %v3492
  %4546 = vmatprep.subr.bf16.mxu0 0
  %4547 = vmatpush2.bf16.msra.mxu0 %v3491
  %4548 = vmatprep.subr.bf16.mxu0 0
  %4549 = vmatpush2.bf16.msra.mxu0 %v3490
  %4550 = vmatprep.subr.bf16.mxu0 0
  %4551 = vmatpush2.bf16.msra.mxu0 %v3489
  %4552 = vmatprep.subr.bf16.mxu0 0
  %4553 = vmatpush2.bf16.msra.mxu0 %v3488
  %4554 = vmatprep.subr.bf16.mxu0 0
  %4555 = vmatpush2.bf16.msra.mxu0 %v3487
  %4556 = vmatprep.subr.bf16.mxu0 0
  %4557 = vmatpush2.bf16.msra.mxu0 %v3486
  %4558 = vmatprep.mubr.bf16.mxu0 %v1094
  %4559 = vmatmul.mubr.bf16.gmra.mxu0 %v1092
  %v4560 = vpop.f32.mrf.mxu0
  %v4561 = vadd.f32 %v4521, %v4560
  %v4562 = vpop.f32.mrf.mxu0
  %v4563 = vpop.f32.mrf.mxu0
  %v4564 = vpop.f32.mrf.mxu0
  %4565 = vdwg.mxu0
  %4566 = vmatprep.subr.bf16.mxu0 0
  %4567 = vmatpush1.bf16.msra.mxu0 %v3501
  %4568 = vmatprep.subr.bf16.mxu0 0
  %4569 = vmatpush1.bf16.msra.mxu0 %v3500
  %4570 = vmatprep.subr.bf16.mxu0 0
  %4571 = vmatpush1.bf16.msra.mxu0 %v3499
  %4572 = vmatprep.subr.bf16.mxu0 0
  %4573 = vmatpush1.bf16.msra.mxu0 %v3498
  %4574 = vmatprep.subr.bf16.mxu0 0
  %4575 = vmatpush1.bf16.msra.mxu0 %v3497
  %4576 = vmatprep.subr.bf16.mxu0 0
  %4577 = vmatpush1.bf16.msra.mxu0 %v3496
  %4578 = vmatprep.subr.bf16.mxu0 0
  %4579 = vmatpush1.bf16.msra.mxu0 %v3495
  %4580 = vmatprep.subr.bf16.mxu0 0
  %4581 = vmatpush1.bf16.msra.mxu0 %v3494
  %4582 = vmatprep.subr.bf16.mxu0 0
  %4583 = vmatpush2.bf16.msra.mxu0 %v3509
  %4584 = vmatprep.subr.bf16.mxu0 0
  %4585 = vmatpush2.bf16.msra.mxu0 %v3508
  %4586 = vmatprep.subr.bf16.mxu0 0
  %4587 = vmatpush2.bf16.msra.mxu0 %v3507
  %4588 = vmatprep.subr.bf16.mxu0 0
  %4589 = vmatpush2.bf16.msra.mxu0 %v3506
  %4590 = vmatprep.subr.bf16.mxu0 0
  %4591 = vmatpush2.bf16.msra.mxu0 %v3505
  %4592 = vmatprep.subr.bf16.mxu0 0
  %4593 = vmatpush2.bf16.msra.mxu0 %v3504
  %4594 = vmatprep.subr.bf16.mxu0 0
  %4595 = vmatpush2.bf16.msra.mxu0 %v3503
  %4596 = vmatprep.subr.bf16.mxu0 0
  %4597 = vmatpush2.bf16.msra.mxu0 %v3502
  %4598 = vmatprep.mubr.bf16.mxu0 %v1110
  %4599 = vmatmul.mubr.bf16.gmra.mxu0 %v1102
  %v4600 = vpop.f32.mrf.mxu0
  %v4601 = vadd.f32 %v4561, %v4600
  %v4602 = vpop.f32.mrf.mxu0
  %v4603 = vpop.f32.mrf.mxu0
  %v4604 = vpop.f32.mrf.mxu0
  %4605 = vdwg.mxu0
  %4606 = vmatprep.subr.bf16.mxu0 0
  %4607 = vmatpush1.bf16.msra.mxu0 %v3517
  %4608 = vmatprep.subr.bf16.mxu0 0
  %4609 = vmatpush1.bf16.msra.mxu0 %v3516
  %4610 = vmatprep.subr.bf16.mxu0 0
  %4611 = vmatpush1.bf16.msra.mxu0 %v3515
  %4612 = vmatprep.subr.bf16.mxu0 0
  %4613 = vmatpush1.bf16.msra.mxu0 %v3514
  %4614 = vmatprep.subr.bf16.mxu0 0
  %4615 = vmatpush1.bf16.msra.mxu0 %v3513
  %4616 = vmatprep.subr.bf16.mxu0 0
  %4617 = vmatpush1.bf16.msra.mxu0 %v3512
  %4618 = vmatprep.subr.bf16.mxu0 0
  %4619 = vmatpush1.bf16.msra.mxu0 %v3511
  %4620 = vmatprep.subr.bf16.mxu0 0
  %4621 = vmatpush1.bf16.msra.mxu0 %v3510
  %4622 = vmatprep.subr.bf16.mxu0 0
  %4623 = vmatpush2.bf16.msra.mxu0 %v3525
  %4624 = vmatprep.subr.bf16.mxu0 0
  %4625 = vmatpush2.bf16.msra.mxu0 %v3524
  %4626 = vmatprep.subr.bf16.mxu0 0
  %4627 = vmatpush2.bf16.msra.mxu0 %v3523
  %4628 = vmatprep.subr.bf16.mxu0 0
  %4629 = vmatpush2.bf16.msra.mxu0 %v3522
  %4630 = vmatprep.subr.bf16.mxu0 0
  %4631 = vmatpush2.bf16.msra.mxu0 %v3521
  %4632 = vmatprep.subr.bf16.mxu0 0
  %4633 = vmatpush2.bf16.msra.mxu0 %v3520
  %4634 = vmatprep.subr.bf16.mxu0 0
  %4635 = vmatpush2.bf16.msra.mxu0 %v3519
  %4636 = vmatprep.subr.bf16.mxu0 0
  %4637 = vmatpush2.bf16.msra.mxu0 %v3518
  %4638 = vmatprep.mubr.bf16.mxu0 %v1111
  %4639 = vmatmul.mubr.bf16.gmra.mxu0 %v1109
  %v4640 = vpop.f32.mrf.mxu0
  %v4641 = vadd.f32 %v4601, %v4640
  %v4642 = vpop.f32.mrf.mxu0
  %v4643 = vpop.f32.mrf.mxu0
  %v4644 = vpop.f32.mrf.mxu0
  %4645 = vdwg.mxu0
  %4646 = vmatprep.subr.bf16.mxu0 0
  %4647 = vmatpush1.bf16.msra.mxu0 %v3533
  %4648 = vmatprep.subr.bf16.mxu0 0
  %4649 = vmatpush1.bf16.msra.mxu0 %v3532
  %4650 = vmatprep.subr.bf16.mxu0 0
  %4651 = vmatpush1.bf16.msra.mxu0 %v3531
  %4652 = vmatprep.subr.bf16.mxu0 0
  %4653 = vmatpush1.bf16.msra.mxu0 %v3530
  %4654 = vmatprep.subr.bf16.mxu0 0
  %4655 = vmatpush1.bf16.msra.mxu0 %v3529
  %4656 = vmatprep.subr.bf16.mxu0 0
  %4657 = vmatpush1.bf16.msra.mxu0 %v3528
  %4658 = vmatprep.subr.bf16.mxu0 0
  %4659 = vmatpush1.bf16.msra.mxu0 %v3527
  %4660 = vmatprep.subr.bf16.mxu0 0
  %4661 = vmatpush1.bf16.msra.mxu0 %v3526
  %4662 = vmatprep.subr.bf16.mxu0 0
  %4663 = vmatpush2.bf16.msra.mxu0 %v3541
  %4664 = vmatprep.subr.bf16.mxu0 0
  %4665 = vmatpush2.bf16.msra.mxu0 %v3540
  %4666 = vmatprep.subr.bf16.mxu0 0
  %4667 = vmatpush2.bf16.msra.mxu0 %v3539
  %4668 = vmatprep.subr.bf16.mxu0 0
  %4669 = vmatpush2.bf16.msra.mxu0 %v3538
  %4670 = vmatprep.subr.bf16.mxu0 0
  %4671 = vmatpush2.bf16.msra.mxu0 %v3537
  %4672 = vmatprep.subr.bf16.mxu0 0
  %4673 = vmatpush2.bf16.msra.mxu0 %v3536
  %4674 = vmatprep.subr.bf16.mxu0 0
  %4675 = vmatpush2.bf16.msra.mxu0 %v3535
  %4676 = vmatprep.subr.bf16.mxu0 0
  %4677 = vmatpush2.bf16.msra.mxu0 %v3534
  %4678 = vmatprep.mubr.bf16.mxu0 %v1127
  %4679 = vmatmul.mubr.bf16.gmra.mxu0 %v1119
  %v4680 = vpop.f32.mrf.mxu0
  %v4681 = vadd.f32 %v4641, %v4680
  %v4682 = vpop.f32.mrf.mxu0
  %v4683 = vpop.f32.mrf.mxu0
  %v4684 = vpop.f32.mrf.mxu0
  %4685 = vdwg.mxu0
  %4686 = vmatprep.subr.bf16.mxu0 0
  %4687 = vmatpush1.bf16.msra.mxu0 %v3549
  %4688 = vmatprep.subr.bf16.mxu0 0
  %4689 = vmatpush1.bf16.msra.mxu0 %v3548
  %4690 = vmatprep.subr.bf16.mxu0 0
  %4691 = vmatpush1.bf16.msra.mxu0 %v3547
  %4692 = vmatprep.subr.bf16.mxu0 0
  %4693 = vmatpush1.bf16.msra.mxu0 %v3546
  %4694 = vmatprep.subr.bf16.mxu0 0
  %4695 = vmatpush1.bf16.msra.mxu0 %v3545
  %4696 = vmatprep.subr.bf16.mxu0 0
  %4697 = vmatpush1.bf16.msra.mxu0 %v3544
  %4698 = vmatprep.subr.bf16.mxu0 0
  %4699 = vmatpush1.bf16.msra.mxu0 %v3543
  %4700 = vmatprep.subr.bf16.mxu0 0
  %4701 = vmatpush1.bf16.msra.mxu0 %v3542
  %4702 = vmatprep.subr.bf16.mxu0 0
  %4703 = vmatpush2.bf16.msra.mxu0 %v3557
  %4704 = vmatprep.subr.bf16.mxu0 0
  %4705 = vmatpush2.bf16.msra.mxu0 %v3556
  %4706 = vmatprep.subr.bf16.mxu0 0
  %4707 = vmatpush2.bf16.msra.mxu0 %v3555
  %4708 = vmatprep.subr.bf16.mxu0 0
  %4709 = vmatpush2.bf16.msra.mxu0 %v3554
  %4710 = vmatprep.subr.bf16.mxu0 0
  %4711 = vmatpush2.bf16.msra.mxu0 %v3553
  %4712 = vmatprep.subr.bf16.mxu0 0
  %4713 = vmatpush2.bf16.msra.mxu0 %v3552
  %4714 = vmatprep.subr.bf16.mxu0 0
  %4715 = vmatpush2.bf16.msra.mxu0 %v3551
  %4716 = vmatprep.subr.bf16.mxu0 0
  %4717 = vmatpush2.bf16.msra.mxu0 %v3550
  %4718 = vmatprep.mubr.bf16.mxu0 %v1128
  %4719 = vmatmul.mubr.bf16.gmra.mxu0 %v1126
  %v4720 = vpop.f32.mrf.mxu0
  %v4721 = vadd.f32 %v4681, %v4720
  %v4722 = vpop.f32.mrf.mxu0
  %v4723 = vpop.f32.mrf.mxu0
  %v4724 = vpop.f32.mrf.mxu0
  %4725 = vdwg.mxu0
  %4726 = vmatprep.subr.bf16.mxu0 0
  %4727 = vmatpush1.bf16.msra.mxu0 %v3565
  %4728 = vmatprep.subr.bf16.mxu0 0
  %4729 = vmatpush1.bf16.msra.mxu0 %v3564
  %4730 = vmatprep.subr.bf16.mxu0 0
  %4731 = vmatpush1.bf16.msra.mxu0 %v3563
  %4732 = vmatprep.subr.bf16.mxu0 0
  %4733 = vmatpush1.bf16.msra.mxu0 %v3562
  %4734 = vmatprep.subr.bf16.mxu0 0
  %4735 = vmatpush1.bf16.msra.mxu0 %v3561
  %4736 = vmatprep.subr.bf16.mxu0 0
  %4737 = vmatpush1.bf16.msra.mxu0 %v3560
  %4738 = vmatprep.subr.bf16.mxu0 0
  %4739 = vmatpush1.bf16.msra.mxu0 %v3559
  %4740 = vmatprep.subr.bf16.mxu0 0
  %4741 = vmatpush1.bf16.msra.mxu0 %v3558
  %4742 = vmatprep.subr.bf16.mxu0 0
  %4743 = vmatpush2.bf16.msra.mxu0 %v3573
  %4744 = vmatprep.subr.bf16.mxu0 0
  %4745 = vmatpush2.bf16.msra.mxu0 %v3572
  %4746 = vmatprep.subr.bf16.mxu0 0
  %4747 = vmatpush2.bf16.msra.mxu0 %v3571
  %4748 = vmatprep.subr.bf16.mxu0 0
  %4749 = vmatpush2.bf16.msra.mxu0 %v3570
  %4750 = vmatprep.subr.bf16.mxu0 0
  %4751 = vmatpush2.bf16.msra.mxu0 %v3569
  %4752 = vmatprep.subr.bf16.mxu0 0
  %4753 = vmatpush2.bf16.msra.mxu0 %v3568
  %4754 = vmatprep.subr.bf16.mxu0 0
  %4755 = vmatpush2.bf16.msra.mxu0 %v3567
  %4756 = vmatprep.subr.bf16.mxu0 0
  %4757 = vmatpush2.bf16.msra.mxu0 %v3566
  %4758 = vmatprep.mubr.bf16.mxu0 %v1144
  %4759 = vmatmul.mubr.bf16.gmra.mxu0 %v1136
  %v4760 = vpop.f32.mrf.mxu0
  %v4761 = vadd.f32 %v4721, %v4760
  %v4762 = vpop.f32.mrf.mxu0
  %v4763 = vpop.f32.mrf.mxu0
  %v4764 = vpop.f32.mrf.mxu0
  %4765 = vdwg.mxu0
  %4766 = vmatprep.subr.bf16.mxu0 0
  %4767 = vmatpush1.bf16.msra.mxu0 %v3581
  %4768 = vmatprep.subr.bf16.mxu0 0
  %4769 = vmatpush1.bf16.msra.mxu0 %v3580
  %4770 = vmatprep.subr.bf16.mxu0 0
  %4771 = vmatpush1.bf16.msra.mxu0 %v3579
  %4772 = vmatprep.subr.bf16.mxu0 0
  %4773 = vmatpush1.bf16.msra.mxu0 %v3578
  %4774 = vmatprep.subr.bf16.mxu0 0
  %4775 = vmatpush1.bf16.msra.mxu0 %v3577
  %4776 = vmatprep.subr.bf16.mxu0 0
  %4777 = vmatpush1.bf16.msra.mxu0 %v3576
  %4778 = vmatprep.subr.bf16.mxu0 0
  %4779 = vmatpush1.bf16.msra.mxu0 %v3575
  %4780 = vmatprep.subr.bf16.mxu0 0
  %4781 = vmatpush1.bf16.msra.mxu0 %v3574
  %4782 = vmatprep.subr.bf16.mxu0 0
  %4783 = vmatpush2.bf16.msra.mxu0 %v3589
  %4784 = vmatprep.subr.bf16.mxu0 0
  %4785 = vmatpush2.bf16.msra.mxu0 %v3588
  %4786 = vmatprep.subr.bf16.mxu0 0
  %4787 = vmatpush2.bf16.msra.mxu0 %v3587
  %4788 = vmatprep.subr.bf16.mxu0 0
  %4789 = vmatpush2.bf16.msra.mxu0 %v3586
  %4790 = vmatprep.subr.bf16.mxu0 0
  %4791 = vmatpush2.bf16.msra.mxu0 %v3585
  %4792 = vmatprep.subr.bf16.mxu0 0
  %4793 = vmatpush2.bf16.msra.mxu0 %v3584
  %4794 = vmatprep.subr.bf16.mxu0 0
  %4795 = vmatpush2.bf16.msra.mxu0 %v3583
  %4796 = vmatprep.subr.bf16.mxu0 0
  %4797 = vmatpush2.bf16.msra.mxu0 %v3582
  %4798 = vmatprep.mubr.bf16.mxu0 %v1145
  %4799 = vmatmul.mubr.bf16.gmra.mxu0 %v1143
  %v4800 = vpop.f32.mrf.mxu0
  %v4801 = vadd.f32 %v4761, %v4800
  %v4802 = vpop.f32.mrf.mxu0
  %v4803 = vpop.f32.mrf.mxu0
  %v4804 = vpop.f32.mrf.mxu0
  %4805 = vdwg.mxu0
  %4806 = vmatprep.subr.bf16.mxu0 0
  %4807 = vmatpush1.bf16.msra.mxu0 %v3597
  %4808 = vmatprep.subr.bf16.mxu0 0
  %4809 = vmatpush1.bf16.msra.mxu0 %v3596
  %4810 = vmatprep.subr.bf16.mxu0 0
  %4811 = vmatpush1.bf16.msra.mxu0 %v3595
  %4812 = vmatprep.subr.bf16.mxu0 0
  %4813 = vmatpush1.bf16.msra.mxu0 %v3594
  %4814 = vmatprep.subr.bf16.mxu0 0
  %4815 = vmatpush1.bf16.msra.mxu0 %v3593
  %4816 = vmatprep.subr.bf16.mxu0 0
  %4817 = vmatpush1.bf16.msra.mxu0 %v3592
  %4818 = vmatprep.subr.bf16.mxu0 0
  %4819 = vmatpush1.bf16.msra.mxu0 %v3591
  %4820 = vmatprep.subr.bf16.mxu0 0
  %4821 = vmatpush1.bf16.msra.mxu0 %v3590
  %4822 = vmatprep.subr.bf16.mxu0 0
  %4823 = vmatpush2.bf16.msra.mxu0 %v3605
  %4824 = vmatprep.subr.bf16.mxu0 0
  %4825 = vmatpush2.bf16.msra.mxu0 %v3604
  %4826 = vmatprep.subr.bf16.mxu0 0
  %4827 = vmatpush2.bf16.msra.mxu0 %v3603
  %4828 = vmatprep.subr.bf16.mxu0 0
  %4829 = vmatpush2.bf16.msra.mxu0 %v3602
  %4830 = vmatprep.subr.bf16.mxu0 0
  %4831 = vmatpush2.bf16.msra.mxu0 %v3601
  %4832 = vmatprep.subr.bf16.mxu0 0
  %4833 = vmatpush2.bf16.msra.mxu0 %v3600
  %4834 = vmatprep.subr.bf16.mxu0 0
  %4835 = vmatpush2.bf16.msra.mxu0 %v3599
  %4836 = vmatprep.subr.bf16.mxu0 0
  %4837 = vmatpush2.bf16.msra.mxu0 %v3598
  %4838 = vmatprep.mubr.bf16.mxu0 %v1161
  %4839 = vmatmul.mubr.bf16.gmra.mxu0 %v1153
  %v4840 = vpop.f32.mrf.mxu0
  %v4841 = vadd.f32 %v4801, %v4840
  %v4842 = vpop.f32.mrf.mxu0
  %v4843 = vpop.f32.mrf.mxu0
  %v4844 = vpop.f32.mrf.mxu0
  %4845 = vdwg.mxu0
  %4846 = vmatprep.subr.bf16.mxu0 0
  %4847 = vmatpush1.bf16.msra.mxu0 %v3613
  %4848 = vmatprep.subr.bf16.mxu0 0
  %4849 = vmatpush1.bf16.msra.mxu0 %v3612
  %4850 = vmatprep.subr.bf16.mxu0 0
  %4851 = vmatpush1.bf16.msra.mxu0 %v3611
  %4852 = vmatprep.subr.bf16.mxu0 0
  %4853 = vmatpush1.bf16.msra.mxu0 %v3610
  %4854 = vmatprep.subr.bf16.mxu0 0
  %4855 = vmatpush1.bf16.msra.mxu0 %v3609
  %4856 = vmatprep.subr.bf16.mxu0 0
  %4857 = vmatpush1.bf16.msra.mxu0 %v3608
  %4858 = vmatprep.subr.bf16.mxu0 0
  %4859 = vmatpush1.bf16.msra.mxu0 %v3607
  %4860 = vmatprep.subr.bf16.mxu0 0
  %4861 = vmatpush1.bf16.msra.mxu0 %v3606
  %4862 = vmatprep.subr.bf16.mxu0 0
  %4863 = vmatpush2.bf16.msra.mxu0 %v3621
  %4864 = vmatprep.subr.bf16.mxu0 0
  %4865 = vmatpush2.bf16.msra.mxu0 %v3620
  %4866 = vmatprep.subr.bf16.mxu0 0
  %4867 = vmatpush2.bf16.msra.mxu0 %v3619
  %4868 = vmatprep.subr.bf16.mxu0 0
  %4869 = vmatpush2.bf16.msra.mxu0 %v3618
  %4870 = vmatprep.subr.bf16.mxu0 0
  %4871 = vmatpush2.bf16.msra.mxu0 %v3617
  %4872 = vmatprep.subr.bf16.mxu0 0
  %4873 = vmatpush2.bf16.msra.mxu0 %v3616
  %4874 = vmatprep.subr.bf16.mxu0 0
  %4875 = vmatpush2.bf16.msra.mxu0 %v3615
  %4876 = vmatprep.subr.bf16.mxu0 0
  %4877 = vmatpush2.bf16.msra.mxu0 %v3614
  %4878 = vmatprep.mubr.bf16.mxu0 %v1162
  %4879 = vmatmul.mubr.bf16.gmra.mxu0 %v1160
  %v4880 = vpop.f32.mrf.mxu0
  %v4881 = vadd.f32 %v4841, %v4880
  %v4882 = vpop.f32.mrf.mxu0
  %v4883 = vpop.f32.mrf.mxu0
  %v4884 = vpop.f32.mrf.mxu0
  %4885 = vdwg.mxu0
  %4886 = vmatprep.subr.bf16.mxu0 0
  %4887 = vmatpush1.bf16.msra.mxu0 %v3629
  %4888 = vmatprep.subr.bf16.mxu0 0
  %4889 = vmatpush1.bf16.msra.mxu0 %v3628
  %4890 = vmatprep.subr.bf16.mxu0 0
  %4891 = vmatpush1.bf16.msra.mxu0 %v3627
  %4892 = vmatprep.subr.bf16.mxu0 0
  %4893 = vmatpush1.bf16.msra.mxu0 %v3626
  %4894 = vmatprep.subr.bf16.mxu0 0
  %4895 = vmatpush1.bf16.msra.mxu0 %v3625
  %4896 = vmatprep.subr.bf16.mxu0 0
  %4897 = vmatpush1.bf16.msra.mxu0 %v3624
  %4898 = vmatprep.subr.bf16.mxu0 0
  %4899 = vmatpush1.bf16.msra.mxu0 %v3623
  %4900 = vmatprep.subr.bf16.mxu0 0
  %4901 = vmatpush1.bf16.msra.mxu0 %v3622
  %4902 = vmatprep.subr.bf16.mxu0 0
  %4903 = vmatpush2.bf16.msra.mxu0 %v3637
  %4904 = vmatprep.subr.bf16.mxu0 0
  %4905 = vmatpush2.bf16.msra.mxu0 %v3636
  %4906 = vmatprep.subr.bf16.mxu0 0
  %4907 = vmatpush2.bf16.msra.mxu0 %v3635
  %4908 = vmatprep.subr.bf16.mxu0 0
  %4909 = vmatpush2.bf16.msra.mxu0 %v3634
  %4910 = vmatprep.subr.bf16.mxu0 0
  %4911 = vmatpush2.bf16.msra.mxu0 %v3633
  %4912 = vmatprep.subr.bf16.mxu0 0
  %4913 = vmatpush2.bf16.msra.mxu0 %v3632
  %4914 = vmatprep.subr.bf16.mxu0 0
  %4915 = vmatpush2.bf16.msra.mxu0 %v3631
  %4916 = vmatprep.subr.bf16.mxu0 0
  %4917 = vmatpush2.bf16.msra.mxu0 %v3630
  %4918 = vmatprep.mubr.bf16.mxu0 %v1178
  %4919 = vmatmul.mubr.bf16.gmra.mxu0 %v1170
  %v4920 = vpop.f32.mrf.mxu0
  %v4921 = vadd.f32 %v4881, %v4920
  %v4922 = vpop.f32.mrf.mxu0
  %v4923 = vpop.f32.mrf.mxu0
  %v4924 = vpop.f32.mrf.mxu0
  %4925 = vdwg.mxu0
  %4926 = vmatprep.subr.bf16.mxu0 0
  %4927 = vmatpush1.bf16.msra.mxu0 %v3645
  %4928 = vmatprep.subr.bf16.mxu0 0
  %4929 = vmatpush1.bf16.msra.mxu0 %v3644
  %4930 = vmatprep.subr.bf16.mxu0 0
  %4931 = vmatpush1.bf16.msra.mxu0 %v3643
  %4932 = vmatprep.subr.bf16.mxu0 0
  %4933 = vmatpush1.bf16.msra.mxu0 %v3642
  %4934 = vmatprep.subr.bf16.mxu0 0
  %4935 = vmatpush1.bf16.msra.mxu0 %v3641
  %4936 = vmatprep.subr.bf16.mxu0 0
  %4937 = vmatpush1.bf16.msra.mxu0 %v3640
  %4938 = vmatprep.subr.bf16.mxu0 0
  %4939 = vmatpush1.bf16.msra.mxu0 %v3639
  %4940 = vmatprep.subr.bf16.mxu0 0
  %4941 = vmatpush1.bf16.msra.mxu0 %v3638
  %4942 = vmatprep.subr.bf16.mxu0 0
  %4943 = vmatpush2.bf16.msra.mxu0 %v3653
  %4944 = vmatprep.subr.bf16.mxu0 0
  %4945 = vmatpush2.bf16.msra.mxu0 %v3652
  %4946 = vmatprep.subr.bf16.mxu0 0
  %4947 = vmatpush2.bf16.msra.mxu0 %v3651
  %4948 = vmatprep.subr.bf16.mxu0 0
  %4949 = vmatpush2.bf16.msra.mxu0 %v3650
  %4950 = vmatprep.subr.bf16.mxu0 0
  %4951 = vmatpush2.bf16.msra.mxu0 %v3649
  %4952 = vmatprep.subr.bf16.mxu0 0
  %4953 = vmatpush2.bf16.msra.mxu0 %v3648
  %4954 = vmatprep.subr.bf16.mxu0 0
  %4955 = vmatpush2.bf16.msra.mxu0 %v3647
  %4956 = vmatprep.subr.bf16.mxu0 0
  %4957 = vmatpush2.bf16.msra.mxu0 %v3646
  %4958 = vmatprep.mubr.bf16.mxu0 %v1179
  %4959 = vmatmul.mubr.bf16.gmra.mxu0 %v1177
  %v4960 = vpop.f32.mrf.mxu0
  %v4961 = vadd.f32 %v4921, %v4960
  %v4962 = vpop.f32.mrf.mxu0
  %v4963 = vpop.f32.mrf.mxu0
  %v4964 = vpop.f32.mrf.mxu0
  %4965 = vdwg.mxu0
  %4966 = vmatprep.subr.bf16.mxu0 0
  %4967 = vmatpush1.bf16.msra.mxu0 %v3661
  %4968 = vmatprep.subr.bf16.mxu0 0
  %4969 = vmatpush1.bf16.msra.mxu0 %v3660
  %4970 = vmatprep.subr.bf16.mxu0 0
  %4971 = vmatpush1.bf16.msra.mxu0 %v3659
  %4972 = vmatprep.subr.bf16.mxu0 0
  %4973 = vmatpush1.bf16.msra.mxu0 %v3658
  %4974 = vmatprep.subr.bf16.mxu0 0
  %4975 = vmatpush1.bf16.msra.mxu0 %v3657
  %4976 = vmatprep.subr.bf16.mxu0 0
  %4977 = vmatpush1.bf16.msra.mxu0 %v3656
  %4978 = vmatprep.subr.bf16.mxu0 0
  %4979 = vmatpush1.bf16.msra.mxu0 %v3655
  %4980 = vmatprep.subr.bf16.mxu0 0
  %4981 = vmatpush1.bf16.msra.mxu0 %v3654
  %4982 = vmatprep.subr.bf16.mxu0 0
  %4983 = vmatpush2.bf16.msra.mxu0 %v3669
  %4984 = vmatprep.subr.bf16.mxu0 0
  %4985 = vmatpush2.bf16.msra.mxu0 %v3668
  %4986 = vmatprep.subr.bf16.mxu0 0
  %4987 = vmatpush2.bf16.msra.mxu0 %v3667
  %4988 = vmatprep.subr.bf16.mxu0 0
  %4989 = vmatpush2.bf16.msra.mxu0 %v3666
  %4990 = vmatprep.subr.bf16.mxu0 0
  %4991 = vmatpush2.bf16.msra.mxu0 %v3665
  %4992 = vmatprep.subr.bf16.mxu0 0
  %4993 = vmatpush2.bf16.msra.mxu0 %v3664
  %4994 = vmatprep.subr.bf16.mxu0 0
  %4995 = vmatpush2.bf16.msra.mxu0 %v3663
  %4996 = vmatprep.subr.bf16.mxu0 0
  %4997 = vmatpush2.bf16.msra.mxu0 %v3662
  %4998 = vmatprep.mubr.bf16.mxu0 %v1195
  %4999 = vmatmul.mubr.bf16.gmra.mxu0 %v1187
  %v5000 = vpop.f32.mrf.mxu0
  %v5001 = vadd.f32 %v4961, %v5000
  %v5002 = vpop.f32.mrf.mxu0
  %v5003 = vpop.f32.mrf.mxu0
  %v5004 = vpop.f32.mrf.mxu0
  %5005 = vdwg.mxu0
  %5006 = vmatprep.subr.bf16.mxu0 0
  %5007 = vmatpush1.bf16.msra.mxu0 %v3677
  %5008 = vmatprep.subr.bf16.mxu0 0
  %5009 = vmatpush1.bf16.msra.mxu0 %v3676
  %5010 = vmatprep.subr.bf16.mxu0 0
  %5011 = vmatpush1.bf16.msra.mxu0 %v3675
  %5012 = vmatprep.subr.bf16.mxu0 0
  %5013 = vmatpush1.bf16.msra.mxu0 %v3674
  %5014 = vmatprep.subr.bf16.mxu0 0
  %5015 = vmatpush1.bf16.msra.mxu0 %v3673
  %5016 = vmatprep.subr.bf16.mxu0 0
  %5017 = vmatpush1.bf16.msra.mxu0 %v3672
  %5018 = vmatprep.subr.bf16.mxu0 0
  %5019 = vmatpush1.bf16.msra.mxu0 %v3671
  %5020 = vmatprep.subr.bf16.mxu0 0
  %5021 = vmatpush1.bf16.msra.mxu0 %v3670
  %5022 = vmatprep.subr.bf16.mxu0 0
  %5023 = vmatpush2.bf16.msra.mxu0 %v3685
  %5024 = vmatprep.subr.bf16.mxu0 0
  %5025 = vmatpush2.bf16.msra.mxu0 %v3684
  %5026 = vmatprep.subr.bf16.mxu0 0
  %5027 = vmatpush2.bf16.msra.mxu0 %v3683
  %5028 = vmatprep.subr.bf16.mxu0 0
  %5029 = vmatpush2.bf16.msra.mxu0 %v3682
  %5030 = vmatprep.subr.bf16.mxu0 0
  %5031 = vmatpush2.bf16.msra.mxu0 %v3681
  %5032 = vmatprep.subr.bf16.mxu0 0
  %5033 = vmatpush2.bf16.msra.mxu0 %v3680
  %5034 = vmatprep.subr.bf16.mxu0 0
  %5035 = vmatpush2.bf16.msra.mxu0 %v3679
  %5036 = vmatprep.subr.bf16.mxu0 0
  %5037 = vmatpush2.bf16.msra.mxu0 %v3678
  %5038 = vmatprep.mubr.bf16.mxu0 %v1196
  %5039 = vmatmul.mubr.bf16.gmra.mxu0 %v1194
  %v5040 = vpop.f32.mrf.mxu0
  %v5041 = vadd.f32 %v5001, %v5040
  %v5042 = vpop.f32.mrf.mxu0
  %v5043 = vpop.f32.mrf.mxu0
  %v5044 = vpop.f32.mrf.mxu0
  %5045 = vdwg.mxu0
  %5046 = vmatprep.subr.bf16.mxu0 0
  %5047 = vmatpush1.bf16.msra.mxu0 %v3693
  %5048 = vmatprep.subr.bf16.mxu0 0
  %5049 = vmatpush1.bf16.msra.mxu0 %v3692
  %5050 = vmatprep.subr.bf16.mxu0 0
  %5051 = vmatpush1.bf16.msra.mxu0 %v3691
  %5052 = vmatprep.subr.bf16.mxu0 0
  %5053 = vmatpush1.bf16.msra.mxu0 %v3690
  %5054 = vmatprep.subr.bf16.mxu0 0
  %5055 = vmatpush1.bf16.msra.mxu0 %v3689
  %5056 = vmatprep.subr.bf16.mxu0 0
  %5057 = vmatpush1.bf16.msra.mxu0 %v3688
  %5058 = vmatprep.subr.bf16.mxu0 0
  %5059 = vmatpush1.bf16.msra.mxu0 %v3687
  %5060 = vmatprep.subr.bf16.mxu0 0
  %5061 = vmatpush1.bf16.msra.mxu0 %v3686
  %5062 = vmatprep.subr.bf16.mxu0 0
  %5063 = vmatpush2.bf16.msra.mxu0 %v3701
  %5064 = vmatprep.subr.bf16.mxu0 0
  %5065 = vmatpush2.bf16.msra.mxu0 %v3700
  %5066 = vmatprep.subr.bf16.mxu0 0
  %5067 = vmatpush2.bf16.msra.mxu0 %v3699
  %5068 = vmatprep.subr.bf16.mxu0 0
  %5069 = vmatpush2.bf16.msra.mxu0 %v3698
  %5070 = vmatprep.subr.bf16.mxu0 0
  %5071 = vmatpush2.bf16.msra.mxu0 %v3697
  %5072 = vmatprep.subr.bf16.mxu0 0
  %5073 = vmatpush2.bf16.msra.mxu0 %v3696
  %5074 = vmatprep.subr.bf16.mxu0 0
  %5075 = vmatpush2.bf16.msra.mxu0 %v3695
  %5076 = vmatprep.subr.bf16.mxu0 0
  %5077 = vmatpush2.bf16.msra.mxu0 %v3694
  %5078 = vmatprep.mubr.bf16.mxu0 %v1212
  %5079 = vmatmul.mubr.bf16.gmra.mxu0 %v1204
  %v5080 = vpop.f32.mrf.mxu0
  %v5081 = vadd.f32 %v5041, %v5080
  %v5082 = vpop.f32.mrf.mxu0
  %v5083 = vpop.f32.mrf.mxu0
  %v5084 = vpop.f32.mrf.mxu0
  %5085 = vdwg.mxu0
  %5086 = vmatprep.subr.bf16.mxu0 0
  %5087 = vmatpush1.bf16.msra.mxu0 %v3709
  %5088 = vmatprep.subr.bf16.mxu0 0
  %5089 = vmatpush1.bf16.msra.mxu0 %v3708
  %5090 = vmatprep.subr.bf16.mxu0 0
  %5091 = vmatpush1.bf16.msra.mxu0 %v3707
  %5092 = vmatprep.subr.bf16.mxu0 0
  %5093 = vmatpush1.bf16.msra.mxu0 %v3706
  %5094 = vmatprep.subr.bf16.mxu0 0
  %5095 = vmatpush1.bf16.msra.mxu0 %v3705
  %5096 = vmatprep.subr.bf16.mxu0 0
  %5097 = vmatpush1.bf16.msra.mxu0 %v3704
  %5098 = vmatprep.subr.bf16.mxu0 0
  %5099 = vmatpush1.bf16.msra.mxu0 %v3703
  %5100 = vmatprep.subr.bf16.mxu0 0
  %5101 = vmatpush1.bf16.msra.mxu0 %v3702
  %5102 = vmatprep.subr.bf16.mxu0 0
  %5103 = vmatpush2.bf16.msra.mxu0 %v3717
  %5104 = vmatprep.subr.bf16.mxu0 0
  %5105 = vmatpush2.bf16.msra.mxu0 %v3716
  %5106 = vmatprep.subr.bf16.mxu0 0
  %5107 = vmatpush2.bf16.msra.mxu0 %v3715
  %5108 = vmatprep.subr.bf16.mxu0 0
  %5109 = vmatpush2.bf16.msra.mxu0 %v3714
  %5110 = vmatprep.subr.bf16.mxu0 0
  %5111 = vmatpush2.bf16.msra.mxu0 %v3713
  %5112 = vmatprep.subr.bf16.mxu0 0
  %5113 = vmatpush2.bf16.msra.mxu0 %v3712
  %5114 = vmatprep.subr.bf16.mxu0 0
  %5115 = vmatpush2.bf16.msra.mxu0 %v3711
  %5116 = vmatprep.subr.bf16.mxu0 0
  %5117 = vmatpush2.bf16.msra.mxu0 %v3710
  %5118 = vmatprep.mubr.bf16.mxu0 %v1213
  %5119 = vmatmul.mubr.bf16.gmra.mxu0 %v1211
  %v5120 = vpop.f32.mrf.mxu0
  %v5121 = vadd.f32 %v5081, %v5120
  %v5122 = vpop.f32.mrf.mxu0
  %v5123 = vpop.f32.mrf.mxu0
  %v5124 = vpop.f32.mrf.mxu0
  %5125 = vdwg.mxu0
  %5126 = vmatprep.subr.bf16.mxu0 0
  %5127 = vmatpush1.bf16.msra.mxu0 %v3725
  %5128 = vmatprep.subr.bf16.mxu0 0
  %5129 = vmatpush1.bf16.msra.mxu0 %v3724
  %5130 = vmatprep.subr.bf16.mxu0 0
  %5131 = vmatpush1.bf16.msra.mxu0 %v3723
  %5132 = vmatprep.subr.bf16.mxu0 0
  %5133 = vmatpush1.bf16.msra.mxu0 %v3722
  %5134 = vmatprep.subr.bf16.mxu0 0
  %5135 = vmatpush1.bf16.msra.mxu0 %v3721
  %5136 = vmatprep.subr.bf16.mxu0 0
  %5137 = vmatpush1.bf16.msra.mxu0 %v3720
  %5138 = vmatprep.subr.bf16.mxu0 0
  %5139 = vmatpush1.bf16.msra.mxu0 %v3719
  %5140 = vmatprep.subr.bf16.mxu0 0
  %5141 = vmatpush1.bf16.msra.mxu0 %v3718
  %5142 = vmatprep.subr.bf16.mxu0 0
  %5143 = vmatpush2.bf16.msra.mxu0 %v3733
  %5144 = vmatprep.subr.bf16.mxu0 0
  %5145 = vmatpush2.bf16.msra.mxu0 %v3732
  %5146 = vmatprep.subr.bf16.mxu0 0
  %5147 = vmatpush2.bf16.msra.mxu0 %v3731
  %5148 = vmatprep.subr.bf16.mxu0 0
  %5149 = vmatpush2.bf16.msra.mxu0 %v3730
  %5150 = vmatprep.subr.bf16.mxu0 0
  %5151 = vmatpush2.bf16.msra.mxu0 %v3729
  %5152 = vmatprep.subr.bf16.mxu0 0
  %5153 = vmatpush2.bf16.msra.mxu0 %v3728
  %5154 = vmatprep.subr.bf16.mxu0 0
  %5155 = vmatpush2.bf16.msra.mxu0 %v3727
  %5156 = vmatprep.subr.bf16.mxu0 0
  %5157 = vmatpush2.bf16.msra.mxu0 %v3726
  %5158 = vmatprep.mubr.bf16.mxu0 %v1229
  %5159 = vmatmul.mubr.bf16.gmra.mxu0 %v1221
  %v5160 = vpop.f32.mrf.mxu0
  %v5161 = vadd.f32 %v5121, %v5160
  %v5162 = vpop.f32.mrf.mxu0
  %v5163 = vpop.f32.mrf.mxu0
  %v5164 = vpop.f32.mrf.mxu0
  %5165 = vdwg.mxu0
  %5166 = vmatprep.subr.bf16.mxu0 0
  %5167 = vmatpush1.bf16.msra.mxu0 %v3741
  %5168 = vmatprep.subr.bf16.mxu0 0
  %5169 = vmatpush1.bf16.msra.mxu0 %v3740
  %5170 = vmatprep.subr.bf16.mxu0 0
  %5171 = vmatpush1.bf16.msra.mxu0 %v3739
  %5172 = vmatprep.subr.bf16.mxu0 0
  %5173 = vmatpush1.bf16.msra.mxu0 %v3738
  %5174 = vmatprep.subr.bf16.mxu0 0
  %5175 = vmatpush1.bf16.msra.mxu0 %v3737
  %5176 = vmatprep.subr.bf16.mxu0 0
  %5177 = vmatpush1.bf16.msra.mxu0 %v3736
  %5178 = vmatprep.subr.bf16.mxu0 0
  %5179 = vmatpush1.bf16.msra.mxu0 %v3735
  %5180 = vmatprep.subr.bf16.mxu0 0
  %5181 = vmatpush1.bf16.msra.mxu0 %v3734
  %5182 = vmatprep.subr.bf16.mxu0 0
  %5183 = vmatpush2.bf16.msra.mxu0 %v3749
  %5184 = vmatprep.subr.bf16.mxu0 0
  %5185 = vmatpush2.bf16.msra.mxu0 %v3748
  %5186 = vmatprep.subr.bf16.mxu0 0
  %5187 = vmatpush2.bf16.msra.mxu0 %v3747
  %5188 = vmatprep.subr.bf16.mxu0 0
  %5189 = vmatpush2.bf16.msra.mxu0 %v3746
  %5190 = vmatprep.subr.bf16.mxu0 0
  %5191 = vmatpush2.bf16.msra.mxu0 %v3745
  %5192 = vmatprep.subr.bf16.mxu0 0
  %5193 = vmatpush2.bf16.msra.mxu0 %v3744
  %5194 = vmatprep.subr.bf16.mxu0 0
  %5195 = vmatpush2.bf16.msra.mxu0 %v3743
  %5196 = vmatprep.subr.bf16.mxu0 0
  %5197 = vmatpush2.bf16.msra.mxu0 %v3742
  %5198 = vmatprep.mubr.bf16.mxu0 %v1230
  %5199 = vmatmul.mubr.bf16.gmra.mxu0 %v1228
  %v5200 = vpop.f32.mrf.mxu0
  %v5201 = vadd.f32 %v5161, %v5200
  %v5202 = vpop.f32.mrf.mxu0
  %v5203 = vpop.f32.mrf.mxu0
  %v5204 = vpop.f32.mrf.mxu0
  %5205 = vdwg.mxu0
  %5206 = vmatprep.subr.bf16.mxu0 0
  %5207 = vmatpush1.bf16.msra.mxu0 %v3757
  %5208 = vmatprep.subr.bf16.mxu0 0
  %5209 = vmatpush1.bf16.msra.mxu0 %v3756
  %5210 = vmatprep.subr.bf16.mxu0 0
  %5211 = vmatpush1.bf16.msra.mxu0 %v3755
  %5212 = vmatprep.subr.bf16.mxu0 0
  %5213 = vmatpush1.bf16.msra.mxu0 %v3754
  %5214 = vmatprep.subr.bf16.mxu0 0
  %5215 = vmatpush1.bf16.msra.mxu0 %v3753
  %5216 = vmatprep.subr.bf16.mxu0 0
  %5217 = vmatpush1.bf16.msra.mxu0 %v3752
  %5218 = vmatprep.subr.bf16.mxu0 0
  %5219 = vmatpush1.bf16.msra.mxu0 %v3751
  %5220 = vmatprep.subr.bf16.mxu0 0
  %5221 = vmatpush1.bf16.msra.mxu0 %v3750
  %5222 = vmatprep.subr.bf16.mxu0 0
  %5223 = vmatpush2.bf16.msra.mxu0 %v3765
  %5224 = vmatprep.subr.bf16.mxu0 0
  %5225 = vmatpush2.bf16.msra.mxu0 %v3764
  %5226 = vmatprep.subr.bf16.mxu0 0
  %5227 = vmatpush2.bf16.msra.mxu0 %v3763
  %5228 = vmatprep.subr.bf16.mxu0 0
  %5229 = vmatpush2.bf16.msra.mxu0 %v3762
  %5230 = vmatprep.subr.bf16.mxu0 0
  %5231 = vmatpush2.bf16.msra.mxu0 %v3761
  %5232 = vmatprep.subr.bf16.mxu0 0
  %5233 = vmatpush2.bf16.msra.mxu0 %v3760
  %5234 = vmatprep.subr.bf16.mxu0 0
  %5235 = vmatpush2.bf16.msra.mxu0 %v3759
  %5236 = vmatprep.subr.bf16.mxu0 0
  %5237 = vmatpush2.bf16.msra.mxu0 %v3758
  %5238 = vmatprep.mubr.bf16.mxu0 %v1246
  %5239 = vmatmul.mubr.bf16.gmra.mxu0 %v1238
  %v5240 = vpop.f32.mrf.mxu0
  %v5241 = vadd.f32 %v5201, %v5240
  %v5242 = vpop.f32.mrf.mxu0
  %v5243 = vpop.f32.mrf.mxu0
  %v5244 = vpop.f32.mrf.mxu0
  %5245 = vdwg.mxu0
  %5246 = vmatprep.subr.bf16.mxu0 0
  %5247 = vmatpush1.bf16.msra.mxu0 %v3773
  %5248 = vmatprep.subr.bf16.mxu0 0
  %5249 = vmatpush1.bf16.msra.mxu0 %v3772
  %5250 = vmatprep.subr.bf16.mxu0 0
  %5251 = vmatpush1.bf16.msra.mxu0 %v3771
  %5252 = vmatprep.subr.bf16.mxu0 0
  %5253 = vmatpush1.bf16.msra.mxu0 %v3770
  %5254 = vmatprep.subr.bf16.mxu0 0
  %5255 = vmatpush1.bf16.msra.mxu0 %v3769
  %5256 = vmatprep.subr.bf16.mxu0 0
  %5257 = vmatpush1.bf16.msra.mxu0 %v3768
  %5258 = vmatprep.subr.bf16.mxu0 0
  %5259 = vmatpush1.bf16.msra.mxu0 %v3767
  %5260 = vmatprep.subr.bf16.mxu0 0
  %5261 = vmatpush1.bf16.msra.mxu0 %v3766
  %5262 = vmatprep.subr.bf16.mxu0 0
  %5263 = vmatpush2.bf16.msra.mxu0 %v3781
  %5264 = vmatprep.subr.bf16.mxu0 0
  %5265 = vmatpush2.bf16.msra.mxu0 %v3780
  %5266 = vmatprep.subr.bf16.mxu0 0
  %5267 = vmatpush2.bf16.msra.mxu0 %v3779
  %5268 = vmatprep.subr.bf16.mxu0 0
  %5269 = vmatpush2.bf16.msra.mxu0 %v3778
  %5270 = vmatprep.subr.bf16.mxu0 0
  %5271 = vmatpush2.bf16.msra.mxu0 %v3777
  %5272 = vmatprep.subr.bf16.mxu0 0
  %5273 = vmatpush2.bf16.msra.mxu0 %v3776
  %5274 = vmatprep.subr.bf16.mxu0 0
  %5275 = vmatpush2.bf16.msra.mxu0 %v3775
  %5276 = vmatprep.subr.bf16.mxu0 0
  %5277 = vmatpush2.bf16.msra.mxu0 %v3774
  %5278 = vmatprep.mubr.bf16.mxu0 %v1247
  %5279 = vmatmul.mubr.bf16.gmra.mxu0 %v1245
  %v5280 = vpop.f32.mrf.mxu0
  %v5281 = vadd.f32 %v5241, %v5280
  %v5282 = vpop.f32.mrf.mxu0
  %v5283 = vpop.f32.mrf.mxu0
  %v5284 = vpop.f32.mrf.mxu0
  %5285 = vdwg.mxu0
  %5286 = vmatprep.subr.bf16.mxu0 0
  %5287 = vmatpush1.bf16.msra.mxu0 %v3789
  %5288 = vmatprep.subr.bf16.mxu0 0
  %5289 = vmatpush1.bf16.msra.mxu0 %v3788
  %5290 = vmatprep.subr.bf16.mxu0 0
  %5291 = vmatpush1.bf16.msra.mxu0 %v3787
  %5292 = vmatprep.subr.bf16.mxu0 0
  %5293 = vmatpush1.bf16.msra.mxu0 %v3786
  %5294 = vmatprep.subr.bf16.mxu0 0
  %5295 = vmatpush1.bf16.msra.mxu0 %v3785
  %5296 = vmatprep.subr.bf16.mxu0 0
  %5297 = vmatpush1.bf16.msra.mxu0 %v3784
  %5298 = vmatprep.subr.bf16.mxu0 0
  %5299 = vmatpush1.bf16.msra.mxu0 %v3783
  %5300 = vmatprep.subr.bf16.mxu0 0
  %5301 = vmatpush1.bf16.msra.mxu0 %v3782
  %5302 = vmatprep.subr.bf16.mxu0 0
  %5303 = vmatpush2.bf16.msra.mxu0 %v3797
  %5304 = vmatprep.subr.bf16.mxu0 0
  %5305 = vmatpush2.bf16.msra.mxu0 %v3796
  %5306 = vmatprep.subr.bf16.mxu0 0
  %5307 = vmatpush2.bf16.msra.mxu0 %v3795
  %5308 = vmatprep.subr.bf16.mxu0 0
  %5309 = vmatpush2.bf16.msra.mxu0 %v3794
  %5310 = vmatprep.subr.bf16.mxu0 0
  %5311 = vmatpush2.bf16.msra.mxu0 %v3793
  %5312 = vmatprep.subr.bf16.mxu0 0
  %5313 = vmatpush2.bf16.msra.mxu0 %v3792
  %5314 = vmatprep.subr.bf16.mxu0 0
  %5315 = vmatpush2.bf16.msra.mxu0 %v3791
  %5316 = vmatprep.subr.bf16.mxu0 0
  %5317 = vmatpush2.bf16.msra.mxu0 %v3790
  %5318 = vmatprep.mubr.bf16.mxu0 %v1263
  %5319 = vmatmul.mubr.bf16.gmra.mxu0 %v1255
  %v5320 = vpop.f32.mrf.mxu0
  %v5321 = vadd.f32 %v5281, %v5320
  %v5322 = vpop.f32.mrf.mxu0
  %v5323 = vpop.f32.mrf.mxu0
  %v5324 = vpop.f32.mrf.mxu0
  %5325 = vdwg.mxu0
  %5326 = vmatprep.subr.bf16.mxu0 0
  %5327 = vmatpush1.bf16.msra.mxu0 %v3805
  %5328 = vmatprep.subr.bf16.mxu0 0
  %5329 = vmatpush1.bf16.msra.mxu0 %v3804
  %5330 = vmatprep.subr.bf16.mxu0 0
  %5331 = vmatpush1.bf16.msra.mxu0 %v3803
  %5332 = vmatprep.subr.bf16.mxu0 0
  %5333 = vmatpush1.bf16.msra.mxu0 %v3802
  %5334 = vmatprep.subr.bf16.mxu0 0
  %5335 = vmatpush1.bf16.msra.mxu0 %v3801
  %5336 = vmatprep.subr.bf16.mxu0 0
  %5337 = vmatpush1.bf16.msra.mxu0 %v3800
  %5338 = vmatprep.subr.bf16.mxu0 0
  %5339 = vmatpush1.bf16.msra.mxu0 %v3799
  %5340 = vmatprep.subr.bf16.mxu0 0
  %5341 = vmatpush1.bf16.msra.mxu0 %v3798
  %5342 = vmatprep.subr.bf16.mxu0 0
  %5343 = vmatpush2.bf16.msra.mxu0 %v3813
  %5344 = vmatprep.subr.bf16.mxu0 0
  %5345 = vmatpush2.bf16.msra.mxu0 %v3812
  %5346 = vmatprep.subr.bf16.mxu0 0
  %5347 = vmatpush2.bf16.msra.mxu0 %v3811
  %5348 = vmatprep.subr.bf16.mxu0 0
  %5349 = vmatpush2.bf16.msra.mxu0 %v3810
  %5350 = vmatprep.subr.bf16.mxu0 0
  %5351 = vmatpush2.bf16.msra.mxu0 %v3809
  %5352 = vmatprep.subr.bf16.mxu0 0
  %5353 = vmatpush2.bf16.msra.mxu0 %v3808
  %5354 = vmatprep.subr.bf16.mxu0 0
  %5355 = vmatpush2.bf16.msra.mxu0 %v3807
  %5356 = vmatprep.subr.bf16.mxu0 0
  %5357 = vmatpush2.bf16.msra.mxu0 %v3806
  %5358 = vmatprep.mubr.bf16.mxu0 %v1264
  %5359 = vmatmul.mubr.bf16.gmra.mxu0 %v1262
  %v5360 = vpop.f32.mrf.mxu0
  %v5361 = vadd.f32 %v5321, %v5360
  %v5362 = vpop.f32.mrf.mxu0
  %v5363 = vpop.f32.mrf.mxu0
  %v5364 = vpop.f32.mrf.mxu0
  %5365 = vdwg.mxu0
  %5366 = vmatprep.subr.bf16.mxu0 0
  %5367 = vmatpush1.bf16.msra.mxu0 %v3821
  %5368 = vmatprep.subr.bf16.mxu0 0
  %5369 = vmatpush1.bf16.msra.mxu0 %v3820
  %5370 = vmatprep.subr.bf16.mxu0 0
  %5371 = vmatpush1.bf16.msra.mxu0 %v3819
  %5372 = vmatprep.subr.bf16.mxu0 0
  %5373 = vmatpush1.bf16.msra.mxu0 %v3818
  %5374 = vmatprep.subr.bf16.mxu0 0
  %5375 = vmatpush1.bf16.msra.mxu0 %v3817
  %5376 = vmatprep.subr.bf16.mxu0 0
  %5377 = vmatpush1.bf16.msra.mxu0 %v3816
  %5378 = vmatprep.subr.bf16.mxu0 0
  %5379 = vmatpush1.bf16.msra.mxu0 %v3815
  %5380 = vmatprep.subr.bf16.mxu0 0
  %5381 = vmatpush1.bf16.msra.mxu0 %v3814
  %5382 = vmatprep.subr.bf16.mxu0 0
  %5383 = vmatpush2.bf16.msra.mxu0 %v3829
  %5384 = vmatprep.subr.bf16.mxu0 0
  %5385 = vmatpush2.bf16.msra.mxu0 %v3828
  %5386 = vmatprep.subr.bf16.mxu0 0
  %5387 = vmatpush2.bf16.msra.mxu0 %v3827
  %5388 = vmatprep.subr.bf16.mxu0 0
  %5389 = vmatpush2.bf16.msra.mxu0 %v3826
  %5390 = vmatprep.subr.bf16.mxu0 0
  %5391 = vmatpush2.bf16.msra.mxu0 %v3825
  %5392 = vmatprep.subr.bf16.mxu0 0
  %5393 = vmatpush2.bf16.msra.mxu0 %v3824
  %5394 = vmatprep.subr.bf16.mxu0 0
  %5395 = vmatpush2.bf16.msra.mxu0 %v3823
  %5396 = vmatprep.subr.bf16.mxu0 0
  %5397 = vmatpush2.bf16.msra.mxu0 %v3822
  %5398 = vmatprep.mubr.bf16.mxu0 %v1280
  %5399 = vmatmul.mubr.bf16.gmra.mxu0 %v1272
  %v5400 = vpop.f32.mrf.mxu0
  %v5401 = vadd.f32 %v5361, %v5400
  %v5402 = vpop.f32.mrf.mxu0
  %v5403 = vpop.f32.mrf.mxu0
  %v5404 = vpop.f32.mrf.mxu0
  %5405 = vdwg.mxu0
  %5406 = vmatprep.subr.bf16.mxu0 0
  %5407 = vmatpush1.bf16.msra.mxu0 %v3837
  %5408 = vmatprep.subr.bf16.mxu0 0
  %5409 = vmatpush1.bf16.msra.mxu0 %v3836
  %5410 = vmatprep.subr.bf16.mxu0 0
  %5411 = vmatpush1.bf16.msra.mxu0 %v3835
  %5412 = vmatprep.subr.bf16.mxu0 0
  %5413 = vmatpush1.bf16.msra.mxu0 %v3834
  %5414 = vmatprep.subr.bf16.mxu0 0
  %5415 = vmatpush1.bf16.msra.mxu0 %v3833
  %5416 = vmatprep.subr.bf16.mxu0 0
  %5417 = vmatpush1.bf16.msra.mxu0 %v3832
  %5418 = vmatprep.subr.bf16.mxu0 0
  %5419 = vmatpush1.bf16.msra.mxu0 %v3831
  %5420 = vmatprep.subr.bf16.mxu0 0
  %5421 = vmatpush1.bf16.msra.mxu0 %v3830
  %5422 = vmatprep.subr.bf16.mxu0 0
  %5423 = vmatpush2.bf16.msra.mxu0 %v3845
  %5424 = vmatprep.subr.bf16.mxu0 0
  %5425 = vmatpush2.bf16.msra.mxu0 %v3844
  %5426 = vmatprep.subr.bf16.mxu0 0
  %5427 = vmatpush2.bf16.msra.mxu0 %v3843
  %5428 = vmatprep.subr.bf16.mxu0 0
  %5429 = vmatpush2.bf16.msra.mxu0 %v3842
  %5430 = vmatprep.subr.bf16.mxu0 0
  %5431 = vmatpush2.bf16.msra.mxu0 %v3841
  %5432 = vmatprep.subr.bf16.mxu0 0
  %5433 = vmatpush2.bf16.msra.mxu0 %v3840
  %5434 = vmatprep.subr.bf16.mxu0 0
  %5435 = vmatpush2.bf16.msra.mxu0 %v3839
  %5436 = vmatprep.subr.bf16.mxu0 0
  %5437 = vmatpush2.bf16.msra.mxu0 %v3838
  %5438 = vmatprep.mubr.bf16.mxu0 %v1281
  %5439 = vmatmul.mubr.bf16.gmra.mxu0 %v1279
  %v5440 = vpop.f32.mrf.mxu0
  %v5441 = vadd.f32 %v5401, %v5440
  %v5442 = vpop.f32.mrf.mxu0
  %v5443 = vpop.f32.mrf.mxu0
  %v5444 = vpop.f32.mrf.mxu0
  %5445 = vdwg.mxu0
  %5446 = vmatprep.subr.bf16.mxu0 0
  %5447 = vmatpush1.bf16.msra.mxu0 %v3853
  %5448 = vmatprep.subr.bf16.mxu0 0
  %5449 = vmatpush1.bf16.msra.mxu0 %v3852
  %5450 = vmatprep.subr.bf16.mxu0 0
  %5451 = vmatpush1.bf16.msra.mxu0 %v3851
  %5452 = vmatprep.subr.bf16.mxu0 0
  %5453 = vmatpush1.bf16.msra.mxu0 %v3850
  %5454 = vmatprep.subr.bf16.mxu0 0
  %5455 = vmatpush1.bf16.msra.mxu0 %v3849
  %5456 = vmatprep.subr.bf16.mxu0 0
  %5457 = vmatpush1.bf16.msra.mxu0 %v3848
  %5458 = vmatprep.subr.bf16.mxu0 0
  %5459 = vmatpush1.bf16.msra.mxu0 %v3847
  %5460 = vmatprep.subr.bf16.mxu0 0
  %5461 = vmatpush1.bf16.msra.mxu0 %v3846
  %5462 = vmatprep.subr.bf16.mxu0 0
  %5463 = vmatpush2.bf16.msra.mxu0 %v3861
  %5464 = vmatprep.subr.bf16.mxu0 0
  %5465 = vmatpush2.bf16.msra.mxu0 %v3860
  %5466 = vmatprep.subr.bf16.mxu0 0
  %5467 = vmatpush2.bf16.msra.mxu0 %v3859
  %5468 = vmatprep.subr.bf16.mxu0 0
  %5469 = vmatpush2.bf16.msra.mxu0 %v3858
  %5470 = vmatprep.subr.bf16.mxu0 0
  %5471 = vmatpush2.bf16.msra.mxu0 %v3857
  %5472 = vmatprep.subr.bf16.mxu0 0
  %5473 = vmatpush2.bf16.msra.mxu0 %v3856
  %5474 = vmatprep.subr.bf16.mxu0 0
  %5475 = vmatpush2.bf16.msra.mxu0 %v3855
  %5476 = vmatprep.subr.bf16.mxu0 0
  %5477 = vmatpush2.bf16.msra.mxu0 %v3854
  %5478 = vmatprep.mubr.bf16.mxu0 %v1297
  %5479 = vmatmul.mubr.bf16.gmra.mxu0 %v1289
  %v5480 = vpop.f32.mrf.mxu0
  %v5481 = vadd.f32 %v5441, %v5480
  %v5482 = vpop.f32.mrf.mxu0
  %v5483 = vpop.f32.mrf.mxu0
  %v5484 = vpop.f32.mrf.mxu0
  %5485 = vdwg.mxu0
  %5486 = vmatprep.subr.bf16.mxu0 0
  %5487 = vmatpush1.bf16.msra.mxu0 %v3869
  %5488 = vmatprep.subr.bf16.mxu0 0
  %5489 = vmatpush1.bf16.msra.mxu0 %v3868
  %5490 = vmatprep.subr.bf16.mxu0 0
  %5491 = vmatpush1.bf16.msra.mxu0 %v3867
  %5492 = vmatprep.subr.bf16.mxu0 0
  %5493 = vmatpush1.bf16.msra.mxu0 %v3866
  %5494 = vmatprep.subr.bf16.mxu0 0
  %5495 = vmatpush1.bf16.msra.mxu0 %v3865
  %5496 = vmatprep.subr.bf16.mxu0 0
  %5497 = vmatpush1.bf16.msra.mxu0 %v3864
  %5498 = vmatprep.subr.bf16.mxu0 0
  %5499 = vmatpush1.bf16.msra.mxu0 %v3863
  %5500 = vmatprep.subr.bf16.mxu0 0
  %5501 = vmatpush1.bf16.msra.mxu0 %v3862
  %5502 = vmatprep.subr.bf16.mxu0 0
  %5503 = vmatpush2.bf16.msra.mxu0 %v3877
  %5504 = vmatprep.subr.bf16.mxu0 0
  %5505 = vmatpush2.bf16.msra.mxu0 %v3876
  %5506 = vmatprep.subr.bf16.mxu0 0
  %5507 = vmatpush2.bf16.msra.mxu0 %v3875
  %5508 = vmatprep.subr.bf16.mxu0 0
  %5509 = vmatpush2.bf16.msra.mxu0 %v3874
  %5510 = vmatprep.subr.bf16.mxu0 0
  %5511 = vmatpush2.bf16.msra.mxu0 %v3873
  %5512 = vmatprep.subr.bf16.mxu0 0
  %5513 = vmatpush2.bf16.msra.mxu0 %v3872
  %5514 = vmatprep.subr.bf16.mxu0 0
  %5515 = vmatpush2.bf16.msra.mxu0 %v3871
  %5516 = vmatprep.subr.bf16.mxu0 0
  %5517 = vmatpush2.bf16.msra.mxu0 %v3870
  %5518 = vmatprep.mubr.bf16.mxu0 %v1298
  %5519 = vmatmul.mubr.bf16.gmra.mxu0 %v1296
  %v5520 = vpop.f32.mrf.mxu0
  %v5521 = vadd.f32 %v5481, %v5520
  %v5522 = vpop.f32.mrf.mxu0
  %v5523 = vpop.f32.mrf.mxu0
  %v5524 = vpop.f32.mrf.mxu0
  %5525 = vdwg.mxu0
  %5526 = vmatprep.subr.bf16.mxu0 0
  %5527 = vmatpush1.bf16.msra.mxu0 %v3885
  %5528 = vmatprep.subr.bf16.mxu0 0
  %5529 = vmatpush1.bf16.msra.mxu0 %v3884
  %5530 = vmatprep.subr.bf16.mxu0 0
  %5531 = vmatpush1.bf16.msra.mxu0 %v3883
  %5532 = vmatprep.subr.bf16.mxu0 0
  %5533 = vmatpush1.bf16.msra.mxu0 %v3882
  %5534 = vmatprep.subr.bf16.mxu0 0
  %5535 = vmatpush1.bf16.msra.mxu0 %v3881
  %5536 = vmatprep.subr.bf16.mxu0 0
  %5537 = vmatpush1.bf16.msra.mxu0 %v3880
  %5538 = vmatprep.subr.bf16.mxu0 0
  %5539 = vmatpush1.bf16.msra.mxu0 %v3879
  %5540 = vmatprep.subr.bf16.mxu0 0
  %5541 = vmatpush1.bf16.msra.mxu0 %v3878
  %5542 = vmatprep.subr.bf16.mxu0 0
  %5543 = vmatpush2.bf16.msra.mxu0 %v3893
  %5544 = vmatprep.subr.bf16.mxu0 0
  %5545 = vmatpush2.bf16.msra.mxu0 %v3892
  %5546 = vmatprep.subr.bf16.mxu0 0
  %5547 = vmatpush2.bf16.msra.mxu0 %v3891
  %5548 = vmatprep.subr.bf16.mxu0 0
  %5549 = vmatpush2.bf16.msra.mxu0 %v3890
  %5550 = vmatprep.subr.bf16.mxu0 0
  %5551 = vmatpush2.bf16.msra.mxu0 %v3889
  %5552 = vmatprep.subr.bf16.mxu0 0
  %5553 = vmatpush2.bf16.msra.mxu0 %v3888
  %5554 = vmatprep.subr.bf16.mxu0 0
  %5555 = vmatpush2.bf16.msra.mxu0 %v3887
  %5556 = vmatprep.subr.bf16.mxu0 0
  %5557 = vmatpush2.bf16.msra.mxu0 %v3886
  %5558 = vmatprep.mubr.bf16.mxu0 %v1314
  %5559 = vmatmul.mubr.bf16.gmra.mxu0 %v1306
  %v5560 = vpop.f32.mrf.mxu0
  %v5561 = vadd.f32 %v5521, %v5560
  %v5562 = vpop.f32.mrf.mxu0
  %v5563 = vpop.f32.mrf.mxu0
  %v5564 = vpop.f32.mrf.mxu0
  %5565 = vdwg.mxu0
  %5566 = vmatprep.subr.bf16.mxu0 0
  %5567 = vmatpush1.bf16.msra.mxu0 %v3901
  %5568 = vmatprep.subr.bf16.mxu0 0
  %5569 = vmatpush1.bf16.msra.mxu0 %v3900
  %5570 = vmatprep.subr.bf16.mxu0 0
  %5571 = vmatpush1.bf16.msra.mxu0 %v3899
  %5572 = vmatprep.subr.bf16.mxu0 0
  %5573 = vmatpush1.bf16.msra.mxu0 %v3898
  %5574 = vmatprep.subr.bf16.mxu0 0
  %5575 = vmatpush1.bf16.msra.mxu0 %v3897
  %5576 = vmatprep.subr.bf16.mxu0 0
  %5577 = vmatpush1.bf16.msra.mxu0 %v3896
  %5578 = vmatprep.subr.bf16.mxu0 0
  %5579 = vmatpush1.bf16.msra.mxu0 %v3895
  %5580 = vmatprep.subr.bf16.mxu0 0
  %5581 = vmatpush1.bf16.msra.mxu0 %v3894
  %5582 = vmatprep.subr.bf16.mxu0 0
  %5583 = vmatpush2.bf16.msra.mxu0 %v3909
  %5584 = vmatprep.subr.bf16.mxu0 0
  %5585 = vmatpush2.bf16.msra.mxu0 %v3908
  %5586 = vmatprep.subr.bf16.mxu0 0
  %5587 = vmatpush2.bf16.msra.mxu0 %v3907
  %5588 = vmatprep.subr.bf16.mxu0 0
  %5589 = vmatpush2.bf16.msra.mxu0 %v3906
  %5590 = vmatprep.subr.bf16.mxu0 0
  %5591 = vmatpush2.bf16.msra.mxu0 %v3905
  %5592 = vmatprep.subr.bf16.mxu0 0
  %5593 = vmatpush2.bf16.msra.mxu0 %v3904
  %5594 = vmatprep.subr.bf16.mxu0 0
  %5595 = vmatpush2.bf16.msra.mxu0 %v3903
  %5596 = vmatprep.subr.bf16.mxu0 0
  %5597 = vmatpush2.bf16.msra.mxu0 %v3902
  %5598 = vmatprep.mubr.bf16.mxu0 %v1315
  %5599 = vmatmul.mubr.bf16.gmra.mxu0 %v1313
  %v5600 = vpop.f32.mrf.mxu0
  %v5601 = vadd.f32 %v5561, %v5600
  %v5602 = vpop.f32.mrf.mxu0
  %v5603 = vpop.f32.mrf.mxu0
  %v5604 = vpop.f32.mrf.mxu0
  %5605 = vdwg.mxu0
  %5606 = vmatprep.subr.bf16.mxu0 0
  %5607 = vmatpush1.bf16.msra.mxu0 %v3917
  %5608 = vmatprep.subr.bf16.mxu0 0
  %5609 = vmatpush1.bf16.msra.mxu0 %v3916
  %5610 = vmatprep.subr.bf16.mxu0 0
  %5611 = vmatpush1.bf16.msra.mxu0 %v3915
  %5612 = vmatprep.subr.bf16.mxu0 0
  %5613 = vmatpush1.bf16.msra.mxu0 %v3914
  %5614 = vmatprep.subr.bf16.mxu0 0
  %5615 = vmatpush1.bf16.msra.mxu0 %v3913
  %5616 = vmatprep.subr.bf16.mxu0 0
  %5617 = vmatpush1.bf16.msra.mxu0 %v3912
  %5618 = vmatprep.subr.bf16.mxu0 0
  %5619 = vmatpush1.bf16.msra.mxu0 %v3911
  %5620 = vmatprep.subr.bf16.mxu0 0
  %5621 = vmatpush1.bf16.msra.mxu0 %v3910
  %5622 = vmatprep.subr.bf16.mxu0 0
  %5623 = vmatpush2.bf16.msra.mxu0 %v3925
  %5624 = vmatprep.subr.bf16.mxu0 0
  %5625 = vmatpush2.bf16.msra.mxu0 %v3924
  %5626 = vmatprep.subr.bf16.mxu0 0
  %5627 = vmatpush2.bf16.msra.mxu0 %v3923
  %5628 = vmatprep.subr.bf16.mxu0 0
  %5629 = vmatpush2.bf16.msra.mxu0 %v3922
  %5630 = vmatprep.subr.bf16.mxu0 0
  %5631 = vmatpush2.bf16.msra.mxu0 %v3921
  %5632 = vmatprep.subr.bf16.mxu0 0
  %5633 = vmatpush2.bf16.msra.mxu0 %v3920
  %5634 = vmatprep.subr.bf16.mxu0 0
  %5635 = vmatpush2.bf16.msra.mxu0 %v3919
  %5636 = vmatprep.subr.bf16.mxu0 0
  %5637 = vmatpush2.bf16.msra.mxu0 %v3918
  %5638 = vmatprep.mubr.bf16.mxu0 %v1331
  %5639 = vmatmul.mubr.bf16.gmra.mxu0 %v1323
  %v5640 = vpop.f32.mrf.mxu0
  %v5641 = vadd.f32 %v5601, %v5640
  %v5642 = vpop.f32.mrf.mxu0
  %v5643 = vpop.f32.mrf.mxu0
  %v5644 = vpop.f32.mrf.mxu0
  %5645 = vdwg.mxu0
  %5646 = vmatprep.subr.bf16.mxu0 0
  %5647 = vmatpush1.bf16.msra.mxu0 %v3933
  %5648 = vmatprep.subr.bf16.mxu0 0
  %5649 = vmatpush1.bf16.msra.mxu0 %v3932
  %5650 = vmatprep.subr.bf16.mxu0 0
  %5651 = vmatpush1.bf16.msra.mxu0 %v3931
  %5652 = vmatprep.subr.bf16.mxu0 0
  %5653 = vmatpush1.bf16.msra.mxu0 %v3930
  %5654 = vmatprep.subr.bf16.mxu0 0
  %5655 = vmatpush1.bf16.msra.mxu0 %v3929
  %5656 = vmatprep.subr.bf16.mxu0 0
  %5657 = vmatpush1.bf16.msra.mxu0 %v3928
  %5658 = vmatprep.subr.bf16.mxu0 0
  %5659 = vmatpush1.bf16.msra.mxu0 %v3927
  %5660 = vmatprep.subr.bf16.mxu0 0
  %5661 = vmatpush1.bf16.msra.mxu0 %v3926
  %5662 = vmatprep.subr.bf16.mxu0 0
  %5663 = vmatpush2.bf16.msra.mxu0 %v3941
  %5664 = vmatprep.subr.bf16.mxu0 0
  %5665 = vmatpush2.bf16.msra.mxu0 %v3940
  %5666 = vmatprep.subr.bf16.mxu0 0
  %5667 = vmatpush2.bf16.msra.mxu0 %v3939
  %5668 = vmatprep.subr.bf16.mxu0 0
  %5669 = vmatpush2.bf16.msra.mxu0 %v3938
  %5670 = vmatprep.subr.bf16.mxu0 0
  %5671 = vmatpush2.bf16.msra.mxu0 %v3937
  %5672 = vmatprep.subr.bf16.mxu0 0
  %5673 = vmatpush2.bf16.msra.mxu0 %v3936
  %5674 = vmatprep.subr.bf16.mxu0 0
  %5675 = vmatpush2.bf16.msra.mxu0 %v3935
  %5676 = vmatprep.subr.bf16.mxu0 0
  %5677 = vmatpush2.bf16.msra.mxu0 %v3934
  %5678 = vmatprep.mubr.bf16.mxu0 %v1332
  %5679 = vmatmul.mubr.bf16.gmra.mxu0 %v1330
  %v5680 = vpop.f32.mrf.mxu0
  %v5681 = vadd.f32 %v5641, %v5680
  %v5682 = vpop.f32.mrf.mxu0
  %v5683 = vpop.f32.mrf.mxu0
  %v5684 = vpop.f32.mrf.mxu0
  %5685 = vdwg.mxu0
  %5686 = vmatprep.subr.bf16.mxu0 0
  %5687 = vmatpush1.bf16.msra.mxu0 %v3949
  %5688 = vmatprep.subr.bf16.mxu0 0
  %5689 = vmatpush1.bf16.msra.mxu0 %v3948
  %5690 = vmatprep.subr.bf16.mxu0 0
  %5691 = vmatpush1.bf16.msra.mxu0 %v3947
  %5692 = vmatprep.subr.bf16.mxu0 0
  %5693 = vmatpush1.bf16.msra.mxu0 %v3946
  %5694 = vmatprep.subr.bf16.mxu0 0
  %5695 = vmatpush1.bf16.msra.mxu0 %v3945
  %5696 = vmatprep.subr.bf16.mxu0 0
  %5697 = vmatpush1.bf16.msra.mxu0 %v3944
  %5698 = vmatprep.subr.bf16.mxu0 0
  %5699 = vmatpush1.bf16.msra.mxu0 %v3943
  %5700 = vmatprep.subr.bf16.mxu0 0
  %5701 = vmatpush1.bf16.msra.mxu0 %v3942
  %5702 = vmatprep.subr.bf16.mxu0 0
  %5703 = vmatpush2.bf16.msra.mxu0 %v3957
  %5704 = vmatprep.subr.bf16.mxu0 0
  %5705 = vmatpush2.bf16.msra.mxu0 %v3956
  %5706 = vmatprep.subr.bf16.mxu0 0
  %5707 = vmatpush2.bf16.msra.mxu0 %v3955
  %5708 = vmatprep.subr.bf16.mxu0 0
  %5709 = vmatpush2.bf16.msra.mxu0 %v3954
  %5710 = vmatprep.subr.bf16.mxu0 0
  %5711 = vmatpush2.bf16.msra.mxu0 %v3953
  %5712 = vmatprep.subr.bf16.mxu0 0
  %5713 = vmatpush2.bf16.msra.mxu0 %v3952
  %5714 = vmatprep.subr.bf16.mxu0 0
  %5715 = vmatpush2.bf16.msra.mxu0 %v3951
  %5716 = vmatprep.subr.bf16.mxu0 0
  %5717 = vmatpush2.bf16.msra.mxu0 %v3950
  %5718 = vmatprep.mubr.bf16.mxu0 %v1348
  %5719 = vmatmul.mubr.bf16.gmra.mxu0 %v1340
  %v5720 = vpop.f32.mrf.mxu0
  %v5721 = vadd.f32 %v5681, %v5720
  %v5722 = vpop.f32.mrf.mxu0
  %v5723 = vpop.f32.mrf.mxu0
  %v5724 = vpop.f32.mrf.mxu0
  %5725 = vdwg.mxu0
  %5726 = vmatprep.subr.bf16.mxu0 0
  %5727 = vmatpush1.bf16.msra.mxu0 %v3965
  %5728 = vmatprep.subr.bf16.mxu0 0
  %5729 = vmatpush1.bf16.msra.mxu0 %v3964
  %5730 = vmatprep.subr.bf16.mxu0 0
  %5731 = vmatpush1.bf16.msra.mxu0 %v3963
  %5732 = vmatprep.subr.bf16.mxu0 0
  %5733 = vmatpush1.bf16.msra.mxu0 %v3962
  %5734 = vmatprep.subr.bf16.mxu0 0
  %5735 = vmatpush1.bf16.msra.mxu0 %v3961
  %5736 = vmatprep.subr.bf16.mxu0 0
  %5737 = vmatpush1.bf16.msra.mxu0 %v3960
  %5738 = vmatprep.subr.bf16.mxu0 0
  %5739 = vmatpush1.bf16.msra.mxu0 %v3959
  %5740 = vmatprep.subr.bf16.mxu0 0
  %5741 = vmatpush1.bf16.msra.mxu0 %v3958
  %5742 = vmatprep.subr.bf16.mxu0 0
  %5743 = vmatpush2.bf16.msra.mxu0 %v3973
  %5744 = vmatprep.subr.bf16.mxu0 0
  %5745 = vmatpush2.bf16.msra.mxu0 %v3972
  %5746 = vmatprep.subr.bf16.mxu0 0
  %5747 = vmatpush2.bf16.msra.mxu0 %v3971
  %5748 = vmatprep.subr.bf16.mxu0 0
  %5749 = vmatpush2.bf16.msra.mxu0 %v3970
  %5750 = vmatprep.subr.bf16.mxu0 0
  %5751 = vmatpush2.bf16.msra.mxu0 %v3969
  %5752 = vmatprep.subr.bf16.mxu0 0
  %5753 = vmatpush2.bf16.msra.mxu0 %v3968
  %5754 = vmatprep.subr.bf16.mxu0 0
  %5755 = vmatpush2.bf16.msra.mxu0 %v3967
  %5756 = vmatprep.subr.bf16.mxu0 0
  %5757 = vmatpush2.bf16.msra.mxu0 %v3966
  %5758 = vmatprep.mubr.bf16.mxu0 %v1349
  %5759 = vmatmul.mubr.bf16.gmra.mxu0 %v1347
  %v5760 = vpop.f32.mrf.mxu0
  %v5761 = vadd.f32 %v5721, %v5760
  %v5762 = vpop.f32.mrf.mxu0
  %v5763 = vpop.f32.mrf.mxu0
  %v5764 = vpop.f32.mrf.mxu0
  %5765 = vdwg.mxu0
  %vm5766 = vcmask 519168
  %5767 = vst.msk [vmem:[%s3] sm:$0xf] %vm5766, %v5761
  // Predicated region
  $region14: #{siamese_forward.5} parent=0 // pred_check
    _
  $region15: #{siamese_forward.5} parent=0 // pred_check_branch
    %5769 = sbr.rel (0) target = $region17
  $region16: #{siamese_forward.5} parent=0 // pred_region
    _
  $region17: #{siamese_forward.5} parent=0 // pred_fallthru
    _
  // Predicated region
  $region18: #{siamese_forward.5} parent=0 // pred_check
    _
  $region19: #{siamese_forward.5} parent=0 // pred_check_branch
    %5771 = sbr.rel (0) target = $region21
  $region20: #{siamese_forward.5} parent=0 // pred_region
    _
  $region21: #{siamese_forward.5} parent=0 // pred_fallthru
    _

</llo_original>
